<compile_context>
chip_gen: v6e
topology: v6e:2x2x1
jax: 0.10.0
libtpu: 0.0.40
codegen_flags: <defaults>
</compile_context>

<pallas_src>
import functools

import jax
import jax.numpy as jnp
from jax.experimental import pallas as pl
from jax.experimental.pallas import tpu as pltpu

# ---------------- model config (small, deterministic, synthetic) ----------------
D_MODEL = 32
NHEAD = 4
HEAD_DIM = D_MODEL // NHEAD
DIM_FF = 64
NUM_LAYERS = 2
HEIGHT = 4
WIDTH = 4
LN_EPS = 1e-5


def _full_spec(shape):
    nd = len(shape)
    return pl.BlockSpec(shape, lambda *_: (0,) * nd)


# ---------------- memory K/V pre-projection (once, all layers, lane-dense 128) ----------------

def _linear_kernel(x_ref, w_ref, b_ref, o_ref):
    acc = jnp.dot(x_ref[...], w_ref[...], preferred_element_type=jnp.float32)
    o_ref[...] = (acc + b_ref[...]).astype(o_ref.dtype)


def linear(x, w, b2d):
    """y = x @ w + b.   x:[M,K]  w:[K,N]  b2d:[1,N]  ->  [M,N]"""
    M, K = x.shape
    N = w.shape[1]
    return pl.pallas_call(
        _linear_kernel,
        out_shape=jax.ShapeDtypeStruct((M, N), x.dtype),
        grid=(1,),
        in_specs=[_full_spec((M, K)), _full_spec((K, N)), _full_spec((1, N))],
        out_specs=_full_spec((M, N)),
        compiler_params=pltpu.CompilerParams(dimension_semantics=("arbitrary",)),
    )(x, w, b2d)


# ---------------- fused decoder-layer kernel ----------------

def _decoder_layer_kernel(*refs, layer_idx, emit_attn, apply_final,
                          T, B, S, H, dk, scale):
    (x_ref, memkv_ref,
     wqkv_ref, bqkv_ref, wo_s_ref, bo_s_ref,
     wq_c_ref, bq_c_ref, wo_c_ref, bo_c_ref,
     w1_ref, b1_ref, w2_ref, b2_ref,
     g1_ref, be1_ref, g2_ref, be2_ref, g3_ref, be3_ref,
     gf_ref, bef_ref,
     sab_ref, cab_ref) = refs[:24]
    y_ref = refs[24]
    attn_ref = refs[25] if emit_attn else None

    D = H * dk

    def _ln(z, g, b):
        mu = jnp.mean(z, axis=-1, keepdims=True)
        var = jnp.mean(jnp.square(z - mu), axis=-1, keepdims=True)
        return (z - mu) * jax.lax.rsqrt(var + LN_EPS) * g + b

    def _mha(q_rows, k_rows, v_rows, bias, wo, want_probs):
        # q_rows: [Tq, D], k_rows/v_rows: [Tk, D], bias: [Tq, Tk] additive.
        # Heads are static lane slices of the D axis; the output projection is folded
        # per head (concat(heads) @ Wo == sum_h head_h @ Wo[h*dk:(h+1)*dk, :]).
        acc = None
        probs_sum = None
        for h in range(H):
            lo = h * dk
            qh = q_rows[:, lo:lo + dk]
            kh = k_rows[:, lo:lo + dk]
            vh = v_rows[:, lo:lo + dk]
            s = jax.lax.dot_general(qh, kh, (((1,), (1,)), ((), ())),
                                    preferred_element_type=jnp.float32)
            s = s * scale + bias
            s = s - jnp.max(s, axis=-1, keepdims=True)
            e = jnp.exp(s)
            p = e * pl.reciprocal(jnp.sum(e, axis=-1, keepdims=True), approx=True)
            if want_probs:
                probs_sum = p if probs_sum is None else probs_sum + p
            hv = jnp.dot(p, vh, preferred_element_type=jnp.float32)
            term = jnp.dot(hv, wo[lo:lo + dk, :], preferred_element_type=jnp.float32)
            acc = term if acc is None else acc + term
        return acc, probs_sum

    x = x_ref[...].astype(jnp.float32)                                   # [B*T, D]

    # ---- self attention (fused QKV projection, all heads/batches in-kernel) ----
    qkv = jnp.dot(x, wqkv_ref[...], preferred_element_type=jnp.float32) + bqkv_ref[...]
    q_s = qkv[:, :D]
    k_s = qkv[:, D:2 * D]
    v_s = qkv[:, 2 * D:3 * D]
    wo_s = wo_s_ref[...].astype(jnp.float32)
    sa_parts = []
    for b in range(B):
        r0 = b * T
        out_b, _ = _mha(q_s[r0:r0 + T, :], k_s[r0:r0 + T, :], v_s[r0:r0 + T, :],
                        sab_ref[b], wo_s, False)
        sa_parts.append(out_b)
    sa = jnp.concatenate(sa_parts, axis=0) + bo_s_ref[...]
    x1 = _ln(x + sa, g1_ref[...], be1_ref[...])

    # ---- cross attention (memory K/V precomputed once for all layers) ----
    qc = jnp.dot(x1, wq_c_ref[...], preferred_element_type=jnp.float32) + bq_c_ref[...]
    memkv = memkv_ref[...].astype(jnp.float32)                           # [B*S, L*2*D]
    koff = layer_idx * 2 * D
    k_c = memkv[:, koff:koff + D]
    v_c = memkv[:, koff + D:koff + 2 * D]
    wo_c = wo_c_ref[...].astype(jnp.float32)
    ca_parts = []
    for b in range(B):
        r0 = b * T
        m0 = b * S
        out_b, probs = _mha(qc[r0:r0 + T, :], k_c[m0:m0 + S, :], v_c[m0:m0 + S, :],
                            cab_ref[b], wo_c, emit_attn)
        if emit_attn:   # PyTorch MHA default: attention weights averaged over heads
            attn_ref[b, :, :] = (probs * (1.0 / H)).astype(attn_ref.dtype)
        ca_parts.append(out_b)
    ca = jnp.concatenate(ca_parts, axis=0) + bo_c_ref[...]
    x2 = _ln(x1 + ca, g2_ref[...], be2_ref[...])

    # ---- feed-forward (eval mode: dropout = identity) ----
    hdn = jnp.maximum(
        jnp.dot(x2, w1_ref[...], preferred_element_type=jnp.float32) + b1_ref[...], 0.0)
    ff = jnp.dot(hdn, w2_ref[...], preferred_element_type=jnp.float32) + b2_ref[...]
    x3 = _ln(x2 + ff, g3_ref[...], be3_ref[...])

    if apply_final:   # decoder-level final LayerNorm folded into the last layer
        x3 = _ln(x3, gf_ref[...], bef_ref[...])

    y_ref[...] = x3.astype(y_ref.dtype)


def decoder_layer_call(x_flat, memkv, lp, final_g, final_b, sa_bias, ca_bias,
                       *, layer_idx, emit_attn, apply_final):
    BT, D = x_flat.shape
    B, T, _ = sa_bias.shape
    S = ca_bias.shape[2]
    kernel = functools.partial(
        _decoder_layer_kernel,
        layer_idx=layer_idx, emit_attn=emit_attn, apply_final=apply_final,
        T=T, B=B, S=S, H=NHEAD, dk=HEAD_DIM, scale=1.0 / (HEAD_DIM ** 0.5))

    inputs = (x_flat, memkv,
              lp["sa_wqkv"], lp["sa_bqkv"], lp["sa_wo"], lp["sa_bo"],
              lp["ca_wq"], lp["ca_bq"], lp["ca_wo"], lp["ca_bo"],
              lp["ff_w1"], lp["ff_b1"], lp["ff_w2"], lp["ff_b2"],
              lp["n1_g"], lp["n1_b"], lp["n2_g"], lp["n2_b"], lp["n3_g"], lp["n3_b"],
              final_g, final_b,
              sa_bias, ca_bias)
    in_specs = [_full_spec(a.shape) for a in inputs]

    if emit_attn:
        out_shape = (jax.ShapeDtypeStruct((BT, D), x_flat.dtype),
                     jax.ShapeDtypeStruct((B, T, S), jnp.float32))
        out_specs = (_full_spec((BT, D)), _full_spec((B, T, S)))
    else:
        out_shape = jax.ShapeDtypeStruct((BT, D), x_flat.dtype)
        out_specs = _full_spec((BT, D))

    return pl.pallas_call(
        kernel,
        out_shape=out_shape,
        grid=(1,),
        in_specs=in_specs,
        out_specs=out_specs,
        compiler_params=pltpu.CompilerParams(dimension_semantics=("arbitrary",)),
    )(*inputs)


# ---------------- decoder forward (JAX glue: layout + masks only) ----------------

def transformer_decoder_forward(params, tgt, memory, height, tgt_mask=None,
                                memory_mask=None, tgt_key_padding_mask=None,
                                memory_key_padding_mask=None, tgt_vocab=None):
    T, B, D = tgt.shape
    S = memory.shape[0]

    # batch-major internal layout so each batch's rows are contiguous in the kernel
    x = tgt.transpose(1, 0, 2).reshape(B * T, D)
    mem = memory.transpose(1, 0, 2).reshape(B * S, D)

    # layer-invariant memory K/V projection for ALL layers in one lane-dense matmul
    memkv = linear(mem, params["mem_kv_w"], params["mem_kv_b"])          # [B*S, L*2*D]

    # additive masks built once per forward (tiny), consumed inside the fused kernels
    sa_bias = (jnp.zeros((T, T), jnp.float32) if tgt_mask is None
               else tgt_mask.astype(jnp.float32))
    sa_bias = jnp.broadcast_to(sa_bias[None, :, :], (B, T, T))
    if tgt_key_padding_mask is not None:
        sa_bias = sa_bias + jnp.where(tgt_key_padding_mask, -1e9, 0.0)[:, None, :]
    ca_bias = (jnp.zeros((T, S), jnp.float32) if memory_mask is None
               else memory_mask.astype(jnp.float32))
    ca_bias = jnp.broadcast_to(ca_bias[None, :, :], (B, T, S))
    if memory_key_padding_mask is not None:
        ca_bias = ca_bias + jnp.where(memory_key_padding_mask, -1e9, 0.0)[:, None, :]

    have_final = params.get("norm") is not None
    if have_final:
        final_g, final_b = params["norm"]
    else:
        final_g = jnp.ones((1, D), jnp.float32)
        final_b = jnp.zeros((1, D), jnp.float32)

    attn = None
    n_layers = len(params["layers"])
    for i, lp in enumerate(params["layers"]):
        last = (i == n_layers - 1)
        res = decoder_layer_call(x, memkv, lp, final_g, final_b, sa_bias, ca_bias,
                                 layer_idx=i, emit_attn=last,
                                 apply_final=(last and have_final))
        if last:
            x, attn = res
        else:
            x = res
        # TODO(synk): AttentionRefinementModule (self.arm) and tgt_vocab hook: source not
        # provided in the reference; arm stays None so no inter-layer refinement runs.

    output = x.reshape(B, T, D).transpose(1, 0, 2)
    return output, attn


# ---------------- deterministic parameter initialization ----------------

def _w(key, shape, scale=0.05):
    return (scale * jax.random.normal(key, shape)).astype(jnp.float32)


def init_layer_params(key):
    ks = jax.random.split(key, 14)
    D, F = D_MODEL, DIM_FF
    ones = jnp.ones((1, D), jnp.float32)
    zeros = jnp.zeros((1, D), jnp.float32)
    return {
        "sa_wqkv": _w(ks[0], (D, 3 * D)), "sa_bqkv": _w(ks[1], (1, 3 * D)),
        "sa_wo": _w(ks[2], (D, D)),       "sa_bo": _w(ks[3], (1, D)),
        "ca_wq": _w(ks[4], (D, D)),       "ca_bq": _w(ks[5], (1, D)),
        "ca_wkv": _w(ks[6], (D, 2 * D)),  "ca_bkv": _w(ks[7], (1, 2 * D)),
        "ca_wo": _w(ks[8], (D, D)),       "ca_bo": _w(ks[9], (1, D)),
        "ff_w1": _w(ks[10], (D, F)),      "ff_b1": _w(ks[11], (1, F)),
        "ff_w2": _w(ks[12], (F, D)),      "ff_b2": _w(ks[13], (1, D)),
        "n1_g": ones, "n1_b": zeros,
        "n2_g": ones, "n2_b": zeros,
        "n3_g": ones, "n3_b": zeros,
    }


def init_decoder_params(key):
    ks = jax.random.split(key, NUM_LAYERS)
    layers = [init_layer_params(k) for k in ks]
    # pack cross-attention K/V weights of all layers for the hoisted memory projection
    mem_kv_w = jnp.concatenate([lp["ca_wkv"] for lp in layers], axis=1)   # [D, L*2*D]
    mem_kv_b = jnp.concatenate([lp["ca_bkv"] for lp in layers], axis=1)   # [1, L*2*D]
    return {
        "layers": layers,
        "mem_kv_w": mem_kv_w,
        "mem_kv_b": mem_kv_b,
        "norm": (jnp.ones((1, D_MODEL), jnp.float32), jnp.zeros((1, D_MODEL), jnp.float32)),
    }


# ---------------- demo ----------------

if __name__ == "__main__":
    key = jax.random.PRNGKey(0)
    k_param, k_tgt, k_mem = jax.random.split(key, 3)

    params = init_decoder_params(k_param)

    T, B = 8, 2
    S = HEIGHT * WIDTH
    tgt = jax.random.normal(k_tgt, (T, B, D_MODEL), jnp.float32)
    memory = jax.random.normal(k_mem, (S, B, D_MODEL), jnp.float32)

    # causal self-attention mask (additive float), key-padding masks (bool, True = pad)
    tgt_mask = jnp.where(jnp.triu(jnp.ones((T, T), bool), k=1), -1e9, 0.0).astype(jnp.float32)
    tgt_key_padding_mask = jnp.zeros((B, T), bool).at[1, -1].set(True)
    memory_key_padding_mask = jnp.zeros((B, S), bool).at[1, -2:].set(True)

    @jax.jit
    def run(params, tgt, memory, tgt_mask, tgt_kpm, mem_kpm):
        return transformer_decoder_forward(
            params, tgt, memory, HEIGHT,
            tgt_mask=tgt_mask,
            tgt_key_padding_mask=tgt_kpm,
            memory_key_padding_mask=mem_kpm,
            tgt_vocab=None)

    output, attn = run(params, tgt, memory, tgt_mask,
                       tgt_key_padding_mask, memory_key_padding_mask)
    jax.block_until_ready((output, attn))

    assert output.shape == (T, B, D_MODEL), output.shape
    assert attn.shape == (B, T, S), attn.shape
    assert bool(jnp.all(jnp.isfinite(output))) and bool(jnp.all(jnp.isfinite(attn)))
    print("KERNEL_OK")
</pallas_src>

<mosaic_0001>
module attributes {stable_mosaic.version = 11 : i64} {
  func.func @_linear_kernel(%arg0: i32, %arg1: memref<32x32xf32, #tpu.memory_space<vmem>>, %arg2: memref<32x128xf32, #tpu.memory_space<vmem>>, %arg3: memref<1x128xf32, #tpu.memory_space<vmem>>, %arg4: memref<32x128xf32, #tpu.memory_space<vmem>>) attributes {dimension_semantics = [#tpu.dimension_semantics<arbitrary>], iteration_bounds = array<i64: 1>, scalar_prefetch = 0 : i64, scratch_operands = 0 : i64, tpu.core_type = #tpu.core_type<tc>, window_params = [{pipeline_mode = #tpu.pipeline_mode<synchronous>, transform_indices = @transform_0, window_bounds = array<i64: 32, 32>}, {pipeline_mode = #tpu.pipeline_mode<synchronous>, transform_indices = @transform_1, window_bounds = array<i64: 32, 128>}, {pipeline_mode = #tpu.pipeline_mode<synchronous>, transform_indices = @transform_2, window_bounds = array<i64: 1, 128>}, {pipeline_mode = #tpu.pipeline_mode<synchronous>, transform_indices = @transform_3, window_bounds = array<i64: 32, 128>}]} {
    %c0 = arith.constant 0 : index
    %c0_0 = arith.constant 0 : index
    %0 = vector.load %arg1[%c0, %c0_0] : memref<32x32xf32, #tpu.memory_space<vmem>>, vector<32x32xf32>
    %c0_1 = arith.constant 0 : index
    %c0_2 = arith.constant 0 : index
    %1 = vector.load %arg2[%c0_1, %c0_2] : memref<32x128xf32, #tpu.memory_space<vmem>>, vector<32x128xf32>
    %cst = arith.constant dense<0.000000e+00> : vector<32x128xf32>
    %2 = tpu.matmul %0, %1, %cst {dimension_numbers = #tpu.dot_dimension_numbers<[1], [0], [0], [1], [0, 0, 1, 1], [], []>} : vector<32x32xf32>, vector<32x128xf32>, vector<32x128xf32> -> vector<32x128xf32>
    %c0_3 = arith.constant 0 : index
    %c0_4 = arith.constant 0 : index
    %3 = vector.load %arg3[%c0_3, %c0_4] : memref<1x128xf32, #tpu.memory_space<vmem>>, vector<1x128xf32>
    %4 = vector.broadcast %3 : vector<1x128xf32> to vector<32x128xf32>
    %5 = arith.addf %2, %4 : vector<32x128xf32>
    %c0_5 = arith.constant 0 : index
    %c0_6 = arith.constant 0 : index
    %6 = vector.load %arg4[%c0_5, %c0_6] : memref<32x128xf32, #tpu.memory_space<vmem>>, vector<32x128xf32>
    tpu.vector_store %arg4[%c0_5, %c0_6], %5 {strides = array<i32>} : memref<32x128xf32, #tpu.memory_space<vmem>>, vector<32x128xf32>,
    return
  }
  func.func @transform_0(%arg0: i32) -> (i32, i32) {
    %c0_i32 = arith.constant 0 : i32
    %c0_i32_0 = arith.constant 0 : i32
    %c0_i32_1 = arith.constant 0 : i32
    return %c0_i32, %c0_i32_0 : i32, i32
  }
  func.func @transform_1(%arg0: i32) -> (i32, i32) {
    %c0_i32 = arith.constant 0 : i32
    %c0_i32_0 = arith.constant 0 : i32
    %c0_i32_1 = arith.constant 0 : i32
    return %c0_i32, %c0_i32_0 : i32, i32
  }
  func.func @transform_2(%arg0: i32) -> (i32, i32) {
    %c0_i32 = arith.constant 0 : i32
    %c0_i32_0 = arith.constant 0 : i32
    %c0_i32_1 = arith.constant 0 : i32
    return %c0_i32, %c0_i32_0 : i32, i32
  }
  func.func @transform_3(%arg0: i32) -> (i32, i32) {
    %c0_i32 = arith.constant 0 : i32
    %c0_i32_0 = arith.constant 0 : i32
    %c0_i32_1 = arith.constant 0 : i32
    return %c0_i32, %c0_i32_0 : i32, i32
  }
}

module attributes {stable_mosaic.version = 11 : i64} {
  func.func @_decoder_layer_kernel(%arg0: i32, %arg1: memref<16x32xf32, #tpu.memory_space<vmem>>, %arg2: memref<32x128xf32, #tpu.memory_space<vmem>>, %arg3: memref<32x96xf32, #tpu.memory_space<vmem>>, %arg4: memref<1x96xf32, #tpu.memory_space<vmem>>, %arg5: memref<32x32xf32, #tpu.memory_space<vmem>>, %arg6: memref<1x32xf32, #tpu.memory_space<vmem>>, %arg7: memref<32x32xf32, #tpu.memory_space<vmem>>, %arg8: memref<1x32xf32, #tpu.memory_space<vmem>>, %arg9: memref<32x32xf32, #tpu.memory_space<vmem>>, %arg10: memref<1x32xf32, #tpu.memory_space<vmem>>, %arg11: memref<32x64xf32, #tpu.memory_space<vmem>>, %arg12: memref<1x64xf32, #tpu.memory_space<vmem>>, %arg13: memref<64x32xf32, #tpu.memory_space<vmem>>, %arg14: memref<1x32xf32, #tpu.memory_space<vmem>>, %arg15: memref<1x32xf32, #tpu.memory_space<vmem>>, %arg16: memref<1x32xf32, #tpu.memory_space<vmem>>, %arg17: memref<1x32xf32, #tpu.memory_space<vmem>>, %arg18: memref<1x32xf32, #tpu.memory_space<vmem>>, %arg19: memref<1x32xf32, #tpu.memory_space<vmem>>, %arg20: memref<1x32xf32, #tpu.memory_space<vmem>>, %arg21: memref<1x32xf32, #tpu.memory_space<vmem>>, %arg22: memref<1x32xf32, #tpu.memory_space<vmem>>, %arg23: memref<2x8x8xf32, #tpu.memory_space<vmem>>, %arg24: memref<2x8x16xf32, #tpu.memory_space<vmem>>, %arg25: memref<16x32xf32, #tpu.memory_space<vmem>>) attributes {dimension_semantics = [#tpu.dimension_semantics<arbitrary>], iteration_bounds = array<i64: 1>, scalar_prefetch = 0 : i64, scratch_operands = 0 : i64, tpu.core_type = #tpu.core_type<tc>, window_params = [{pipeline_mode = #tpu.pipeline_mode<synchronous>, transform_indices = @transform_0, window_bounds = array<i64: 16, 32>}, {pipeline_mode = #tpu.pipeline_mode<synchronous>, transform_indices = @transform_1, window_bounds = array<i64: 32, 128>}, {pipeline_mode = #tpu.pipeline_mode<synchronous>, transform_indices = @transform_2, window_bounds = array<i64: 32, 96>}, {pipeline_mode = #tpu.pipeline_mode<synchronous>, transform_indices = @transform_3, window_bounds = array<i64: 1, 96>}, {pipeline_mode = #tpu.pipeline_mode<synchronous>, transform_indices = @transform_4, window_bounds = array<i64: 32, 32>}, {pipeline_mode = #tpu.pipeline_mode<synchronous>, transform_indices = @transform_5, window_bounds = array<i64: 1, 32>}, {pipeline_mode = #tpu.pipeline_mode<synchronous>, transform_indices = @transform_6, window_bounds = array<i64: 32, 32>}, {pipeline_mode = #tpu.pipeline_mode<synchronous>, transform_indices = @transform_7, window_bounds = array<i64: 1, 32>}, {pipeline_mode = #tpu.pipeline_mode<synchronous>, transform_indices = @transform_8, window_bounds = array<i64: 32, 32>}, {pipeline_mode = #tpu.pipeline_mode<synchronous>, transform_indices = @transform_9, window_bounds = array<i64: 1, 32>}, {pipeline_mode = #tpu.pipeline_mode<synchronous>, transform_indices = @transform_10, window_bounds = array<i64: 32, 64>}, {pipeline_mode = #tpu.pipeline_mode<synchronous>, transform_indices = @transform_11, window_bounds = array<i64: 1, 64>}, {pipeline_mode = #tpu.pipeline_mode<synchronous>, transform_indices = @transform_12, window_bounds = array<i64: 64, 32>}, {pipeline_mode = #tpu.pipeline_mode<synchronous>, transform_indices = @transform_13, window_bounds = array<i64: 1, 32>}, {pipeline_mode = #tpu.pipeline_mode<synchronous>, transform_indices = @transform_14, window_bounds = array<i64: 1, 32>}, {pipeline_mode = #tpu.pipeline_mode<synchronous>, transform_indices = @transform_15, window_bounds = array<i64: 1, 32>}, {pipeline_mode = #tpu.pipeline_mode<synchronous>, transform_indices = @transform_16, window_bounds = array<i64: 1, 32>}, {pipeline_mode = #tpu.pipeline_mode<synchronous>, transform_indices = @transform_17, window_bounds = array<i64: 1, 32>}, {pipeline_mode = #tpu.pipeline_mode<synchronous>, transform_indices = @transform_18, window_bounds = array<i64: 1, 32>}, {pipeline_mode = #tpu.pipeline_mode<synchronous>, transform_indices = @transform_19, window_bounds = array<i64: 1, 32>}, {pipeline_mode = #tpu.pipeline_mode<synchronous>, transform_indices = @transform_20, window_bounds = array<i64: 1, 32>}, {pipeline_mode = #tpu.pipeline_mode<synchronous>, transform_indices = @transform_21, window_bounds = array<i64: 1, 32>}, {pipeline_mode = #tpu.pipeline_mode<synchronous>, transform_indices = @transform_22, window_bounds = array<i64: 2, 8, 8>}, {pipeline_mode = #tpu.pipeline_mode<synchronous>, transform_indices = @transform_23, window_bounds = array<i64: 2, 8, 16>}, {pipeline_mode = #tpu.pipeline_mode<synchronous>, transform_indices = @transform_24, window_bounds = array<i64: 16, 32>}]} {
    %c0 = arith.constant 0 : index
    %c0_0 = arith.constant 0 : index
    %0 = vector.load %arg1[%c0, %c0_0] : memref<16x32xf32, #tpu.memory_space<vmem>>, vector<16x32xf32>
    %c0_1 = arith.constant 0 : index
    %c0_2 = arith.constant 0 : index
    %1 = vector.load %arg3[%c0_1, %c0_2] : memref<32x96xf32, #tpu.memory_space<vmem>>, vector<32x96xf32>
    %cst = arith.constant dense<0.000000e+00> : vector<16x96xf32>
    %2 = tpu.matmul %0, %1, %cst {dimension_numbers = #tpu.dot_dimension_numbers<[1], [0], [0], [1], [0, 0, 1, 1], [], []>} : vector<16x32xf32>, vector<32x96xf32>, vector<16x96xf32> -> vector<16x96xf32>
    %c0_3 = arith.constant 0 : index
    %c0_4 = arith.constant 0 : index
    %3 = vector.load %arg4[%c0_3, %c0_4] : memref<1x96xf32, #tpu.memory_space<vmem>>, vector<1x96xf32>
    %4 = vector.broadcast %3 : vector<1x96xf32> to vector<16x96xf32>
    %5 = arith.addf %2, %4 : vector<16x96xf32>
    %6 = vector.extract_strided_slice %5 {offsets = [0, 0], sizes = [16, 32], strides = [1, 1]} : vector<16x96xf32> to vector<16x32xf32>
    %7 = vector.extract_strided_slice %5 {offsets = [0, 32], sizes = [16, 32], strides = [1, 1]} : vector<16x96xf32> to vector<16x32xf32>
    %8 = vector.extract_strided_slice %5 {offsets = [0, 64], sizes = [16, 32], strides = [1, 1]} : vector<16x96xf32> to vector<16x32xf32>
    %c0_5 = arith.constant 0 : index
    %c0_6 = arith.constant 0 : index
    %9 = vector.load %arg5[%c0_5, %c0_6] : memref<32x32xf32, #tpu.memory_space<vmem>>, vector<32x32xf32>
    %10 = vector.extract_strided_slice %6 {offsets = [0, 0], sizes = [8, 32], strides = [1, 1]} : vector<16x32xf32> to vector<8x32xf32>
    %11 = vector.extract_strided_slice %7 {offsets = [0, 0], sizes = [8, 32], strides = [1, 1]} : vector<16x32xf32> to vector<8x32xf32>
    %12 = vector.extract_strided_slice %8 {offsets = [0, 0], sizes = [8, 32], strides = [1, 1]} : vector<16x32xf32> to vector<8x32xf32>
    %c0_7 = arith.constant 0 : index
    %c0_8 = arith.constant 0 : index
    %c0_9 = arith.constant 0 : index
    %13 = vector.load %arg23[%c0_7, %c0_8, %c0_9] : memref<2x8x8xf32, #tpu.memory_space<vmem>>, vector<1x8x8xf32>
    %14 = vector.shape_cast %13 : vector<1x8x8xf32> to vector<8x8xf32>
    %15 = vector.extract_strided_slice %10 {offsets = [0, 0], sizes = [8, 8], strides = [1, 1]} : vector<8x32xf32> to vector<8x8xf32>
    %16 = vector.extract_strided_slice %11 {offsets = [0, 0], sizes = [8, 8], strides = [1, 1]} : vector<8x32xf32> to vector<8x8xf32>
    %17 = vector.extract_strided_slice %12 {offsets = [0, 0], sizes = [8, 8], strides = [1, 1]} : vector<8x32xf32> to vector<8x8xf32>
    %cst_10 = arith.constant dense<0.000000e+00> : vector<8x8xf32>
    %18 = tpu.matmul %15, %16, %cst_10 {dimension_numbers = #tpu.dot_dimension_numbers<[1], [1], [0], [0], [0, 0, 1, 0], [], []>} : vector<8x8xf32>, vector<8x8xf32>, vector<8x8xf32> -> vector<8x8xf32>
    %cst_11 = arith.constant 0.353553385 : f32
    %19 = vector.broadcast %cst_11 : f32 to vector<8x8xf32>
    %20 = arith.mulf %18, %19 : vector<8x8xf32>
    %21 = arith.addf %20, %14 : vector<8x8xf32>
    %cst_12 = arith.constant dense<0xFF800000> : vector<8xf32>
    %22 = vector.multi_reduction <maximumf>, %21, %cst_12 [1] : vector<8x8xf32> to vector<8xf32>
    %23 = vector.shape_cast %22 : vector<8xf32> to vector<8x1xf32>
    %24 = vector.broadcast %23 : vector<8x1xf32> to vector<8x8xf32>
    %25 = arith.subf %21, %24 : vector<8x8xf32>
    %26 = math.exp %25 : vector<8x8xf32>
    %cst_13 = arith.constant dense<0.000000e+00> : vector<8xf32>
    %27 = vector.multi_reduction <add>, %26, %cst_13 [1] : vector<8x8xf32> to vector<8xf32>
    %28 = vector.shape_cast %27 : vector<8xf32> to vector<8x1xf32>
    %29 = tpu.reciprocal %28 {approx = true} : vector<8x1xf32> -> vector<8x1xf32>
    %30 = vector.broadcast %29 : vector<8x1xf32> to vector<8x8xf32>
    %31 = arith.mulf %26, %30 : vector<8x8xf32>
    %cst_14 = arith.constant dense<0.000000e+00> : vector<8x8xf32>
    %32 = tpu.matmul %31, %17, %cst_14 {dimension_numbers = #tpu.dot_dimension_numbers<[1], [0], [0], [1], [0, 0, 1, 1], [], []>} : vector<8x8xf32>, vector<8x8xf32>, vector<8x8xf32> -> vector<8x8xf32>
    %33 = vector.extract_strided_slice %9 {offsets = [0, 0], sizes = [8, 32], strides = [1, 1]} : vector<32x32xf32> to vector<8x32xf32>
    %cst_15 = arith.constant dense<0.000000e+00> : vector<8x32xf32>
    %34 = tpu.matmul %32, %33, %cst_15 {dimension_numbers = #tpu.dot_dimension_numbers<[1], [0], [0], [1], [0, 0, 1, 1], [], []>} : vector<8x8xf32>, vector<8x32xf32>, vector<8x32xf32> -> vector<8x32xf32>
    %35 = vector.extract_strided_slice %10 {offsets = [0, 8], sizes = [8, 8], strides = [1, 1]} : vector<8x32xf32> to vector<8x8xf32>
    %36 = vector.extract_strided_slice %11 {offsets = [0, 8], sizes = [8, 8], strides = [1, 1]} : vector<8x32xf32> to vector<8x8xf32>
    %37 = vector.extract_strided_slice %12 {offsets = [0, 8], sizes = [8, 8], strides = [1, 1]} : vector<8x32xf32> to vector<8x8xf32>
    %cst_16 = arith.constant dense<0.000000e+00> : vector<8x8xf32>
    %38 = tpu.matmul %35, %36, %cst_16 {dimension_numbers = #tpu.dot_dimension_numbers<[1], [1], [0], [0], [0, 0, 1, 0], [], []>} : vector<8x8xf32>, vector<8x8xf32>, vector<8x8xf32> -> vector<8x8xf32>
    %cst_17 = arith.constant 0.353553385 : f32
    %39 = vector.broadcast %cst_17 : f32 to vector<8x8xf32>
    %40 = arith.mulf %38, %39 : vector<8x8xf32>
    %41 = arith.addf %40, %14 : vector<8x8xf32>
    %cst_18 = arith.constant dense<0xFF800000> : vector<8xf32>
    %42 = vector.multi_reduction <maximumf>, %41, %cst_18 [1] : vector<8x8xf32> to vector<8xf32>
    %43 = vector.shape_cast %42 : vector<8xf32> to vector<8x1xf32>
    %44 = vector.broadcast %43 : vector<8x1xf32> to vector<8x8xf32>
    %45 = arith.subf %41, %44 : vector<8x8xf32>
    %46 = math.exp %45 : vector<8x8xf32>
    %cst_19 = arith.constant dense<0.000000e+00> : vector<8xf32>
    %47 = vector.multi_reduction <add>, %46, %cst_19 [1] : vector<8x8xf32> to vector<8xf32>
    %48 = vector.shape_cast %47 : vector<8xf32> to vector<8x1xf32>
    %49 = tpu.reciprocal %48 {approx = true} : vector<8x1xf32> -> vector<8x1xf32>
    %50 = vector.broadcast %49 : vector<8x1xf32> to vector<8x8xf32>
    %51 = arith.mulf %46, %50 : vector<8x8xf32>
    %cst_20 = arith.constant dense<0.000000e+00> : vector<8x8xf32>
    %52 = tpu.matmul %51, %37, %cst_20 {dimension_numbers = #tpu.dot_dimension_numbers<[1], [0], [0], [1], [0, 0, 1, 1], [], []>} : vector<8x8xf32>, vector<8x8xf32>, vector<8x8xf32> -> vector<8x8xf32>
    %53 = vector.extract_strided_slice %9 {offsets = [8, 0], sizes = [8, 32], strides = [1, 1]} : vector<32x32xf32> to vector<8x32xf32>
    %cst_21 = arith.constant dense<0.000000e+00> : vector<8x32xf32>
    %54 = tpu.matmul %52, %53, %cst_21 {dimension_numbers = #tpu.dot_dimension_numbers<[1], [0], [0], [1], [0, 0, 1, 1], [], []>} : vector<8x8xf32>, vector<8x32xf32>, vector<8x32xf32> -> vector<8x32xf32>
    %55 = arith.addf %34, %54 : vector<8x32xf32>
    %56 = vector.extract_strided_slice %10 {offsets = [0, 16], sizes = [8, 8], strides = [1, 1]} : vector<8x32xf32> to vector<8x8xf32>
    %57 = vector.extract_strided_slice %11 {offsets = [0, 16], sizes = [8, 8], strides = [1, 1]} : vector<8x32xf32> to vector<8x8xf32>
    %58 = vector.extract_strided_slice %12 {offsets = [0, 16], sizes = [8, 8], strides = [1, 1]} : vector<8x32xf32> to vector<8x8xf32>
    %cst_22 = arith.constant dense<0.000000e+00> : vector<8x8xf32>
    %59 = tpu.matmul %56, %57, %cst_22 {dimension_numbers = #tpu.dot_dimension_numbers<[1], [1], [0], [0], [0, 0, 1, 0], [], []>} : vector<8x8xf32>, vector<8x8xf32>, vector<8x8xf32> -> vector<8x8xf32>
    %cst_23 = arith.constant 0.353553385 : f32
    %60 = vector.broadcast %cst_23 : f32 to vector<8x8xf32>
    %61 = arith.mulf %59, %60 : vector<8x8xf32>
    %62 = arith.addf %61, %14 : vector<8x8xf32>
    %cst_24 = arith.constant dense<0xFF800000> : vector<8xf32>
    %63 = vector.multi_reduction <maximumf>, %62, %cst_24 [1] : vector<8x8xf32> to vector<8xf32>
    %64 = vector.shape_cast %63 : vector<8xf32> to vector<8x1xf32>
    %65 = vector.broadcast %64 : vector<8x1xf32> to vector<8x8xf32>
    %66 = arith.subf %62, %65 : vector<8x8xf32>
    %67 = math.exp %66 : vector<8x8xf32>
    %cst_25 = arith.constant dense<0.000000e+00> : vector<8xf32>
    %68 = vector.multi_reduction <add>, %67, %cst_25 [1] : vector<8x8xf32> to vector<8xf32>
    %69 = vector.shape_cast %68 : vector<8xf32> to vector<8x1xf32>
    %70 = tpu.reciprocal %69 {approx = true} : vector<8x1xf32> -> vector<8x1xf32>
    %71 = vector.broadcast %70 : vector<8x1xf32> to vector<8x8xf32>
    %72 = arith.mulf %67, %71 : vector<8x8xf32>
    %cst_26 = arith.constant dense<0.000000e+00> : vector<8x8xf32>
    %73 = tpu.matmul %72, %58, %cst_26 {dimension_numbers = #tpu.dot_dimension_numbers<[1], [0], [0], [1], [0, 0, 1, 1], [], []>} : vector<8x8xf32>, vector<8x8xf32>, vector<8x8xf32> -> vector<8x8xf32>
    %74 = vector.extract_strided_slice %9 {offsets = [16, 0], sizes = [8, 32], strides = [1, 1]} : vector<32x32xf32> to vector<8x32xf32>
    %cst_27 = arith.constant dense<0.000000e+00> : vector<8x32xf32>
    %75 = tpu.matmul %73, %74, %cst_27 {dimension_numbers = #tpu.dot_dimension_numbers<[1], [0], [0], [1], [0, 0, 1, 1], [], []>} : vector<8x8xf32>, vector<8x32xf32>, vector<8x32xf32> -> vector<8x32xf32>
    %76 = arith.addf %55, %75 : vector<8x32xf32>
    %77 = vector.extract_strided_slice %10 {offsets = [0, 24], sizes = [8, 8], strides = [1, 1]} : vector<8x32xf32> to vector<8x8xf32>
    %78 = vector.extract_strided_slice %11 {offsets = [0, 24], sizes = [8, 8], strides = [1, 1]} : vector<8x32xf32> to vector<8x8xf32>
    %79 = vector.extract_strided_slice %12 {offsets = [0, 24], sizes = [8, 8], strides = [1, 1]} : vector<8x32xf32> to vector<8x8xf32>
    %cst_28 = arith.constant dense<0.000000e+00> : vector<8x8xf32>
    %80 = tpu.matmul %77, %78, %cst_28 {dimension_numbers = #tpu.dot_dimension_numbers<[1], [1], [0], [0], [0, 0, 1, 0], [], []>} : vector<8x8xf32>, vector<8x8xf32>, vector<8x8xf32> -> vector<8x8xf32>
    %cst_29 = arith.constant 0.353553385 : f32
    %81 = vector.broadcast %cst_29 : f32 to vector<8x8xf32>
    %82 = arith.mulf %80, %81 : vector<8x8xf32>
    %83 = arith.addf %82, %14 : vector<8x8xf32>
    %cst_30 = arith.constant dense<0xFF800000> : vector<8xf32>
    %84 = vector.multi_reduction <maximumf>, %83, %cst_30 [1] : vector<8x8xf32> to vector<8xf32>
    %85 = vector.shape_cast %84 : vector<8xf32> to vector<8x1xf32>
    %86 = vector.broadcast %85 : vector<8x1xf32> to vector<8x8xf32>
    %87 = arith.subf %83, %86 : vector<8x8xf32>
    %88 = math.exp %87 : vector<8x8xf32>
    %cst_31 = arith.constant dense<0.000000e+00> : vector<8xf32>
    %89 = vector.multi_reduction <add>, %88, %cst_31 [1] : vector<8x8xf32> to vector<8xf32>
    %90 = vector.shape_cast %89 : vector<8xf32> to vector<8x1xf32>
    %91 = tpu.reciprocal %90 {approx = true} : vector<8x1xf32> -> vector<8x1xf32>
    %92 = vector.broadcast %91 : vector<8x1xf32> to vector<8x8xf32>
    %93 = arith.mulf %88, %92 : vector<8x8xf32>
    %cst_32 = arith.constant dense<0.000000e+00> : vector<8x8xf32>
    %94 = tpu.matmul %93, %79, %cst_32 {dimension_numbers = #tpu.dot_dimension_numbers<[1], [0], [0], [1], [0, 0, 1, 1], [], []>} : vector<8x8xf32>, vector<8x8xf32>, vector<8x8xf32> -> vector<8x8xf32>
    %95 = vector.extract_strided_slice %9 {offsets = [24, 0], sizes = [8, 32], strides = [1, 1]} : vector<32x32xf32> to vector<8x32xf32>
    %cst_33 = arith.constant dense<0.000000e+00> : vector<8x32xf32>
    %96 = tpu.matmul %94, %95, %cst_33 {dimension_numbers = #tpu.dot_dimension_numbers<[1], [0], [0], [1], [0, 0, 1, 1], [], []>} : vector<8x8xf32>, vector<8x32xf32>, vector<8x32xf32> -> vector<8x32xf32>
    %97 = arith.addf %76, %96 : vector<8x32xf32>
    %98 = vector.extract_strided_slice %6 {offsets = [8, 0], sizes = [8, 32], strides = [1, 1]} : vector<16x32xf32> to vector<8x32xf32>
    %99 = vector.extract_strided_slice %7 {offsets = [8, 0], sizes = [8, 32], strides = [1, 1]} : vector<16x32xf32> to vector<8x32xf32>
    %100 = vector.extract_strided_slice %8 {offsets = [8, 0], sizes = [8, 32], strides = [1, 1]} : vector<16x32xf32> to vector<8x32xf32>
    %c1 = arith.constant 1 : index
    %c0_34 = arith.constant 0 : index
    %c0_35 = arith.constant 0 : index
    %101 = vector.load %arg23[%c1, %c0_34, %c0_35] : memref<2x8x8xf32, #tpu.memory_space<vmem>>, vector<1x8x8xf32>
    %102 = vector.shape_cast %101 : vector<1x8x8xf32> to vector<8x8xf32>
    %103 = vector.extract_strided_slice %98 {offsets = [0, 0], sizes = [8, 8], strides = [1, 1]} : vector<8x32xf32> to vector<8x8xf32>
    %104 = vector.extract_strided_slice %99 {offsets = [0, 0], sizes = [8, 8], strides = [1, 1]} : vector<8x32xf32> to vector<8x8xf32>
    %105 = vector.extract_strided_slice %100 {offsets = [0, 0], sizes = [8, 8], strides = [1, 1]} : vector<8x32xf32> to vector<8x8xf32>
    %cst_36 = arith.constant dense<0.000000e+00> : vector<8x8xf32>
    %106 = tpu.matmul %103, %104, %cst_36 {dimension_numbers = #tpu.dot_dimension_numbers<[1], [1], [0], [0], [0, 0, 1, 0], [], []>} : vector<8x8xf32>, vector<8x8xf32>, vector<8x8xf32> -> vector<8x8xf32>
    %cst_37 = arith.constant 0.353553385 : f32
    %107 = vector.broadcast %cst_37 : f32 to vector<8x8xf32>
    %108 = arith.mulf %106, %107 : vector<8x8xf32>
    %109 = arith.addf %108, %102 : vector<8x8xf32>
    %cst_38 = arith.constant dense<0xFF800000> : vector<8xf32>
    %110 = vector.multi_reduction <maximumf>, %109, %cst_38 [1] : vector<8x8xf32> to vector<8xf32>
    %111 = vector.shape_cast %110 : vector<8xf32> to vector<8x1xf32>
    %112 = vector.broadcast %111 : vector<8x1xf32> to vector<8x8xf32>
    %113 = arith.subf %109, %112 : vector<8x8xf32>
    %114 = math.exp %113 : vector<8x8xf32>
    %cst_39 = arith.constant dense<0.000000e+00> : vector<8xf32>
    %115 = vector.multi_reduction <add>, %114, %cst_39 [1] : vector<8x8xf32> to vector<8xf32>
    %116 = vector.shape_cast %115 : vector<8xf32> to vector<8x1xf32>
    %117 = tpu.reciprocal %116 {approx = true} : vector<8x1xf32> -> vector<8x1xf32>
    %118 = vector.broadcast %117 : vector<8x1xf32> to vector<8x8xf32>
    %119 = arith.mulf %114, %118 : vector<8x8xf32>
    %cst_40 = arith.constant dense<0.000000e+00> : vector<8x8xf32>
    %120 = tpu.matmul %119, %105, %cst_40 {dimension_numbers = #tpu.dot_dimension_numbers<[1], [0], [0], [1], [0, 0, 1, 1], [], []>} : vector<8x8xf32>, vector<8x8xf32>, vector<8x8xf32> -> vector<8x8xf32>
    %121 = vector.extract_strided_slice %9 {offsets = [0, 0], sizes = [8, 32], strides = [1, 1]} : vector<32x32xf32> to vector<8x32xf32>
    %cst_41 = arith.constant dense<0.000000e+00> : vector<8x32xf32>
    %122 = tpu.matmul %120, %121, %cst_41 {dimension_numbers = #tpu.dot_dimension_numbers<[1], [0], [0], [1], [0, 0, 1, 1], [], []>} : vector<8x8xf32>, vector<8x32xf32>, vector<8x32xf32> -> vector<8x32xf32>
    %123 = vector.extract_strided_slice %98 {offsets = [0, 8], sizes = [8, 8], strides = [1, 1]} : vector<8x32xf32> to vector<8x8xf32>
    %124 = vector.extract_strided_slice %99 {offsets = [0, 8], sizes = [8, 8], strides = [1, 1]} : vector<8x32xf32> to vector<8x8xf32>
    %125 = vector.extract_strided_slice %100 {offsets = [0, 8], sizes = [8, 8], strides = [1, 1]} : vector<8x32xf32> to vector<8x8xf32>
    %cst_42 = arith.constant dense<0.000000e+00> : vector<8x8xf32>
    %126 = tpu.matmul %123, %124, %cst_42 {dimension_numbers = #tpu.dot_dimension_numbers<[1], [1], [0], [0], [0, 0, 1, 0], [], []>} : vector<8x8xf32>, vector<8x8xf32>, vector<8x8xf32> -> vector<8x8xf32>
    %cst_43 = arith.constant 0.353553385 : f32
    %127 = vector.broadcast %cst_43 : f32 to vector<8x8xf32>
    %128 = arith.mulf %126, %127 : vector<8x8xf32>
    %129 = arith.addf %128, %102 : vector<8x8xf32>
    %cst_44 = arith.constant dense<0xFF800000> : vector<8xf32>
    %130 = vector.multi_reduction <maximumf>, %129, %cst_44 [1] : vector<8x8xf32> to vector<8xf32>
    %131 = vector.shape_cast %130 : vector<8xf32> to vector<8x1xf32>
    %132 = vector.broadcast %131 : vector<8x1xf32> to vector<8x8xf32>
    %133 = arith.subf %129, %132 : vector<8x8xf32>
    %134 = math.exp %133 : vector<8x8xf32>
    %cst_45 = arith.constant dense<0.000000e+00> : vector<8xf32>
    %135 = vector.multi_reduction <add>, %134, %cst_45 [1] : vector<8x8xf32> to vector<8xf32>
    %136 = vector.shape_cast %135 : vector<8xf32> to vector<8x1xf32>
    %137 = tpu.reciprocal %136 {approx = true} : vector<8x1xf32> -> vector<8x1xf32>
    %138 = vector.broadcast %137 : vector<8x1xf32> to vector<8x8xf32>
    %139 = arith.mulf %134, %138 : vector<8x8xf32>
    %cst_46 = arith.constant dense<0.000000e+00> : vector<8x8xf32>
    %140 = tpu.matmul %139, %125, %cst_46 {dimension_numbers = #tpu.dot_dimension_numbers<[1], [0], [0], [1], [0, 0, 1, 1], [], []>} : vector<8x8xf32>, vector<8x8xf32>, vector<8x8xf32> -> vector<8x8xf32>
    %141 = vector.extract_strided_slice %9 {offsets = [8, 0], sizes = [8, 32], strides = [1, 1]} : vector<32x32xf32> to vector<8x32xf32>
    %cst_47 = arith.constant dense<0.000000e+00> : vector<8x32xf32>
    %142 = tpu.matmul %140, %141, %cst_47 {dimension_numbers = #tpu.dot_dimension_numbers<[1], [0], [0], [1], [0, 0, 1, 1], [], []>} : vector<8x8xf32>, vector<8x32xf32>, vector<8x32xf32> -> vector<8x32xf32>
    %143 = arith.addf %122, %142 : vector<8x32xf32>
    %144 = vector.extract_strided_slice %98 {offsets = [0, 16], sizes = [8, 8], strides = [1, 1]} : vector<8x32xf32> to vector<8x8xf32>
    %145 = vector.extract_strided_slice %99 {offsets = [0, 16], sizes = [8, 8], strides = [1, 1]} : vector<8x32xf32> to vector<8x8xf32>
    %146 = vector.extract_strided_slice %100 {offsets = [0, 16], sizes = [8, 8], strides = [1, 1]} : vector<8x32xf32> to vector<8x8xf32>
    %cst_48 = arith.constant dense<0.000000e+00> : vector<8x8xf32>
    %147 = tpu.matmul %144, %145, %cst_48 {dimension_numbers = #tpu.dot_dimension_numbers<[1], [1], [0], [0], [0, 0, 1, 0], [], []>} : vector<8x8xf32>, vector<8x8xf32>, vector<8x8xf32> -> vector<8x8xf32>
    %cst_49 = arith.constant 0.353553385 : f32
    %148 = vector.broadcast %cst_49 : f32 to vector<8x8xf32>
    %149 = arith.mulf %147, %148 : vector<8x8xf32>
    %150 = arith.addf %149, %102 : vector<8x8xf32>
    %cst_50 = arith.constant dense<0xFF800000> : vector<8xf32>
    %151 = vector.multi_reduction <maximumf>, %150, %cst_50 [1] : vector<8x8xf32> to vector<8xf32>
    %152 = vector.shape_cast %151 : vector<8xf32> to vector<8x1xf32>
    %153 = vector.broadcast %152 : vector<8x1xf32> to vector<8x8xf32>
    %154 = arith.subf %150, %153 : vector<8x8xf32>
    %155 = math.exp %154 : vector<8x8xf32>
    %cst_51 = arith.constant dense<0.000000e+00> : vector<8xf32>
    %156 = vector.multi_reduction <add>, %155, %cst_51 [1] : vector<8x8xf32> to vector<8xf32>
    %157 = vector.shape_cast %156 : vector<8xf32> to vector<8x1xf32>
    %158 = tpu.reciprocal %157 {approx = true} : vector<8x1xf32> -> vector<8x1xf32>
    %159 = vector.broadcast %158 : vector<8x1xf32> to vector<8x8xf32>
    %160 = arith.mulf %155, %159 : vector<8x8xf32>
    %cst_52 = arith.constant dense<0.000000e+00> : vector<8x8xf32>
    %161 = tpu.matmul %160, %146, %cst_52 {dimension_numbers = #tpu.dot_dimension_numbers<[1], [0], [0], [1], [0, 0, 1, 1], [], []>} : vector<8x8xf32>, vector<8x8xf32>, vector<8x8xf32> -> vector<8x8xf32>
    %162 = vector.extract_strided_slice %9 {offsets = [16, 0], sizes = [8, 32], strides = [1, 1]} : vector<32x32xf32> to vector<8x32xf32>
    %cst_53 = arith.constant dense<0.000000e+00> : vector<8x32xf32>
    %163 = tpu.matmul %161, %162, %cst_53 {dimension_numbers = #tpu.dot_dimension_numbers<[1], [0], [0], [1], [0, 0, 1, 1], [], []>} : vector<8x8xf32>, vector<8x32xf32>, vector<8x32xf32> -> vector<8x32xf32>
    %164 = arith.addf %143, %163 : vector<8x32xf32>
    %165 = vector.extract_strided_slice %98 {offsets = [0, 24], sizes = [8, 8], strides = [1, 1]} : vector<8x32xf32> to vector<8x8xf32>
    %166 = vector.extract_strided_slice %99 {offsets = [0, 24], sizes = [8, 8], strides = [1, 1]} : vector<8x32xf32> to vector<8x8xf32>
    %167 = vector.extract_strided_slice %100 {offsets = [0, 24], sizes = [8, 8], strides = [1, 1]} : vector<8x32xf32> to vector<8x8xf32>
    %cst_54 = arith.constant dense<0.000000e+00> : vector<8x8xf32>
    %168 = tpu.matmul %165, %166, %cst_54 {dimension_numbers = #tpu.dot_dimension_numbers<[1], [1], [0], [0], [0, 0, 1, 0], [], []>} : vector<8x8xf32>, vector<8x8xf32>, vector<8x8xf32> -> vector<8x8xf32>
    %cst_55 = arith.constant 0.353553385 : f32
    %169 = vector.broadcast %cst_55 : f32 to vector<8x8xf32>
    %170 = arith.mulf %168, %169 : vector<8x8xf32>
    %171 = arith.addf %170, %102 : vector<8x8xf32>
    %cst_56 = arith.constant dense<0xFF800000> : vector<8xf32>
    %172 = vector.multi_reduction <maximumf>, %171, %cst_56 [1] : vector<8x8xf32> to vector<8xf32>
    %173 = vector.shape_cast %172 : vector<8xf32> to vector<8x1xf32>
    %174 = vector.broadcast %173 : vector<8x1xf32> to vector<8x8xf32>
    %175 = arith.subf %171, %174 : vector<8x8xf32>
    %176 = math.exp %175 : vector<8x8xf32>
    %cst_57 = arith.constant dense<0.000000e+00> : vector<8xf32>
    %177 = vector.multi_reduction <add>, %176, %cst_57 [1] : vector<8x8xf32> to vector<8xf32>
    %178 = vector.shape_cast %177 : vector<8xf32> to vector<8x1xf32>
    %179 = tpu.reciprocal %178 {approx = true} : vector<8x1xf32> -> vector<8x1xf32>
    %180 = vector.broadcast %179 : vector<8x1xf32> to vector<8x8xf32>
    %181 = arith.mulf %176, %180 : vector<8x8xf32>
    %cst_58 = arith.constant dense<0.000000e+00> : vector<8x8xf32>
    %182 = tpu.matmul %181, %167, %cst_58 {dimension_numbers = #tpu.dot_dimension_numbers<[1], [0], [0], [1], [0, 0, 1, 1], [], []>} : vector<8x8xf32>, vector<8x8xf32>, vector<8x8xf32> -> vector<8x8xf32>
    %183 = vector.extract_strided_slice %9 {offsets = [24, 0], sizes = [8, 32], strides = [1, 1]} : vector<32x32xf32> to vector<8x32xf32>
    %cst_59 = arith.constant dense<0.000000e+00> : vector<8x32xf32>
    %184 = tpu.matmul %182, %183, %cst_59 {dimension_numbers = #tpu.dot_dimension_numbers<[1], [0], [0], [1], [0, 0, 1, 1], [], []>} : vector<8x8xf32>, vector<8x32xf32>, vector<8x32xf32> -> vector<8x32xf32>
    %185 = arith.addf %164, %184 : vector<8x32xf32>
    %186 = tpu.concatenate %97, %185 in 0 : vector<8x32xf32>, vector<8x32xf32> -> vector<16x32xf32>
    %c0_60 = arith.constant 0 : index
    %c0_61 = arith.constant 0 : index
    %187 = vector.load %arg6[%c0_60, %c0_61] : memref<1x32xf32, #tpu.memory_space<vmem>>, vector<1x32xf32>
    %188 = vector.broadcast %187 : vector<1x32xf32> to vector<16x32xf32>
    %189 = arith.addf %186, %188 : vector<16x32xf32>
    %190 = arith.addf %0, %189 : vector<16x32xf32>
    %c0_62 = arith.constant 0 : index
    %c0_63 = arith.constant 0 : index
    %191 = vector.load %arg15[%c0_62, %c0_63] : memref<1x32xf32, #tpu.memory_space<vmem>>, vector<1x32xf32>
    %c0_64 = arith.constant 0 : index
    %c0_65 = arith.constant 0 : index
    %192 = vector.load %arg16[%c0_64, %c0_65] : memref<1x32xf32, #tpu.memory_space<vmem>>, vector<1x32xf32>
    %cst_66 = arith.constant dense<0.000000e+00> : vector<16xf32>
    %193 = vector.multi_reduction <add>, %190, %cst_66 [1] : vector<16x32xf32> to vector<16xf32>
    %194 = vector.shape_cast %193 : vector<16xf32> to vector<16x1xf32>
    %cst_67 = arith.constant 3.200000e+01 : f32
    %195 = vector.broadcast %cst_67 : f32 to vector<16x1xf32>
    %196 = arith.divf %194, %195 : vector<16x1xf32>
    %197 = vector.broadcast %196 : vector<16x1xf32> to vector<16x32xf32>
    %198 = arith.subf %190, %197 : vector<16x32xf32>
    %199 = arith.mulf %198, %198 : vector<16x32xf32>
    %cst_68 = arith.constant dense<0.000000e+00> : vector<16xf32>
    %200 = vector.multi_reduction <add>, %199, %cst_68 [1] : vector<16x32xf32> to vector<16xf32>
    %201 = vector.shape_cast %200 : vector<16xf32> to vector<16x1xf32>
    %cst_69 = arith.constant 3.200000e+01 : f32
    %202 = vector.broadcast %cst_69 : f32 to vector<16x1xf32>
    %203 = arith.divf %201, %202 : vector<16x1xf32>
    %204 = vector.broadcast %196 : vector<16x1xf32> to vector<16x32xf32>
    %205 = arith.subf %190, %204 : vector<16x32xf32>
    %cst_70 = arith.constant 9.99999974E-6 : f32
    %206 = vector.broadcast %cst_70 : f32 to vector<16x1xf32>
    %207 = arith.addf %203, %206 : vector<16x1xf32>
    %208 = math.rsqrt %207 : vector<16x1xf32>
    %209 = vector.broadcast %208 : vector<16x1xf32> to vector<16x32xf32>
    %210 = arith.mulf %205, %209 : vector<16x32xf32>
    %211 = vector.broadcast %191 : vector<1x32xf32> to vector<16x32xf32>
    %212 = arith.mulf %210, %211 : vector<16x32xf32>
    %213 = vector.broadcast %192 : vector<1x32xf32> to vector<16x32xf32>
    %214 = arith.addf %212, %213 : vector<16x32xf32>
    %c0_71 = arith.constant 0 : index
    %c0_72 = arith.constant 0 : index
    %215 = vector.load %arg7[%c0_71, %c0_72] : memref<32x32xf32, #tpu.memory_space<vmem>>, vector<32x32xf32>
    %cst_73 = arith.constant dense<0.000000e+00> : vector<16x32xf32>
    %216 = tpu.matmul %214, %215, %cst_73 {dimension_numbers = #tpu.dot_dimension_numbers<[1], [0], [0], [1], [0, 0, 1, 1], [], []>} : vector<16x32xf32>, vector<32x32xf32>, vector<16x32xf32> -> vector<16x32xf32>
    %c0_74 = arith.constant 0 : index
    %c0_75 = arith.constant 0 : index
    %217 = vector.load %arg8[%c0_74, %c0_75] : memref<1x32xf32, #tpu.memory_space<vmem>>, vector<1x32xf32>
    %218 = vector.broadcast %217 : vector<1x32xf32> to vector<16x32xf32>
    %219 = arith.addf %216, %218 : vector<16x32xf32>
    %c0_76 = arith.constant 0 : index
    %c0_77 = arith.constant 0 : index
    %220 = vector.load %arg2[%c0_76, %c0_77] : memref<32x128xf32, #tpu.memory_space<vmem>>, vector<32x128xf32>
    %221 = vector.extract_strided_slice %220 {offsets = [0, 0], sizes = [32, 32], strides = [1, 1]} : vector<32x128xf32> to vector<32x32xf32>
    %222 = vector.extract_strided_slice %220 {offsets = [0, 32], sizes = [32, 32], strides = [1, 1]} : vector<32x128xf32> to vector<32x32xf32>
    %c0_78 = arith.constant 0 : index
    %c0_79 = arith.constant 0 : index
    %223 = vector.load %arg9[%c0_78, %c0_79] : memref<32x32xf32, #tpu.memory_space<vmem>>, vector<32x32xf32>
    %224 = vector.extract_strided_slice %219 {offsets = [0, 0], sizes = [8, 32], strides = [1, 1]} : vector<16x32xf32> to vector<8x32xf32>
    %225 = vector.extract_strided_slice %221 {offsets = [0, 0], sizes = [16, 32], strides = [1, 1]} : vector<32x32xf32> to vector<16x32xf32>
    %226 = vector.extract_strided_slice %222 {offsets = [0, 0], sizes = [16, 32], strides = [1, 1]} : vector<32x32xf32> to vector<16x32xf32>
    %c0_80 = arith.constant 0 : index
    %c0_81 = arith.constant 0 : index
    %c0_82 = arith.constant 0 : index
    %227 = vector.load %arg24[%c0_80, %c0_81, %c0_82] : memref<2x8x16xf32, #tpu.memory_space<vmem>>, vector<1x8x16xf32>
    %228 = vector.shape_cast %227 : vector<1x8x16xf32> to vector<8x16xf32>
    %229 = vector.extract_strided_slice %224 {offsets = [0, 0], sizes = [8, 8], strides = [1, 1]} : vector<8x32xf32> to vector<8x8xf32>
    %230 = vector.extract_strided_slice %225 {offsets = [0, 0], sizes = [16, 8], strides = [1, 1]} : vector<16x32xf32> to vector<16x8xf32>
    %231 = vector.extract_strided_slice %226 {offsets = [0, 0], sizes = [16, 8], strides = [1, 1]} : vector<16x32xf32> to vector<16x8xf32>
    %cst_83 = arith.constant dense<0.000000e+00> : vector<8x16xf32>
    %232 = tpu.matmul %229, %230, %cst_83 {dimension_numbers = #tpu.dot_dimension_numbers<[1], [1], [0], [0], [0, 0, 1, 0], [], []>} : vector<8x8xf32>, vector<16x8xf32>, vector<8x16xf32> -> vector<8x16xf32>
    %cst_84 = arith.constant 0.353553385 : f32
    %233 = vector.broadcast %cst_84 : f32 to vector<8x16xf32>
    %234 = arith.mulf %232, %233 : vector<8x16xf32>
    %235 = arith.addf %234, %228 : vector<8x16xf32>
    %cst_85 = arith.constant dense<0xFF800000> : vector<8xf32>
    %236 = vector.multi_reduction <maximumf>, %235, %cst_85 [1] : vector<8x16xf32> to vector<8xf32>
    %237 = vector.shape_cast %236 : vector<8xf32> to vector<8x1xf32>
    %238 = vector.broadcast %237 : vector<8x1xf32> to vector<8x16xf32>
    %239 = arith.subf %235, %238 : vector<8x16xf32>
    %240 = math.exp %239 : vector<8x16xf32>
    %cst_86 = arith.constant dense<0.000000e+00> : vector<8xf32>
    %241 = vector.multi_reduction <add>, %240, %cst_86 [1] : vector<8x16xf32> to vector<8xf32>
    %242 = vector.shape_cast %241 : vector<8xf32> to vector<8x1xf32>
    %243 = tpu.reciprocal %242 {approx = true} : vector<8x1xf32> -> vector<8x1xf32>
    %244 = vector.broadcast %243 : vector<8x1xf32> to vector<8x16xf32>
    %245 = arith.mulf %240, %244 : vector<8x16xf32>
    %cst_87 = arith.constant dense<0.000000e+00> : vector<8x8xf32>
    %246 = tpu.matmul %245, %231, %cst_87 {dimension_numbers = #tpu.dot_dimension_numbers<[1], [0], [0], [1], [0, 0, 1, 1], [], []>} : vector<8x16xf32>, vector<16x8xf32>, vector<8x8xf32> -> vector<8x8xf32>
    %247 = vector.extract_strided_slice %223 {offsets = [0, 0], sizes = [8, 32], strides = [1, 1]} : vector<32x32xf32> to vector<8x32xf32>
    %cst_88 = arith.constant dense<0.000000e+00> : vector<8x32xf32>
    %248 = tpu.matmul %246, %247, %cst_88 {dimension_numbers = #tpu.dot_dimension_numbers<[1], [0], [0], [1], [0, 0, 1, 1], [], []>} : vector<8x8xf32>, vector<8x32xf32>, vector<8x32xf32> -> vector<8x32xf32>
    %249 = vector.extract_strided_slice %224 {offsets = [0, 8], sizes = [8, 8], strides = [1, 1]} : vector<8x32xf32> to vector<8x8xf32>
    %250 = vector.extract_strided_slice %225 {offsets = [0, 8], sizes = [16, 8], strides = [1, 1]} : vector<16x32xf32> to vector<16x8xf32>
    %251 = vector.extract_strided_slice %226 {offsets = [0, 8], sizes = [16, 8], strides = [1, 1]} : vector<16x32xf32> to vector<16x8xf32>
    %cst_89 = arith.constant dense<0.000000e+00> : vector<8x16xf32>
    %252 = tpu.matmul %249, %250, %cst_89 {dimension_numbers = #tpu.dot_dimension_numbers<[1], [1], [0], [0], [0, 0, 1, 0], [], []>} : vector<8x8xf32>, vector<16x8xf32>, vector<8x16xf32> -> vector<8x16xf32>
    %cst_90 = arith.constant 0.353553385 : f32
    %253 = vector.broadcast %cst_90 : f32 to vector<8x16xf32>
    %254 = arith.mulf %252, %253 : vector<8x16xf32>
    %255 = arith.addf %254, %228 : vector<8x16xf32>
    %cst_91 = arith.constant dense<0xFF800000> : vector<8xf32>
    %256 = vector.multi_reduction <maximumf>, %255, %cst_91 [1] : vector<8x16xf32> to vector<8xf32>
    %257 = vector.shape_cast %256 : vector<8xf32> to vector<8x1xf32>
    %258 = vector.broadcast %257 : vector<8x1xf32> to vector<8x16xf32>
    %259 = arith.subf %255, %258 : vector<8x16xf32>
    %260 = math.exp %259 : vector<8x16xf32>
    %cst_92 = arith.constant dense<0.000000e+00> : vector<8xf32>
    %261 = vector.multi_reduction <add>, %260, %cst_92 [1] : vector<8x16xf32> to vector<8xf32>
    %262 = vector.shape_cast %261 : vector<8xf32> to vector<8x1xf32>
    %263 = tpu.reciprocal %262 {approx = true} : vector<8x1xf32> -> vector<8x1xf32>
    %264 = vector.broadcast %263 : vector<8x1xf32> to vector<8x16xf32>
    %265 = arith.mulf %260, %264 : vector<8x16xf32>
    %cst_93 = arith.constant dense<0.000000e+00> : vector<8x8xf32>
    %266 = tpu.matmul %265, %251, %cst_93 {dimension_numbers = #tpu.dot_dimension_numbers<[1], [0], [0], [1], [0, 0, 1, 1], [], []>} : vector<8x16xf32>, vector<16x8xf32>, vector<8x8xf32> -> vector<8x8xf32>
    %267 = vector.extract_strided_slice %223 {offsets = [8, 0], sizes = [8, 32], strides = [1, 1]} : vector<32x32xf32> to vector<8x32xf32>
    %cst_94 = arith.constant dense<0.000000e+00> : vector<8x32xf32>
    %268 = tpu.matmul %266, %267, %cst_94 {dimension_numbers = #tpu.dot_dimension_numbers<[1], [0], [0], [1], [0, 0, 1, 1], [], []>} : vector<8x8xf32>, vector<8x32xf32>, vector<8x32xf32> -> vector<8x32xf32>
    %269 = arith.addf %248, %268 : vector<8x32xf32>
    %270 = vector.extract_strided_slice %224 {offsets = [0, 16], sizes = [8, 8], strides = [1, 1]} : vector<8x32xf32> to vector<8x8xf32>
    %271 = vector.extract_strided_slice %225 {offsets = [0, 16], sizes = [16, 8], strides = [1, 1]} : vector<16x32xf32> to vector<16x8xf32>
    %272 = vector.extract_strided_slice %226 {offsets = [0, 16], sizes = [16, 8], strides = [1, 1]} : vector<16x32xf32> to vector<16x8xf32>
    %cst_95 = arith.constant dense<0.000000e+00> : vector<8x16xf32>
    %273 = tpu.matmul %270, %271, %cst_95 {dimension_numbers = #tpu.dot_dimension_numbers<[1], [1], [0], [0], [0, 0, 1, 0], [], []>} : vector<8x8xf32>, vector<16x8xf32>, vector<8x16xf32> -> vector<8x16xf32>
    %cst_96 = arith.constant 0.353553385 : f32
    %274 = vector.broadcast %cst_96 : f32 to vector<8x16xf32>
    %275 = arith.mulf %273, %274 : vector<8x16xf32>
    %276 = arith.addf %275, %228 : vector<8x16xf32>
    %cst_97 = arith.constant dense<0xFF800000> : vector<8xf32>
    %277 = vector.multi_reduction <maximumf>, %276, %cst_97 [1] : vector<8x16xf32> to vector<8xf32>
    %278 = vector.shape_cast %277 : vector<8xf32> to vector<8x1xf32>
    %279 = vector.broadcast %278 : vector<8x1xf32> to vector<8x16xf32>
    %280 = arith.subf %276, %279 : vector<8x16xf32>
    %281 = math.exp %280 : vector<8x16xf32>
    %cst_98 = arith.constant dense<0.000000e+00> : vector<8xf32>
    %282 = vector.multi_reduction <add>, %281, %cst_98 [1] : vector<8x16xf32> to vector<8xf32>
    %283 = vector.shape_cast %282 : vector<8xf32> to vector<8x1xf32>
    %284 = tpu.reciprocal %283 {approx = true} : vector<8x1xf32> -> vector<8x1xf32>
    %285 = vector.broadcast %284 : vector<8x1xf32> to vector<8x16xf32>
    %286 = arith.mulf %281, %285 : vector<8x16xf32>
    %cst_99 = arith.constant dense<0.000000e+00> : vector<8x8xf32>
    %287 = tpu.matmul %286, %272, %cst_99 {dimension_numbers = #tpu.dot_dimension_numbers<[1], [0], [0], [1], [0, 0, 1, 1], [], []>} : vector<8x16xf32>, vector<16x8xf32>, vector<8x8xf32> -> vector<8x8xf32>
    %288 = vector.extract_strided_slice %223 {offsets = [16, 0], sizes = [8, 32], strides = [1, 1]} : vector<32x32xf32> to vector<8x32xf32>
    %cst_100 = arith.constant dense<0.000000e+00> : vector<8x32xf32>
    %289 = tpu.matmul %287, %288, %cst_100 {dimension_numbers = #tpu.dot_dimension_numbers<[1], [0], [0], [1], [0, 0, 1, 1], [], []>} : vector<8x8xf32>, vector<8x32xf32>, vector<8x32xf32> -> vector<8x32xf32>
    %290 = arith.addf %269, %289 : vector<8x32xf32>
    %291 = vector.extract_strided_slice %224 {offsets = [0, 24], sizes = [8, 8], strides = [1, 1]} : vector<8x32xf32> to vector<8x8xf32>
    %292 = vector.extract_strided_slice %225 {offsets = [0, 24], sizes = [16, 8], strides = [1, 1]} : vector<16x32xf32> to vector<16x8xf32>
    %293 = vector.extract_strided_slice %226 {offsets = [0, 24], sizes = [16, 8], strides = [1, 1]} : vector<16x32xf32> to vector<16x8xf32>
    %cst_101 = arith.constant dense<0.000000e+00> : vector<8x16xf32>
    %294 = tpu.matmul %291, %292, %cst_101 {dimension_numbers = #tpu.dot_dimension_numbers<[1], [1], [0], [0], [0, 0, 1, 0], [], []>} : vector<8x8xf32>, vector<16x8xf32>, vector<8x16xf32> -> vector<8x16xf32>
    %cst_102 = arith.constant 0.353553385 : f32
    %295 = vector.broadcast %cst_102 : f32 to vector<8x16xf32>
    %296 = arith.mulf %294, %295 : vector<8x16xf32>
    %297 = arith.addf %296, %228 : vector<8x16xf32>
    %cst_103 = arith.constant dense<0xFF800000> : vector<8xf32>
    %298 = vector.multi_reduction <maximumf>, %297, %cst_103 [1] : vector<8x16xf32> to vector<8xf32>
    %299 = vector.shape_cast %298 : vector<8xf32> to vector<8x1xf32>
    %300 = vector.broadcast %299 : vector<8x1xf32> to vector<8x16xf32>
    %301 = arith.subf %297, %300 : vector<8x16xf32>
    %302 = math.exp %301 : vector<8x16xf32>
    %cst_104 = arith.constant dense<0.000000e+00> : vector<8xf32>
    %303 = vector.multi_reduction <add>, %302, %cst_104 [1] : vector<8x16xf32> to vector<8xf32>
    %304 = vector.shape_cast %303 : vector<8xf32> to vector<8x1xf32>
    %305 = tpu.reciprocal %304 {approx = true} : vector<8x1xf32> -> vector<8x1xf32>
    %306 = vector.broadcast %305 : vector<8x1xf32> to vector<8x16xf32>
    %307 = arith.mulf %302, %306 : vector<8x16xf32>
    %cst_105 = arith.constant dense<0.000000e+00> : vector<8x8xf32>
    %308 = tpu.matmul %307, %293, %cst_105 {dimension_numbers = #tpu.dot_dimension_numbers<[1], [0], [0], [1], [0, 0, 1, 1], [], []>} : vector<8x16xf32>, vector<16x8xf32>, vector<8x8xf32> -> vector<8x8xf32>
    %309 = vector.extract_strided_slice %223 {offsets = [24, 0], sizes = [8, 32], strides = [1, 1]} : vector<32x32xf32> to vector<8x32xf32>
    %cst_106 = arith.constant dense<0.000000e+00> : vector<8x32xf32>
    %310 = tpu.matmul %308, %309, %cst_106 {dimension_numbers = #tpu.dot_dimension_numbers<[1], [0], [0], [1], [0, 0, 1, 1], [], []>} : vector<8x8xf32>, vector<8x32xf32>, vector<8x32xf32> -> vector<8x32xf32>
    %311 = arith.addf %290, %310 : vector<8x32xf32>
    %312 = vector.extract_strided_slice %219 {offsets = [8, 0], sizes = [8, 32], strides = [1, 1]} : vector<16x32xf32> to vector<8x32xf32>
    %313 = vector.extract_strided_slice %221 {offsets = [16, 0], sizes = [16, 32], strides = [1, 1]} : vector<32x32xf32> to vector<16x32xf32>
    %314 = vector.extract_strided_slice %222 {offsets = [16, 0], sizes = [16, 32], strides = [1, 1]} : vector<32x32xf32> to vector<16x32xf32>
    %c1_107 = arith.constant 1 : index
    %c0_108 = arith.constant 0 : index
    %c0_109 = arith.constant 0 : index
    %315 = vector.load %arg24[%c1_107, %c0_108, %c0_109] : memref<2x8x16xf32, #tpu.memory_space<vmem>>, vector<1x8x16xf32>
    %316 = vector.shape_cast %315 : vector<1x8x16xf32> to vector<8x16xf32>
    %317 = vector.extract_strided_slice %312 {offsets = [0, 0], sizes = [8, 8], strides = [1, 1]} : vector<8x32xf32> to vector<8x8xf32>
    %318 = vector.extract_strided_slice %313 {offsets = [0, 0], sizes = [16, 8], strides = [1, 1]} : vector<16x32xf32> to vector<16x8xf32>
    %319 = vector.extract_strided_slice %314 {offsets = [0, 0], sizes = [16, 8], strides = [1, 1]} : vector<16x32xf32> to vector<16x8xf32>
    %cst_110 = arith.constant dense<0.000000e+00> : vector<8x16xf32>
    %320 = tpu.matmul %317, %318, %cst_110 {dimension_numbers = #tpu.dot_dimension_numbers<[1], [1], [0], [0], [0, 0, 1, 0], [], []>} : vector<8x8xf32>, vector<16x8xf32>, vector<8x16xf32> -> vector<8x16xf32>
    %cst_111 = arith.constant 0.353553385 : f32
    %321 = vector.broadcast %cst_111 : f32 to vector<8x16xf32>
    %322 = arith.mulf %320, %321 : vector<8x16xf32>
    %323 = arith.addf %322, %316 : vector<8x16xf32>
    %cst_112 = arith.constant dense<0xFF800000> : vector<8xf32>
    %324 = vector.multi_reduction <maximumf>, %323, %cst_112 [1] : vector<8x16xf32> to vector<8xf32>
    %325 = vector.shape_cast %324 : vector<8xf32> to vector<8x1xf32>
    %326 = vector.broadcast %325 : vector<8x1xf32> to vector<8x16xf32>
    %327 = arith.subf %323, %326 : vector<8x16xf32>
    %328 = math.exp %327 : vector<8x16xf32>
    %cst_113 = arith.constant dense<0.000000e+00> : vector<8xf32>
    %329 = vector.multi_reduction <add>, %328, %cst_113 [1] : vector<8x16xf32> to vector<8xf32>
    %330 = vector.shape_cast %329 : vector<8xf32> to vector<8x1xf32>
    %331 = tpu.reciprocal %330 {approx = true} : vector<8x1xf32> -> vector<8x1xf32>
    %332 = vector.broadcast %331 : vector<8x1xf32> to vector<8x16xf32>
    %333 = arith.mulf %328, %332 : vector<8x16xf32>
    %cst_114 = arith.constant dense<0.000000e+00> : vector<8x8xf32>
    %334 = tpu.matmul %333, %319, %cst_114 {dimension_numbers = #tpu.dot_dimension_numbers<[1], [0], [0], [1], [0, 0, 1, 1], [], []>} : vector<8x16xf32>, vector<16x8xf32>, vector<8x8xf32> -> vector<8x8xf32>
    %335 = vector.extract_strided_slice %223 {offsets = [0, 0], sizes = [8, 32], strides = [1, 1]} : vector<32x32xf32> to vector<8x32xf32>
    %cst_115 = arith.constant dense<0.000000e+00> : vector<8x32xf32>
    %336 = tpu.matmul %334, %335, %cst_115 {dimension_numbers = #tpu.dot_dimension_numbers<[1], [0], [0], [1], [0, 0, 1, 1], [], []>} : vector<8x8xf32>, vector<8x32xf32>, vector<8x32xf32> -> vector<8x32xf32>
    %337 = vector.extract_strided_slice %312 {offsets = [0, 8], sizes = [8, 8], strides = [1, 1]} : vector<8x32xf32> to vector<8x8xf32>
    %338 = vector.extract_strided_slice %313 {offsets = [0, 8], sizes = [16, 8], strides = [1, 1]} : vector<16x32xf32> to vector<16x8xf32>
    %339 = vector.extract_strided_slice %314 {offsets = [0, 8], sizes = [16, 8], strides = [1, 1]} : vector<16x32xf32> to vector<16x8xf32>
    %cst_116 = arith.constant dense<0.000000e+00> : vector<8x16xf32>
    %340 = tpu.matmul %337, %338, %cst_116 {dimension_numbers = #tpu.dot_dimension_numbers<[1], [1], [0], [0], [0, 0, 1, 0], [], []>} : vector<8x8xf32>, vector<16x8xf32>, vector<8x16xf32> -> vector<8x16xf32>
    %cst_117 = arith.constant 0.353553385 : f32
    %341 = vector.broadcast %cst_117 : f32 to vector<8x16xf32>
    %342 = arith.mulf %340, %341 : vector<8x16xf32>
    %343 = arith.addf %342, %316 : vector<8x16xf32>
    %cst_118 = arith.constant dense<0xFF800000> : vector<8xf32>
    %344 = vector.multi_reduction <maximumf>, %343, %cst_118 [1] : vector<8x16xf32> to vector<8xf32>
    %345 = vector.shape_cast %344 : vector<8xf32> to vector<8x1xf32>
    %346 = vector.broadcast %345 : vector<8x1xf32> to vector<8x16xf32>
    %347 = arith.subf %343, %346 : vector<8x16xf32>
    %348 = math.exp %347 : vector<8x16xf32>
    %cst_119 = arith.constant dense<0.000000e+00> : vector<8xf32>
    %349 = vector.multi_reduction <add>, %348, %cst_119 [1] : vector<8x16xf32> to vector<8xf32>
    %350 = vector.shape_cast %349 : vector<8xf32> to vector<8x1xf32>
    %351 = tpu.reciprocal %350 {approx = true} : vector<8x1xf32> -> vector<8x1xf32>
    %352 = vector.broadcast %351 : vector<8x1xf32> to vector<8x16xf32>
    %353 = arith.mulf %348, %352 : vector<8x16xf32>
    %cst_120 = arith.constant dense<0.000000e+00> : vector<8x8xf32>
    %354 = tpu.matmul %353, %339, %cst_120 {dimension_numbers = #tpu.dot_dimension_numbers<[1], [0], [0], [1], [0, 0, 1, 1], [], []>} : vector<8x16xf32>, vector<16x8xf32>, vector<8x8xf32> -> vector<8x8xf32>
    %355 = vector.extract_strided_slice %223 {offsets = [8, 0], sizes = [8, 32], strides = [1, 1]} : vector<32x32xf32> to vector<8x32xf32>
    %cst_121 = arith.constant dense<0.000000e+00> : vector<8x32xf32>
    %356 = tpu.matmul %354, %355, %cst_121 {dimension_numbers = #tpu.dot_dimension_numbers<[1], [0], [0], [1], [0, 0, 1, 1], [], []>} : vector<8x8xf32>, vector<8x32xf32>, vector<8x32xf32> -> vector<8x32xf32>
    %357 = arith.addf %336, %356 : vector<8x32xf32>
    %358 = vector.extract_strided_slice %312 {offsets = [0, 16], sizes = [8, 8], strides = [1, 1]} : vector<8x32xf32> to vector<8x8xf32>
    %359 = vector.extract_strided_slice %313 {offsets = [0, 16], sizes = [16, 8], strides = [1, 1]} : vector<16x32xf32> to vector<16x8xf32>
    %360 = vector.extract_strided_slice %314 {offsets = [0, 16], sizes = [16, 8], strides = [1, 1]} : vector<16x32xf32> to vector<16x8xf32>
    %cst_122 = arith.constant dense<0.000000e+00> : vector<8x16xf32>
    %361 = tpu.matmul %358, %359, %cst_122 {dimension_numbers = #tpu.dot_dimension_numbers<[1], [1], [0], [0], [0, 0, 1, 0], [], []>} : vector<8x8xf32>, vector<16x8xf32>, vector<8x16xf32> -> vector<8x16xf32>
    %cst_123 = arith.constant 0.353553385 : f32
    %362 = vector.broadcast %cst_123 : f32 to vector<8x16xf32>
    %363 = arith.mulf %361, %362 : vector<8x16xf32>
    %364 = arith.addf %363, %316 : vector<8x16xf32>
    %cst_124 = arith.constant dense<0xFF800000> : vector<8xf32>
    %365 = vector.multi_reduction <maximumf>, %364, %cst_124 [1] : vector<8x16xf32> to vector<8xf32>
    %366 = vector.shape_cast %365 : vector<8xf32> to vector<8x1xf32>
    %367 = vector.broadcast %366 : vector<8x1xf32> to vector<8x16xf32>
    %368 = arith.subf %364, %367 : vector<8x16xf32>
    %369 = math.exp %368 : vector<8x16xf32>
    %cst_125 = arith.constant dense<0.000000e+00> : vector<8xf32>
    %370 = vector.multi_reduction <add>, %369, %cst_125 [1] : vector<8x16xf32> to vector<8xf32>
    %371 = vector.shape_cast %370 : vector<8xf32> to vector<8x1xf32>
    %372 = tpu.reciprocal %371 {approx = true} : vector<8x1xf32> -> vector<8x1xf32>
    %373 = vector.broadcast %372 : vector<8x1xf32> to vector<8x16xf32>
    %374 = arith.mulf %369, %373 : vector<8x16xf32>
    %cst_126 = arith.constant dense<0.000000e+00> : vector<8x8xf32>
    %375 = tpu.matmul %374, %360, %cst_126 {dimension_numbers = #tpu.dot_dimension_numbers<[1], [0], [0], [1], [0, 0, 1, 1], [], []>} : vector<8x16xf32>, vector<16x8xf32>, vector<8x8xf32> -> vector<8x8xf32>
    %376 = vector.extract_strided_slice %223 {offsets = [16, 0], sizes = [8, 32], strides = [1, 1]} : vector<32x32xf32> to vector<8x32xf32>
    %cst_127 = arith.constant dense<0.000000e+00> : vector<8x32xf32>
    %377 = tpu.matmul %375, %376, %cst_127 {dimension_numbers = #tpu.dot_dimension_numbers<[1], [0], [0], [1], [0, 0, 1, 1], [], []>} : vector<8x8xf32>, vector<8x32xf32>, vector<8x32xf32> -> vector<8x32xf32>
    %378 = arith.addf %357, %377 : vector<8x32xf32>
    %379 = vector.extract_strided_slice %312 {offsets = [0, 24], sizes = [8, 8], strides = [1, 1]} : vector<8x32xf32> to vector<8x8xf32>
    %380 = vector.extract_strided_slice %313 {offsets = [0, 24], sizes = [16, 8], strides = [1, 1]} : vector<16x32xf32> to vector<16x8xf32>
    %381 = vector.extract_strided_slice %314 {offsets = [0, 24], sizes = [16, 8], strides = [1, 1]} : vector<16x32xf32> to vector<16x8xf32>
    %cst_128 = arith.constant dense<0.000000e+00> : vector<8x16xf32>
    %382 = tpu.matmul %379, %380, %cst_128 {dimension_numbers = #tpu.dot_dimension_numbers<[1], [1], [0], [0], [0, 0, 1, 0], [], []>} : vector<8x8xf32>, vector<16x8xf32>, vector<8x16xf32> -> vector<8x16xf32>
    %cst_129 = arith.constant 0.353553385 : f32
    %383 = vector.broadcast %cst_129 : f32 to vector<8x16xf32>
    %384 = arith.mulf %382, %383 : vector<8x16xf32>
    %385 = arith.addf %384, %316 : vector<8x16xf32>
    %cst_130 = arith.constant dense<0xFF800000> : vector<8xf32>
    %386 = vector.multi_reduction <maximumf>, %385, %cst_130 [1] : vector<8x16xf32> to vector<8xf32>
    %387 = vector.shape_cast %386 : vector<8xf32> to vector<8x1xf32>
    %388 = vector.broadcast %387 : vector<8x1xf32> to vector<8x16xf32>
    %389 = arith.subf %385, %388 : vector<8x16xf32>
    %390 = math.exp %389 : vector<8x16xf32>
    %cst_131 = arith.constant dense<0.000000e+00> : vector<8xf32>
    %391 = vector.multi_reduction <add>, %390, %cst_131 [1] : vector<8x16xf32> to vector<8xf32>
    %392 = vector.shape_cast %391 : vector<8xf32> to vector<8x1xf32>
    %393 = tpu.reciprocal %392 {approx = true} : vector<8x1xf32> -> vector<8x1xf32>
    %394 = vector.broadcast %393 : vector<8x1xf32> to vector<8x16xf32>
    %395 = arith.mulf %390, %394 : vector<8x16xf32>
    %cst_132 = arith.constant dense<0.000000e+00> : vector<8x8xf32>
    %396 = tpu.matmul %395, %381, %cst_132 {dimension_numbers = #tpu.dot_dimension_numbers<[1], [0], [0], [1], [0, 0, 1, 1], [], []>} : vector<8x16xf32>, vector<16x8xf32>, vector<8x8xf32> -> vector<8x8xf32>
    %397 = vector.extract_strided_slice %223 {offsets = [24, 0], sizes = [8, 32], strides = [1, 1]} : vector<32x32xf32> to vector<8x32xf32>
    %cst_133 = arith.constant dense<0.000000e+00> : vector<8x32xf32>
    %398 = tpu.matmul %396, %397, %cst_133 {dimension_numbers = #tpu.dot_dimension_numbers<[1], [0], [0], [1], [0, 0, 1, 1], [], []>} : vector<8x8xf32>, vector<8x32xf32>, vector<8x32xf32> -> vector<8x32xf32>
    %399 = arith.addf %378, %398 : vector<8x32xf32>
    %400 = tpu.concatenate %311, %399 in 0 : vector<8x32xf32>, vector<8x32xf32> -> vector<16x32xf32>
    %c0_134 = arith.constant 0 : index
    %c0_135 = arith.constant 0 : index
    %401 = vector.load %arg10[%c0_134, %c0_135] : memref<1x32xf32, #tpu.memory_space<vmem>>, vector<1x32xf32>
    %402 = vector.broadcast %401 : vector<1x32xf32> to vector<16x32xf32>
    %403 = arith.addf %400, %402 : vector<16x32xf32>
    %404 = arith.addf %214, %403 : vector<16x32xf32>
    %c0_136 = arith.constant 0 : index
    %c0_137 = arith.constant 0 : index
    %405 = vector.load %arg17[%c0_136, %c0_137] : memref<1x32xf32, #tpu.memory_space<vmem>>, vector<1x32xf32>
    %c0_138 = arith.constant 0 : index
    %c0_139 = arith.constant 0 : index
    %406 = vector.load %arg18[%c0_138, %c0_139] : memref<1x32xf32, #tpu.memory_space<vmem>>, vector<1x32xf32>
    %cst_140 = arith.constant dense<0.000000e+00> : vector<16xf32>
    %407 = vector.multi_reduction <add>, %404, %cst_140 [1] : vector<16x32xf32> to vector<16xf32>
    %408 = vector.shape_cast %407 : vector<16xf32> to vector<16x1xf32>
    %cst_141 = arith.constant 3.200000e+01 : f32
    %409 = vector.broadcast %cst_141 : f32 to vector<16x1xf32>
    %410 = arith.divf %408, %409 : vector<16x1xf32>
    %411 = vector.broadcast %410 : vector<16x1xf32> to vector<16x32xf32>
    %412 = arith.subf %404, %411 : vector<16x32xf32>
    %413 = arith.mulf %412, %412 : vector<16x32xf32>
    %cst_142 = arith.constant dense<0.000000e+00> : vector<16xf32>
    %414 = vector.multi_reduction <add>, %413, %cst_142 [1] : vector<16x32xf32> to vector<16xf32>
    %415 = vector.shape_cast %414 : vector<16xf32> to vector<16x1xf32>
    %cst_143 = arith.constant 3.200000e+01 : f32
    %416 = vector.broadcast %cst_143 : f32 to vector<16x1xf32>
    %417 = arith.divf %415, %416 : vector<16x1xf32>
    %418 = vector.broadcast %410 : vector<16x1xf32> to vector<16x32xf32>
    %419 = arith.subf %404, %418 : vector<16x32xf32>
    %cst_144 = arith.constant 9.99999974E-6 : f32
    %420 = vector.broadcast %cst_144 : f32 to vector<16x1xf32>
    %421 = arith.addf %417, %420 : vector<16x1xf32>
    %422 = math.rsqrt %421 : vector<16x1xf32>
    %423 = vector.broadcast %422 : vector<16x1xf32> to vector<16x32xf32>
    %424 = arith.mulf %419, %423 : vector<16x32xf32>
    %425 = vector.broadcast %405 : vector<1x32xf32> to vector<16x32xf32>
    %426 = arith.mulf %424, %425 : vector<16x32xf32>
    %427 = vector.broadcast %406 : vector<1x32xf32> to vector<16x32xf32>
    %428 = arith.addf %426, %427 : vector<16x32xf32>
    %c0_145 = arith.constant 0 : index
    %c0_146 = arith.constant 0 : index
    %429 = vector.load %arg11[%c0_145, %c0_146] : memref<32x64xf32, #tpu.memory_space<vmem>>, vector<32x64xf32>
    %cst_147 = arith.constant dense<0.000000e+00> : vector<16x64xf32>
    %430 = tpu.matmul %428, %429, %cst_147 {dimension_numbers = #tpu.dot_dimension_numbers<[1], [0], [0], [1], [0, 0, 1, 1], [], []>} : vector<16x32xf32>, vector<32x64xf32>, vector<16x64xf32> -> vector<16x64xf32>
    %c0_148 = arith.constant 0 : index
    %c0_149 = arith.constant 0 : index
    %431 = vector.load %arg12[%c0_148, %c0_149] : memref<1x64xf32, #tpu.memory_space<vmem>>, vector<1x64xf32>
    %432 = vector.broadcast %431 : vector<1x64xf32> to vector<16x64xf32>
    %433 = arith.addf %430, %432 : vector<16x64xf32>
    %cst_150 = arith.constant 0.000000e+00 : f32
    %434 = vector.broadcast %cst_150 : f32 to vector<16x64xf32>
    %435 = arith.maximumf %433, %434 : vector<16x64xf32>
    %c0_151 = arith.constant 0 : index
    %c0_152 = arith.constant 0 : index
    %436 = vector.load %arg13[%c0_151, %c0_152] : memref<64x32xf32, #tpu.memory_space<vmem>>, vector<64x32xf32>
    %cst_153 = arith.constant dense<0.000000e+00> : vector<16x32xf32>
    %437 = tpu.matmul %435, %436, %cst_153 {dimension_numbers = #tpu.dot_dimension_numbers<[1], [0], [0], [1], [0, 0, 1, 1], [], []>} : vector<16x64xf32>, vector<64x32xf32>, vector<16x32xf32> -> vector<16x32xf32>
    %c0_154 = arith.constant 0 : index
    %c0_155 = arith.constant 0 : index
    %438 = vector.load %arg14[%c0_154, %c0_155] : memref<1x32xf32, #tpu.memory_space<vmem>>, vector<1x32xf32>
    %439 = vector.broadcast %438 : vector<1x32xf32> to vector<16x32xf32>
    %440 = arith.addf %437, %439 : vector<16x32xf32>
    %441 = arith.addf %428, %440 : vector<16x32xf32>
    %c0_156 = arith.constant 0 : index
    %c0_157 = arith.constant 0 : index
    %442 = vector.load %arg19[%c0_156, %c0_157] : memref<1x32xf32, #tpu.memory_space<vmem>>, vector<1x32xf32>
    %c0_158 = arith.constant 0 : index
    %c0_159 = arith.constant 0 : index
    %443 = vector.load %arg20[%c0_158, %c0_159] : memref<1x32xf32, #tpu.memory_space<vmem>>, vector<1x32xf32>
    %cst_160 = arith.constant dense<0.000000e+00> : vector<16xf32>
    %444 = vector.multi_reduction <add>, %441, %cst_160 [1] : vector<16x32xf32> to vector<16xf32>
    %445 = vector.shape_cast %444 : vector<16xf32> to vector<16x1xf32>
    %cst_161 = arith.constant 3.200000e+01 : f32
    %446 = vector.broadcast %cst_161 : f32 to vector<16x1xf32>
    %447 = arith.divf %445, %446 : vector<16x1xf32>
    %448 = vector.broadcast %447 : vector<16x1xf32> to vector<16x32xf32>
    %449 = arith.subf %441, %448 : vector<16x32xf32>
    %450 = arith.mulf %449, %449 : vector<16x32xf32>
    %cst_162 = arith.constant dense<0.000000e+00> : vector<16xf32>
    %451 = vector.multi_reduction <add>, %450, %cst_162 [1] : vector<16x32xf32> to vector<16xf32>
    %452 = vector.shape_cast %451 : vector<16xf32> to vector<16x1xf32>
    %cst_163 = arith.constant 3.200000e+01 : f32
    %453 = vector.broadcast %cst_163 : f32 to vector<16x1xf32>
    %454 = arith.divf %452, %453 : vector<16x1xf32>
    %455 = vector.broadcast %447 : vector<16x1xf32> to vector<16x32xf32>
    %456 = arith.subf %441, %455 : vector<16x32xf32>
    %cst_164 = arith.constant 9.99999974E-6 : f32
    %457 = vector.broadcast %cst_164 : f32 to vector<16x1xf32>
    %458 = arith.addf %454, %457 : vector<16x1xf32>
    %459 = math.rsqrt %458 : vector<16x1xf32>
    %460 = vector.broadcast %459 : vector<16x1xf32> to vector<16x32xf32>
    %461 = arith.mulf %456, %460 : vector<16x32xf32>
    %462 = vector.broadcast %442 : vector<1x32xf32> to vector<16x32xf32>
    %463 = arith.mulf %461, %462 : vector<16x32xf32>
    %464 = vector.broadcast %443 : vector<1x32xf32> to vector<16x32xf32>
    %465 = arith.addf %463, %464 : vector<16x32xf32>
    %c0_165 = arith.constant 0 : index
    %c0_166 = arith.constant 0 : index
    %466 = vector.load %arg25[%c0_165, %c0_166] : memref<16x32xf32, #tpu.memory_space<vmem>>, vector<16x32xf32>
    tpu.vector_store %arg25[%c0_165, %c0_166], %465 {strides = array<i32>} : memref<16x32xf32, #tpu.memory_space<vmem>>, vector<16x32xf32>,
    return
  }
  func.func @transform_0(%arg0: i32) -> (i32, i32) {
    %c0_i32 = arith.constant 0 : i32
    %c0_i32_0 = arith.constant 0 : i32
    %c0_i32_1 = arith.constant 0 : i32
    return %c0_i32, %c0_i32_0 : i32, i32
  }
  func.func @transform_1(%arg0: i32) -> (i32, i32) {
    %c0_i32 = arith.constant 0 : i32
    %c0_i32_0 = arith.constant 0 : i32
    %c0_i32_1 = arith.constant 0 : i32
    return %c0_i32, %c0_i32_0 : i32, i32
  }
  func.func @transform_2(%arg0: i32) -> (i32, i32) {
    %c0_i32 = arith.constant 0 : i32
    %c0_i32_0 = arith.constant 0 : i32
    %c0_i32_1 = arith.constant 0 : i32
    return %c0_i32, %c0_i32_0 : i32, i32
  }
  func.func @transform_3(%arg0: i32) -> (i32, i32) {
    %c0_i32 = arith.constant 0 : i32
    %c0_i32_0 = arith.constant 0 : i32
    %c0_i32_1 = arith.constant 0 : i32
    return %c0_i32, %c0_i32_0 : i32, i32
  }
  func.func @transform_4(%arg0: i32) -> (i32, i32) {
    %c0_i32 = arith.constant 0 : i32
    %c0_i32_0 = arith.constant 0 : i32
    %c0_i32_1 = arith.constant 0 : i32
    return %c0_i32, %c0_i32_0 : i32, i32
  }
  func.func @transform_5(%arg0: i32) -> (i32, i32) {
    %c0_i32 = arith.constant 0 : i32
    %c0_i32_0 = arith.constant 0 : i32
    %c0_i32_1 = arith.constant 0 : i32
    return %c0_i32, %c0_i32_0 : i32, i32
  }
  func.func @transform_6(%arg0: i32) -> (i32, i32) {
    %c0_i32 = arith.constant 0 : i32
    %c0_i32_0 = arith.constant 0 : i32
    %c0_i32_1 = arith.constant 0 : i32
    return %c0_i32, %c0_i32_0 : i32, i32
  }
  func.func @transform_7(%arg0: i32) -> (i32, i32) {
    %c0_i32 = arith.constant 0 : i32
    %c0_i32_0 = arith.constant 0 : i32
    %c0_i32_1 = arith.constant 0 : i32
    return %c0_i32, %c0_i32_0 : i32, i32
  }
  func.func @transform_8(%arg0: i32) -> (i32, i32) {
    %c0_i32 = arith.constant 0 : i32
    %c0_i32_0 = arith.constant 0 : i32
    %c0_i32_1 = arith.constant 0 : i32
    return %c0_i32, %c0_i32_0 : i32, i32
  }
  func.func @transform_9(%arg0: i32) -> (i32, i32) {
    %c0_i32 = arith.constant 0 : i32
    %c0_i32_0 = arith.constant 0 : i32
    %c0_i32_1 = arith.constant 0 : i32
    return %c0_i32, %c0_i32_0 : i32, i32
  }
  func.func @transform_10(%arg0: i32) -> (i32, i32) {
    %c0_i32 = arith.constant 0 : i32
    %c0_i32_0 = arith.constant 0 : i32
    %c0_i32_1 = arith.constant 0 : i32
    return %c0_i32, %c0_i32_0 : i32, i32
  }
  func.func @transform_11(%arg0: i32) -> (i32, i32) {
    %c0_i32 = arith.constant 0 : i32
    %c0_i32_0 = arith.constant 0 : i32
    %c0_i32_1 = arith.constant 0 : i32
    return %c0_i32, %c0_i32_0 : i32, i32
  }
  func.func @transform_12(%arg0: i32) -> (i32, i32) {
    %c0_i32 = arith.constant 0 : i32
    %c0_i32_0 = arith.constant 0 : i32
    %c0_i32_1 = arith.constant 0 : i32
    return %c0_i32, %c0_i32_0 : i32, i32
  }
  func.func @transform_13(%arg0: i32) -> (i32, i32) {
    %c0_i32 = arith.constant 0 : i32
    %c0_i32_0 = arith.constant 0 : i32
    %c0_i32_1 = arith.constant 0 : i32
    return %c0_i32, %c0_i32_0 : i32, i32
  }
  func.func @transform_14(%arg0: i32) -> (i32, i32) {
    %c0_i32 = arith.constant 0 : i32
    %c0_i32_0 = arith.constant 0 : i32
    %c0_i32_1 = arith.constant 0 : i32
    return %c0_i32, %c0_i32_0 : i32, i32
  }
  func.func @transform_15(%arg0: i32) -> (i32, i32) {
    %c0_i32 = arith.constant 0 : i32
    %c0_i32_0 = arith.constant 0 : i32
    %c0_i32_1 = arith.constant 0 : i32
    return %c0_i32, %c0_i32_0 : i32, i32
  }
  func.func @transform_16(%arg0: i32) -> (i32, i32) {
    %c0_i32 = arith.constant 0 : i32
    %c0_i32_0 = arith.constant 0 : i32
    %c0_i32_1 = arith.constant 0 : i32
    return %c0_i32, %c0_i32_0 : i32, i32
  }
  func.func @transform_17(%arg0: i32) -> (i32, i32) {
    %c0_i32 = arith.constant 0 : i32
    %c0_i32_0 = arith.constant 0 : i32
    %c0_i32_1 = arith.constant 0 : i32
    return %c0_i32, %c0_i32_0 : i32, i32
  }
  func.func @transform_18(%arg0: i32) -> (i32, i32) {
    %c0_i32 = arith.constant 0 : i32
    %c0_i32_0 = arith.constant 0 : i32
    %c0_i32_1 = arith.constant 0 : i32
    return %c0_i32, %c0_i32_0 : i32, i32
  }
  func.func @transform_19(%arg0: i32) -> (i32, i32) {
    %c0_i32 = arith.constant 0 : i32
    %c0_i32_0 = arith.constant 0 : i32
    %c0_i32_1 = arith.constant 0 : i32
    return %c0_i32, %c0_i32_0 : i32, i32
  }
  func.func @transform_20(%arg0: i32) -> (i32, i32) {
    %c0_i32 = arith.constant 0 : i32
    %c0_i32_0 = arith.constant 0 : i32
    %c0_i32_1 = arith.constant 0 : i32
    return %c0_i32, %c0_i32_0 : i32, i32
  }
  func.func @transform_21(%arg0: i32) -> (i32, i32) {
    %c0_i32 = arith.constant 0 : i32
    %c0_i32_0 = arith.constant 0 : i32
    %c0_i32_1 = arith.constant 0 : i32
    return %c0_i32, %c0_i32_0 : i32, i32
  }
  func.func @transform_22(%arg0: i32) -> (i32, i32, i32) {
    %c0_i32 = arith.constant 0 : i32
    %c0_i32_0 = arith.constant 0 : i32
    %c0_i32_1 = arith.constant 0 : i32
    %c0_i32_2 = arith.constant 0 : i32
    return %c0_i32, %c0_i32_0, %c0_i32_1 : i32, i32, i32
  }
  func.func @transform_23(%arg0: i32) -> (i32, i32, i32) {
    %c0_i32 = arith.constant 0 : i32
    %c0_i32_0 = arith.constant 0 : i32
    %c0_i32_1 = arith.constant 0 : i32
    %c0_i32_2 = arith.constant 0 : i32
    return %c0_i32, %c0_i32_0, %c0_i32_1 : i32, i32, i32
  }
  func.func @transform_24(%arg0: i32) -> (i32, i32) {
    %c0_i32 = arith.constant 0 : i32
    %c0_i32_0 = arith.constant 0 : i32
    %c0_i32_1 = arith.constant 0 : i32
    return %c0_i32, %c0_i32_0 : i32, i32
  }
}

module attributes {stable_mosaic.version = 11 : i64} {
  func.func @_decoder_layer_kernel(%arg0: i32, %arg1: memref<16x32xf32, #tpu.memory_space<vmem>>, %arg2: memref<32x128xf32, #tpu.memory_space<vmem>>, %arg3: memref<32x96xf32, #tpu.memory_space<vmem>>, %arg4: memref<1x96xf32, #tpu.memory_space<vmem>>, %arg5: memref<32x32xf32, #tpu.memory_space<vmem>>, %arg6: memref<1x32xf32, #tpu.memory_space<vmem>>, %arg7: memref<32x32xf32, #tpu.memory_space<vmem>>, %arg8: memref<1x32xf32, #tpu.memory_space<vmem>>, %arg9: memref<32x32xf32, #tpu.memory_space<vmem>>, %arg10: memref<1x32xf32, #tpu.memory_space<vmem>>, %arg11: memref<32x64xf32, #tpu.memory_space<vmem>>, %arg12: memref<1x64xf32, #tpu.memory_space<vmem>>, %arg13: memref<64x32xf32, #tpu.memory_space<vmem>>, %arg14: memref<1x32xf32, #tpu.memory_space<vmem>>, %arg15: memref<1x32xf32, #tpu.memory_space<vmem>>, %arg16: memref<1x32xf32, #tpu.memory_space<vmem>>, %arg17: memref<1x32xf32, #tpu.memory_space<vmem>>, %arg18: memref<1x32xf32, #tpu.memory_space<vmem>>, %arg19: memref<1x32xf32, #tpu.memory_space<vmem>>, %arg20: memref<1x32xf32, #tpu.memory_space<vmem>>, %arg21: memref<1x32xf32, #tpu.memory_space<vmem>>, %arg22: memref<1x32xf32, #tpu.memory_space<vmem>>, %arg23: memref<2x8x8xf32, #tpu.memory_space<vmem>>, %arg24: memref<2x8x16xf32, #tpu.memory_space<vmem>>, %arg25: memref<16x32xf32, #tpu.memory_space<vmem>>, %arg26: memref<2x8x16xf32, #tpu.memory_space<vmem>>) attributes {dimension_semantics = [#tpu.dimension_semantics<arbitrary>], iteration_bounds = array<i64: 1>, scalar_prefetch = 0 : i64, scratch_operands = 0 : i64, tpu.core_type = #tpu.core_type<tc>, window_params = [{pipeline_mode = #tpu.pipeline_mode<synchronous>, transform_indices = @transform_0, window_bounds = array<i64: 16, 32>}, {pipeline_mode = #tpu.pipeline_mode<synchronous>, transform_indices = @transform_1, window_bounds = array<i64: 32, 128>}, {pipeline_mode = #tpu.pipeline_mode<synchronous>, transform_indices = @transform_2, window_bounds = array<i64: 32, 96>}, {pipeline_mode = #tpu.pipeline_mode<synchronous>, transform_indices = @transform_3, window_bounds = array<i64: 1, 96>}, {pipeline_mode = #tpu.pipeline_mode<synchronous>, transform_indices = @transform_4, window_bounds = array<i64: 32, 32>}, {pipeline_mode = #tpu.pipeline_mode<synchronous>, transform_indices = @transform_5, window_bounds = array<i64: 1, 32>}, {pipeline_mode = #tpu.pipeline_mode<synchronous>, transform_indices = @transform_6, window_bounds = array<i64: 32, 32>}, {pipeline_mode = #tpu.pipeline_mode<synchronous>, transform_indices = @transform_7, window_bounds = array<i64: 1, 32>}, {pipeline_mode = #tpu.pipeline_mode<synchronous>, transform_indices = @transform_8, window_bounds = array<i64: 32, 32>}, {pipeline_mode = #tpu.pipeline_mode<synchronous>, transform_indices = @transform_9, window_bounds = array<i64: 1, 32>}, {pipeline_mode = #tpu.pipeline_mode<synchronous>, transform_indices = @transform_10, window_bounds = array<i64: 32, 64>}, {pipeline_mode = #tpu.pipeline_mode<synchronous>, transform_indices = @transform_11, window_bounds = array<i64: 1, 64>}, {pipeline_mode = #tpu.pipeline_mode<synchronous>, transform_indices = @transform_12, window_bounds = array<i64: 64, 32>}, {pipeline_mode = #tpu.pipeline_mode<synchronous>, transform_indices = @transform_13, window_bounds = array<i64: 1, 32>}, {pipeline_mode = #tpu.pipeline_mode<synchronous>, transform_indices = @transform_14, window_bounds = array<i64: 1, 32>}, {pipeline_mode = #tpu.pipeline_mode<synchronous>, transform_indices = @transform_15, window_bounds = array<i64: 1, 32>}, {pipeline_mode = #tpu.pipeline_mode<synchronous>, transform_indices = @transform_16, window_bounds = array<i64: 1, 32>}, {pipeline_mode = #tpu.pipeline_mode<synchronous>, transform_indices = @transform_17, window_bounds = array<i64: 1, 32>}, {pipeline_mode = #tpu.pipeline_mode<synchronous>, transform_indices = @transform_18, window_bounds = array<i64: 1, 32>}, {pipeline_mode = #tpu.pipeline_mode<synchronous>, transform_indices = @transform_19, window_bounds = array<i64: 1, 32>}, {pipeline_mode = #tpu.pipeline_mode<synchronous>, transform_indices = @transform_20, window_bounds = array<i64: 1, 32>}, {pipeline_mode = #tpu.pipeline_mode<synchronous>, transform_indices = @transform_21, window_bounds = array<i64: 1, 32>}, {pipeline_mode = #tpu.pipeline_mode<synchronous>, transform_indices = @transform_22, window_bounds = array<i64: 2, 8, 8>}, {pipeline_mode = #tpu.pipeline_mode<synchronous>, transform_indices = @transform_23, window_bounds = array<i64: 2, 8, 16>}, {pipeline_mode = #tpu.pipeline_mode<synchronous>, transform_indices = @transform_24, window_bounds = array<i64: 16, 32>}, {pipeline_mode = #tpu.pipeline_mode<synchronous>, transform_indices = @transform_25, window_bounds = array<i64: 2, 8, 16>}]} {
    %c0 = arith.constant 0 : index
    %c0_0 = arith.constant 0 : index
    %0 = vector.load %arg1[%c0, %c0_0] : memref<16x32xf32, #tpu.memory_space<vmem>>, vector<16x32xf32>
    %c0_1 = arith.constant 0 : index
    %c0_2 = arith.constant 0 : index
    %1 = vector.load %arg3[%c0_1, %c0_2] : memref<32x96xf32, #tpu.memory_space<vmem>>, vector<32x96xf32>
    %cst = arith.constant dense<0.000000e+00> : vector<16x96xf32>
    %2 = tpu.matmul %0, %1, %cst {dimension_numbers = #tpu.dot_dimension_numbers<[1], [0], [0], [1], [0, 0, 1, 1], [], []>} : vector<16x32xf32>, vector<32x96xf32>, vector<16x96xf32> -> vector<16x96xf32>
    %c0_3 = arith.constant 0 : index
    %c0_4 = arith.constant 0 : index
    %3 = vector.load %arg4[%c0_3, %c0_4] : memref<1x96xf32, #tpu.memory_space<vmem>>, vector<1x96xf32>
    %4 = vector.broadcast %3 : vector<1x96xf32> to vector<16x96xf32>
    %5 = arith.addf %2, %4 : vector<16x96xf32>
    %6 = vector.extract_strided_slice %5 {offsets = [0, 0], sizes = [16, 32], strides = [1, 1]} : vector<16x96xf32> to vector<16x32xf32>
    %7 = vector.extract_strided_slice %5 {offsets = [0, 32], sizes = [16, 32], strides = [1, 1]} : vector<16x96xf32> to vector<16x32xf32>
    %8 = vector.extract_strided_slice %5 {offsets = [0, 64], sizes = [16, 32], strides = [1, 1]} : vector<16x96xf32> to vector<16x32xf32>
    %c0_5 = arith.constant 0 : index
    %c0_6 = arith.constant 0 : index
    %9 = vector.load %arg5[%c0_5, %c0_6] : memref<32x32xf32, #tpu.memory_space<vmem>>, vector<32x32xf32>
    %10 = vector.extract_strided_slice %6 {offsets = [0, 0], sizes = [8, 32], strides = [1, 1]} : vector<16x32xf32> to vector<8x32xf32>
    %11 = vector.extract_strided_slice %7 {offsets = [0, 0], sizes = [8, 32], strides = [1, 1]} : vector<16x32xf32> to vector<8x32xf32>
    %12 = vector.extract_strided_slice %8 {offsets = [0, 0], sizes = [8, 32], strides = [1, 1]} : vector<16x32xf32> to vector<8x32xf32>
    %c0_7 = arith.constant 0 : index
    %c0_8 = arith.constant 0 : index
    %c0_9 = arith.constant 0 : index
    %13 = vector.load %arg23[%c0_7, %c0_8, %c0_9] : memref<2x8x8xf32, #tpu.memory_space<vmem>>, vector<1x8x8xf32>
    %14 = vector.shape_cast %13 : vector<1x8x8xf32> to vector<8x8xf32>
    %15 = vector.extract_strided_slice %10 {offsets = [0, 0], sizes = [8, 8], strides = [1, 1]} : vector<8x32xf32> to vector<8x8xf32>
    %16 = vector.extract_strided_slice %11 {offsets = [0, 0], sizes = [8, 8], strides = [1, 1]} : vector<8x32xf32> to vector<8x8xf32>
    %17 = vector.extract_strided_slice %12 {offsets = [0, 0], sizes = [8, 8], strides = [1, 1]} : vector<8x32xf32> to vector<8x8xf32>
    %cst_10 = arith.constant dense<0.000000e+00> : vector<8x8xf32>
    %18 = tpu.matmul %15, %16, %cst_10 {dimension_numbers = #tpu.dot_dimension_numbers<[1], [1], [0], [0], [0, 0, 1, 0], [], []>} : vector<8x8xf32>, vector<8x8xf32>, vector<8x8xf32> -> vector<8x8xf32>
    %cst_11 = arith.constant 0.353553385 : f32
    %19 = vector.broadcast %cst_11 : f32 to vector<8x8xf32>
    %20 = arith.mulf %18, %19 : vector<8x8xf32>
    %21 = arith.addf %20, %14 : vector<8x8xf32>
    %cst_12 = arith.constant dense<0xFF800000> : vector<8xf32>
    %22 = vector.multi_reduction <maximumf>, %21, %cst_12 [1] : vector<8x8xf32> to vector<8xf32>
    %23 = vector.shape_cast %22 : vector<8xf32> to vector<8x1xf32>
    %24 = vector.broadcast %23 : vector<8x1xf32> to vector<8x8xf32>
    %25 = arith.subf %21, %24 : vector<8x8xf32>
    %26 = math.exp %25 : vector<8x8xf32>
    %cst_13 = arith.constant dense<0.000000e+00> : vector<8xf32>
    %27 = vector.multi_reduction <add>, %26, %cst_13 [1] : vector<8x8xf32> to vector<8xf32>
    %28 = vector.shape_cast %27 : vector<8xf32> to vector<8x1xf32>
    %29 = tpu.reciprocal %28 {approx = true} : vector<8x1xf32> -> vector<8x1xf32>
    %30 = vector.broadcast %29 : vector<8x1xf32> to vector<8x8xf32>
    %31 = arith.mulf %26, %30 : vector<8x8xf32>
    %cst_14 = arith.constant dense<0.000000e+00> : vector<8x8xf32>
    %32 = tpu.matmul %31, %17, %cst_14 {dimension_numbers = #tpu.dot_dimension_numbers<[1], [0], [0], [1], [0, 0, 1, 1], [], []>} : vector<8x8xf32>, vector<8x8xf32>, vector<8x8xf32> -> vector<8x8xf32>
    %33 = vector.extract_strided_slice %9 {offsets = [0, 0], sizes = [8, 32], strides = [1, 1]} : vector<32x32xf32> to vector<8x32xf32>
    %cst_15 = arith.constant dense<0.000000e+00> : vector<8x32xf32>
    %34 = tpu.matmul %32, %33, %cst_15 {dimension_numbers = #tpu.dot_dimension_numbers<[1], [0], [0], [1], [0, 0, 1, 1], [], []>} : vector<8x8xf32>, vector<8x32xf32>, vector<8x32xf32> -> vector<8x32xf32>
    %35 = vector.extract_strided_slice %10 {offsets = [0, 8], sizes = [8, 8], strides = [1, 1]} : vector<8x32xf32> to vector<8x8xf32>
    %36 = vector.extract_strided_slice %11 {offsets = [0, 8], sizes = [8, 8], strides = [1, 1]} : vector<8x32xf32> to vector<8x8xf32>
    %37 = vector.extract_strided_slice %12 {offsets = [0, 8], sizes = [8, 8], strides = [1, 1]} : vector<8x32xf32> to vector<8x8xf32>
    %cst_16 = arith.constant dense<0.000000e+00> : vector<8x8xf32>
    %38 = tpu.matmul %35, %36, %cst_16 {dimension_numbers = #tpu.dot_dimension_numbers<[1], [1], [0], [0], [0, 0, 1, 0], [], []>} : vector<8x8xf32>, vector<8x8xf32>, vector<8x8xf32> -> vector<8x8xf32>
    %cst_17 = arith.constant 0.353553385 : f32
    %39 = vector.broadcast %cst_17 : f32 to vector<8x8xf32>
    %40 = arith.mulf %38, %39 : vector<8x8xf32>
    %41 = arith.addf %40, %14 : vector<8x8xf32>
    %cst_18 = arith.constant dense<0xFF800000> : vector<8xf32>
    %42 = vector.multi_reduction <maximumf>, %41, %cst_18 [1] : vector<8x8xf32> to vector<8xf32>
    %43 = vector.shape_cast %42 : vector<8xf32> to vector<8x1xf32>
    %44 = vector.broadcast %43 : vector<8x1xf32> to vector<8x8xf32>
    %45 = arith.subf %41, %44 : vector<8x8xf32>
    %46 = math.exp %45 : vector<8x8xf32>
    %cst_19 = arith.constant dense<0.000000e+00> : vector<8xf32>
    %47 = vector.multi_reduction <add>, %46, %cst_19 [1] : vector<8x8xf32> to vector<8xf32>
    %48 = vector.shape_cast %47 : vector<8xf32> to vector<8x1xf32>
    %49 = tpu.reciprocal %48 {approx = true} : vector<8x1xf32> -> vector<8x1xf32>
    %50 = vector.broadcast %49 : vector<8x1xf32> to vector<8x8xf32>
    %51 = arith.mulf %46, %50 : vector<8x8xf32>
    %cst_20 = arith.constant dense<0.000000e+00> : vector<8x8xf32>
    %52 = tpu.matmul %51, %37, %cst_20 {dimension_numbers = #tpu.dot_dimension_numbers<[1], [0], [0], [1], [0, 0, 1, 1], [], []>} : vector<8x8xf32>, vector<8x8xf32>, vector<8x8xf32> -> vector<8x8xf32>
    %53 = vector.extract_strided_slice %9 {offsets = [8, 0], sizes = [8, 32], strides = [1, 1]} : vector<32x32xf32> to vector<8x32xf32>
    %cst_21 = arith.constant dense<0.000000e+00> : vector<8x32xf32>
    %54 = tpu.matmul %52, %53, %cst_21 {dimension_numbers = #tpu.dot_dimension_numbers<[1], [0], [0], [1], [0, 0, 1, 1], [], []>} : vector<8x8xf32>, vector<8x32xf32>, vector<8x32xf32> -> vector<8x32xf32>
    %55 = arith.addf %34, %54 : vector<8x32xf32>
    %56 = vector.extract_strided_slice %10 {offsets = [0, 16], sizes = [8, 8], strides = [1, 1]} : vector<8x32xf32> to vector<8x8xf32>
    %57 = vector.extract_strided_slice %11 {offsets = [0, 16], sizes = [8, 8], strides = [1, 1]} : vector<8x32xf32> to vector<8x8xf32>
    %58 = vector.extract_strided_slice %12 {offsets = [0, 16], sizes = [8, 8], strides = [1, 1]} : vector<8x32xf32> to vector<8x8xf32>
    %cst_22 = arith.constant dense<0.000000e+00> : vector<8x8xf32>
    %59 = tpu.matmul %56, %57, %cst_22 {dimension_numbers = #tpu.dot_dimension_numbers<[1], [1], [0], [0], [0, 0, 1, 0], [], []>} : vector<8x8xf32>, vector<8x8xf32>, vector<8x8xf32> -> vector<8x8xf32>
    %cst_23 = arith.constant 0.353553385 : f32
    %60 = vector.broadcast %cst_23 : f32 to vector<8x8xf32>
    %61 = arith.mulf %59, %60 : vector<8x8xf32>
    %62 = arith.addf %61, %14 : vector<8x8xf32>
    %cst_24 = arith.constant dense<0xFF800000> : vector<8xf32>
    %63 = vector.multi_reduction <maximumf>, %62, %cst_24 [1] : vector<8x8xf32> to vector<8xf32>
    %64 = vector.shape_cast %63 : vector<8xf32> to vector<8x1xf32>
    %65 = vector.broadcast %64 : vector<8x1xf32> to vector<8x8xf32>
    %66 = arith.subf %62, %65 : vector<8x8xf32>
    %67 = math.exp %66 : vector<8x8xf32>
    %cst_25 = arith.constant dense<0.000000e+00> : vector<8xf32>
    %68 = vector.multi_reduction <add>, %67, %cst_25 [1] : vector<8x8xf32> to vector<8xf32>
    %69 = vector.shape_cast %68 : vector<8xf32> to vector<8x1xf32>
    %70 = tpu.reciprocal %69 {approx = true} : vector<8x1xf32> -> vector<8x1xf32>
    %71 = vector.broadcast %70 : vector<8x1xf32> to vector<8x8xf32>
    %72 = arith.mulf %67, %71 : vector<8x8xf32>
    %cst_26 = arith.constant dense<0.000000e+00> : vector<8x8xf32>
    %73 = tpu.matmul %72, %58, %cst_26 {dimension_numbers = #tpu.dot_dimension_numbers<[1], [0], [0], [1], [0, 0, 1, 1], [], []>} : vector<8x8xf32>, vector<8x8xf32>, vector<8x8xf32> -> vector<8x8xf32>
    %74 = vector.extract_strided_slice %9 {offsets = [16, 0], sizes = [8, 32], strides = [1, 1]} : vector<32x32xf32> to vector<8x32xf32>
    %cst_27 = arith.constant dense<0.000000e+00> : vector<8x32xf32>
    %75 = tpu.matmul %73, %74, %cst_27 {dimension_numbers = #tpu.dot_dimension_numbers<[1], [0], [0], [1], [0, 0, 1, 1], [], []>} : vector<8x8xf32>, vector<8x32xf32>, vector<8x32xf32> -> vector<8x32xf32>
    %76 = arith.addf %55, %75 : vector<8x32xf32>
    %77 = vector.extract_strided_slice %10 {offsets = [0, 24], sizes = [8, 8], strides = [1, 1]} : vector<8x32xf32> to vector<8x8xf32>
    %78 = vector.extract_strided_slice %11 {offsets = [0, 24], sizes = [8, 8], strides = [1, 1]} : vector<8x32xf32> to vector<8x8xf32>
    %79 = vector.extract_strided_slice %12 {offsets = [0, 24], sizes = [8, 8], strides = [1, 1]} : vector<8x32xf32> to vector<8x8xf32>
    %cst_28 = arith.constant dense<0.000000e+00> : vector<8x8xf32>
    %80 = tpu.matmul %77, %78, %cst_28 {dimension_numbers = #tpu.dot_dimension_numbers<[1], [1], [0], [0], [0, 0, 1, 0], [], []>} : vector<8x8xf32>, vector<8x8xf32>, vector<8x8xf32> -> vector<8x8xf32>
    %cst_29 = arith.constant 0.353553385 : f32
    %81 = vector.broadcast %cst_29 : f32 to vector<8x8xf32>
    %82 = arith.mulf %80, %81 : vector<8x8xf32>
    %83 = arith.addf %82, %14 : vector<8x8xf32>
    %cst_30 = arith.constant dense<0xFF800000> : vector<8xf32>
    %84 = vector.multi_reduction <maximumf>, %83, %cst_30 [1] : vector<8x8xf32> to vector<8xf32>
    %85 = vector.shape_cast %84 : vector<8xf32> to vector<8x1xf32>
    %86 = vector.broadcast %85 : vector<8x1xf32> to vector<8x8xf32>
    %87 = arith.subf %83, %86 : vector<8x8xf32>
    %88 = math.exp %87 : vector<8x8xf32>
    %cst_31 = arith.constant dense<0.000000e+00> : vector<8xf32>
    %89 = vector.multi_reduction <add>, %88, %cst_31 [1] : vector<8x8xf32> to vector<8xf32>
    %90 = vector.shape_cast %89 : vector<8xf32> to vector<8x1xf32>
    %91 = tpu.reciprocal %90 {approx = true} : vector<8x1xf32> -> vector<8x1xf32>
    %92 = vector.broadcast %91 : vector<8x1xf32> to vector<8x8xf32>
    %93 = arith.mulf %88, %92 : vector<8x8xf32>
    %cst_32 = arith.constant dense<0.000000e+00> : vector<8x8xf32>
    %94 = tpu.matmul %93, %79, %cst_32 {dimension_numbers = #tpu.dot_dimension_numbers<[1], [0], [0], [1], [0, 0, 1, 1], [], []>} : vector<8x8xf32>, vector<8x8xf32>, vector<8x8xf32> -> vector<8x8xf32>
    %95 = vector.extract_strided_slice %9 {offsets = [24, 0], sizes = [8, 32], strides = [1, 1]} : vector<32x32xf32> to vector<8x32xf32>
    %cst_33 = arith.constant dense<0.000000e+00> : vector<8x32xf32>
    %96 = tpu.matmul %94, %95, %cst_33 {dimension_numbers = #tpu.dot_dimension_numbers<[1], [0], [0], [1], [0, 0, 1, 1], [], []>} : vector<8x8xf32>, vector<8x32xf32>, vector<8x32xf32> -> vector<8x32xf32>
    %97 = arith.addf %76, %96 : vector<8x32xf32>
    %98 = vector.extract_strided_slice %6 {offsets = [8, 0], sizes = [8, 32], strides = [1, 1]} : vector<16x32xf32> to vector<8x32xf32>
    %99 = vector.extract_strided_slice %7 {offsets = [8, 0], sizes = [8, 32], strides = [1, 1]} : vector<16x32xf32> to vector<8x32xf32>
    %100 = vector.extract_strided_slice %8 {offsets = [8, 0], sizes = [8, 32], strides = [1, 1]} : vector<16x32xf32> to vector<8x32xf32>
    %c1 = arith.constant 1 : index
    %c0_34 = arith.constant 0 : index
    %c0_35 = arith.constant 0 : index
    %101 = vector.load %arg23[%c1, %c0_34, %c0_35] : memref<2x8x8xf32, #tpu.memory_space<vmem>>, vector<1x8x8xf32>
    %102 = vector.shape_cast %101 : vector<1x8x8xf32> to vector<8x8xf32>
    %103 = vector.extract_strided_slice %98 {offsets = [0, 0], sizes = [8, 8], strides = [1, 1]} : vector<8x32xf32> to vector<8x8xf32>
    %104 = vector.extract_strided_slice %99 {offsets = [0, 0], sizes = [8, 8], strides = [1, 1]} : vector<8x32xf32> to vector<8x8xf32>
    %105 = vector.extract_strided_slice %100 {offsets = [0, 0], sizes = [8, 8], strides = [1, 1]} : vector<8x32xf32> to vector<8x8xf32>
    %cst_36 = arith.constant dense<0.000000e+00> : vector<8x8xf32>
    %106 = tpu.matmul %103, %104, %cst_36 {dimension_numbers = #tpu.dot_dimension_numbers<[1], [1], [0], [0], [0, 0, 1, 0], [], []>} : vector<8x8xf32>, vector<8x8xf32>, vector<8x8xf32> -> vector<8x8xf32>
    %cst_37 = arith.constant 0.353553385 : f32
    %107 = vector.broadcast %cst_37 : f32 to vector<8x8xf32>
    %108 = arith.mulf %106, %107 : vector<8x8xf32>
    %109 = arith.addf %108, %102 : vector<8x8xf32>
    %cst_38 = arith.constant dense<0xFF800000> : vector<8xf32>
    %110 = vector.multi_reduction <maximumf>, %109, %cst_38 [1] : vector<8x8xf32> to vector<8xf32>
    %111 = vector.shape_cast %110 : vector<8xf32> to vector<8x1xf32>
    %112 = vector.broadcast %111 : vector<8x1xf32> to vector<8x8xf32>
    %113 = arith.subf %109, %112 : vector<8x8xf32>
    %114 = math.exp %113 : vector<8x8xf32>
    %cst_39 = arith.constant dense<0.000000e+00> : vector<8xf32>
    %115 = vector.multi_reduction <add>, %114, %cst_39 [1] : vector<8x8xf32> to vector<8xf32>
    %116 = vector.shape_cast %115 : vector<8xf32> to vector<8x1xf32>
    %117 = tpu.reciprocal %116 {approx = true} : vector<8x1xf32> -> vector<8x1xf32>
    %118 = vector.broadcast %117 : vector<8x1xf32> to vector<8x8xf32>
    %119 = arith.mulf %114, %118 : vector<8x8xf32>
    %cst_40 = arith.constant dense<0.000000e+00> : vector<8x8xf32>
    %120 = tpu.matmul %119, %105, %cst_40 {dimension_numbers = #tpu.dot_dimension_numbers<[1], [0], [0], [1], [0, 0, 1, 1], [], []>} : vector<8x8xf32>, vector<8x8xf32>, vector<8x8xf32> -> vector<8x8xf32>
    %121 = vector.extract_strided_slice %9 {offsets = [0, 0], sizes = [8, 32], strides = [1, 1]} : vector<32x32xf32> to vector<8x32xf32>
    %cst_41 = arith.constant dense<0.000000e+00> : vector<8x32xf32>
    %122 = tpu.matmul %120, %121, %cst_41 {dimension_numbers = #tpu.dot_dimension_numbers<[1], [0], [0], [1], [0, 0, 1, 1], [], []>} : vector<8x8xf32>, vector<8x32xf32>, vector<8x32xf32> -> vector<8x32xf32>
    %123 = vector.extract_strided_slice %98 {offsets = [0, 8], sizes = [8, 8], strides = [1, 1]} : vector<8x32xf32> to vector<8x8xf32>
    %124 = vector.extract_strided_slice %99 {offsets = [0, 8], sizes = [8, 8], strides = [1, 1]} : vector<8x32xf32> to vector<8x8xf32>
    %125 = vector.extract_strided_slice %100 {offsets = [0, 8], sizes = [8, 8], strides = [1, 1]} : vector<8x32xf32> to vector<8x8xf32>
    %cst_42 = arith.constant dense<0.000000e+00> : vector<8x8xf32>
    %126 = tpu.matmul %123, %124, %cst_42 {dimension_numbers = #tpu.dot_dimension_numbers<[1], [1], [0], [0], [0, 0, 1, 0], [], []>} : vector<8x8xf32>, vector<8x8xf32>, vector<8x8xf32> -> vector<8x8xf32>
    %cst_43 = arith.constant 0.353553385 : f32
    %127 = vector.broadcast %cst_43 : f32 to vector<8x8xf32>
    %128 = arith.mulf %126, %127 : vector<8x8xf32>
    %129 = arith.addf %128, %102 : vector<8x8xf32>
    %cst_44 = arith.constant dense<0xFF800000> : vector<8xf32>
    %130 = vector.multi_reduction <maximumf>, %129, %cst_44 [1] : vector<8x8xf32> to vector<8xf32>
    %131 = vector.shape_cast %130 : vector<8xf32> to vector<8x1xf32>
    %132 = vector.broadcast %131 : vector<8x1xf32> to vector<8x8xf32>
    %133 = arith.subf %129, %132 : vector<8x8xf32>
    %134 = math.exp %133 : vector<8x8xf32>
    %cst_45 = arith.constant dense<0.000000e+00> : vector<8xf32>
    %135 = vector.multi_reduction <add>, %134, %cst_45 [1] : vector<8x8xf32> to vector<8xf32>
    %136 = vector.shape_cast %135 : vector<8xf32> to vector<8x1xf32>
    %137 = tpu.reciprocal %136 {approx = true} : vector<8x1xf32> -> vector<8x1xf32>
    %138 = vector.broadcast %137 : vector<8x1xf32> to vector<8x8xf32>
    %139 = arith.mulf %134, %138 : vector<8x8xf32>
    %cst_46 = arith.constant dense<0.000000e+00> : vector<8x8xf32>
    %140 = tpu.matmul %139, %125, %cst_46 {dimension_numbers = #tpu.dot_dimension_numbers<[1], [0], [0], [1], [0, 0, 1, 1], [], []>} : vector<8x8xf32>, vector<8x8xf32>, vector<8x8xf32> -> vector<8x8xf32>
    %141 = vector.extract_strided_slice %9 {offsets = [8, 0], sizes = [8, 32], strides = [1, 1]} : vector<32x32xf32> to vector<8x32xf32>
    %cst_47 = arith.constant dense<0.000000e+00> : vector<8x32xf32>
    %142 = tpu.matmul %140, %141, %cst_47 {dimension_numbers = #tpu.dot_dimension_numbers<[1], [0], [0], [1], [0, 0, 1, 1], [], []>} : vector<8x8xf32>, vector<8x32xf32>, vector<8x32xf32> -> vector<8x32xf32>
    %143 = arith.addf %122, %142 : vector<8x32xf32>
    %144 = vector.extract_strided_slice %98 {offsets = [0, 16], sizes = [8, 8], strides = [1, 1]} : vector<8x32xf32> to vector<8x8xf32>
    %145 = vector.extract_strided_slice %99 {offsets = [0, 16], sizes = [8, 8], strides = [1, 1]} : vector<8x32xf32> to vector<8x8xf32>
    %146 = vector.extract_strided_slice %100 {offsets = [0, 16], sizes = [8, 8], strides = [1, 1]} : vector<8x32xf32> to vector<8x8xf32>
    %cst_48 = arith.constant dense<0.000000e+00> : vector<8x8xf32>
    %147 = tpu.matmul %144, %145, %cst_48 {dimension_numbers = #tpu.dot_dimension_numbers<[1], [1], [0], [0], [0, 0, 1, 0], [], []>} : vector<8x8xf32>, vector<8x8xf32>, vector<8x8xf32> -> vector<8x8xf32>
    %cst_49 = arith.constant 0.353553385 : f32
    %148 = vector.broadcast %cst_49 : f32 to vector<8x8xf32>
    %149 = arith.mulf %147, %148 : vector<8x8xf32>
    %150 = arith.addf %149, %102 : vector<8x8xf32>
    %cst_50 = arith.constant dense<0xFF800000> : vector<8xf32>
    %151 = vector.multi_reduction <maximumf>, %150, %cst_50 [1] : vector<8x8xf32> to vector<8xf32>
    %152 = vector.shape_cast %151 : vector<8xf32> to vector<8x1xf32>
    %153 = vector.broadcast %152 : vector<8x1xf32> to vector<8x8xf32>
    %154 = arith.subf %150, %153 : vector<8x8xf32>
    %155 = math.exp %154 : vector<8x8xf32>
    %cst_51 = arith.constant dense<0.000000e+00> : vector<8xf32>
    %156 = vector.multi_reduction <add>, %155, %cst_51 [1] : vector<8x8xf32> to vector<8xf32>
    %157 = vector.shape_cast %156 : vector<8xf32> to vector<8x1xf32>
    %158 = tpu.reciprocal %157 {approx = true} : vector<8x1xf32> -> vector<8x1xf32>
    %159 = vector.broadcast %158 : vector<8x1xf32> to vector<8x8xf32>
    %160 = arith.mulf %155, %159 : vector<8x8xf32>
    %cst_52 = arith.constant dense<0.000000e+00> : vector<8x8xf32>
    %161 = tpu.matmul %160, %146, %cst_52 {dimension_numbers = #tpu.dot_dimension_numbers<[1], [0], [0], [1], [0, 0, 1, 1], [], []>} : vector<8x8xf32>, vector<8x8xf32>, vector<8x8xf32> -> vector<8x8xf32>
    %162 = vector.extract_strided_slice %9 {offsets = [16, 0], sizes = [8, 32], strides = [1, 1]} : vector<32x32xf32> to vector<8x32xf32>
    %cst_53 = arith.constant dense<0.000000e+00> : vector<8x32xf32>
    %163 = tpu.matmul %161, %162, %cst_53 {dimension_numbers = #tpu.dot_dimension_numbers<[1], [0], [0], [1], [0, 0, 1, 1], [], []>} : vector<8x8xf32>, vector<8x32xf32>, vector<8x32xf32> -> vector<8x32xf32>
    %164 = arith.addf %143, %163 : vector<8x32xf32>
    %165 = vector.extract_strided_slice %98 {offsets = [0, 24], sizes = [8, 8], strides = [1, 1]} : vector<8x32xf32> to vector<8x8xf32>
    %166 = vector.extract_strided_slice %99 {offsets = [0, 24], sizes = [8, 8], strides = [1, 1]} : vector<8x32xf32> to vector<8x8xf32>
    %167 = vector.extract_strided_slice %100 {offsets = [0, 24], sizes = [8, 8], strides = [1, 1]} : vector<8x32xf32> to vector<8x8xf32>
    %cst_54 = arith.constant dense<0.000000e+00> : vector<8x8xf32>
    %168 = tpu.matmul %165, %166, %cst_54 {dimension_numbers = #tpu.dot_dimension_numbers<[1], [1], [0], [0], [0, 0, 1, 0], [], []>} : vector<8x8xf32>, vector<8x8xf32>, vector<8x8xf32> -> vector<8x8xf32>
    %cst_55 = arith.constant 0.353553385 : f32
    %169 = vector.broadcast %cst_55 : f32 to vector<8x8xf32>
    %170 = arith.mulf %168, %169 : vector<8x8xf32>
    %171 = arith.addf %170, %102 : vector<8x8xf32>
    %cst_56 = arith.constant dense<0xFF800000> : vector<8xf32>
    %172 = vector.multi_reduction <maximumf>, %171, %cst_56 [1] : vector<8x8xf32> to vector<8xf32>
    %173 = vector.shape_cast %172 : vector<8xf32> to vector<8x1xf32>
    %174 = vector.broadcast %173 : vector<8x1xf32> to vector<8x8xf32>
    %175 = arith.subf %171, %174 : vector<8x8xf32>
    %176 = math.exp %175 : vector<8x8xf32>
    %cst_57 = arith.constant dense<0.000000e+00> : vector<8xf32>
    %177 = vector.multi_reduction <add>, %176, %cst_57 [1] : vector<8x8xf32> to vector<8xf32>
    %178 = vector.shape_cast %177 : vector<8xf32> to vector<8x1xf32>
    %179 = tpu.reciprocal %178 {approx = true} : vector<8x1xf32> -> vector<8x1xf32>
    %180 = vector.broadcast %179 : vector<8x1xf32> to vector<8x8xf32>
    %181 = arith.mulf %176, %180 : vector<8x8xf32>
    %cst_58 = arith.constant dense<0.000000e+00> : vector<8x8xf32>
    %182 = tpu.matmul %181, %167, %cst_58 {dimension_numbers = #tpu.dot_dimension_numbers<[1], [0], [0], [1], [0, 0, 1, 1], [], []>} : vector<8x8xf32>, vector<8x8xf32>, vector<8x8xf32> -> vector<8x8xf32>
    %183 = vector.extract_strided_slice %9 {offsets = [24, 0], sizes = [8, 32], strides = [1, 1]} : vector<32x32xf32> to vector<8x32xf32>
    %cst_59 = arith.constant dense<0.000000e+00> : vector<8x32xf32>
    %184 = tpu.matmul %182, %183, %cst_59 {dimension_numbers = #tpu.dot_dimension_numbers<[1], [0], [0], [1], [0, 0, 1, 1], [], []>} : vector<8x8xf32>, vector<8x32xf32>, vector<8x32xf32> -> vector<8x32xf32>
    %185 = arith.addf %164, %184 : vector<8x32xf32>
    %186 = tpu.concatenate %97, %185 in 0 : vector<8x32xf32>, vector<8x32xf32> -> vector<16x32xf32>
    %c0_60 = arith.constant 0 : index
    %c0_61 = arith.constant 0 : index
    %187 = vector.load %arg6[%c0_60, %c0_61] : memref<1x32xf32, #tpu.memory_space<vmem>>, vector<1x32xf32>
    %188 = vector.broadcast %187 : vector<1x32xf32> to vector<16x32xf32>
    %189 = arith.addf %186, %188 : vector<16x32xf32>
    %190 = arith.addf %0, %189 : vector<16x32xf32>
    %c0_62 = arith.constant 0 : index
    %c0_63 = arith.constant 0 : index
    %191 = vector.load %arg15[%c0_62, %c0_63] : memref<1x32xf32, #tpu.memory_space<vmem>>, vector<1x32xf32>
    %c0_64 = arith.constant 0 : index
    %c0_65 = arith.constant 0 : index
    %192 = vector.load %arg16[%c0_64, %c0_65] : memref<1x32xf32, #tpu.memory_space<vmem>>, vector<1x32xf32>
    %cst_66 = arith.constant dense<0.000000e+00> : vector<16xf32>
    %193 = vector.multi_reduction <add>, %190, %cst_66 [1] : vector<16x32xf32> to vector<16xf32>
    %194 = vector.shape_cast %193 : vector<16xf32> to vector<16x1xf32>
    %cst_67 = arith.constant 3.200000e+01 : f32
    %195 = vector.broadcast %cst_67 : f32 to vector<16x1xf32>
    %196 = arith.divf %194, %195 : vector<16x1xf32>
    %197 = vector.broadcast %196 : vector<16x1xf32> to vector<16x32xf32>
    %198 = arith.subf %190, %197 : vector<16x32xf32>
    %199 = arith.mulf %198, %198 : vector<16x32xf32>
    %cst_68 = arith.constant dense<0.000000e+00> : vector<16xf32>
    %200 = vector.multi_reduction <add>, %199, %cst_68 [1] : vector<16x32xf32> to vector<16xf32>
    %201 = vector.shape_cast %200 : vector<16xf32> to vector<16x1xf32>
    %cst_69 = arith.constant 3.200000e+01 : f32
    %202 = vector.broadcast %cst_69 : f32 to vector<16x1xf32>
    %203 = arith.divf %201, %202 : vector<16x1xf32>
    %204 = vector.broadcast %196 : vector<16x1xf32> to vector<16x32xf32>
    %205 = arith.subf %190, %204 : vector<16x32xf32>
    %cst_70 = arith.constant 9.99999974E-6 : f32
    %206 = vector.broadcast %cst_70 : f32 to vector<16x1xf32>
    %207 = arith.addf %203, %206 : vector<16x1xf32>
    %208 = math.rsqrt %207 : vector<16x1xf32>
    %209 = vector.broadcast %208 : vector<16x1xf32> to vector<16x32xf32>
    %210 = arith.mulf %205, %209 : vector<16x32xf32>
    %211 = vector.broadcast %191 : vector<1x32xf32> to vector<16x32xf32>
    %212 = arith.mulf %210, %211 : vector<16x32xf32>
    %213 = vector.broadcast %192 : vector<1x32xf32> to vector<16x32xf32>
    %214 = arith.addf %212, %213 : vector<16x32xf32>
    %c0_71 = arith.constant 0 : index
    %c0_72 = arith.constant 0 : index
    %215 = vector.load %arg7[%c0_71, %c0_72] : memref<32x32xf32, #tpu.memory_space<vmem>>, vector<32x32xf32>
    %cst_73 = arith.constant dense<0.000000e+00> : vector<16x32xf32>
    %216 = tpu.matmul %214, %215, %cst_73 {dimension_numbers = #tpu.dot_dimension_numbers<[1], [0], [0], [1], [0, 0, 1, 1], [], []>} : vector<16x32xf32>, vector<32x32xf32>, vector<16x32xf32> -> vector<16x32xf32>
    %c0_74 = arith.constant 0 : index
    %c0_75 = arith.constant 0 : index
    %217 = vector.load %arg8[%c0_74, %c0_75] : memref<1x32xf32, #tpu.memory_space<vmem>>, vector<1x32xf32>
    %218 = vector.broadcast %217 : vector<1x32xf32> to vector<16x32xf32>
    %219 = arith.addf %216, %218 : vector<16x32xf32>
    %c0_76 = arith.constant 0 : index
    %c0_77 = arith.constant 0 : index
    %220 = vector.load %arg2[%c0_76, %c0_77] : memref<32x128xf32, #tpu.memory_space<vmem>>, vector<32x128xf32>
    %221 = vector.extract_strided_slice %220 {offsets = [0, 64], sizes = [32, 32], strides = [1, 1]} : vector<32x128xf32> to vector<32x32xf32>
    %222 = vector.extract_strided_slice %220 {offsets = [0, 96], sizes = [32, 32], strides = [1, 1]} : vector<32x128xf32> to vector<32x32xf32>
    %c0_78 = arith.constant 0 : index
    %c0_79 = arith.constant 0 : index
    %223 = vector.load %arg9[%c0_78, %c0_79] : memref<32x32xf32, #tpu.memory_space<vmem>>, vector<32x32xf32>
    %224 = vector.extract_strided_slice %219 {offsets = [0, 0], sizes = [8, 32], strides = [1, 1]} : vector<16x32xf32> to vector<8x32xf32>
    %225 = vector.extract_strided_slice %221 {offsets = [0, 0], sizes = [16, 32], strides = [1, 1]} : vector<32x32xf32> to vector<16x32xf32>
    %226 = vector.extract_strided_slice %222 {offsets = [0, 0], sizes = [16, 32], strides = [1, 1]} : vector<32x32xf32> to vector<16x32xf32>
    %c0_80 = arith.constant 0 : index
    %c0_81 = arith.constant 0 : index
    %c0_82 = arith.constant 0 : index
    %227 = vector.load %arg24[%c0_80, %c0_81, %c0_82] : memref<2x8x16xf32, #tpu.memory_space<vmem>>, vector<1x8x16xf32>
    %228 = vector.shape_cast %227 : vector<1x8x16xf32> to vector<8x16xf32>
    %229 = vector.extract_strided_slice %224 {offsets = [0, 0], sizes = [8, 8], strides = [1, 1]} : vector<8x32xf32> to vector<8x8xf32>
    %230 = vector.extract_strided_slice %225 {offsets = [0, 0], sizes = [16, 8], strides = [1, 1]} : vector<16x32xf32> to vector<16x8xf32>
    %231 = vector.extract_strided_slice %226 {offsets = [0, 0], sizes = [16, 8], strides = [1, 1]} : vector<16x32xf32> to vector<16x8xf32>
    %cst_83 = arith.constant dense<0.000000e+00> : vector<8x16xf32>
    %232 = tpu.matmul %229, %230, %cst_83 {dimension_numbers = #tpu.dot_dimension_numbers<[1], [1], [0], [0], [0, 0, 1, 0], [], []>} : vector<8x8xf32>, vector<16x8xf32>, vector<8x16xf32> -> vector<8x16xf32>
    %cst_84 = arith.constant 0.353553385 : f32
    %233 = vector.broadcast %cst_84 : f32 to vector<8x16xf32>
    %234 = arith.mulf %232, %233 : vector<8x16xf32>
    %235 = arith.addf %234, %228 : vector<8x16xf32>
    %cst_85 = arith.constant dense<0xFF800000> : vector<8xf32>
    %236 = vector.multi_reduction <maximumf>, %235, %cst_85 [1] : vector<8x16xf32> to vector<8xf32>
    %237 = vector.shape_cast %236 : vector<8xf32> to vector<8x1xf32>
    %238 = vector.broadcast %237 : vector<8x1xf32> to vector<8x16xf32>
    %239 = arith.subf %235, %238 : vector<8x16xf32>
    %240 = math.exp %239 : vector<8x16xf32>
    %cst_86 = arith.constant dense<0.000000e+00> : vector<8xf32>
    %241 = vector.multi_reduction <add>, %240, %cst_86 [1] : vector<8x16xf32> to vector<8xf32>
    %242 = vector.shape_cast %241 : vector<8xf32> to vector<8x1xf32>
    %243 = tpu.reciprocal %242 {approx = true} : vector<8x1xf32> -> vector<8x1xf32>
    %244 = vector.broadcast %243 : vector<8x1xf32> to vector<8x16xf32>
    %245 = arith.mulf %240, %244 : vector<8x16xf32>
    %cst_87 = arith.constant dense<0.000000e+00> : vector<8x8xf32>
    %246 = tpu.matmul %245, %231, %cst_87 {dimension_numbers = #tpu.dot_dimension_numbers<[1], [0], [0], [1], [0, 0, 1, 1], [], []>} : vector<8x16xf32>, vector<16x8xf32>, vector<8x8xf32> -> vector<8x8xf32>
    %247 = vector.extract_strided_slice %223 {offsets = [0, 0], sizes = [8, 32], strides = [1, 1]} : vector<32x32xf32> to vector<8x32xf32>
    %cst_88 = arith.constant dense<0.000000e+00> : vector<8x32xf32>
    %248 = tpu.matmul %246, %247, %cst_88 {dimension_numbers = #tpu.dot_dimension_numbers<[1], [0], [0], [1], [0, 0, 1, 1], [], []>} : vector<8x8xf32>, vector<8x32xf32>, vector<8x32xf32> -> vector<8x32xf32>
    %249 = vector.extract_strided_slice %224 {offsets = [0, 8], sizes = [8, 8], strides = [1, 1]} : vector<8x32xf32> to vector<8x8xf32>
    %250 = vector.extract_strided_slice %225 {offsets = [0, 8], sizes = [16, 8], strides = [1, 1]} : vector<16x32xf32> to vector<16x8xf32>
    %251 = vector.extract_strided_slice %226 {offsets = [0, 8], sizes = [16, 8], strides = [1, 1]} : vector<16x32xf32> to vector<16x8xf32>
    %cst_89 = arith.constant dense<0.000000e+00> : vector<8x16xf32>
    %252 = tpu.matmul %249, %250, %cst_89 {dimension_numbers = #tpu.dot_dimension_numbers<[1], [1], [0], [0], [0, 0, 1, 0], [], []>} : vector<8x8xf32>, vector<16x8xf32>, vector<8x16xf32> -> vector<8x16xf32>
    %cst_90 = arith.constant 0.353553385 : f32
    %253 = vector.broadcast %cst_90 : f32 to vector<8x16xf32>
    %254 = arith.mulf %252, %253 : vector<8x16xf32>
    %255 = arith.addf %254, %228 : vector<8x16xf32>
    %cst_91 = arith.constant dense<0xFF800000> : vector<8xf32>
    %256 = vector.multi_reduction <maximumf>, %255, %cst_91 [1] : vector<8x16xf32> to vector<8xf32>
    %257 = vector.shape_cast %256 : vector<8xf32> to vector<8x1xf32>
    %258 = vector.broadcast %257 : vector<8x1xf32> to vector<8x16xf32>
    %259 = arith.subf %255, %258 : vector<8x16xf32>
    %260 = math.exp %259 : vector<8x16xf32>
    %cst_92 = arith.constant dense<0.000000e+00> : vector<8xf32>
    %261 = vector.multi_reduction <add>, %260, %cst_92 [1] : vector<8x16xf32> to vector<8xf32>
    %262 = vector.shape_cast %261 : vector<8xf32> to vector<8x1xf32>
    %263 = tpu.reciprocal %262 {approx = true} : vector<8x1xf32> -> vector<8x1xf32>
    %264 = vector.broadcast %263 : vector<8x1xf32> to vector<8x16xf32>
    %265 = arith.mulf %260, %264 : vector<8x16xf32>
    %266 = arith.addf %245, %265 : vector<8x16xf32>
    %cst_93 = arith.constant dense<0.000000e+00> : vector<8x8xf32>
    %267 = tpu.matmul %265, %251, %cst_93 {dimension_numbers = #tpu.dot_dimension_numbers<[1], [0], [0], [1], [0, 0, 1, 1], [], []>} : vector<8x16xf32>, vector<16x8xf32>, vector<8x8xf32> -> vector<8x8xf32>
    %268 = vector.extract_strided_slice %223 {offsets = [8, 0], sizes = [8, 32], strides = [1, 1]} : vector<32x32xf32> to vector<8x32xf32>
    %cst_94 = arith.constant dense<0.000000e+00> : vector<8x32xf32>
    %269 = tpu.matmul %267, %268, %cst_94 {dimension_numbers = #tpu.dot_dimension_numbers<[1], [0], [0], [1], [0, 0, 1, 1], [], []>} : vector<8x8xf32>, vector<8x32xf32>, vector<8x32xf32> -> vector<8x32xf32>
    %270 = arith.addf %248, %269 : vector<8x32xf32>
    %271 = vector.extract_strided_slice %224 {offsets = [0, 16], sizes = [8, 8], strides = [1, 1]} : vector<8x32xf32> to vector<8x8xf32>
    %272 = vector.extract_strided_slice %225 {offsets = [0, 16], sizes = [16, 8], strides = [1, 1]} : vector<16x32xf32> to vector<16x8xf32>
    %273 = vector.extract_strided_slice %226 {offsets = [0, 16], sizes = [16, 8], strides = [1, 1]} : vector<16x32xf32> to vector<16x8xf32>
    %cst_95 = arith.constant dense<0.000000e+00> : vector<8x16xf32>
    %274 = tpu.matmul %271, %272, %cst_95 {dimension_numbers = #tpu.dot_dimension_numbers<[1], [1], [0], [0], [0, 0, 1, 0], [], []>} : vector<8x8xf32>, vector<16x8xf32>, vector<8x16xf32> -> vector<8x16xf32>
    %cst_96 = arith.constant 0.353553385 : f32
    %275 = vector.broadcast %cst_96 : f32 to vector<8x16xf32>
    %276 = arith.mulf %274, %275 : vector<8x16xf32>
    %277 = arith.addf %276, %228 : vector<8x16xf32>
    %cst_97 = arith.constant dense<0xFF800000> : vector<8xf32>
    %278 = vector.multi_reduction <maximumf>, %277, %cst_97 [1] : vector<8x16xf32> to vector<8xf32>
    %279 = vector.shape_cast %278 : vector<8xf32> to vector<8x1xf32>
    %280 = vector.broadcast %279 : vector<8x1xf32> to vector<8x16xf32>
    %281 = arith.subf %277, %280 : vector<8x16xf32>
    %282 = math.exp %281 : vector<8x16xf32>
    %cst_98 = arith.constant dense<0.000000e+00> : vector<8xf32>
    %283 = vector.multi_reduction <add>, %282, %cst_98 [1] : vector<8x16xf32> to vector<8xf32>
    %284 = vector.shape_cast %283 : vector<8xf32> to vector<8x1xf32>
    %285 = tpu.reciprocal %284 {approx = true} : vector<8x1xf32> -> vector<8x1xf32>
    %286 = vector.broadcast %285 : vector<8x1xf32> to vector<8x16xf32>
    %287 = arith.mulf %282, %286 : vector<8x16xf32>
    %288 = arith.addf %266, %287 : vector<8x16xf32>
    %cst_99 = arith.constant dense<0.000000e+00> : vector<8x8xf32>
    %289 = tpu.matmul %287, %273, %cst_99 {dimension_numbers = #tpu.dot_dimension_numbers<[1], [0], [0], [1], [0, 0, 1, 1], [], []>} : vector<8x16xf32>, vector<16x8xf32>, vector<8x8xf32> -> vector<8x8xf32>
    %290 = vector.extract_strided_slice %223 {offsets = [16, 0], sizes = [8, 32], strides = [1, 1]} : vector<32x32xf32> to vector<8x32xf32>
    %cst_100 = arith.constant dense<0.000000e+00> : vector<8x32xf32>
    %291 = tpu.matmul %289, %290, %cst_100 {dimension_numbers = #tpu.dot_dimension_numbers<[1], [0], [0], [1], [0, 0, 1, 1], [], []>} : vector<8x8xf32>, vector<8x32xf32>, vector<8x32xf32> -> vector<8x32xf32>
    %292 = arith.addf %270, %291 : vector<8x32xf32>
    %293 = vector.extract_strided_slice %224 {offsets = [0, 24], sizes = [8, 8], strides = [1, 1]} : vector<8x32xf32> to vector<8x8xf32>
    %294 = vector.extract_strided_slice %225 {offsets = [0, 24], sizes = [16, 8], strides = [1, 1]} : vector<16x32xf32> to vector<16x8xf32>
    %295 = vector.extract_strided_slice %226 {offsets = [0, 24], sizes = [16, 8], strides = [1, 1]} : vector<16x32xf32> to vector<16x8xf32>
    %cst_101 = arith.constant dense<0.000000e+00> : vector<8x16xf32>
    %296 = tpu.matmul %293, %294, %cst_101 {dimension_numbers = #tpu.dot_dimension_numbers<[1], [1], [0], [0], [0, 0, 1, 0], [], []>} : vector<8x8xf32>, vector<16x8xf32>, vector<8x16xf32> -> vector<8x16xf32>
    %cst_102 = arith.constant 0.353553385 : f32
    %297 = vector.broadcast %cst_102 : f32 to vector<8x16xf32>
    %298 = arith.mulf %296, %297 : vector<8x16xf32>
    %299 = arith.addf %298, %228 : vector<8x16xf32>
    %cst_103 = arith.constant dense<0xFF800000> : vector<8xf32>
    %300 = vector.multi_reduction <maximumf>, %299, %cst_103 [1] : vector<8x16xf32> to vector<8xf32>
    %301 = vector.shape_cast %300 : vector<8xf32> to vector<8x1xf32>
    %302 = vector.broadcast %301 : vector<8x1xf32> to vector<8x16xf32>
    %303 = arith.subf %299, %302 : vector<8x16xf32>
    %304 = math.exp %303 : vector<8x16xf32>
    %cst_104 = arith.constant dense<0.000000e+00> : vector<8xf32>
    %305 = vector.multi_reduction <add>, %304, %cst_104 [1] : vector<8x16xf32> to vector<8xf32>
    %306 = vector.shape_cast %305 : vector<8xf32> to vector<8x1xf32>
    %307 = tpu.reciprocal %306 {approx = true} : vector<8x1xf32> -> vector<8x1xf32>
    %308 = vector.broadcast %307 : vector<8x1xf32> to vector<8x16xf32>
    %309 = arith.mulf %304, %308 : vector<8x16xf32>
    %310 = arith.addf %288, %309 : vector<8x16xf32>
    %cst_105 = arith.constant dense<0.000000e+00> : vector<8x8xf32>
    %311 = tpu.matmul %309, %295, %cst_105 {dimension_numbers = #tpu.dot_dimension_numbers<[1], [0], [0], [1], [0, 0, 1, 1], [], []>} : vector<8x16xf32>, vector<16x8xf32>, vector<8x8xf32> -> vector<8x8xf32>
    %312 = vector.extract_strided_slice %223 {offsets = [24, 0], sizes = [8, 32], strides = [1, 1]} : vector<32x32xf32> to vector<8x32xf32>
    %cst_106 = arith.constant dense<0.000000e+00> : vector<8x32xf32>
    %313 = tpu.matmul %311, %312, %cst_106 {dimension_numbers = #tpu.dot_dimension_numbers<[1], [0], [0], [1], [0, 0, 1, 1], [], []>} : vector<8x8xf32>, vector<8x32xf32>, vector<8x32xf32> -> vector<8x32xf32>
    %314 = arith.addf %292, %313 : vector<8x32xf32>
    %cst_107 = arith.constant 2.500000e-01 : f32
    %315 = vector.broadcast %cst_107 : f32 to vector<8x16xf32>
    %316 = arith.mulf %310, %315 : vector<8x16xf32>
    %c0_108 = arith.constant 0 : index
    %c0_109 = arith.constant 0 : index
    %c0_110 = arith.constant 0 : index
    %317 = vector.load %arg26[%c0_108, %c0_109, %c0_110] : memref<2x8x16xf32, #tpu.memory_space<vmem>>, vector<1x8x16xf32>
    %318 = vector.shape_cast %317 : vector<1x8x16xf32> to vector<8x16xf32>
    %319 = vector.shape_cast %316 : vector<8x16xf32> to vector<1x8x16xf32>
    tpu.vector_store %arg26[%c0_108, %c0_109, %c0_110], %319 {strides = array<i32>} : memref<2x8x16xf32, #tpu.memory_space<vmem>>, vector<1x8x16xf32>,
    %320 = vector.extract_strided_slice %219 {offsets = [8, 0], sizes = [8, 32], strides = [1, 1]} : vector<16x32xf32> to vector<8x32xf32>
    %321 = vector.extract_strided_slice %221 {offsets = [16, 0], sizes = [16, 32], strides = [1, 1]} : vector<32x32xf32> to vector<16x32xf32>
    %322 = vector.extract_strided_slice %222 {offsets = [16, 0], sizes = [16, 32], strides = [1, 1]} : vector<32x32xf32> to vector<16x32xf32>
    %c1_111 = arith.constant 1 : index
    %c0_112 = arith.constant 0 : index
    %c0_113 = arith.constant 0 : index
    %323 = vector.load %arg24[%c1_111, %c0_112, %c0_113] : memref<2x8x16xf32, #tpu.memory_space<vmem>>, vector<1x8x16xf32>
    %324 = vector.shape_cast %323 : vector<1x8x16xf32> to vector<8x16xf32>
    %325 = vector.extract_strided_slice %320 {offsets = [0, 0], sizes = [8, 8], strides = [1, 1]} : vector<8x32xf32> to vector<8x8xf32>
    %326 = vector.extract_strided_slice %321 {offsets = [0, 0], sizes = [16, 8], strides = [1, 1]} : vector<16x32xf32> to vector<16x8xf32>
    %327 = vector.extract_strided_slice %322 {offsets = [0, 0], sizes = [16, 8], strides = [1, 1]} : vector<16x32xf32> to vector<16x8xf32>
    %cst_114 = arith.constant dense<0.000000e+00> : vector<8x16xf32>
    %328 = tpu.matmul %325, %326, %cst_114 {dimension_numbers = #tpu.dot_dimension_numbers<[1], [1], [0], [0], [0, 0, 1, 0], [], []>} : vector<8x8xf32>, vector<16x8xf32>, vector<8x16xf32> -> vector<8x16xf32>
    %cst_115 = arith.constant 0.353553385 : f32
    %329 = vector.broadcast %cst_115 : f32 to vector<8x16xf32>
    %330 = arith.mulf %328, %329 : vector<8x16xf32>
    %331 = arith.addf %330, %324 : vector<8x16xf32>
    %cst_116 = arith.constant dense<0xFF800000> : vector<8xf32>
    %332 = vector.multi_reduction <maximumf>, %331, %cst_116 [1] : vector<8x16xf32> to vector<8xf32>
    %333 = vector.shape_cast %332 : vector<8xf32> to vector<8x1xf32>
    %334 = vector.broadcast %333 : vector<8x1xf32> to vector<8x16xf32>
    %335 = arith.subf %331, %334 : vector<8x16xf32>
    %336 = math.exp %335 : vector<8x16xf32>
    %cst_117 = arith.constant dense<0.000000e+00> : vector<8xf32>
    %337 = vector.multi_reduction <add>, %336, %cst_117 [1] : vector<8x16xf32> to vector<8xf32>
    %338 = vector.shape_cast %337 : vector<8xf32> to vector<8x1xf32>
    %339 = tpu.reciprocal %338 {approx = true} : vector<8x1xf32> -> vector<8x1xf32>
    %340 = vector.broadcast %339 : vector<8x1xf32> to vector<8x16xf32>
    %341 = arith.mulf %336, %340 : vector<8x16xf32>
    %cst_118 = arith.constant dense<0.000000e+00> : vector<8x8xf32>
    %342 = tpu.matmul %341, %327, %cst_118 {dimension_numbers = #tpu.dot_dimension_numbers<[1], [0], [0], [1], [0, 0, 1, 1], [], []>} : vector<8x16xf32>, vector<16x8xf32>, vector<8x8xf32> -> vector<8x8xf32>
    %343 = vector.extract_strided_slice %223 {offsets = [0, 0], sizes = [8, 32], strides = [1, 1]} : vector<32x32xf32> to vector<8x32xf32>
    %cst_119 = arith.constant dense<0.000000e+00> : vector<8x32xf32>
    %344 = tpu.matmul %342, %343, %cst_119 {dimension_numbers = #tpu.dot_dimension_numbers<[1], [0], [0], [1], [0, 0, 1, 1], [], []>} : vector<8x8xf32>, vector<8x32xf32>, vector<8x32xf32> -> vector<8x32xf32>
    %345 = vector.extract_strided_slice %320 {offsets = [0, 8], sizes = [8, 8], strides = [1, 1]} : vector<8x32xf32> to vector<8x8xf32>
    %346 = vector.extract_strided_slice %321 {offsets = [0, 8], sizes = [16, 8], strides = [1, 1]} : vector<16x32xf32> to vector<16x8xf32>
    %347 = vector.extract_strided_slice %322 {offsets = [0, 8], sizes = [16, 8], strides = [1, 1]} : vector<16x32xf32> to vector<16x8xf32>
    %cst_120 = arith.constant dense<0.000000e+00> : vector<8x16xf32>
    %348 = tpu.matmul %345, %346, %cst_120 {dimension_numbers = #tpu.dot_dimension_numbers<[1], [1], [0], [0], [0, 0, 1, 0], [], []>} : vector<8x8xf32>, vector<16x8xf32>, vector<8x16xf32> -> vector<8x16xf32>
    %cst_121 = arith.constant 0.353553385 : f32
    %349 = vector.broadcast %cst_121 : f32 to vector<8x16xf32>
    %350 = arith.mulf %348, %349 : vector<8x16xf32>
    %351 = arith.addf %350, %324 : vector<8x16xf32>
    %cst_122 = arith.constant dense<0xFF800000> : vector<8xf32>
    %352 = vector.multi_reduction <maximumf>, %351, %cst_122 [1] : vector<8x16xf32> to vector<8xf32>
    %353 = vector.shape_cast %352 : vector<8xf32> to vector<8x1xf32>
    %354 = vector.broadcast %353 : vector<8x1xf32> to vector<8x16xf32>
    %355 = arith.subf %351, %354 : vector<8x16xf32>
    %356 = math.exp %355 : vector<8x16xf32>
    %cst_123 = arith.constant dense<0.000000e+00> : vector<8xf32>
    %357 = vector.multi_reduction <add>, %356, %cst_123 [1] : vector<8x16xf32> to vector<8xf32>
    %358 = vector.shape_cast %357 : vector<8xf32> to vector<8x1xf32>
    %359 = tpu.reciprocal %358 {approx = true} : vector<8x1xf32> -> vector<8x1xf32>
    %360 = vector.broadcast %359 : vector<8x1xf32> to vector<8x16xf32>
    %361 = arith.mulf %356, %360 : vector<8x16xf32>
    %362 = arith.addf %341, %361 : vector<8x16xf32>
    %cst_124 = arith.constant dense<0.000000e+00> : vector<8x8xf32>
    %363 = tpu.matmul %361, %347, %cst_124 {dimension_numbers = #tpu.dot_dimension_numbers<[1], [0], [0], [1], [0, 0, 1, 1], [], []>} : vector<8x16xf32>, vector<16x8xf32>, vector<8x8xf32> -> vector<8x8xf32>
    %364 = vector.extract_strided_slice %223 {offsets = [8, 0], sizes = [8, 32], strides = [1, 1]} : vector<32x32xf32> to vector<8x32xf32>
    %cst_125 = arith.constant dense<0.000000e+00> : vector<8x32xf32>
    %365 = tpu.matmul %363, %364, %cst_125 {dimension_numbers = #tpu.dot_dimension_numbers<[1], [0], [0], [1], [0, 0, 1, 1], [], []>} : vector<8x8xf32>, vector<8x32xf32>, vector<8x32xf32> -> vector<8x32xf32>
    %366 = arith.addf %344, %365 : vector<8x32xf32>
    %367 = vector.extract_strided_slice %320 {offsets = [0, 16], sizes = [8, 8], strides = [1, 1]} : vector<8x32xf32> to vector<8x8xf32>
    %368 = vector.extract_strided_slice %321 {offsets = [0, 16], sizes = [16, 8], strides = [1, 1]} : vector<16x32xf32> to vector<16x8xf32>
    %369 = vector.extract_strided_slice %322 {offsets = [0, 16], sizes = [16, 8], strides = [1, 1]} : vector<16x32xf32> to vector<16x8xf32>
    %cst_126 = arith.constant dense<0.000000e+00> : vector<8x16xf32>
    %370 = tpu.matmul %367, %368, %cst_126 {dimension_numbers = #tpu.dot_dimension_numbers<[1], [1], [0], [0], [0, 0, 1, 0], [], []>} : vector<8x8xf32>, vector<16x8xf32>, vector<8x16xf32> -> vector<8x16xf32>
    %cst_127 = arith.constant 0.353553385 : f32
    %371 = vector.broadcast %cst_127 : f32 to vector<8x16xf32>
    %372 = arith.mulf %370, %371 : vector<8x16xf32>
    %373 = arith.addf %372, %324 : vector<8x16xf32>
    %cst_128 = arith.constant dense<0xFF800000> : vector<8xf32>
    %374 = vector.multi_reduction <maximumf>, %373, %cst_128 [1] : vector<8x16xf32> to vector<8xf32>
    %375 = vector.shape_cast %374 : vector<8xf32> to vector<8x1xf32>
    %376 = vector.broadcast %375 : vector<8x1xf32> to vector<8x16xf32>
    %377 = arith.subf %373, %376 : vector<8x16xf32>
    %378 = math.exp %377 : vector<8x16xf32>
    %cst_129 = arith.constant dense<0.000000e+00> : vector<8xf32>
    %379 = vector.multi_reduction <add>, %378, %cst_129 [1] : vector<8x16xf32> to vector<8xf32>
    %380 = vector.shape_cast %379 : vector<8xf32> to vector<8x1xf32>
    %381 = tpu.reciprocal %380 {approx = true} : vector<8x1xf32> -> vector<8x1xf32>
    %382 = vector.broadcast %381 : vector<8x1xf32> to vector<8x16xf32>
    %383 = arith.mulf %378, %382 : vector<8x16xf32>
    %384 = arith.addf %362, %383 : vector<8x16xf32>
    %cst_130 = arith.constant dense<0.000000e+00> : vector<8x8xf32>
    %385 = tpu.matmul %383, %369, %cst_130 {dimension_numbers = #tpu.dot_dimension_numbers<[1], [0], [0], [1], [0, 0, 1, 1], [], []>} : vector<8x16xf32>, vector<16x8xf32>, vector<8x8xf32> -> vector<8x8xf32>
    %386 = vector.extract_strided_slice %223 {offsets = [16, 0], sizes = [8, 32], strides = [1, 1]} : vector<32x32xf32> to vector<8x32xf32>
    %cst_131 = arith.constant dense<0.000000e+00> : vector<8x32xf32>
    %387 = tpu.matmul %385, %386, %cst_131 {dimension_numbers = #tpu.dot_dimension_numbers<[1], [0], [0], [1], [0, 0, 1, 1], [], []>} : vector<8x8xf32>, vector<8x32xf32>, vector<8x32xf32> -> vector<8x32xf32>
    %388 = arith.addf %366, %387 : vector<8x32xf32>
    %389 = vector.extract_strided_slice %320 {offsets = [0, 24], sizes = [8, 8], strides = [1, 1]} : vector<8x32xf32> to vector<8x8xf32>
    %390 = vector.extract_strided_slice %321 {offsets = [0, 24], sizes = [16, 8], strides = [1, 1]} : vector<16x32xf32> to vector<16x8xf32>
    %391 = vector.extract_strided_slice %322 {offsets = [0, 24], sizes = [16, 8], strides = [1, 1]} : vector<16x32xf32> to vector<16x8xf32>
    %cst_132 = arith.constant dense<0.000000e+00> : vector<8x16xf32>
    %392 = tpu.matmul %389, %390, %cst_132 {dimension_numbers = #tpu.dot_dimension_numbers<[1], [1], [0], [0], [0, 0, 1, 0], [], []>} : vector<8x8xf32>, vector<16x8xf32>, vector<8x16xf32> -> vector<8x16xf32>
    %cst_133 = arith.constant 0.353553385 : f32
    %393 = vector.broadcast %cst_133 : f32 to vector<8x16xf32>
    %394 = arith.mulf %392, %393 : vector<8x16xf32>
    %395 = arith.addf %394, %324 : vector<8x16xf32>
    %cst_134 = arith.constant dense<0xFF800000> : vector<8xf32>
    %396 = vector.multi_reduction <maximumf>, %395, %cst_134 [1] : vector<8x16xf32> to vector<8xf32>
    %397 = vector.shape_cast %396 : vector<8xf32> to vector<8x1xf32>
    %398 = vector.broadcast %397 : vector<8x1xf32> to vector<8x16xf32>
    %399 = arith.subf %395, %398 : vector<8x16xf32>
    %400 = math.exp %399 : vector<8x16xf32>
    %cst_135 = arith.constant dense<0.000000e+00> : vector<8xf32>
    %401 = vector.multi_reduction <add>, %400, %cst_135 [1] : vector<8x16xf32> to vector<8xf32>
    %402 = vector.shape_cast %401 : vector<8xf32> to vector<8x1xf32>
    %403 = tpu.reciprocal %402 {approx = true} : vector<8x1xf32> -> vector<8x1xf32>
    %404 = vector.broadcast %403 : vector<8x1xf32> to vector<8x16xf32>
    %405 = arith.mulf %400, %404 : vector<8x16xf32>
    %406 = arith.addf %384, %405 : vector<8x16xf32>
    %cst_136 = arith.constant dense<0.000000e+00> : vector<8x8xf32>
    %407 = tpu.matmul %405, %391, %cst_136 {dimension_numbers = #tpu.dot_dimension_numbers<[1], [0], [0], [1], [0, 0, 1, 1], [], []>} : vector<8x16xf32>, vector<16x8xf32>, vector<8x8xf32> -> vector<8x8xf32>
    %408 = vector.extract_strided_slice %223 {offsets = [24, 0], sizes = [8, 32], strides = [1, 1]} : vector<32x32xf32> to vector<8x32xf32>
    %cst_137 = arith.constant dense<0.000000e+00> : vector<8x32xf32>
    %409 = tpu.matmul %407, %408, %cst_137 {dimension_numbers = #tpu.dot_dimension_numbers<[1], [0], [0], [1], [0, 0, 1, 1], [], []>} : vector<8x8xf32>, vector<8x32xf32>, vector<8x32xf32> -> vector<8x32xf32>
    %410 = arith.addf %388, %409 : vector<8x32xf32>
    %cst_138 = arith.constant 2.500000e-01 : f32
    %411 = vector.broadcast %cst_138 : f32 to vector<8x16xf32>
    %412 = arith.mulf %406, %411 : vector<8x16xf32>
    %c1_139 = arith.constant 1 : index
    %c0_140 = arith.constant 0 : index
    %c0_141 = arith.constant 0 : index
    %413 = vector.load %arg26[%c1_139, %c0_140, %c0_141] : memref<2x8x16xf32, #tpu.memory_space<vmem>>, vector<1x8x16xf32>
    %414 = vector.shape_cast %413 : vector<1x8x16xf32> to vector<8x16xf32>
    %415 = vector.shape_cast %412 : vector<8x16xf32> to vector<1x8x16xf32>
    tpu.vector_store %arg26[%c1_139, %c0_140, %c0_141], %415 {strides = array<i32>} : memref<2x8x16xf32, #tpu.memory_space<vmem>>, vector<1x8x16xf32>,
    %416 = tpu.concatenate %314, %410 in 0 : vector<8x32xf32>, vector<8x32xf32> -> vector<16x32xf32>
    %c0_142 = arith.constant 0 : index
    %c0_143 = arith.constant 0 : index
    %417 = vector.load %arg10[%c0_142, %c0_143] : memref<1x32xf32, #tpu.memory_space<vmem>>, vector<1x32xf32>
    %418 = vector.broadcast %417 : vector<1x32xf32> to vector<16x32xf32>
    %419 = arith.addf %416, %418 : vector<16x32xf32>
    %420 = arith.addf %214, %419 : vector<16x32xf32>
    %c0_144 = arith.constant 0 : index
    %c0_145 = arith.constant 0 : index
    %421 = vector.load %arg17[%c0_144, %c0_145] : memref<1x32xf32, #tpu.memory_space<vmem>>, vector<1x32xf32>
    %c0_146 = arith.constant 0 : index
    %c0_147 = arith.constant 0 : index
    %422 = vector.load %arg18[%c0_146, %c0_147] : memref<1x32xf32, #tpu.memory_space<vmem>>, vector<1x32xf32>
    %cst_148 = arith.constant dense<0.000000e+00> : vector<16xf32>
    %423 = vector.multi_reduction <add>, %420, %cst_148 [1] : vector<16x32xf32> to vector<16xf32>
    %424 = vector.shape_cast %423 : vector<16xf32> to vector<16x1xf32>
    %cst_149 = arith.constant 3.200000e+01 : f32
    %425 = vector.broadcast %cst_149 : f32 to vector<16x1xf32>
    %426 = arith.divf %424, %425 : vector<16x1xf32>
    %427 = vector.broadcast %426 : vector<16x1xf32> to vector<16x32xf32>
    %428 = arith.subf %420, %427 : vector<16x32xf32>
    %429 = arith.mulf %428, %428 : vector<16x32xf32>
    %cst_150 = arith.constant dense<0.000000e+00> : vector<16xf32>
    %430 = vector.multi_reduction <add>, %429, %cst_150 [1] : vector<16x32xf32> to vector<16xf32>
    %431 = vector.shape_cast %430 : vector<16xf32> to vector<16x1xf32>
    %cst_151 = arith.constant 3.200000e+01 : f32
    %432 = vector.broadcast %cst_151 : f32 to vector<16x1xf32>
    %433 = arith.divf %431, %432 : vector<16x1xf32>
    %434 = vector.broadcast %426 : vector<16x1xf32> to vector<16x32xf32>
    %435 = arith.subf %420, %434 : vector<16x32xf32>
    %cst_152 = arith.constant 9.99999974E-6 : f32
    %436 = vector.broadcast %cst_152 : f32 to vector<16x1xf32>
    %437 = arith.addf %433, %436 : vector<16x1xf32>
    %438 = math.rsqrt %437 : vector<16x1xf32>
    %439 = vector.broadcast %438 : vector<16x1xf32> to vector<16x32xf32>
    %440 = arith.mulf %435, %439 : vector<16x32xf32>
    %441 = vector.broadcast %421 : vector<1x32xf32> to vector<16x32xf32>
    %442 = arith.mulf %440, %441 : vector<16x32xf32>
    %443 = vector.broadcast %422 : vector<1x32xf32> to vector<16x32xf32>
    %444 = arith.addf %442, %443 : vector<16x32xf32>
    %c0_153 = arith.constant 0 : index
    %c0_154 = arith.constant 0 : index
    %445 = vector.load %arg11[%c0_153, %c0_154] : memref<32x64xf32, #tpu.memory_space<vmem>>, vector<32x64xf32>
    %cst_155 = arith.constant dense<0.000000e+00> : vector<16x64xf32>
    %446 = tpu.matmul %444, %445, %cst_155 {dimension_numbers = #tpu.dot_dimension_numbers<[1], [0], [0], [1], [0, 0, 1, 1], [], []>} : vector<16x32xf32>, vector<32x64xf32>, vector<16x64xf32> -> vector<16x64xf32>
    %c0_156 = arith.constant 0 : index
    %c0_157 = arith.constant 0 : index
    %447 = vector.load %arg12[%c0_156, %c0_157] : memref<1x64xf32, #tpu.memory_space<vmem>>, vector<1x64xf32>
    %448 = vector.broadcast %447 : vector<1x64xf32> to vector<16x64xf32>
    %449 = arith.addf %446, %448 : vector<16x64xf32>
    %cst_158 = arith.constant 0.000000e+00 : f32
    %450 = vector.broadcast %cst_158 : f32 to vector<16x64xf32>
    %451 = arith.maximumf %449, %450 : vector<16x64xf32>
    %c0_159 = arith.constant 0 : index
    %c0_160 = arith.constant 0 : index
    %452 = vector.load %arg13[%c0_159, %c0_160] : memref<64x32xf32, #tpu.memory_space<vmem>>, vector<64x32xf32>
    %cst_161 = arith.constant dense<0.000000e+00> : vector<16x32xf32>
    %453 = tpu.matmul %451, %452, %cst_161 {dimension_numbers = #tpu.dot_dimension_numbers<[1], [0], [0], [1], [0, 0, 1, 1], [], []>} : vector<16x64xf32>, vector<64x32xf32>, vector<16x32xf32> -> vector<16x32xf32>
    %c0_162 = arith.constant 0 : index
    %c0_163 = arith.constant 0 : index
    %454 = vector.load %arg14[%c0_162, %c0_163] : memref<1x32xf32, #tpu.memory_space<vmem>>, vector<1x32xf32>
    %455 = vector.broadcast %454 : vector<1x32xf32> to vector<16x32xf32>
    %456 = arith.addf %453, %455 : vector<16x32xf32>
    %457 = arith.addf %444, %456 : vector<16x32xf32>
    %c0_164 = arith.constant 0 : index
    %c0_165 = arith.constant 0 : index
    %458 = vector.load %arg19[%c0_164, %c0_165] : memref<1x32xf32, #tpu.memory_space<vmem>>, vector<1x32xf32>
    %c0_166 = arith.constant 0 : index
    %c0_167 = arith.constant 0 : index
    %459 = vector.load %arg20[%c0_166, %c0_167] : memref<1x32xf32, #tpu.memory_space<vmem>>, vector<1x32xf32>
    %cst_168 = arith.constant dense<0.000000e+00> : vector<16xf32>
    %460 = vector.multi_reduction <add>, %457, %cst_168 [1] : vector<16x32xf32> to vector<16xf32>
    %461 = vector.shape_cast %460 : vector<16xf32> to vector<16x1xf32>
    %cst_169 = arith.constant 3.200000e+01 : f32
    %462 = vector.broadcast %cst_169 : f32 to vector<16x1xf32>
    %463 = arith.divf %461, %462 : vector<16x1xf32>
    %464 = vector.broadcast %463 : vector<16x1xf32> to vector<16x32xf32>
    %465 = arith.subf %457, %464 : vector<16x32xf32>
    %466 = arith.mulf %465, %465 : vector<16x32xf32>
    %cst_170 = arith.constant dense<0.000000e+00> : vector<16xf32>
    %467 = vector.multi_reduction <add>, %466, %cst_170 [1] : vector<16x32xf32> to vector<16xf32>
    %468 = vector.shape_cast %467 : vector<16xf32> to vector<16x1xf32>
    %cst_171 = arith.constant 3.200000e+01 : f32
    %469 = vector.broadcast %cst_171 : f32 to vector<16x1xf32>
    %470 = arith.divf %468, %469 : vector<16x1xf32>
    %471 = vector.broadcast %463 : vector<16x1xf32> to vector<16x32xf32>
    %472 = arith.subf %457, %471 : vector<16x32xf32>
    %cst_172 = arith.constant 9.99999974E-6 : f32
    %473 = vector.broadcast %cst_172 : f32 to vector<16x1xf32>
    %474 = arith.addf %470, %473 : vector<16x1xf32>
    %475 = math.rsqrt %474 : vector<16x1xf32>
    %476 = vector.broadcast %475 : vector<16x1xf32> to vector<16x32xf32>
    %477 = arith.mulf %472, %476 : vector<16x32xf32>
    %478 = vector.broadcast %458 : vector<1x32xf32> to vector<16x32xf32>
    %479 = arith.mulf %477, %478 : vector<16x32xf32>
    %480 = vector.broadcast %459 : vector<1x32xf32> to vector<16x32xf32>
    %481 = arith.addf %479, %480 : vector<16x32xf32>
    %c0_173 = arith.constant 0 : index
    %c0_174 = arith.constant 0 : index
    %482 = vector.load %arg21[%c0_173, %c0_174] : memref<1x32xf32, #tpu.memory_space<vmem>>, vector<1x32xf32>
    %c0_175 = arith.constant 0 : index
    %c0_176 = arith.constant 0 : index
    %483 = vector.load %arg22[%c0_175, %c0_176] : memref<1x32xf32, #tpu.memory_space<vmem>>, vector<1x32xf32>
    %cst_177 = arith.constant dense<0.000000e+00> : vector<16xf32>
    %484 = vector.multi_reduction <add>, %481, %cst_177 [1] : vector<16x32xf32> to vector<16xf32>
    %485 = vector.shape_cast %484 : vector<16xf32> to vector<16x1xf32>
    %cst_178 = arith.constant 3.200000e+01 : f32
    %486 = vector.broadcast %cst_178 : f32 to vector<16x1xf32>
    %487 = arith.divf %485, %486 : vector<16x1xf32>
    %488 = vector.broadcast %487 : vector<16x1xf32> to vector<16x32xf32>
    %489 = arith.subf %481, %488 : vector<16x32xf32>
    %490 = arith.mulf %489, %489 : vector<16x32xf32>
    %cst_179 = arith.constant dense<0.000000e+00> : vector<16xf32>
    %491 = vector.multi_reduction <add>, %490, %cst_179 [1] : vector<16x32xf32> to vector<16xf32>
    %492 = vector.shape_cast %491 : vector<16xf32> to vector<16x1xf32>
    %cst_180 = arith.constant 3.200000e+01 : f32
    %493 = vector.broadcast %cst_180 : f32 to vector<16x1xf32>
    %494 = arith.divf %492, %493 : vector<16x1xf32>
    %495 = vector.broadcast %487 : vector<16x1xf32> to vector<16x32xf32>
    %496 = arith.subf %481, %495 : vector<16x32xf32>
    %cst_181 = arith.constant 9.99999974E-6 : f32
    %497 = vector.broadcast %cst_181 : f32 to vector<16x1xf32>
    %498 = arith.addf %494, %497 : vector<16x1xf32>
    %499 = math.rsqrt %498 : vector<16x1xf32>
    %500 = vector.broadcast %499 : vector<16x1xf32> to vector<16x32xf32>
    %501 = arith.mulf %496, %500 : vector<16x32xf32>
    %502 = vector.broadcast %482 : vector<1x32xf32> to vector<16x32xf32>
    %503 = arith.mulf %501, %502 : vector<16x32xf32>
    %504 = vector.broadcast %483 : vector<1x32xf32> to vector<16x32xf32>
    %505 = arith.addf %503, %504 : vector<16x32xf32>
    %c0_182 = arith.constant 0 : index
    %c0_183 = arith.constant 0 : index
    %506 = vector.load %arg25[%c0_182, %c0_183] : memref<16x32xf32, #tpu.memory_space<vmem>>, vector<16x32xf32>
    tpu.vector_store %arg25[%c0_182, %c0_183], %505 {strides = array<i32>} : memref<16x32xf32, #tpu.memory_space<vmem>>, vector<16x32xf32>,
    return
  }
  func.func @transform_0(%arg0: i32) -> (i32, i32) {
    %c0_i32 = arith.constant 0 : i32
    %c0_i32_0 = arith.constant 0 : i32
    %c0_i32_1 = arith.constant 0 : i32
    return %c0_i32, %c0_i32_0 : i32, i32
  }
  func.func @transform_1(%arg0: i32) -> (i32, i32) {
    %c0_i32 = arith.constant 0 : i32
    %c0_i32_0 = arith.constant 0 : i32
    %c0_i32_1 = arith.constant 0 : i32
    return %c0_i32, %c0_i32_0 : i32, i32
  }
  func.func @transform_2(%arg0: i32) -> (i32, i32) {
    %c0_i32 = arith.constant 0 : i32
    %c0_i32_0 = arith.constant 0 : i32
    %c0_i32_1 = arith.constant 0 : i32
    return %c0_i32, %c0_i32_0 : i32, i32
  }
  func.func @transform_3(%arg0: i32) -> (i32, i32) {
    %c0_i32 = arith.constant 0 : i32
    %c0_i32_0 = arith.constant 0 : i32
    %c0_i32_1 = arith.constant 0 : i32
    return %c0_i32, %c0_i32_0 : i32, i32
  }
  func.func @transform_4(%arg0: i32) -> (i32, i32) {
    %c0_i32 = arith.constant 0 : i32
    %c0_i32_0 = arith.constant 0 : i32
    %c0_i32_1 = arith.constant 0 : i32
    return %c0_i32, %c0_i32_0 : i32, i32
  }
  func.func @transform_5(%arg0: i32) -> (i32, i32) {
    %c0_i32 = arith.constant 0 : i32
    %c0_i32_0 = arith.constant 0 : i32
    %c0_i32_1 = arith.constant 0 : i32
    return %c0_i32, %c0_i32_0 : i32, i32
  }
  func.func @transform_6(%arg0: i32) -> (i32, i32) {
    %c0_i32 = arith.constant 0 : i32
    %c0_i32_0 = arith.constant 0 : i32
    %c0_i32_1 = arith.constant 0 : i32
    return %c0_i32, %c0_i32_0 : i32, i32
  }
  func.func @transform_7(%arg0: i32) -> (i32, i32) {
    %c0_i32 = arith.constant 0 : i32
    %c0_i32_0 = arith.constant 0 : i32
    %c0_i32_1 = arith.constant 0 : i32
    return %c0_i32, %c0_i32_0 : i32, i32
  }
  func.func @transform_8(%arg0: i32) -> (i32, i32) {
    %c0_i32 = arith.constant 0 : i32
    %c0_i32_0 = arith.constant 0 : i32
    %c0_i32_1 = arith.constant 0 : i32
    return %c0_i32, %c0_i32_0 : i32, i32
  }
  func.func @transform_9(%arg0: i32) -> (i32, i32) {
    %c0_i32 = arith.constant 0 : i32
    %c0_i32_0 = arith.constant 0 : i32
    %c0_i32_1 = arith.constant 0 : i32
    return %c0_i32, %c0_i32_0 : i32, i32
  }
  func.func @transform_10(%arg0: i32) -> (i32, i32) {
    %c0_i32 = arith.constant 0 : i32
    %c0_i32_0 = arith.constant 0 : i32
    %c0_i32_1 = arith.constant 0 : i32
    return %c0_i32, %c0_i32_0 : i32, i32
  }
  func.func @transform_11(%arg0: i32) -> (i32, i32) {
    %c0_i32 = arith.constant 0 : i32
    %c0_i32_0 = arith.constant 0 : i32
    %c0_i32_1 = arith.constant 0 : i32
    return %c0_i32, %c0_i32_0 : i32, i32
  }
  func.func @transform_12(%arg0: i32) -> (i32, i32) {
    %c0_i32 = arith.constant 0 : i32
    %c0_i32_0 = arith.constant 0 : i32
    %c0_i32_1 = arith.constant 0 : i32
    return %c0_i32, %c0_i32_0 : i32, i32
  }
  func.func @transform_13(%arg0: i32) -> (i32, i32) {
    %c0_i32 = arith.constant 0 : i32
    %c0_i32_0 = arith.constant 0 : i32
    %c0_i32_1 = arith.constant 0 : i32
    return %c0_i32, %c0_i32_0 : i32, i32
  }
  func.func @transform_14(%arg0: i32) -> (i32, i32) {
    %c0_i32 = arith.constant 0 : i32
    %c0_i32_0 = arith.constant 0 : i32
    %c0_i32_1 = arith.constant 0 : i32
    return %c0_i32, %c0_i32_0 : i32, i32
  }
  func.func @transform_15(%arg0: i32) -> (i32, i32) {
    %c0_i32 = arith.constant 0 : i32
    %c0_i32_0 = arith.constant 0 : i32
    %c0_i32_1 = arith.constant 0 : i32
    return %c0_i32, %c0_i32_0 : i32, i32
  }
  func.func @transform_16(%arg0: i32) -> (i32, i32) {
    %c0_i32 = arith.constant 0 : i32
    %c0_i32_0 = arith.constant 0 : i32
    %c0_i32_1 = arith.constant 0 : i32
    return %c0_i32, %c0_i32_0 : i32, i32
  }
  func.func @transform_17(%arg0: i32) -> (i32, i32) {
    %c0_i32 = arith.constant 0 : i32
    %c0_i32_0 = arith.constant 0 : i32
    %c0_i32_1 = arith.constant 0 : i32
    return %c0_i32, %c0_i32_0 : i32, i32
  }
  func.func @transform_18(%arg0: i32) -> (i32, i32) {
    %c0_i32 = arith.constant 0 : i32
    %c0_i32_0 = arith.constant 0 : i32
    %c0_i32_1 = arith.constant 0 : i32
    return %c0_i32, %c0_i32_0 : i32, i32
  }
  func.func @transform_19(%arg0: i32) -> (i32, i32) {
    %c0_i32 = arith.constant 0 : i32
    %c0_i32_0 = arith.constant 0 : i32
    %c0_i32_1 = arith.constant 0 : i32
    return %c0_i32, %c0_i32_0 : i32, i32
  }
  func.func @transform_20(%arg0: i32) -> (i32, i32) {
    %c0_i32 = arith.constant 0 : i32
    %c0_i32_0 = arith.constant 0 : i32
    %c0_i32_1 = arith.constant 0 : i32
    return %c0_i32, %c0_i32_0 : i32, i32
  }
  func.func @transform_21(%arg0: i32) -> (i32, i32) {
    %c0_i32 = arith.constant 0 : i32
    %c0_i32_0 = arith.constant 0 : i32
    %c0_i32_1 = arith.constant 0 : i32
    return %c0_i32, %c0_i32_0 : i32, i32
  }
  func.func @transform_22(%arg0: i32) -> (i32, i32, i32) {
    %c0_i32 = arith.constant 0 : i32
    %c0_i32_0 = arith.constant 0 : i32
    %c0_i32_1 = arith.constant 0 : i32
    %c0_i32_2 = arith.constant 0 : i32
    return %c0_i32, %c0_i32_0, %c0_i32_1 : i32, i32, i32
  }
  func.func @transform_23(%arg0: i32) -> (i32, i32, i32) {
    %c0_i32 = arith.constant 0 : i32
    %c0_i32_0 = arith.constant 0 : i32
    %c0_i32_1 = arith.constant 0 : i32
    %c0_i32_2 = arith.constant 0 : i32
    return %c0_i32, %c0_i32_0, %c0_i32_1 : i32, i32, i32
  }
  func.func @transform_24(%arg0: i32) -> (i32, i32) {
    %c0_i32 = arith.constant 0 : i32
    %c0_i32_0 = arith.constant 0 : i32
    %c0_i32_1 = arith.constant 0 : i32
    return %c0_i32, %c0_i32_0 : i32, i32
  }
  func.func @transform_25(%arg0: i32) -> (i32, i32, i32) {
    %c0_i32 = arith.constant 0 : i32
    %c0_i32_0 = arith.constant 0 : i32
    %c0_i32_1 = arith.constant 0 : i32
    %c0_i32_2 = arith.constant 0 : i32
    return %c0_i32, %c0_i32_0, %c0_i32_1 : i32, i32, i32
  }
}

</mosaic_0001>

<llo_original>
// kernel: run.3
$region0: #{run.3}
  #allocation0 [shape = 'u32[]', space=smem, size = 0x4, offset = 0x4, fixed_abs, tag = 'smem constant byte address 0x4 - core index']
  #allocation1 [shape = 'u32[144,128]{1,0:T(1,128)}', space=vmem, size = 0x12000, scoped, tag = 'internal scratch']
  %s0 = inlined_call_operand.vmem [shape: f32[32,32], index: 0, kind: input, shape index: {}]
  %s1 = inlined_call_operand.vmem [shape: f32[32,128], index: 1, kind: input, shape index: {}]
  %s2 = inlined_call_operand.vmem [shape: f32[1,128], index: 2, kind: input, shape index: {}]
  %s3 = inlined_call_operand.vmem [shape: f32[32,128], index: 3, kind: output, shape index: {}]
  %s4 = sld [smem:[#allocation0]]
  $region22: #{run.3} parent=0
    _
  %s6 = ssub.s32 1, %s4
  %s7 = scalar_select 0, %s6, %s4
  // Predicated region
  $region2: #{run.3} parent=0 // pred_check
    _
  $region3: #{run.3} parent=0 // pred_check_branch
    %9 = sbr.rel (0) target = $region5
  $region4: #{run.3} parent=0 // pred_region
    _
  $region5: #{run.3} parent=0 // pred_fallthru
    _
  // Predicated region
  $region6: #{run.3} parent=0 // pred_check
    _
  $region7: #{run.3} parent=0 // pred_check_branch
    %11 = sbr.rel (0) target = $region9
  $region8: #{run.3} parent=0 // pred_region
    _
  $region9: #{run.3} parent=0 // pred_fallthru
    _
  // Predicated region
  $region10: #{run.3} parent=0 // pred_check
    _
  $region11: #{run.3} parent=0 // pred_check_branch
    %13 = sbr.rel (0) target = $region13
  $region12: #{run.3} parent=0 // pred_region
    _
  $region13: #{run.3} parent=0 // pred_fallthru
    _
  %v14 = vld [vmem:[%s0] sm:$0xff]
  %v15 = vld [vmem:[%s0 + $0x8] sm:$0xff]
  %v16 = vld [vmem:[%s0 + $0x10] sm:$0xff]
  %v17 = vld [vmem:[%s0 + $0x18] sm:$0xff]
  %v18 = vld [vmem:[%s1] sm:$0xff]
  %v19 = vld [vmem:[%s1 + $0x8] sm:$0xff]
  %v20 = vld [vmem:[%s1 + $0x10] sm:$0xff]
  %v21 = vld [vmem:[%s1 + $0x18] sm:$0xff]
  %v22 = vld [vmem:[%s2] sm:$0x1]
  %v24 = vlaneseq
  %v25 = vshrl.u32 %v24, 7
  %v26 = vsub.s32 0, %v25
  %v27 = vrot.slane %v22, %v26
  %vm29 = vcmask 261120
  %v31 = vsel %vm29, %v14, 0
  %v34 = vsel %vm29, %v15, 0
  %v37 = vsel %vm29, %v16, 0
  %v40 = vsel %vm29, %v17, 0
  %42 = vmatprep.subr.mxu0 0.0
  %43 = vmatpush1.msra.mxu0 0.0
  %44 = vmatprep.subr.mxu0 0.0
  %45 = vmatpush1.msra.mxu0 0.0
  %46 = vmatprep.subr.mxu0 0.0
  %47 = vmatpush1.msra.mxu0 0.0
  %48 = vmatprep.subr.mxu0 0.0
  %49 = vmatpush1.msra.mxu0 0.0
  %50 = vmatprep.subr.mxu0 0.0
  %51 = vmatpush1.msra.mxu0 0.0
  %52 = vmatprep.subr.mxu0 0.0
  %53 = vmatpush1.msra.mxu0 0.0
  %54 = vmatprep.subr.mxu0 0.0
  %55 = vmatpush1.msra.mxu0 0.0
  %56 = vmatprep.subr.mxu0 0.0
  %57 = vmatpush1.msra.mxu0 0.0
  %58 = vmatprep.subr.mxu0 0.0
  %59 = vmatpush1.msra.mxu0 0.0
  %60 = vmatprep.subr.mxu0 0.0
  %61 = vmatpush1.msra.mxu0 0.0
  %62 = vmatprep.subr.mxu0 0.0
  %63 = vmatpush1.msra.mxu0 0.0
  %64 = vmatprep.subr.mxu0 0.0
  %65 = vmatpush1.msra.mxu0 0.0
  %66 = vmatprep.subr.mxu0 0.0
  %67 = vmatpush1.msra.mxu0 %v21
  %68 = vmatprep.subr.mxu0 0.0
  %69 = vmatpush1.msra.mxu0 %v20
  %70 = vmatprep.subr.mxu0 0.0
  %71 = vmatpush1.msra.mxu0 %v19
  %72 = vmatprep.subr.mxu0 0.0
  %73 = vmatpush1.msra.mxu0 %v18
  %74 = vmatprep.subr.mxu0 0.0
  %75 = vmatpush2.msra.mxu0 0.0
  %76 = vmatprep.subr.mxu0 0.0
  %77 = vmatpush2.msra.mxu0 0.0
  %78 = vmatprep.subr.mxu0 0.0
  %79 = vmatpush2.msra.mxu0 0.0
  %80 = vmatprep.subr.mxu0 0.0
  %81 = vmatpush2.msra.mxu0 0.0
  %82 = vmatprep.subr.mxu0 0.0
  %83 = vmatpush2.msra.mxu0 0.0
  %84 = vmatprep.subr.mxu0 0.0
  %85 = vmatpush2.msra.mxu0 0.0
  %86 = vmatprep.subr.mxu0 0.0
  %87 = vmatpush2.msra.mxu0 0.0
  %88 = vmatprep.subr.mxu0 0.0
  %89 = vmatpush2.msra.mxu0 0.0
  %90 = vmatprep.subr.mxu0 0.0
  %91 = vmatpush2.msra.mxu0 0.0
  %92 = vmatprep.subr.mxu0 0.0
  %93 = vmatpush2.msra.mxu0 0.0
  %94 = vmatprep.subr.mxu0 0.0
  %95 = vmatpush2.msra.mxu0 0.0
  %96 = vmatprep.subr.mxu0 0.0
  %97 = vmatpush2.msra.mxu0 0.0
  %98 = vmatprep.subr.mxu0 0.0
  %99 = vmatpush2.msra.mxu0 0.0
  %100 = vmatprep.subr.mxu0 0.0
  %101 = vmatpush2.msra.mxu0 0.0
  %102 = vmatprep.subr.mxu0 0.0
  %103 = vmatpush2.msra.mxu0 0.0
  %104 = vmatprep.subr.mxu0 0.0
  %105 = vmatpush2.msra.mxu0 0.0
  %106 = vmatprep.mubr.f32.mxu0 0.0
  %107 = vmatmul.mubr.f32.gmra.mxu0 %v31
  %v108 = vpop.f32.mrf.mxu0
  %v109 = vadd.f32 %v27, %v108
  %v110 = vpop.f32.mrf.mxu0
  %111 = vmatprep.mubr.f32.mxu0 0.0
  %112 = vmatmul.mubr.f32.gmra.mxu0 %v34
  %v113 = vpop.f32.mrf.mxu0
  %v114 = vadd.f32 %v27, %v113
  %v115 = vpop.f32.mrf.mxu0
  %116 = vmatprep.mubr.f32.mxu0 0.0
  %117 = vmatmul.mubr.f32.gmra.mxu0 %v37
  %v118 = vpop.f32.mrf.mxu0
  %v119 = vadd.f32 %v27, %v118
  %v120 = vpop.f32.mrf.mxu0
  %121 = vmatprep.mubr.f32.mxu0 0.0
  %122 = vmatmul.mubr.f32.gmra.mxu0 %v40
  %v123 = vpop.f32.mrf.mxu0
  %v124 = vadd.f32 %v27, %v123
  %v125 = vpop.f32.mrf.mxu0
  %126 = vdwg.mxu0
  %127 = vst [vmem:[%s3] sm:$0xff] %v109
  %128 = vst [vmem:[%s3 + $0x8] sm:$0xff] %v114
  %129 = vst [vmem:[%s3 + $0x10] sm:$0xff] %v119
  %130 = vst [vmem:[%s3 + $0x18] sm:$0xff] %v124
  // Predicated region
  $region14: #{run.3} parent=0 // pred_check
    _
  $region15: #{run.3} parent=0 // pred_check_branch
    %132 = sbr.rel (0) target = $region17
  $region16: #{run.3} parent=0 // pred_region
    _
  $region17: #{run.3} parent=0 // pred_fallthru
    _
  // Predicated region
  $region18: #{run.3} parent=0 // pred_check
    _
  $region19: #{run.3} parent=0 // pred_check_branch
    %134 = sbr.rel (0) target = $region21
  $region20: #{run.3} parent=0 // pred_region
    _
  $region21: #{run.3} parent=0 // pred_fallthru
    _

// kernel: run.4
$region0: #{run.4}
  #allocation0 [shape = 'u32[]', space=smem, size = 0x4, offset = 0x4, fixed_abs, tag = 'smem constant byte address 0x4 - core index']
  #allocation1 [shape = 'u32[144,128]{1,0:T(1,128)}', space=vmem, size = 0x12000, scoped, tag = 'internal scratch']
  %s0 = inlined_call_operand.vmem [shape: f32[16,32], index: 0, kind: input, shape index: {}]
  %s1 = inlined_call_operand.vmem [shape: f32[32,128], index: 1, kind: input, shape index: {}]
  %s2 = inlined_call_operand.vmem [shape: f32[32,96], index: 2, kind: input, shape index: {}]
  %s3 = inlined_call_operand.vmem [shape: f32[1,96], index: 3, kind: input, shape index: {}]
  %s4 = inlined_call_operand.vmem [shape: f32[32,32], index: 4, kind: input, shape index: {}]
  %s5 = inlined_call_operand.vmem [shape: f32[1,32], index: 5, kind: input, shape index: {}]
  %s6 = inlined_call_operand.vmem [shape: f32[32,32], index: 6, kind: input, shape index: {}]
  %s7 = inlined_call_operand.vmem [shape: f32[1,32], index: 7, kind: input, shape index: {}]
  %s8 = inlined_call_operand.vmem [shape: f32[32,32], index: 8, kind: input, shape index: {}]
  %s9 = inlined_call_operand.vmem [shape: f32[1,32], index: 9, kind: input, shape index: {}]
  %s10 = inlined_call_operand.vmem [shape: f32[32,64], index: 10, kind: input, shape index: {}]
  %s11 = inlined_call_operand.vmem [shape: f32[1,64], index: 11, kind: input, shape index: {}]
  %s12 = inlined_call_operand.vmem [shape: f32[64,32], index: 12, kind: input, shape index: {}]
  %s13 = inlined_call_operand.vmem [shape: f32[1,32], index: 13, kind: input, shape index: {}]
  %s14 = inlined_call_operand.vmem [shape: f32[1,32], index: 14, kind: input, shape index: {}]
  %s15 = inlined_call_operand.vmem [shape: f32[1,32], index: 15, kind: input, shape index: {}]
  %s16 = inlined_call_operand.vmem [shape: f32[1,32], index: 16, kind: input, shape index: {}]
  %s17 = inlined_call_operand.vmem [shape: f32[1,32], index: 17, kind: input, shape index: {}]
  %s18 = inlined_call_operand.vmem [shape: f32[1,32], index: 18, kind: input, shape index: {}]
  %s19 = inlined_call_operand.vmem [shape: f32[1,32], index: 19, kind: input, shape index: {}]
  %s20 = inlined_call_operand.vmem [shape: f32[1,32], index: 20, kind: input, shape index: {}]
  %s21 = inlined_call_operand.vmem [shape: f32[1,32], index: 21, kind: input, shape index: {}]
  %s22 = inlined_call_operand.vmem [shape: f32[2,8,8], index: 22, kind: input, shape index: {}]
  %s23 = inlined_call_operand.vmem [shape: f32[2,8,16], index: 23, kind: input, shape index: {}]
  %s24 = inlined_call_operand.vmem [shape: f32[16,32], index: 24, kind: output, shape index: {}]
  %s25 = sld [smem:[#allocation0]]
  $region106: #{run.4} parent=0
    _
  %s27 = ssub.s32 1, %s25
  %s28 = scalar_select 0, %s27, %s25
  // Predicated region
  $region2: #{run.4} parent=0 // pred_check
    _
  $region3: #{run.4} parent=0 // pred_check_branch
    %30 = sbr.rel (0) target = $region5
  $region4: #{run.4} parent=0 // pred_region
    _
  $region5: #{run.4} parent=0 // pred_fallthru
    _
  // Predicated region
  $region6: #{run.4} parent=0 // pred_check
    _
  $region7: #{run.4} parent=0 // pred_check_branch
    %32 = sbr.rel (0) target = $region9
  $region8: #{run.4} parent=0 // pred_region
    _
  $region9: #{run.4} parent=0 // pred_fallthru
    _
  // Predicated region
  $region10: #{run.4} parent=0 // pred_check
    _
  $region11: #{run.4} parent=0 // pred_check_branch
    %34 = sbr.rel (0) target = $region13
  $region12: #{run.4} parent=0 // pred_region
    _
  $region13: #{run.4} parent=0 // pred_fallthru
    _
  // Predicated region
  $region14: #{run.4} parent=0 // pred_check
    _
  $region15: #{run.4} parent=0 // pred_check_branch
    %36 = sbr.rel (0) target = $region17
  $region16: #{run.4} parent=0 // pred_region
    _
  $region17: #{run.4} parent=0 // pred_fallthru
    _
  // Predicated region
  $region18: #{run.4} parent=0 // pred_check
    _
  $region19: #{run.4} parent=0 // pred_check_branch
    %38 = sbr.rel (0) target = $region21
  $region20: #{run.4} parent=0 // pred_region
    _
  $region21: #{run.4} parent=0 // pred_fallthru
    _
  // Predicated region
  $region22: #{run.4} parent=0 // pred_check
    _
  $region23: #{run.4} parent=0 // pred_check_branch
    %40 = sbr.rel (0) target = $region25
  $region24: #{run.4} parent=0 // pred_region
    _
  $region25: #{run.4} parent=0 // pred_fallthru
    _
  // Predicated region
  $region26: #{run.4} parent=0 // pred_check
    _
  $region27: #{run.4} parent=0 // pred_check_branch
    %42 = sbr.rel (0) target = $region29
  $region28: #{run.4} parent=0 // pred_region
    _
  $region29: #{run.4} parent=0 // pred_fallthru
    _
  // Predicated region
  $region30: #{run.4} parent=0 // pred_check
    _
  $region31: #{run.4} parent=0 // pred_check_branch
    %44 = sbr.rel (0) target = $region33
  $region32: #{run.4} parent=0 // pred_region
    _
  $region33: #{run.4} parent=0 // pred_fallthru
    _
  // Predicated region
  $region34: #{run.4} parent=0 // pred_check
    _
  $region35: #{run.4} parent=0 // pred_check_branch
    %46 = sbr.rel (0) target = $region37
  $region36: #{run.4} parent=0 // pred_region
    _
  $region37: #{run.4} parent=0 // pred_fallthru
    _
  // Predicated region
  $region38: #{run.4} parent=0 // pred_check
    _
  $region39: #{run.4} parent=0 // pred_check_branch
    %48 = sbr.rel (0) target = $region41
  $region40: #{run.4} parent=0 // pred_region
    _
  $region41: #{run.4} parent=0 // pred_fallthru
    _
  // Predicated region
  $region42: #{run.4} parent=0 // pred_check
    _
  $region43: #{run.4} parent=0 // pred_check_branch
    %50 = sbr.rel (0) target = $region45
  $region44: #{run.4} parent=0 // pred_region
    _
  $region45: #{run.4} parent=0 // pred_fallthru
    _
  // Predicated region
  $region46: #{run.4} parent=0 // pred_check
    _
  $region47: #{run.4} parent=0 // pred_check_branch
    %52 = sbr.rel (0) target = $region49
  $region48: #{run.4} parent=0 // pred_region
    _
  $region49: #{run.4} parent=0 // pred_fallthru
    _
  // Predicated region
  $region50: #{run.4} parent=0 // pred_check
    _
  $region51: #{run.4} parent=0 // pred_check_branch
    %54 = sbr.rel (0) target = $region53
  $region52: #{run.4} parent=0 // pred_region
    _
  $region53: #{run.4} parent=0 // pred_fallthru
    _
  // Predicated region
  $region54: #{run.4} parent=0 // pred_check
    _
  $region55: #{run.4} parent=0 // pred_check_branch
    %56 = sbr.rel (0) target = $region57
  $region56: #{run.4} parent=0 // pred_region
    _
  $region57: #{run.4} parent=0 // pred_fallthru
    _
  // Predicated region
  $region58: #{run.4} parent=0 // pred_check
    _
  $region59: #{run.4} parent=0 // pred_check_branch
    %58 = sbr.rel (0) target = $region61
  $region60: #{run.4} parent=0 // pred_region
    _
  $region61: #{run.4} parent=0 // pred_fallthru
    _
  // Predicated region
  $region62: #{run.4} parent=0 // pred_check
    _
  $region63: #{run.4} parent=0 // pred_check_branch
    %60 = sbr.rel (0) target = $region65
  $region64: #{run.4} parent=0 // pred_region
    _
  $region65: #{run.4} parent=0 // pred_fallthru
    _
  // Predicated region
  $region66: #{run.4} parent=0 // pred_check
    _
  $region67: #{run.4} parent=0 // pred_check_branch
    %62 = sbr.rel (0) target = $region69
  $region68: #{run.4} parent=0 // pred_region
    _
  $region69: #{run.4} parent=0 // pred_fallthru
    _
  // Predicated region
  $region70: #{run.4} parent=0 // pred_check
    _
  $region71: #{run.4} parent=0 // pred_check_branch
    %64 = sbr.rel (0) target = $region73
  $region72: #{run.4} parent=0 // pred_region
    _
  $region73: #{run.4} parent=0 // pred_fallthru
    _
  // Predicated region
  $region74: #{run.4} parent=0 // pred_check
    _
  $region75: #{run.4} parent=0 // pred_check_branch
    %66 = sbr.rel (0) target = $region77
  $region76: #{run.4} parent=0 // pred_region
    _
  $region77: #{run.4} parent=0 // pred_fallthru
    _
  // Predicated region
  $region78: #{run.4} parent=0 // pred_check
    _
  $region79: #{run.4} parent=0 // pred_check_branch
    %68 = sbr.rel (0) target = $region81
  $region80: #{run.4} parent=0 // pred_region
    _
  $region81: #{run.4} parent=0 // pred_fallthru
    _
  // Predicated region
  $region82: #{run.4} parent=0 // pred_check
    _
  $region83: #{run.4} parent=0 // pred_check_branch
    %70 = sbr.rel (0) target = $region85
  $region84: #{run.4} parent=0 // pred_region
    _
  $region85: #{run.4} parent=0 // pred_fallthru
    _
  // Predicated region
  $region86: #{run.4} parent=0 // pred_check
    _
  $region87: #{run.4} parent=0 // pred_check_branch
    %72 = sbr.rel (0) target = $region89
  $region88: #{run.4} parent=0 // pred_region
    _
  $region89: #{run.4} parent=0 // pred_fallthru
    _
  // Predicated region
  $region90: #{run.4} parent=0 // pred_check
    _
  $region91: #{run.4} parent=0 // pred_check_branch
    %74 = sbr.rel (0) target = $region93
  $region92: #{run.4} parent=0 // pred_region
    _
  $region93: #{run.4} parent=0 // pred_fallthru
    _
  // Predicated region
  $region94: #{run.4} parent=0 // pred_check
    _
  $region95: #{run.4} parent=0 // pred_check_branch
    %76 = sbr.rel (0) target = $region97
  $region96: #{run.4} parent=0 // pred_region
    _
  $region97: #{run.4} parent=0 // pred_fallthru
    _
  %v77 = vld [vmem:[%s0] sm:$0xff]
  %v78 = vld [vmem:[%s0 + $0x8] sm:$0xff]
  %v79 = vld [vmem:[%s2] sm:$0xff]
  %v80 = vld [vmem:[%s2 + $0x8] sm:$0xff]
  %v81 = vld [vmem:[%s2 + $0x10] sm:$0xff]
  %v82 = vld [vmem:[%s2 + $0x18] sm:$0xff]
  %v83 = vld [vmem:[%s3] sm:$0x1]
  %v85 = vlaneseq
  %v86 = vshrl.u32 %v85, 7
  %v87 = vsub.s32 0, %v86
  %v88 = vrot.slane %v83, %v87
  %vm90 = vcmask 261120
  %v92 = vsel %vm90, %v77, 0
  %v95 = vsel %vm90, %v78, 0
  %97 = vmatprep.subr.mxu0 0.0
  %98 = vmatpush1.msra.mxu0 0.0
  %99 = vmatprep.subr.mxu0 0.0
  %100 = vmatpush1.msra.mxu0 0.0
  %101 = vmatprep.subr.mxu0 0.0
  %102 = vmatpush1.msra.mxu0 0.0
  %103 = vmatprep.subr.mxu0 0.0
  %104 = vmatpush1.msra.mxu0 0.0
  %105 = vmatprep.subr.mxu0 0.0
  %106 = vmatpush1.msra.mxu0 0.0
  %107 = vmatprep.subr.mxu0 0.0
  %108 = vmatpush1.msra.mxu0 0.0
  %109 = vmatprep.subr.mxu0 0.0
  %110 = vmatpush1.msra.mxu0 0.0
  %111 = vmatprep.subr.mxu0 0.0
  %112 = vmatpush1.msra.mxu0 0.0
  %113 = vmatprep.subr.mxu0 0.0
  %114 = vmatpush1.msra.mxu0 0.0
  %115 = vmatprep.subr.mxu0 0.0
  %116 = vmatpush1.msra.mxu0 0.0
  %117 = vmatprep.subr.mxu0 0.0
  %118 = vmatpush1.msra.mxu0 0.0
  %119 = vmatprep.subr.mxu0 0.0
  %120 = vmatpush1.msra.mxu0 0.0
  %121 = vmatprep.subr.mxu0 0.0
  %122 = vmatpush1.msra.mxu0 %v82
  %123 = vmatprep.subr.mxu0 0.0
  %124 = vmatpush1.msra.mxu0 %v81
  %125 = vmatprep.subr.mxu0 0.0
  %126 = vmatpush1.msra.mxu0 %v80
  %127 = vmatprep.subr.mxu0 0.0
  %128 = vmatpush1.msra.mxu0 %v79
  %129 = vmatprep.subr.mxu0 0.0
  %130 = vmatpush2.msra.mxu0 0.0
  %131 = vmatprep.subr.mxu0 0.0
  %132 = vmatpush2.msra.mxu0 0.0
  %133 = vmatprep.subr.mxu0 0.0
  %134 = vmatpush2.msra.mxu0 0.0
  %135 = vmatprep.subr.mxu0 0.0
  %136 = vmatpush2.msra.mxu0 0.0
  %137 = vmatprep.subr.mxu0 0.0
  %138 = vmatpush2.msra.mxu0 0.0
  %139 = vmatprep.subr.mxu0 0.0
  %140 = vmatpush2.msra.mxu0 0.0
  %141 = vmatprep.subr.mxu0 0.0
  %142 = vmatpush2.msra.mxu0 0.0
  %143 = vmatprep.subr.mxu0 0.0
  %144 = vmatpush2.msra.mxu0 0.0
  %145 = vmatprep.subr.mxu0 0.0
  %146 = vmatpush2.msra.mxu0 0.0
  %147 = vmatprep.subr.mxu0 0.0
  %148 = vmatpush2.msra.mxu0 0.0
  %149 = vmatprep.subr.mxu0 0.0
  %150 = vmatpush2.msra.mxu0 0.0
  %151 = vmatprep.subr.mxu0 0.0
  %152 = vmatpush2.msra.mxu0 0.0
  %153 = vmatprep.subr.mxu0 0.0
  %154 = vmatpush2.msra.mxu0 0.0
  %155 = vmatprep.subr.mxu0 0.0
  %156 = vmatpush2.msra.mxu0 0.0
  %157 = vmatprep.subr.mxu0 0.0
  %158 = vmatpush2.msra.mxu0 0.0
  %159 = vmatprep.subr.mxu0 0.0
  %160 = vmatpush2.msra.mxu0 0.0
  %161 = vmatprep.mubr.f32.mxu0 0.0
  %162 = vmatmul.mubr.f32.gmra.mxu0 %v92
  %v163 = vpop.f32.mrf.mxu0
  %v164 = vadd.f32 %v88, %v163
  %v165 = vpop.f32.mrf.mxu0
  %166 = vmatprep.mubr.f32.mxu0 0.0
  %167 = vmatmul.mubr.f32.gmra.mxu0 %v95
  %v168 = vpop.f32.mrf.mxu0
  %v169 = vadd.f32 %v88, %v168
  %v170 = vpop.f32.mrf.mxu0
  %171 = vdwg.mxu0
  %v172 = vld [vmem:[%s4] sm:$0xff]
  %v173 = vld [vmem:[%s4 + $0x8] sm:$0xff]
  %v174 = vld [vmem:[%s4 + $0x10] sm:$0xff]
  %v175 = vld [vmem:[%s4 + $0x18] sm:$0xff]
  %v176 = vld [vmem:[%s22] sm:$0xff]
  %178 = vrot.lane.b32.xlu0 %v164, 96
  %v179 = vpop.permute.xlu0 %178
  %vm180 = vcmask 64512
  %v181 = vsel %vm180, %v164, 0
  %v183 = vsel %vm180, %v179, 0
  %185 = vmatprep.subr.mxu0 0.0
  %186 = vmatpush1.xpose.msra.mxu0 0.0
  %187 = vmatprep.subr.mxu0 0.0
  %188 = vmatpush1.xpose.msra.mxu0 0.0
  %189 = vmatprep.subr.mxu0 0.0
  %190 = vmatpush1.xpose.msra.mxu0 0.0
  %191 = vmatprep.subr.mxu0 0.0
  %192 = vmatpush1.xpose.msra.mxu0 0.0
  %193 = vmatprep.subr.mxu0 0.0
  %194 = vmatpush1.xpose.msra.mxu0 0.0
  %195 = vmatprep.subr.mxu0 0.0
  %196 = vmatpush1.xpose.msra.mxu0 0.0
  %197 = vmatprep.subr.mxu0 0.0
  %198 = vmatpush1.xpose.msra.mxu0 0.0
  %199 = vmatprep.subr.mxu0 0.0
  %200 = vmatpush1.xpose.msra.mxu0 0.0
  %201 = vmatprep.subr.mxu0 0.0
  %202 = vmatpush1.xpose.msra.mxu0 0.0
  %203 = vmatprep.subr.mxu0 0.0
  %204 = vmatpush1.xpose.msra.mxu0 0.0
  %205 = vmatprep.subr.mxu0 0.0
  %206 = vmatpush1.xpose.msra.mxu0 0.0
  %207 = vmatprep.subr.mxu0 0.0
  %208 = vmatpush1.xpose.msra.mxu0 0.0
  %209 = vmatprep.subr.mxu0 0.0
  %210 = vmatpush1.xpose.msra.mxu0 0.0
  %211 = vmatprep.subr.mxu0 0.0
  %212 = vmatpush1.xpose.msra.mxu0 0.0
  %213 = vmatprep.subr.mxu0 0.0
  %214 = vmatpush1.xpose.msra.mxu0 0.0
  %215 = vmatprep.subr.mxu0 0.0
  %216 = vmatpush1.xpose.msra.mxu0 %v183
  %217 = vmatprep.subr.mxu0 0.0
  %218 = vmatpush2.xpose.msra.mxu0 0.0
  %219 = vmatprep.subr.mxu0 0.0
  %220 = vmatpush2.xpose.msra.mxu0 0.0
  %221 = vmatprep.subr.mxu0 0.0
  %222 = vmatpush2.xpose.msra.mxu0 0.0
  %223 = vmatprep.subr.mxu0 0.0
  %224 = vmatpush2.xpose.msra.mxu0 0.0
  %225 = vmatprep.subr.mxu0 0.0
  %226 = vmatpush2.xpose.msra.mxu0 0.0
  %227 = vmatprep.subr.mxu0 0.0
  %228 = vmatpush2.xpose.msra.mxu0 0.0
  %229 = vmatprep.subr.mxu0 0.0
  %230 = vmatpush2.xpose.msra.mxu0 0.0
  %231 = vmatprep.subr.mxu0 0.0
  %232 = vmatpush2.xpose.msra.mxu0 0.0
  %233 = vmatprep.subr.mxu0 0.0
  %234 = vmatpush2.xpose.msra.mxu0 0.0
  %235 = vmatprep.subr.mxu0 0.0
  %236 = vmatpush2.xpose.msra.mxu0 0.0
  %237 = vmatprep.subr.mxu0 0.0
  %238 = vmatpush2.xpose.msra.mxu0 0.0
  %239 = vmatprep.subr.mxu0 0.0
  %240 = vmatpush2.xpose.msra.mxu0 0.0
  %241 = vmatprep.subr.mxu0 0.0
  %242 = vmatpush2.xpose.msra.mxu0 0.0
  %243 = vmatprep.subr.mxu0 0.0
  %244 = vmatpush2.xpose.msra.mxu0 0.0
  %245 = vmatprep.subr.mxu0 0.0
  %246 = vmatpush2.xpose.msra.mxu0 0.0
  %247 = vmatprep.subr.mxu0 0.0
  %248 = vmatpush2.xpose.msra.mxu0 0.0
  %249 = vmatprep.mubr.f32.mxu0 0.0
  %250 = vmatmul.mubr.f32.gmra.mxu0 %v181
  %v251 = vpop.f32.mrf.mxu0
  %v252 = vadd.f32 0.0, %v251
  %v253 = vpop.f32.mrf.mxu0
  %254 = vdwg.mxu0
  %v255 = vmul.f32 %v252, 0.35355338
  %v256 = vadd.f32 %v255, %v176
  %v257 = vsel %vm180, %v256, -inf
  %258 = vmax.xlane.f32.xlu0 %v257
  %v259 = vpop.xlane.xlu0 %258
  %v260 = vsub.f32 %v256, %v259
  %v261 = vmul.f32 %v260, 1.442695
  %v262 = vpow.pop %v261
  %v263 = vsel %vm180, %v262, 0.0
  %264 = vadd.xlane.f32.xlu0 %v263
  %v265 = vpop.xlane.xlu0 %264
  %v266 = vrcp.pop %v265
  %v267 = vmul.f32 %v262, %v266
  %268 = vrot.lane.b32.xlu0 %v164, 64
  %v269 = vpop.permute.xlu0 %268
  %v272 = vsel %vm180, %v267, 0
  %274 = vmatprep.subr.mxu0 0.0
  %275 = vmatpush1.msra.mxu0 0.0
  %276 = vmatprep.subr.mxu0 0.0
  %277 = vmatpush1.msra.mxu0 0.0
  %278 = vmatprep.subr.mxu0 0.0
  %279 = vmatpush1.msra.mxu0 0.0
  %280 = vmatprep.subr.mxu0 0.0
  %281 = vmatpush1.msra.mxu0 0.0
  %282 = vmatprep.subr.mxu0 0.0
  %283 = vmatpush1.msra.mxu0 0.0
  %284 = vmatprep.subr.mxu0 0.0
  %285 = vmatpush1.msra.mxu0 0.0
  %286 = vmatprep.subr.mxu0 0.0
  %287 = vmatpush1.msra.mxu0 0.0
  %288 = vmatprep.subr.mxu0 0.0
  %289 = vmatpush1.msra.mxu0 0.0
  %290 = vmatprep.subr.mxu0 0.0
  %291 = vmatpush1.msra.mxu0 0.0
  %292 = vmatprep.subr.mxu0 0.0
  %293 = vmatpush1.msra.mxu0 0.0
  %294 = vmatprep.subr.mxu0 0.0
  %295 = vmatpush1.msra.mxu0 0.0
  %296 = vmatprep.subr.mxu0 0.0
  %297 = vmatpush1.msra.mxu0 0.0
  %298 = vmatprep.subr.mxu0 0.0
  %299 = vmatpush1.msra.mxu0 0.0
  %300 = vmatprep.subr.mxu0 0.0
  %301 = vmatpush1.msra.mxu0 0.0
  %302 = vmatprep.subr.mxu0 0.0
  %303 = vmatpush1.msra.mxu0 0.0
  %304 = vmatprep.subr.mxu0 0.0
  %305 = vmatpush1.msra.mxu0 %v269
  %306 = vmatprep.subr.mxu0 0.0
  %307 = vmatpush2.msra.mxu0 0.0
  %308 = vmatprep.subr.mxu0 0.0
  %309 = vmatpush2.msra.mxu0 0.0
  %310 = vmatprep.subr.mxu0 0.0
  %311 = vmatpush2.msra.mxu0 0.0
  %312 = vmatprep.subr.mxu0 0.0
  %313 = vmatpush2.msra.mxu0 0.0
  %314 = vmatprep.subr.mxu0 0.0
  %315 = vmatpush2.msra.mxu0 0.0
  %316 = vmatprep.subr.mxu0 0.0
  %317 = vmatpush2.msra.mxu0 0.0
  %318 = vmatprep.subr.mxu0 0.0
  %319 = vmatpush2.msra.mxu0 0.0
  %320 = vmatprep.subr.mxu0 0.0
  %321 = vmatpush2.msra.mxu0 0.0
  %322 = vmatprep.subr.mxu0 0.0
  %323 = vmatpush2.msra.mxu0 0.0
  %324 = vmatprep.subr.mxu0 0.0
  %325 = vmatpush2.msra.mxu0 0.0
  %326 = vmatprep.subr.mxu0 0.0
  %327 = vmatpush2.msra.mxu0 0.0
  %328 = vmatprep.subr.mxu0 0.0
  %329 = vmatpush2.msra.mxu0 0.0
  %330 = vmatprep.subr.mxu0 0.0
  %331 = vmatpush2.msra.mxu0 0.0
  %332 = vmatprep.subr.mxu0 0.0
  %333 = vmatpush2.msra.mxu0 0.0
  %334 = vmatprep.subr.mxu0 0.0
  %335 = vmatpush2.msra.mxu0 0.0
  %336 = vmatprep.subr.mxu0 0.0
  %337 = vmatpush2.msra.mxu0 0.0
  %338 = vmatprep.mubr.f32.mxu0 0.0
  %339 = vmatmul.mubr.f32.gmra.mxu0 %v272
  %v340 = vpop.f32.mrf.mxu0
  %v341 = vadd.f32 0.0, %v340
  %v342 = vpop.f32.mrf.mxu0
  %343 = vdwg.mxu0
  %344 = vrot.lane.b32.xlu0 %v164, 120
  %v345 = vpop.permute.xlu0 %344
  %346 = vrot.lane.b32.xlu0 %v164, 88
  %v347 = vpop.permute.xlu0 %346
  %v348 = vsel %vm180, %v345, 0
  %v350 = vsel %vm180, %v347, 0
  %352 = vmatprep.subr.mxu0 0.0
  %353 = vmatpush1.xpose.msra.mxu0 0.0
  %354 = vmatprep.subr.mxu0 0.0
  %355 = vmatpush1.xpose.msra.mxu0 0.0
  %356 = vmatprep.subr.mxu0 0.0
  %357 = vmatpush1.xpose.msra.mxu0 0.0
  %358 = vmatprep.subr.mxu0 0.0
  %359 = vmatpush1.xpose.msra.mxu0 0.0
  %360 = vmatprep.subr.mxu0 0.0
  %361 = vmatpush1.xpose.msra.mxu0 0.0
  %362 = vmatprep.subr.mxu0 0.0
  %363 = vmatpush1.xpose.msra.mxu0 0.0
  %364 = vmatprep.subr.mxu0 0.0
  %365 = vmatpush1.xpose.msra.mxu0 0.0
  %366 = vmatprep.subr.mxu0 0.0
  %367 = vmatpush1.xpose.msra.mxu0 0.0
  %368 = vmatprep.subr.mxu0 0.0
  %369 = vmatpush1.xpose.msra.mxu0 0.0
  %370 = vmatprep.subr.mxu0 0.0
  %371 = vmatpush1.xpose.msra.mxu0 0.0
  %372 = vmatprep.subr.mxu0 0.0
  %373 = vmatpush1.xpose.msra.mxu0 0.0
  %374 = vmatprep.subr.mxu0 0.0
  %375 = vmatpush1.xpose.msra.mxu0 0.0
  %376 = vmatprep.subr.mxu0 0.0
  %377 = vmatpush1.xpose.msra.mxu0 0.0
  %378 = vmatprep.subr.mxu0 0.0
  %379 = vmatpush1.xpose.msra.mxu0 0.0
  %380 = vmatprep.subr.mxu0 0.0
  %381 = vmatpush1.xpose.msra.mxu0 0.0
  %382 = vmatprep.subr.mxu0 0.0
  %383 = vmatpush1.xpose.msra.mxu0 %v350
  %384 = vmatprep.subr.mxu0 0.0
  %385 = vmatpush2.xpose.msra.mxu0 0.0
  %386 = vmatprep.subr.mxu0 0.0
  %387 = vmatpush2.xpose.msra.mxu0 0.0
  %388 = vmatprep.subr.mxu0 0.0
  %389 = vmatpush2.xpose.msra.mxu0 0.0
  %390 = vmatprep.subr.mxu0 0.0
  %391 = vmatpush2.xpose.msra.mxu0 0.0
  %392 = vmatprep.subr.mxu0 0.0
  %393 = vmatpush2.xpose.msra.mxu0 0.0
  %394 = vmatprep.subr.mxu0 0.0
  %395 = vmatpush2.xpose.msra.mxu0 0.0
  %396 = vmatprep.subr.mxu0 0.0
  %397 = vmatpush2.xpose.msra.mxu0 0.0
  %398 = vmatprep.subr.mxu0 0.0
  %399 = vmatpush2.xpose.msra.mxu0 0.0
  %400 = vmatprep.subr.mxu0 0.0
  %401 = vmatpush2.xpose.msra.mxu0 0.0
  %402 = vmatprep.subr.mxu0 0.0
  %403 = vmatpush2.xpose.msra.mxu0 0.0
  %404 = vmatprep.subr.mxu0 0.0
  %405 = vmatpush2.xpose.msra.mxu0 0.0
  %406 = vmatprep.subr.mxu0 0.0
  %407 = vmatpush2.xpose.msra.mxu0 0.0
  %408 = vmatprep.subr.mxu0 0.0
  %409 = vmatpush2.xpose.msra.mxu0 0.0
  %410 = vmatprep.subr.mxu0 0.0
  %411 = vmatpush2.xpose.msra.mxu0 0.0
  %412 = vmatprep.subr.mxu0 0.0
  %413 = vmatpush2.xpose.msra.mxu0 0.0
  %414 = vmatprep.subr.mxu0 0.0
  %415 = vmatpush2.xpose.msra.mxu0 0.0
  %416 = vmatprep.mubr.f32.mxu0 0.0
  %417 = vmatmul.mubr.f32.gmra.mxu0 %v348
  %v418 = vpop.f32.mrf.mxu0
  %v419 = vadd.f32 0.0, %v418
  %v420 = vpop.f32.mrf.mxu0
  %421 = vdwg.mxu0
  %v422 = vmul.f32 %v419, 0.35355338
  %v423 = vadd.f32 %v422, %v176
  %v424 = vsel %vm180, %v423, -inf
  %425 = vmax.xlane.f32.xlu0 %v424
  %v426 = vpop.xlane.xlu0 %425
  %v427 = vsub.f32 %v423, %v426
  %v428 = vmul.f32 %v427, 1.442695
  %v429 = vpow.pop %v428
  %v430 = vsel %vm180, %v429, 0.0
  %431 = vadd.xlane.f32.xlu0 %v430
  %v432 = vpop.xlane.xlu0 %431
  %v433 = vrcp.pop %v432
  %v434 = vmul.f32 %v429, %v433
  %435 = vrot.lane.b32.xlu0 %v164, 56
  %v436 = vpop.permute.xlu0 %435
  %v439 = vsel %vm180, %v434, 0
  %441 = vmatprep.subr.mxu0 0.0
  %442 = vmatpush1.msra.mxu0 0.0
  %443 = vmatprep.subr.mxu0 0.0
  %444 = vmatpush1.msra.mxu0 0.0
  %445 = vmatprep.subr.mxu0 0.0
  %446 = vmatpush1.msra.mxu0 0.0
  %447 = vmatprep.subr.mxu0 0.0
  %448 = vmatpush1.msra.mxu0 0.0
  %449 = vmatprep.subr.mxu0 0.0
  %450 = vmatpush1.msra.mxu0 0.0
  %451 = vmatprep.subr.mxu0 0.0
  %452 = vmatpush1.msra.mxu0 0.0
  %453 = vmatprep.subr.mxu0 0.0
  %454 = vmatpush1.msra.mxu0 0.0
  %455 = vmatprep.subr.mxu0 0.0
  %456 = vmatpush1.msra.mxu0 0.0
  %457 = vmatprep.subr.mxu0 0.0
  %458 = vmatpush1.msra.mxu0 0.0
  %459 = vmatprep.subr.mxu0 0.0
  %460 = vmatpush1.msra.mxu0 0.0
  %461 = vmatprep.subr.mxu0 0.0
  %462 = vmatpush1.msra.mxu0 0.0
  %463 = vmatprep.subr.mxu0 0.0
  %464 = vmatpush1.msra.mxu0 0.0
  %465 = vmatprep.subr.mxu0 0.0
  %466 = vmatpush1.msra.mxu0 0.0
  %467 = vmatprep.subr.mxu0 0.0
  %468 = vmatpush1.msra.mxu0 0.0
  %469 = vmatprep.subr.mxu0 0.0
  %470 = vmatpush1.msra.mxu0 0.0
  %471 = vmatprep.subr.mxu0 0.0
  %472 = vmatpush1.msra.mxu0 %v436
  %473 = vmatprep.subr.mxu0 0.0
  %474 = vmatpush2.msra.mxu0 0.0
  %475 = vmatprep.subr.mxu0 0.0
  %476 = vmatpush2.msra.mxu0 0.0
  %477 = vmatprep.subr.mxu0 0.0
  %478 = vmatpush2.msra.mxu0 0.0
  %479 = vmatprep.subr.mxu0 0.0
  %480 = vmatpush2.msra.mxu0 0.0
  %481 = vmatprep.subr.mxu0 0.0
  %482 = vmatpush2.msra.mxu0 0.0
  %483 = vmatprep.subr.mxu0 0.0
  %484 = vmatpush2.msra.mxu0 0.0
  %485 = vmatprep.subr.mxu0 0.0
  %486 = vmatpush2.msra.mxu0 0.0
  %487 = vmatprep.subr.mxu0 0.0
  %488 = vmatpush2.msra.mxu0 0.0
  %489 = vmatprep.subr.mxu0 0.0
  %490 = vmatpush2.msra.mxu0 0.0
  %491 = vmatprep.subr.mxu0 0.0
  %492 = vmatpush2.msra.mxu0 0.0
  %493 = vmatprep.subr.mxu0 0.0
  %494 = vmatpush2.msra.mxu0 0.0
  %495 = vmatprep.subr.mxu0 0.0
  %496 = vmatpush2.msra.mxu0 0.0
  %497 = vmatprep.subr.mxu0 0.0
  %498 = vmatpush2.msra.mxu0 0.0
  %499 = vmatprep.subr.mxu0 0.0
  %500 = vmatpush2.msra.mxu0 0.0
  %501 = vmatprep.subr.mxu0 0.0
  %502 = vmatpush2.msra.mxu0 0.0
  %503 = vmatprep.subr.mxu0 0.0
  %504 = vmatpush2.msra.mxu0 0.0
  %505 = vmatprep.mubr.f32.mxu0 0.0
  %506 = vmatmul.mubr.f32.gmra.mxu0 %v439
  %v507 = vpop.f32.mrf.mxu0
  %v508 = vadd.f32 0.0, %v507
  %v509 = vpop.f32.mrf.mxu0
  %510 = vdwg.mxu0
  %v512 = vsel %vm180, %v508, 0
  %514 = vmatprep.subr.mxu0 0.0
  %515 = vmatpush1.msra.mxu0 0.0
  %516 = vmatprep.subr.mxu0 0.0
  %517 = vmatpush1.msra.mxu0 0.0
  %518 = vmatprep.subr.mxu0 0.0
  %519 = vmatpush1.msra.mxu0 0.0
  %520 = vmatprep.subr.mxu0 0.0
  %521 = vmatpush1.msra.mxu0 0.0
  %522 = vmatprep.subr.mxu0 0.0
  %523 = vmatpush1.msra.mxu0 0.0
  %524 = vmatprep.subr.mxu0 0.0
  %525 = vmatpush1.msra.mxu0 0.0
  %526 = vmatprep.subr.mxu0 0.0
  %527 = vmatpush1.msra.mxu0 0.0
  %528 = vmatprep.subr.mxu0 0.0
  %529 = vmatpush1.msra.mxu0 0.0
  %530 = vmatprep.subr.mxu0 0.0
  %531 = vmatpush1.msra.mxu0 0.0
  %532 = vmatprep.subr.mxu0 0.0
  %533 = vmatpush1.msra.mxu0 0.0
  %534 = vmatprep.subr.mxu0 0.0
  %535 = vmatpush1.msra.mxu0 0.0
  %536 = vmatprep.subr.mxu0 0.0
  %537 = vmatpush1.msra.mxu0 0.0
  %538 = vmatprep.subr.mxu0 0.0
  %539 = vmatpush1.msra.mxu0 0.0
  %540 = vmatprep.subr.mxu0 0.0
  %541 = vmatpush1.msra.mxu0 0.0
  %542 = vmatprep.subr.mxu0 0.0
  %543 = vmatpush1.msra.mxu0 0.0
  %544 = vmatprep.subr.mxu0 0.0
  %545 = vmatpush1.msra.mxu0 %v173
  %546 = vmatprep.subr.mxu0 0.0
  %547 = vmatpush2.msra.mxu0 0.0
  %548 = vmatprep.subr.mxu0 0.0
  %549 = vmatpush2.msra.mxu0 0.0
  %550 = vmatprep.subr.mxu0 0.0
  %551 = vmatpush2.msra.mxu0 0.0
  %552 = vmatprep.subr.mxu0 0.0
  %553 = vmatpush2.msra.mxu0 0.0
  %554 = vmatprep.subr.mxu0 0.0
  %555 = vmatpush2.msra.mxu0 0.0
  %556 = vmatprep.subr.mxu0 0.0
  %557 = vmatpush2.msra.mxu0 0.0
  %558 = vmatprep.subr.mxu0 0.0
  %559 = vmatpush2.msra.mxu0 0.0
  %560 = vmatprep.subr.mxu0 0.0
  %561 = vmatpush2.msra.mxu0 0.0
  %562 = vmatprep.subr.mxu0 0.0
  %563 = vmatpush2.msra.mxu0 0.0
  %564 = vmatprep.subr.mxu0 0.0
  %565 = vmatpush2.msra.mxu0 0.0
  %566 = vmatprep.subr.mxu0 0.0
  %567 = vmatpush2.msra.mxu0 0.0
  %568 = vmatprep.subr.mxu0 0.0
  %569 = vmatpush2.msra.mxu0 0.0
  %570 = vmatprep.subr.mxu0 0.0
  %571 = vmatpush2.msra.mxu0 0.0
  %572 = vmatprep.subr.mxu0 0.0
  %573 = vmatpush2.msra.mxu0 0.0
  %574 = vmatprep.subr.mxu0 0.0
  %575 = vmatpush2.msra.mxu0 0.0
  %576 = vmatprep.subr.mxu0 0.0
  %577 = vmatpush2.msra.mxu0 0.0
  %578 = vmatprep.mubr.f32.mxu0 0.0
  %579 = vmatmul.mubr.f32.gmra.mxu0 %v512
  %v580 = vpop.f32.mrf.mxu0
  %v581 = vadd.f32 0.0, %v580
  %v582 = vpop.f32.mrf.mxu0
  %583 = vdwg.mxu0
  %v585 = vsel %vm180, %v341, 0
  %587 = vmatprep.subr.mxu0 0.0
  %588 = vmatpush1.msra.mxu0 0.0
  %589 = vmatprep.subr.mxu0 0.0
  %590 = vmatpush1.msra.mxu0 0.0
  %591 = vmatprep.subr.mxu0 0.0
  %592 = vmatpush1.msra.mxu0 0.0
  %593 = vmatprep.subr.mxu0 0.0
  %594 = vmatpush1.msra.mxu0 0.0
  %595 = vmatprep.subr.mxu0 0.0
  %596 = vmatpush1.msra.mxu0 0.0
  %597 = vmatprep.subr.mxu0 0.0
  %598 = vmatpush1.msra.mxu0 0.0
  %599 = vmatprep.subr.mxu0 0.0
  %600 = vmatpush1.msra.mxu0 0.0
  %601 = vmatprep.subr.mxu0 0.0
  %602 = vmatpush1.msra.mxu0 0.0
  %603 = vmatprep.subr.mxu0 0.0
  %604 = vmatpush1.msra.mxu0 0.0
  %605 = vmatprep.subr.mxu0 0.0
  %606 = vmatpush1.msra.mxu0 0.0
  %607 = vmatprep.subr.mxu0 0.0
  %608 = vmatpush1.msra.mxu0 0.0
  %609 = vmatprep.subr.mxu0 0.0
  %610 = vmatpush1.msra.mxu0 0.0
  %611 = vmatprep.subr.mxu0 0.0
  %612 = vmatpush1.msra.mxu0 0.0
  %613 = vmatprep.subr.mxu0 0.0
  %614 = vmatpush1.msra.mxu0 0.0
  %615 = vmatprep.subr.mxu0 0.0
  %616 = vmatpush1.msra.mxu0 0.0
  %617 = vmatprep.subr.mxu0 0.0
  %618 = vmatpush1.msra.mxu0 %v172
  %619 = vmatprep.subr.mxu0 0.0
  %620 = vmatpush2.msra.mxu0 0.0
  %621 = vmatprep.subr.mxu0 0.0
  %622 = vmatpush2.msra.mxu0 0.0
  %623 = vmatprep.subr.mxu0 0.0
  %624 = vmatpush2.msra.mxu0 0.0
  %625 = vmatprep.subr.mxu0 0.0
  %626 = vmatpush2.msra.mxu0 0.0
  %627 = vmatprep.subr.mxu0 0.0
  %628 = vmatpush2.msra.mxu0 0.0
  %629 = vmatprep.subr.mxu0 0.0
  %630 = vmatpush2.msra.mxu0 0.0
  %631 = vmatprep.subr.mxu0 0.0
  %632 = vmatpush2.msra.mxu0 0.0
  %633 = vmatprep.subr.mxu0 0.0
  %634 = vmatpush2.msra.mxu0 0.0
  %635 = vmatprep.subr.mxu0 0.0
  %636 = vmatpush2.msra.mxu0 0.0
  %637 = vmatprep.subr.mxu0 0.0
  %638 = vmatpush2.msra.mxu0 0.0
  %639 = vmatprep.subr.mxu0 0.0
  %640 = vmatpush2.msra.mxu0 0.0
  %641 = vmatprep.subr.mxu0 0.0
  %642 = vmatpush2.msra.mxu0 0.0
  %643 = vmatprep.subr.mxu0 0.0
  %644 = vmatpush2.msra.mxu0 0.0
  %645 = vmatprep.subr.mxu0 0.0
  %646 = vmatpush2.msra.mxu0 0.0
  %647 = vmatprep.subr.mxu0 0.0
  %648 = vmatpush2.msra.mxu0 0.0
  %649 = vmatprep.subr.mxu0 0.0
  %650 = vmatpush2.msra.mxu0 0.0
  %651 = vmatprep.mubr.f32.mxu0 0.0
  %652 = vmatmul.mubr.f32.gmra.mxu0 %v585
  %v653 = vpop.f32.mrf.mxu0
  %v654 = vadd.f32 %v581, %v653
  %v655 = vpop.f32.mrf.mxu0
  %656 = vdwg.mxu0
  %657 = vrot.lane.b32.xlu0 %v164, 112
  %v658 = vpop.permute.xlu0 %657
  %659 = vrot.lane.b32.xlu0 %v164, 80
  %v660 = vpop.permute.xlu0 %659
  %v661 = vsel %vm180, %v658, 0
  %v663 = vsel %vm180, %v660, 0
  %665 = vmatprep.subr.mxu0 0.0
  %666 = vmatpush1.xpose.msra.mxu0 0.0
  %667 = vmatprep.subr.mxu0 0.0
  %668 = vmatpush1.xpose.msra.mxu0 0.0
  %669 = vmatprep.subr.mxu0 0.0
  %670 = vmatpush1.xpose.msra.mxu0 0.0
  %671 = vmatprep.subr.mxu0 0.0
  %672 = vmatpush1.xpose.msra.mxu0 0.0
  %673 = vmatprep.subr.mxu0 0.0
  %674 = vmatpush1.xpose.msra.mxu0 0.0
  %675 = vmatprep.subr.mxu0 0.0
  %676 = vmatpush1.xpose.msra.mxu0 0.0
  %677 = vmatprep.subr.mxu0 0.0
  %678 = vmatpush1.xpose.msra.mxu0 0.0
  %679 = vmatprep.subr.mxu0 0.0
  %680 = vmatpush1.xpose.msra.mxu0 0.0
  %681 = vmatprep.subr.mxu0 0.0
  %682 = vmatpush1.xpose.msra.mxu0 0.0
  %683 = vmatprep.subr.mxu0 0.0
  %684 = vmatpush1.xpose.msra.mxu0 0.0
  %685 = vmatprep.subr.mxu0 0.0
  %686 = vmatpush1.xpose.msra.mxu0 0.0
  %687 = vmatprep.subr.mxu0 0.0
  %688 = vmatpush1.xpose.msra.mxu0 0.0
  %689 = vmatprep.subr.mxu0 0.0
  %690 = vmatpush1.xpose.msra.mxu0 0.0
  %691 = vmatprep.subr.mxu0 0.0
  %692 = vmatpush1.xpose.msra.mxu0 0.0
  %693 = vmatprep.subr.mxu0 0.0
  %694 = vmatpush1.xpose.msra.mxu0 0.0
  %695 = vmatprep.subr.mxu0 0.0
  %696 = vmatpush1.xpose.msra.mxu0 %v663
  %697 = vmatprep.subr.mxu0 0.0
  %698 = vmatpush2.xpose.msra.mxu0 0.0
  %699 = vmatprep.subr.mxu0 0.0
  %700 = vmatpush2.xpose.msra.mxu0 0.0
  %701 = vmatprep.subr.mxu0 0.0
  %702 = vmatpush2.xpose.msra.mxu0 0.0
  %703 = vmatprep.subr.mxu0 0.0
  %704 = vmatpush2.xpose.msra.mxu0 0.0
  %705 = vmatprep.subr.mxu0 0.0
  %706 = vmatpush2.xpose.msra.mxu0 0.0
  %707 = vmatprep.subr.mxu0 0.0
  %708 = vmatpush2.xpose.msra.mxu0 0.0
  %709 = vmatprep.subr.mxu0 0.0
  %710 = vmatpush2.xpose.msra.mxu0 0.0
  %711 = vmatprep.subr.mxu0 0.0
  %712 = vmatpush2.xpose.msra.mxu0 0.0
  %713 = vmatprep.subr.mxu0 0.0
  %714 = vmatpush2.xpose.msra.mxu0 0.0
  %715 = vmatprep.subr.mxu0 0.0
  %716 = vmatpush2.xpose.msra.mxu0 0.0
  %717 = vmatprep.subr.mxu0 0.0
  %718 = vmatpush2.xpose.msra.mxu0 0.0
  %719 = vmatprep.subr.mxu0 0.0
  %720 = vmatpush2.xpose.msra.mxu0 0.0
  %721 = vmatprep.subr.mxu0 0.0
  %722 = vmatpush2.xpose.msra.mxu0 0.0
  %723 = vmatprep.subr.mxu0 0.0
  %724 = vmatpush2.xpose.msra.mxu0 0.0
  %725 = vmatprep.subr.mxu0 0.0
  %726 = vmatpush2.xpose.msra.mxu0 0.0
  %727 = vmatprep.subr.mxu0 0.0
  %728 = vmatpush2.xpose.msra.mxu0 0.0
  %729 = vmatprep.mubr.f32.mxu0 0.0
  %730 = vmatmul.mubr.f32.gmra.mxu0 %v661
  %v731 = vpop.f32.mrf.mxu0
  %v732 = vadd.f32 0.0, %v731
  %v733 = vpop.f32.mrf.mxu0
  %734 = vdwg.mxu0
  %v735 = vmul.f32 %v732, 0.35355338
  %v736 = vadd.f32 %v735, %v176
  %v737 = vsel %vm180, %v736, -inf
  %738 = vmax.xlane.f32.xlu0 %v737
  %v739 = vpop.xlane.xlu0 %738
  %v740 = vsub.f32 %v736, %v739
  %v741 = vmul.f32 %v740, 1.442695
  %v742 = vpow.pop %v741
  %v743 = vsel %vm180, %v742, 0.0
  %744 = vadd.xlane.f32.xlu0 %v743
  %v745 = vpop.xlane.xlu0 %744
  %v746 = vrcp.pop %v745
  %v747 = vmul.f32 %v742, %v746
  %748 = vrot.lane.b32.xlu0 %v164, 48
  %v749 = vpop.permute.xlu0 %748
  %v752 = vsel %vm180, %v747, 0
  %754 = vmatprep.subr.mxu0 0.0
  %755 = vmatpush1.msra.mxu0 0.0
  %756 = vmatprep.subr.mxu0 0.0
  %757 = vmatpush1.msra.mxu0 0.0
  %758 = vmatprep.subr.mxu0 0.0
  %759 = vmatpush1.msra.mxu0 0.0
  %760 = vmatprep.subr.mxu0 0.0
  %761 = vmatpush1.msra.mxu0 0.0
  %762 = vmatprep.subr.mxu0 0.0
  %763 = vmatpush1.msra.mxu0 0.0
  %764 = vmatprep.subr.mxu0 0.0
  %765 = vmatpush1.msra.mxu0 0.0
  %766 = vmatprep.subr.mxu0 0.0
  %767 = vmatpush1.msra.mxu0 0.0
  %768 = vmatprep.subr.mxu0 0.0
  %769 = vmatpush1.msra.mxu0 0.0
  %770 = vmatprep.subr.mxu0 0.0
  %771 = vmatpush1.msra.mxu0 0.0
  %772 = vmatprep.subr.mxu0 0.0
  %773 = vmatpush1.msra.mxu0 0.0
  %774 = vmatprep.subr.mxu0 0.0
  %775 = vmatpush1.msra.mxu0 0.0
  %776 = vmatprep.subr.mxu0 0.0
  %777 = vmatpush1.msra.mxu0 0.0
  %778 = vmatprep.subr.mxu0 0.0
  %779 = vmatpush1.msra.mxu0 0.0
  %780 = vmatprep.subr.mxu0 0.0
  %781 = vmatpush1.msra.mxu0 0.0
  %782 = vmatprep.subr.mxu0 0.0
  %783 = vmatpush1.msra.mxu0 0.0
  %784 = vmatprep.subr.mxu0 0.0
  %785 = vmatpush1.msra.mxu0 %v749
  %786 = vmatprep.subr.mxu0 0.0
  %787 = vmatpush2.msra.mxu0 0.0
  %788 = vmatprep.subr.mxu0 0.0
  %789 = vmatpush2.msra.mxu0 0.0
  %790 = vmatprep.subr.mxu0 0.0
  %791 = vmatpush2.msra.mxu0 0.0
  %792 = vmatprep.subr.mxu0 0.0
  %793 = vmatpush2.msra.mxu0 0.0
  %794 = vmatprep.subr.mxu0 0.0
  %795 = vmatpush2.msra.mxu0 0.0
  %796 = vmatprep.subr.mxu0 0.0
  %797 = vmatpush2.msra.mxu0 0.0
  %798 = vmatprep.subr.mxu0 0.0
  %799 = vmatpush2.msra.mxu0 0.0
  %800 = vmatprep.subr.mxu0 0.0
  %801 = vmatpush2.msra.mxu0 0.0
  %802 = vmatprep.subr.mxu0 0.0
  %803 = vmatpush2.msra.mxu0 0.0
  %804 = vmatprep.subr.mxu0 0.0
  %805 = vmatpush2.msra.mxu0 0.0
  %806 = vmatprep.subr.mxu0 0.0
  %807 = vmatpush2.msra.mxu0 0.0
  %808 = vmatprep.subr.mxu0 0.0
  %809 = vmatpush2.msra.mxu0 0.0
  %810 = vmatprep.subr.mxu0 0.0
  %811 = vmatpush2.msra.mxu0 0.0
  %812 = vmatprep.subr.mxu0 0.0
  %813 = vmatpush2.msra.mxu0 0.0
  %814 = vmatprep.subr.mxu0 0.0
  %815 = vmatpush2.msra.mxu0 0.0
  %816 = vmatprep.subr.mxu0 0.0
  %817 = vmatpush2.msra.mxu0 0.0
  %818 = vmatprep.mubr.f32.mxu0 0.0
  %819 = vmatmul.mubr.f32.gmra.mxu0 %v752
  %v820 = vpop.f32.mrf.mxu0
  %v821 = vadd.f32 0.0, %v820
  %v822 = vpop.f32.mrf.mxu0
  %823 = vdwg.mxu0
  %v825 = vsel %vm180, %v821, 0
  %827 = vmatprep.subr.mxu0 0.0
  %828 = vmatpush1.msra.mxu0 0.0
  %829 = vmatprep.subr.mxu0 0.0
  %830 = vmatpush1.msra.mxu0 0.0
  %831 = vmatprep.subr.mxu0 0.0
  %832 = vmatpush1.msra.mxu0 0.0
  %833 = vmatprep.subr.mxu0 0.0
  %834 = vmatpush1.msra.mxu0 0.0
  %835 = vmatprep.subr.mxu0 0.0
  %836 = vmatpush1.msra.mxu0 0.0
  %837 = vmatprep.subr.mxu0 0.0
  %838 = vmatpush1.msra.mxu0 0.0
  %839 = vmatprep.subr.mxu0 0.0
  %840 = vmatpush1.msra.mxu0 0.0
  %841 = vmatprep.subr.mxu0 0.0
  %842 = vmatpush1.msra.mxu0 0.0
  %843 = vmatprep.subr.mxu0 0.0
  %844 = vmatpush1.msra.mxu0 0.0
  %845 = vmatprep.subr.mxu0 0.0
  %846 = vmatpush1.msra.mxu0 0.0
  %847 = vmatprep.subr.mxu0 0.0
  %848 = vmatpush1.msra.mxu0 0.0
  %849 = vmatprep.subr.mxu0 0.0
  %850 = vmatpush1.msra.mxu0 0.0
  %851 = vmatprep.subr.mxu0 0.0
  %852 = vmatpush1.msra.mxu0 0.0
  %853 = vmatprep.subr.mxu0 0.0
  %854 = vmatpush1.msra.mxu0 0.0
  %855 = vmatprep.subr.mxu0 0.0
  %856 = vmatpush1.msra.mxu0 0.0
  %857 = vmatprep.subr.mxu0 0.0
  %858 = vmatpush1.msra.mxu0 %v174
  %859 = vmatprep.subr.mxu0 0.0
  %860 = vmatpush2.msra.mxu0 0.0
  %861 = vmatprep.subr.mxu0 0.0
  %862 = vmatpush2.msra.mxu0 0.0
  %863 = vmatprep.subr.mxu0 0.0
  %864 = vmatpush2.msra.mxu0 0.0
  %865 = vmatprep.subr.mxu0 0.0
  %866 = vmatpush2.msra.mxu0 0.0
  %867 = vmatprep.subr.mxu0 0.0
  %868 = vmatpush2.msra.mxu0 0.0
  %869 = vmatprep.subr.mxu0 0.0
  %870 = vmatpush2.msra.mxu0 0.0
  %871 = vmatprep.subr.mxu0 0.0
  %872 = vmatpush2.msra.mxu0 0.0
  %873 = vmatprep.subr.mxu0 0.0
  %874 = vmatpush2.msra.mxu0 0.0
  %875 = vmatprep.subr.mxu0 0.0
  %876 = vmatpush2.msra.mxu0 0.0
  %877 = vmatprep.subr.mxu0 0.0
  %878 = vmatpush2.msra.mxu0 0.0
  %879 = vmatprep.subr.mxu0 0.0
  %880 = vmatpush2.msra.mxu0 0.0
  %881 = vmatprep.subr.mxu0 0.0
  %882 = vmatpush2.msra.mxu0 0.0
  %883 = vmatprep.subr.mxu0 0.0
  %884 = vmatpush2.msra.mxu0 0.0
  %885 = vmatprep.subr.mxu0 0.0
  %886 = vmatpush2.msra.mxu0 0.0
  %887 = vmatprep.subr.mxu0 0.0
  %888 = vmatpush2.msra.mxu0 0.0
  %889 = vmatprep.subr.mxu0 0.0
  %890 = vmatpush2.msra.mxu0 0.0
  %891 = vmatprep.mubr.f32.mxu0 0.0
  %892 = vmatmul.mubr.f32.gmra.mxu0 %v825
  %v893 = vpop.f32.mrf.mxu0
  %v894 = vadd.f32 0.0, %v893
  %v895 = vpop.f32.mrf.mxu0
  %896 = vdwg.mxu0
  %v897 = vadd.f32 %v654, %v894
  %898 = vrot.lane.b32.xlu0 %v164, 104
  %v899 = vpop.permute.xlu0 %898
  %900 = vrot.lane.b32.xlu0 %v164, 72
  %v901 = vpop.permute.xlu0 %900
  %v902 = vsel %vm180, %v899, 0
  %v904 = vsel %vm180, %v901, 0
  %906 = vmatprep.subr.mxu0 0.0
  %907 = vmatpush1.xpose.msra.mxu0 0.0
  %908 = vmatprep.subr.mxu0 0.0
  %909 = vmatpush1.xpose.msra.mxu0 0.0
  %910 = vmatprep.subr.mxu0 0.0
  %911 = vmatpush1.xpose.msra.mxu0 0.0
  %912 = vmatprep.subr.mxu0 0.0
  %913 = vmatpush1.xpose.msra.mxu0 0.0
  %914 = vmatprep.subr.mxu0 0.0
  %915 = vmatpush1.xpose.msra.mxu0 0.0
  %916 = vmatprep.subr.mxu0 0.0
  %917 = vmatpush1.xpose.msra.mxu0 0.0
  %918 = vmatprep.subr.mxu0 0.0
  %919 = vmatpush1.xpose.msra.mxu0 0.0
  %920 = vmatprep.subr.mxu0 0.0
  %921 = vmatpush1.xpose.msra.mxu0 0.0
  %922 = vmatprep.subr.mxu0 0.0
  %923 = vmatpush1.xpose.msra.mxu0 0.0
  %924 = vmatprep.subr.mxu0 0.0
  %925 = vmatpush1.xpose.msra.mxu0 0.0
  %926 = vmatprep.subr.mxu0 0.0
  %927 = vmatpush1.xpose.msra.mxu0 0.0
  %928 = vmatprep.subr.mxu0 0.0
  %929 = vmatpush1.xpose.msra.mxu0 0.0
  %930 = vmatprep.subr.mxu0 0.0
  %931 = vmatpush1.xpose.msra.mxu0 0.0
  %932 = vmatprep.subr.mxu0 0.0
  %933 = vmatpush1.xpose.msra.mxu0 0.0
  %934 = vmatprep.subr.mxu0 0.0
  %935 = vmatpush1.xpose.msra.mxu0 0.0
  %936 = vmatprep.subr.mxu0 0.0
  %937 = vmatpush1.xpose.msra.mxu0 %v904
  %938 = vmatprep.subr.mxu0 0.0
  %939 = vmatpush2.xpose.msra.mxu0 0.0
  %940 = vmatprep.subr.mxu0 0.0
  %941 = vmatpush2.xpose.msra.mxu0 0.0
  %942 = vmatprep.subr.mxu0 0.0
  %943 = vmatpush2.xpose.msra.mxu0 0.0
  %944 = vmatprep.subr.mxu0 0.0
  %945 = vmatpush2.xpose.msra.mxu0 0.0
  %946 = vmatprep.subr.mxu0 0.0
  %947 = vmatpush2.xpose.msra.mxu0 0.0
  %948 = vmatprep.subr.mxu0 0.0
  %949 = vmatpush2.xpose.msra.mxu0 0.0
  %950 = vmatprep.subr.mxu0 0.0
  %951 = vmatpush2.xpose.msra.mxu0 0.0
  %952 = vmatprep.subr.mxu0 0.0
  %953 = vmatpush2.xpose.msra.mxu0 0.0
  %954 = vmatprep.subr.mxu0 0.0
  %955 = vmatpush2.xpose.msra.mxu0 0.0
  %956 = vmatprep.subr.mxu0 0.0
  %957 = vmatpush2.xpose.msra.mxu0 0.0
  %958 = vmatprep.subr.mxu0 0.0
  %959 = vmatpush2.xpose.msra.mxu0 0.0
  %960 = vmatprep.subr.mxu0 0.0
  %961 = vmatpush2.xpose.msra.mxu0 0.0
  %962 = vmatprep.subr.mxu0 0.0
  %963 = vmatpush2.xpose.msra.mxu0 0.0
  %964 = vmatprep.subr.mxu0 0.0
  %965 = vmatpush2.xpose.msra.mxu0 0.0
  %966 = vmatprep.subr.mxu0 0.0
  %967 = vmatpush2.xpose.msra.mxu0 0.0
  %968 = vmatprep.subr.mxu0 0.0
  %969 = vmatpush2.xpose.msra.mxu0 0.0
  %970 = vmatprep.mubr.f32.mxu0 0.0
  %971 = vmatmul.mubr.f32.gmra.mxu0 %v902
  %v972 = vpop.f32.mrf.mxu0
  %v973 = vadd.f32 0.0, %v972
  %v974 = vpop.f32.mrf.mxu0
  %975 = vdwg.mxu0
  %v976 = vmul.f32 %v973, 0.35355338
  %v977 = vadd.f32 %v976, %v176
  %v978 = vsel %vm180, %v977, -inf
  %979 = vmax.xlane.f32.xlu0 %v978
  %v980 = vpop.xlane.xlu0 %979
  %v981 = vsub.f32 %v977, %v980
  %v982 = vmul.f32 %v981, 1.442695
  %v983 = vpow.pop %v982
  %v984 = vsel %vm180, %v983, 0.0
  %985 = vadd.xlane.f32.xlu0 %v984
  %v986 = vpop.xlane.xlu0 %985
  %v987 = vrcp.pop %v986
  %v988 = vmul.f32 %v983, %v987
  %989 = vrot.lane.b32.xlu0 %v164, 40
  %v990 = vpop.permute.xlu0 %989
  %v993 = vsel %vm180, %v988, 0
  %995 = vmatprep.subr.mxu0 0.0
  %996 = vmatpush1.msra.mxu0 0.0
  %997 = vmatprep.subr.mxu0 0.0
  %998 = vmatpush1.msra.mxu0 0.0
  %999 = vmatprep.subr.mxu0 0.0
  %1000 = vmatpush1.msra.mxu0 0.0
  %1001 = vmatprep.subr.mxu0 0.0
  %1002 = vmatpush1.msra.mxu0 0.0
  %1003 = vmatprep.subr.mxu0 0.0
  %1004 = vmatpush1.msra.mxu0 0.0
  %1005 = vmatprep.subr.mxu0 0.0
  %1006 = vmatpush1.msra.mxu0 0.0
  %1007 = vmatprep.subr.mxu0 0.0
  %1008 = vmatpush1.msra.mxu0 0.0
  %1009 = vmatprep.subr.mxu0 0.0
  %1010 = vmatpush1.msra.mxu0 0.0
  %1011 = vmatprep.subr.mxu0 0.0
  %1012 = vmatpush1.msra.mxu0 0.0
  %1013 = vmatprep.subr.mxu0 0.0
  %1014 = vmatpush1.msra.mxu0 0.0
  %1015 = vmatprep.subr.mxu0 0.0
  %1016 = vmatpush1.msra.mxu0 0.0
  %1017 = vmatprep.subr.mxu0 0.0
  %1018 = vmatpush1.msra.mxu0 0.0
  %1019 = vmatprep.subr.mxu0 0.0
  %1020 = vmatpush1.msra.mxu0 0.0
  %1021 = vmatprep.subr.mxu0 0.0
  %1022 = vmatpush1.msra.mxu0 0.0
  %1023 = vmatprep.subr.mxu0 0.0
  %1024 = vmatpush1.msra.mxu0 0.0
  %1025 = vmatprep.subr.mxu0 0.0
  %1026 = vmatpush1.msra.mxu0 %v990
  %1027 = vmatprep.subr.mxu0 0.0
  %1028 = vmatpush2.msra.mxu0 0.0
  %1029 = vmatprep.subr.mxu0 0.0
  %1030 = vmatpush2.msra.mxu0 0.0
  %1031 = vmatprep.subr.mxu0 0.0
  %1032 = vmatpush2.msra.mxu0 0.0
  %1033 = vmatprep.subr.mxu0 0.0
  %1034 = vmatpush2.msra.mxu0 0.0
  %1035 = vmatprep.subr.mxu0 0.0
  %1036 = vmatpush2.msra.mxu0 0.0
  %1037 = vmatprep.subr.mxu0 0.0
  %1038 = vmatpush2.msra.mxu0 0.0
  %1039 = vmatprep.subr.mxu0 0.0
  %1040 = vmatpush2.msra.mxu0 0.0
  %1041 = vmatprep.subr.mxu0 0.0
  %1042 = vmatpush2.msra.mxu0 0.0
  %1043 = vmatprep.subr.mxu0 0.0
  %1044 = vmatpush2.msra.mxu0 0.0
  %1045 = vmatprep.subr.mxu0 0.0
  %1046 = vmatpush2.msra.mxu0 0.0
  %1047 = vmatprep.subr.mxu0 0.0
  %1048 = vmatpush2.msra.mxu0 0.0
  %1049 = vmatprep.subr.mxu0 0.0
  %1050 = vmatpush2.msra.mxu0 0.0
  %1051 = vmatprep.subr.mxu0 0.0
  %1052 = vmatpush2.msra.mxu0 0.0
  %1053 = vmatprep.subr.mxu0 0.0
  %1054 = vmatpush2.msra.mxu0 0.0
  %1055 = vmatprep.subr.mxu0 0.0
  %1056 = vmatpush2.msra.mxu0 0.0
  %1057 = vmatprep.subr.mxu0 0.0
  %1058 = vmatpush2.msra.mxu0 0.0
  %1059 = vmatprep.mubr.f32.mxu0 0.0
  %1060 = vmatmul.mubr.f32.gmra.mxu0 %v993
  %v1061 = vpop.f32.mrf.mxu0
  %v1062 = vadd.f32 0.0, %v1061
  %v1063 = vpop.f32.mrf.mxu0
  %1064 = vdwg.mxu0
  %v1066 = vsel %vm180, %v1062, 0
  %1068 = vmatprep.subr.mxu0 0.0
  %1069 = vmatpush1.msra.mxu0 0.0
  %1070 = vmatprep.subr.mxu0 0.0
  %1071 = vmatpush1.msra.mxu0 0.0
  %1072 = vmatprep.subr.mxu0 0.0
  %1073 = vmatpush1.msra.mxu0 0.0
  %1074 = vmatprep.subr.mxu0 0.0
  %1075 = vmatpush1.msra.mxu0 0.0
  %1076 = vmatprep.subr.mxu0 0.0
  %1077 = vmatpush1.msra.mxu0 0.0
  %1078 = vmatprep.subr.mxu0 0.0
  %1079 = vmatpush1.msra.mxu0 0.0
  %1080 = vmatprep.subr.mxu0 0.0
  %1081 = vmatpush1.msra.mxu0 0.0
  %1082 = vmatprep.subr.mxu0 0.0
  %1083 = vmatpush1.msra.mxu0 0.0
  %1084 = vmatprep.subr.mxu0 0.0
  %1085 = vmatpush1.msra.mxu0 0.0
  %1086 = vmatprep.subr.mxu0 0.0
  %1087 = vmatpush1.msra.mxu0 0.0
  %1088 = vmatprep.subr.mxu0 0.0
  %1089 = vmatpush1.msra.mxu0 0.0
  %1090 = vmatprep.subr.mxu0 0.0
  %1091 = vmatpush1.msra.mxu0 0.0
  %1092 = vmatprep.subr.mxu0 0.0
  %1093 = vmatpush1.msra.mxu0 0.0
  %1094 = vmatprep.subr.mxu0 0.0
  %1095 = vmatpush1.msra.mxu0 0.0
  %1096 = vmatprep.subr.mxu0 0.0
  %1097 = vmatpush1.msra.mxu0 0.0
  %1098 = vmatprep.subr.mxu0 0.0
  %1099 = vmatpush1.msra.mxu0 %v175
  %1100 = vmatprep.subr.mxu0 0.0
  %1101 = vmatpush2.msra.mxu0 0.0
  %1102 = vmatprep.subr.mxu0 0.0
  %1103 = vmatpush2.msra.mxu0 0.0
  %1104 = vmatprep.subr.mxu0 0.0
  %1105 = vmatpush2.msra.mxu0 0.0
  %1106 = vmatprep.subr.mxu0 0.0
  %1107 = vmatpush2.msra.mxu0 0.0
  %1108 = vmatprep.subr.mxu0 0.0
  %1109 = vmatpush2.msra.mxu0 0.0
  %1110 = vmatprep.subr.mxu0 0.0
  %1111 = vmatpush2.msra.mxu0 0.0
  %1112 = vmatprep.subr.mxu0 0.0
  %1113 = vmatpush2.msra.mxu0 0.0
  %1114 = vmatprep.subr.mxu0 0.0
  %1115 = vmatpush2.msra.mxu0 0.0
  %1116 = vmatprep.subr.mxu0 0.0
  %1117 = vmatpush2.msra.mxu0 0.0
  %1118 = vmatprep.subr.mxu0 0.0
  %1119 = vmatpush2.msra.mxu0 0.0
  %1120 = vmatprep.subr.mxu0 0.0
  %1121 = vmatpush2.msra.mxu0 0.0
  %1122 = vmatprep.subr.mxu0 0.0
  %1123 = vmatpush2.msra.mxu0 0.0
  %1124 = vmatprep.subr.mxu0 0.0
  %1125 = vmatpush2.msra.mxu0 0.0
  %1126 = vmatprep.subr.mxu0 0.0
  %1127 = vmatpush2.msra.mxu0 0.0
  %1128 = vmatprep.subr.mxu0 0.0
  %1129 = vmatpush2.msra.mxu0 0.0
  %1130 = vmatprep.subr.mxu0 0.0
  %1131 = vmatpush2.msra.mxu0 0.0
  %1132 = vmatprep.mubr.f32.mxu0 0.0
  %1133 = vmatmul.mubr.f32.gmra.mxu0 %v1066
  %v1134 = vpop.f32.mrf.mxu0
  %v1135 = vadd.f32 0.0, %v1134
  %v1136 = vpop.f32.mrf.mxu0
  %1137 = vdwg.mxu0
  %v1138 = vadd.f32 %v897, %v1135
  %s1139 = scalar_lea.vmem %s22, 8
  %v1140 = vld [vmem:[%s1139] sm:$0xff]
  %1142 = vrot.lane.b32.xlu0 %v169, 96
  %v1143 = vpop.permute.xlu0 %1142
  %v1144 = vsel %vm180, %v169, 0
  %v1146 = vsel %vm180, %v1143, 0
  %1148 = vmatprep.subr.mxu0 0.0
  %1149 = vmatpush1.xpose.msra.mxu0 0.0
  %1150 = vmatprep.subr.mxu0 0.0
  %1151 = vmatpush1.xpose.msra.mxu0 0.0
  %1152 = vmatprep.subr.mxu0 0.0
  %1153 = vmatpush1.xpose.msra.mxu0 0.0
  %1154 = vmatprep.subr.mxu0 0.0
  %1155 = vmatpush1.xpose.msra.mxu0 0.0
  %1156 = vmatprep.subr.mxu0 0.0
  %1157 = vmatpush1.xpose.msra.mxu0 0.0
  %1158 = vmatprep.subr.mxu0 0.0
  %1159 = vmatpush1.xpose.msra.mxu0 0.0
  %1160 = vmatprep.subr.mxu0 0.0
  %1161 = vmatpush1.xpose.msra.mxu0 0.0
  %1162 = vmatprep.subr.mxu0 0.0
  %1163 = vmatpush1.xpose.msra.mxu0 0.0
  %1164 = vmatprep.subr.mxu0 0.0
  %1165 = vmatpush1.xpose.msra.mxu0 0.0
  %1166 = vmatprep.subr.mxu0 0.0
  %1167 = vmatpush1.xpose.msra.mxu0 0.0
  %1168 = vmatprep.subr.mxu0 0.0
  %1169 = vmatpush1.xpose.msra.mxu0 0.0
  %1170 = vmatprep.subr.mxu0 0.0
  %1171 = vmatpush1.xpose.msra.mxu0 0.0
  %1172 = vmatprep.subr.mxu0 0.0
  %1173 = vmatpush1.xpose.msra.mxu0 0.0
  %1174 = vmatprep.subr.mxu0 0.0
  %1175 = vmatpush1.xpose.msra.mxu0 0.0
  %1176 = vmatprep.subr.mxu0 0.0
  %1177 = vmatpush1.xpose.msra.mxu0 0.0
  %1178 = vmatprep.subr.mxu0 0.0
  %1179 = vmatpush1.xpose.msra.mxu0 %v1146
  %1180 = vmatprep.subr.mxu0 0.0
  %1181 = vmatpush2.xpose.msra.mxu0 0.0
  %1182 = vmatprep.subr.mxu0 0.0
  %1183 = vmatpush2.xpose.msra.mxu0 0.0
  %1184 = vmatprep.subr.mxu0 0.0
  %1185 = vmatpush2.xpose.msra.mxu0 0.0
  %1186 = vmatprep.subr.mxu0 0.0
  %1187 = vmatpush2.xpose.msra.mxu0 0.0
  %1188 = vmatprep.subr.mxu0 0.0
  %1189 = vmatpush2.xpose.msra.mxu0 0.0
  %1190 = vmatprep.subr.mxu0 0.0
  %1191 = vmatpush2.xpose.msra.mxu0 0.0
  %1192 = vmatprep.subr.mxu0 0.0
  %1193 = vmatpush2.xpose.msra.mxu0 0.0
  %1194 = vmatprep.subr.mxu0 0.0
  %1195 = vmatpush2.xpose.msra.mxu0 0.0
  %1196 = vmatprep.subr.mxu0 0.0
  %1197 = vmatpush2.xpose.msra.mxu0 0.0
  %1198 = vmatprep.subr.mxu0 0.0
  %1199 = vmatpush2.xpose.msra.mxu0 0.0
  %1200 = vmatprep.subr.mxu0 0.0
  %1201 = vmatpush2.xpose.msra.mxu0 0.0
  %1202 = vmatprep.subr.mxu0 0.0
  %1203 = vmatpush2.xpose.msra.mxu0 0.0
  %1204 = vmatprep.subr.mxu0 0.0
  %1205 = vmatpush2.xpose.msra.mxu0 0.0
  %1206 = vmatprep.subr.mxu0 0.0
  %1207 = vmatpush2.xpose.msra.mxu0 0.0
  %1208 = vmatprep.subr.mxu0 0.0
  %1209 = vmatpush2.xpose.msra.mxu0 0.0
  %1210 = vmatprep.subr.mxu0 0.0
  %1211 = vmatpush2.xpose.msra.mxu0 0.0
  %1212 = vmatprep.mubr.f32.mxu0 0.0
  %1213 = vmatmul.mubr.f32.gmra.mxu0 %v1144
  %v1214 = vpop.f32.mrf.mxu0
  %v1215 = vadd.f32 0.0, %v1214
  %v1216 = vpop.f32.mrf.mxu0
  %1217 = vdwg.mxu0
  %v1218 = vmul.f32 %v1215, 0.35355338
  %v1219 = vadd.f32 %v1218, %v1140
  %v1220 = vsel %vm180, %v1219, -inf
  %1221 = vmax.xlane.f32.xlu0 %v1220
  %v1222 = vpop.xlane.xlu0 %1221
  %v1223 = vsub.f32 %v1219, %v1222
  %v1224 = vmul.f32 %v1223, 1.442695
  %v1225 = vpow.pop %v1224
  %v1226 = vsel %vm180, %v1225, 0.0
  %1227 = vadd.xlane.f32.xlu0 %v1226
  %v1228 = vpop.xlane.xlu0 %1227
  %v1229 = vrcp.pop %v1228
  %v1230 = vmul.f32 %v1225, %v1229
  %1231 = vrot.lane.b32.xlu0 %v169, 64
  %v1232 = vpop.permute.xlu0 %1231
  %v1235 = vsel %vm180, %v1230, 0
  %1237 = vmatprep.subr.mxu0 0.0
  %1238 = vmatpush1.msra.mxu0 0.0
  %1239 = vmatprep.subr.mxu0 0.0
  %1240 = vmatpush1.msra.mxu0 0.0
  %1241 = vmatprep.subr.mxu0 0.0
  %1242 = vmatpush1.msra.mxu0 0.0
  %1243 = vmatprep.subr.mxu0 0.0
  %1244 = vmatpush1.msra.mxu0 0.0
  %1245 = vmatprep.subr.mxu0 0.0
  %1246 = vmatpush1.msra.mxu0 0.0
  %1247 = vmatprep.subr.mxu0 0.0
  %1248 = vmatpush1.msra.mxu0 0.0
  %1249 = vmatprep.subr.mxu0 0.0
  %1250 = vmatpush1.msra.mxu0 0.0
  %1251 = vmatprep.subr.mxu0 0.0
  %1252 = vmatpush1.msra.mxu0 0.0
  %1253 = vmatprep.subr.mxu0 0.0
  %1254 = vmatpush1.msra.mxu0 0.0
  %1255 = vmatprep.subr.mxu0 0.0
  %1256 = vmatpush1.msra.mxu0 0.0
  %1257 = vmatprep.subr.mxu0 0.0
  %1258 = vmatpush1.msra.mxu0 0.0
  %1259 = vmatprep.subr.mxu0 0.0
  %1260 = vmatpush1.msra.mxu0 0.0
  %1261 = vmatprep.subr.mxu0 0.0
  %1262 = vmatpush1.msra.mxu0 0.0
  %1263 = vmatprep.subr.mxu0 0.0
  %1264 = vmatpush1.msra.mxu0 0.0
  %1265 = vmatprep.subr.mxu0 0.0
  %1266 = vmatpush1.msra.mxu0 0.0
  %1267 = vmatprep.subr.mxu0 0.0
  %1268 = vmatpush1.msra.mxu0 %v1232
  %1269 = vmatprep.subr.mxu0 0.0
  %1270 = vmatpush2.msra.mxu0 0.0
  %1271 = vmatprep.subr.mxu0 0.0
  %1272 = vmatpush2.msra.mxu0 0.0
  %1273 = vmatprep.subr.mxu0 0.0
  %1274 = vmatpush2.msra.mxu0 0.0
  %1275 = vmatprep.subr.mxu0 0.0
  %1276 = vmatpush2.msra.mxu0 0.0
  %1277 = vmatprep.subr.mxu0 0.0
  %1278 = vmatpush2.msra.mxu0 0.0
  %1279 = vmatprep.subr.mxu0 0.0
  %1280 = vmatpush2.msra.mxu0 0.0
  %1281 = vmatprep.subr.mxu0 0.0
  %1282 = vmatpush2.msra.mxu0 0.0
  %1283 = vmatprep.subr.mxu0 0.0
  %1284 = vmatpush2.msra.mxu0 0.0
  %1285 = vmatprep.subr.mxu0 0.0
  %1286 = vmatpush2.msra.mxu0 0.0
  %1287 = vmatprep.subr.mxu0 0.0
  %1288 = vmatpush2.msra.mxu0 0.0
  %1289 = vmatprep.subr.mxu0 0.0
  %1290 = vmatpush2.msra.mxu0 0.0
  %1291 = vmatprep.subr.mxu0 0.0
  %1292 = vmatpush2.msra.mxu0 0.0
  %1293 = vmatprep.subr.mxu0 0.0
  %1294 = vmatpush2.msra.mxu0 0.0
  %1295 = vmatprep.subr.mxu0 0.0
  %1296 = vmatpush2.msra.mxu0 0.0
  %1297 = vmatprep.subr.mxu0 0.0
  %1298 = vmatpush2.msra.mxu0 0.0
  %1299 = vmatprep.subr.mxu0 0.0
  %1300 = vmatpush2.msra.mxu0 0.0
  %1301 = vmatprep.mubr.f32.mxu0 0.0
  %1302 = vmatmul.mubr.f32.gmra.mxu0 %v1235
  %v1303 = vpop.f32.mrf.mxu0
  %v1304 = vadd.f32 0.0, %v1303
  %v1305 = vpop.f32.mrf.mxu0
  %1306 = vdwg.mxu0
  %1307 = vrot.lane.b32.xlu0 %v169, 120
  %v1308 = vpop.permute.xlu0 %1307
  %1309 = vrot.lane.b32.xlu0 %v169, 88
  %v1310 = vpop.permute.xlu0 %1309
  %v1311 = vsel %vm180, %v1308, 0
  %v1313 = vsel %vm180, %v1310, 0
  %1315 = vmatprep.subr.mxu0 0.0
  %1316 = vmatpush1.xpose.msra.mxu0 0.0
  %1317 = vmatprep.subr.mxu0 0.0
  %1318 = vmatpush1.xpose.msra.mxu0 0.0
  %1319 = vmatprep.subr.mxu0 0.0
  %1320 = vmatpush1.xpose.msra.mxu0 0.0
  %1321 = vmatprep.subr.mxu0 0.0
  %1322 = vmatpush1.xpose.msra.mxu0 0.0
  %1323 = vmatprep.subr.mxu0 0.0
  %1324 = vmatpush1.xpose.msra.mxu0 0.0
  %1325 = vmatprep.subr.mxu0 0.0
  %1326 = vmatpush1.xpose.msra.mxu0 0.0
  %1327 = vmatprep.subr.mxu0 0.0
  %1328 = vmatpush1.xpose.msra.mxu0 0.0
  %1329 = vmatprep.subr.mxu0 0.0
  %1330 = vmatpush1.xpose.msra.mxu0 0.0
  %1331 = vmatprep.subr.mxu0 0.0
  %1332 = vmatpush1.xpose.msra.mxu0 0.0
  %1333 = vmatprep.subr.mxu0 0.0
  %1334 = vmatpush1.xpose.msra.mxu0 0.0
  %1335 = vmatprep.subr.mxu0 0.0
  %1336 = vmatpush1.xpose.msra.mxu0 0.0
  %1337 = vmatprep.subr.mxu0 0.0
  %1338 = vmatpush1.xpose.msra.mxu0 0.0
  %1339 = vmatprep.subr.mxu0 0.0
  %1340 = vmatpush1.xpose.msra.mxu0 0.0
  %1341 = vmatprep.subr.mxu0 0.0
  %1342 = vmatpush1.xpose.msra.mxu0 0.0
  %1343 = vmatprep.subr.mxu0 0.0
  %1344 = vmatpush1.xpose.msra.mxu0 0.0
  %1345 = vmatprep.subr.mxu0 0.0
  %1346 = vmatpush1.xpose.msra.mxu0 %v1313
  %1347 = vmatprep.subr.mxu0 0.0
  %1348 = vmatpush2.xpose.msra.mxu0 0.0
  %1349 = vmatprep.subr.mxu0 0.0
  %1350 = vmatpush2.xpose.msra.mxu0 0.0
  %1351 = vmatprep.subr.mxu0 0.0
  %1352 = vmatpush2.xpose.msra.mxu0 0.0
  %1353 = vmatprep.subr.mxu0 0.0
  %1354 = vmatpush2.xpose.msra.mxu0 0.0
  %1355 = vmatprep.subr.mxu0 0.0
  %1356 = vmatpush2.xpose.msra.mxu0 0.0
  %1357 = vmatprep.subr.mxu0 0.0
  %1358 = vmatpush2.xpose.msra.mxu0 0.0
  %1359 = vmatprep.subr.mxu0 0.0
  %1360 = vmatpush2.xpose.msra.mxu0 0.0
  %1361 = vmatprep.subr.mxu0 0.0
  %1362 = vmatpush2.xpose.msra.mxu0 0.0
  %1363 = vmatprep.subr.mxu0 0.0
  %1364 = vmatpush2.xpose.msra.mxu0 0.0
  %1365 = vmatprep.subr.mxu0 0.0
  %1366 = vmatpush2.xpose.msra.mxu0 0.0
  %1367 = vmatprep.subr.mxu0 0.0
  %1368 = vmatpush2.xpose.msra.mxu0 0.0
  %1369 = vmatprep.subr.mxu0 0.0
  %1370 = vmatpush2.xpose.msra.mxu0 0.0
  %1371 = vmatprep.subr.mxu0 0.0
  %1372 = vmatpush2.xpose.msra.mxu0 0.0
  %1373 = vmatprep.subr.mxu0 0.0
  %1374 = vmatpush2.xpose.msra.mxu0 0.0
  %1375 = vmatprep.subr.mxu0 0.0
  %1376 = vmatpush2.xpose.msra.mxu0 0.0
  %1377 = vmatprep.subr.mxu0 0.0
  %1378 = vmatpush2.xpose.msra.mxu0 0.0
  %1379 = vmatprep.mubr.f32.mxu0 0.0
  %1380 = vmatmul.mubr.f32.gmra.mxu0 %v1311
  %v1381 = vpop.f32.mrf.mxu0
  %v1382 = vadd.f32 0.0, %v1381
  %v1383 = vpop.f32.mrf.mxu0
  %1384 = vdwg.mxu0
  %v1385 = vmul.f32 %v1382, 0.35355338
  %v1386 = vadd.f32 %v1385, %v1140
  %v1387 = vsel %vm180, %v1386, -inf
  %1388 = vmax.xlane.f32.xlu0 %v1387
  %v1389 = vpop.xlane.xlu0 %1388
  %v1390 = vsub.f32 %v1386, %v1389
  %v1391 = vmul.f32 %v1390, 1.442695
  %v1392 = vpow.pop %v1391
  %v1393 = vsel %vm180, %v1392, 0.0
  %1394 = vadd.xlane.f32.xlu0 %v1393
  %v1395 = vpop.xlane.xlu0 %1394
  %v1396 = vrcp.pop %v1395
  %v1397 = vmul.f32 %v1392, %v1396
  %1398 = vrot.lane.b32.xlu0 %v169, 56
  %v1399 = vpop.permute.xlu0 %1398
  %v1402 = vsel %vm180, %v1397, 0
  %1404 = vmatprep.subr.mxu0 0.0
  %1405 = vmatpush1.msra.mxu0 0.0
  %1406 = vmatprep.subr.mxu0 0.0
  %1407 = vmatpush1.msra.mxu0 0.0
  %1408 = vmatprep.subr.mxu0 0.0
  %1409 = vmatpush1.msra.mxu0 0.0
  %1410 = vmatprep.subr.mxu0 0.0
  %1411 = vmatpush1.msra.mxu0 0.0
  %1412 = vmatprep.subr.mxu0 0.0
  %1413 = vmatpush1.msra.mxu0 0.0
  %1414 = vmatprep.subr.mxu0 0.0
  %1415 = vmatpush1.msra.mxu0 0.0
  %1416 = vmatprep.subr.mxu0 0.0
  %1417 = vmatpush1.msra.mxu0 0.0
  %1418 = vmatprep.subr.mxu0 0.0
  %1419 = vmatpush1.msra.mxu0 0.0
  %1420 = vmatprep.subr.mxu0 0.0
  %1421 = vmatpush1.msra.mxu0 0.0
  %1422 = vmatprep.subr.mxu0 0.0
  %1423 = vmatpush1.msra.mxu0 0.0
  %1424 = vmatprep.subr.mxu0 0.0
  %1425 = vmatpush1.msra.mxu0 0.0
  %1426 = vmatprep.subr.mxu0 0.0
  %1427 = vmatpush1.msra.mxu0 0.0
  %1428 = vmatprep.subr.mxu0 0.0
  %1429 = vmatpush1.msra.mxu0 0.0
  %1430 = vmatprep.subr.mxu0 0.0
  %1431 = vmatpush1.msra.mxu0 0.0
  %1432 = vmatprep.subr.mxu0 0.0
  %1433 = vmatpush1.msra.mxu0 0.0
  %1434 = vmatprep.subr.mxu0 0.0
  %1435 = vmatpush1.msra.mxu0 %v1399
  %1436 = vmatprep.subr.mxu0 0.0
  %1437 = vmatpush2.msra.mxu0 0.0
  %1438 = vmatprep.subr.mxu0 0.0
  %1439 = vmatpush2.msra.mxu0 0.0
  %1440 = vmatprep.subr.mxu0 0.0
  %1441 = vmatpush2.msra.mxu0 0.0
  %1442 = vmatprep.subr.mxu0 0.0
  %1443 = vmatpush2.msra.mxu0 0.0
  %1444 = vmatprep.subr.mxu0 0.0
  %1445 = vmatpush2.msra.mxu0 0.0
  %1446 = vmatprep.subr.mxu0 0.0
  %1447 = vmatpush2.msra.mxu0 0.0
  %1448 = vmatprep.subr.mxu0 0.0
  %1449 = vmatpush2.msra.mxu0 0.0
  %1450 = vmatprep.subr.mxu0 0.0
  %1451 = vmatpush2.msra.mxu0 0.0
  %1452 = vmatprep.subr.mxu0 0.0
  %1453 = vmatpush2.msra.mxu0 0.0
  %1454 = vmatprep.subr.mxu0 0.0
  %1455 = vmatpush2.msra.mxu0 0.0
  %1456 = vmatprep.subr.mxu0 0.0
  %1457 = vmatpush2.msra.mxu0 0.0
  %1458 = vmatprep.subr.mxu0 0.0
  %1459 = vmatpush2.msra.mxu0 0.0
  %1460 = vmatprep.subr.mxu0 0.0
  %1461 = vmatpush2.msra.mxu0 0.0
  %1462 = vmatprep.subr.mxu0 0.0
  %1463 = vmatpush2.msra.mxu0 0.0
  %1464 = vmatprep.subr.mxu0 0.0
  %1465 = vmatpush2.msra.mxu0 0.0
  %1466 = vmatprep.subr.mxu0 0.0
  %1467 = vmatpush2.msra.mxu0 0.0
  %1468 = vmatprep.mubr.f32.mxu0 0.0
  %1469 = vmatmul.mubr.f32.gmra.mxu0 %v1402
  %v1470 = vpop.f32.mrf.mxu0
  %v1471 = vadd.f32 0.0, %v1470
  %v1472 = vpop.f32.mrf.mxu0
  %1473 = vdwg.mxu0
  %v1475 = vsel %vm180, %v1471, 0
  %1477 = vmatprep.subr.mxu0 0.0
  %1478 = vmatpush1.msra.mxu0 0.0
  %1479 = vmatprep.subr.mxu0 0.0
  %1480 = vmatpush1.msra.mxu0 0.0
  %1481 = vmatprep.subr.mxu0 0.0
  %1482 = vmatpush1.msra.mxu0 0.0
  %1483 = vmatprep.subr.mxu0 0.0
  %1484 = vmatpush1.msra.mxu0 0.0
  %1485 = vmatprep.subr.mxu0 0.0
  %1486 = vmatpush1.msra.mxu0 0.0
  %1487 = vmatprep.subr.mxu0 0.0
  %1488 = vmatpush1.msra.mxu0 0.0
  %1489 = vmatprep.subr.mxu0 0.0
  %1490 = vmatpush1.msra.mxu0 0.0
  %1491 = vmatprep.subr.mxu0 0.0
  %1492 = vmatpush1.msra.mxu0 0.0
  %1493 = vmatprep.subr.mxu0 0.0
  %1494 = vmatpush1.msra.mxu0 0.0
  %1495 = vmatprep.subr.mxu0 0.0
  %1496 = vmatpush1.msra.mxu0 0.0
  %1497 = vmatprep.subr.mxu0 0.0
  %1498 = vmatpush1.msra.mxu0 0.0
  %1499 = vmatprep.subr.mxu0 0.0
  %1500 = vmatpush1.msra.mxu0 0.0
  %1501 = vmatprep.subr.mxu0 0.0
  %1502 = vmatpush1.msra.mxu0 0.0
  %1503 = vmatprep.subr.mxu0 0.0
  %1504 = vmatpush1.msra.mxu0 0.0
  %1505 = vmatprep.subr.mxu0 0.0
  %1506 = vmatpush1.msra.mxu0 0.0
  %1507 = vmatprep.subr.mxu0 0.0
  %1508 = vmatpush1.msra.mxu0 %v173
  %1509 = vmatprep.subr.mxu0 0.0
  %1510 = vmatpush2.msra.mxu0 0.0
  %1511 = vmatprep.subr.mxu0 0.0
  %1512 = vmatpush2.msra.mxu0 0.0
  %1513 = vmatprep.subr.mxu0 0.0
  %1514 = vmatpush2.msra.mxu0 0.0
  %1515 = vmatprep.subr.mxu0 0.0
  %1516 = vmatpush2.msra.mxu0 0.0
  %1517 = vmatprep.subr.mxu0 0.0
  %1518 = vmatpush2.msra.mxu0 0.0
  %1519 = vmatprep.subr.mxu0 0.0
  %1520 = vmatpush2.msra.mxu0 0.0
  %1521 = vmatprep.subr.mxu0 0.0
  %1522 = vmatpush2.msra.mxu0 0.0
  %1523 = vmatprep.subr.mxu0 0.0
  %1524 = vmatpush2.msra.mxu0 0.0
  %1525 = vmatprep.subr.mxu0 0.0
  %1526 = vmatpush2.msra.mxu0 0.0
  %1527 = vmatprep.subr.mxu0 0.0
  %1528 = vmatpush2.msra.mxu0 0.0
  %1529 = vmatprep.subr.mxu0 0.0
  %1530 = vmatpush2.msra.mxu0 0.0
  %1531 = vmatprep.subr.mxu0 0.0
  %1532 = vmatpush2.msra.mxu0 0.0
  %1533 = vmatprep.subr.mxu0 0.0
  %1534 = vmatpush2.msra.mxu0 0.0
  %1535 = vmatprep.subr.mxu0 0.0
  %1536 = vmatpush2.msra.mxu0 0.0
  %1537 = vmatprep.subr.mxu0 0.0
  %1538 = vmatpush2.msra.mxu0 0.0
  %1539 = vmatprep.subr.mxu0 0.0
  %1540 = vmatpush2.msra.mxu0 0.0
  %1541 = vmatprep.mubr.f32.mxu0 0.0
  %1542 = vmatmul.mubr.f32.gmra.mxu0 %v1475
  %v1543 = vpop.f32.mrf.mxu0
  %v1544 = vadd.f32 0.0, %v1543
  %v1545 = vpop.f32.mrf.mxu0
  %1546 = vdwg.mxu0
  %v1548 = vsel %vm180, %v1304, 0
  %1550 = vmatprep.subr.mxu0 0.0
  %1551 = vmatpush1.msra.mxu0 0.0
  %1552 = vmatprep.subr.mxu0 0.0
  %1553 = vmatpush1.msra.mxu0 0.0
  %1554 = vmatprep.subr.mxu0 0.0
  %1555 = vmatpush1.msra.mxu0 0.0
  %1556 = vmatprep.subr.mxu0 0.0
  %1557 = vmatpush1.msra.mxu0 0.0
  %1558 = vmatprep.subr.mxu0 0.0
  %1559 = vmatpush1.msra.mxu0 0.0
  %1560 = vmatprep.subr.mxu0 0.0
  %1561 = vmatpush1.msra.mxu0 0.0
  %1562 = vmatprep.subr.mxu0 0.0
  %1563 = vmatpush1.msra.mxu0 0.0
  %1564 = vmatprep.subr.mxu0 0.0
  %1565 = vmatpush1.msra.mxu0 0.0
  %1566 = vmatprep.subr.mxu0 0.0
  %1567 = vmatpush1.msra.mxu0 0.0
  %1568 = vmatprep.subr.mxu0 0.0
  %1569 = vmatpush1.msra.mxu0 0.0
  %1570 = vmatprep.subr.mxu0 0.0
  %1571 = vmatpush1.msra.mxu0 0.0
  %1572 = vmatprep.subr.mxu0 0.0
  %1573 = vmatpush1.msra.mxu0 0.0
  %1574 = vmatprep.subr.mxu0 0.0
  %1575 = vmatpush1.msra.mxu0 0.0
  %1576 = vmatprep.subr.mxu0 0.0
  %1577 = vmatpush1.msra.mxu0 0.0
  %1578 = vmatprep.subr.mxu0 0.0
  %1579 = vmatpush1.msra.mxu0 0.0
  %1580 = vmatprep.subr.mxu0 0.0
  %1581 = vmatpush1.msra.mxu0 %v172
  %1582 = vmatprep.subr.mxu0 0.0
  %1583 = vmatpush2.msra.mxu0 0.0
  %1584 = vmatprep.subr.mxu0 0.0
  %1585 = vmatpush2.msra.mxu0 0.0
  %1586 = vmatprep.subr.mxu0 0.0
  %1587 = vmatpush2.msra.mxu0 0.0
  %1588 = vmatprep.subr.mxu0 0.0
  %1589 = vmatpush2.msra.mxu0 0.0
  %1590 = vmatprep.subr.mxu0 0.0
  %1591 = vmatpush2.msra.mxu0 0.0
  %1592 = vmatprep.subr.mxu0 0.0
  %1593 = vmatpush2.msra.mxu0 0.0
  %1594 = vmatprep.subr.mxu0 0.0
  %1595 = vmatpush2.msra.mxu0 0.0
  %1596 = vmatprep.subr.mxu0 0.0
  %1597 = vmatpush2.msra.mxu0 0.0
  %1598 = vmatprep.subr.mxu0 0.0
  %1599 = vmatpush2.msra.mxu0 0.0
  %1600 = vmatprep.subr.mxu0 0.0
  %1601 = vmatpush2.msra.mxu0 0.0
  %1602 = vmatprep.subr.mxu0 0.0
  %1603 = vmatpush2.msra.mxu0 0.0
  %1604 = vmatprep.subr.mxu0 0.0
  %1605 = vmatpush2.msra.mxu0 0.0
  %1606 = vmatprep.subr.mxu0 0.0
  %1607 = vmatpush2.msra.mxu0 0.0
  %1608 = vmatprep.subr.mxu0 0.0
  %1609 = vmatpush2.msra.mxu0 0.0
  %1610 = vmatprep.subr.mxu0 0.0
  %1611 = vmatpush2.msra.mxu0 0.0
  %1612 = vmatprep.subr.mxu0 0.0
  %1613 = vmatpush2.msra.mxu0 0.0
  %1614 = vmatprep.mubr.f32.mxu0 0.0
  %1615 = vmatmul.mubr.f32.gmra.mxu0 %v1548
  %v1616 = vpop.f32.mrf.mxu0
  %v1617 = vadd.f32 %v1544, %v1616
  %v1618 = vpop.f32.mrf.mxu0
  %1619 = vdwg.mxu0
  %1620 = vrot.lane.b32.xlu0 %v169, 112
  %v1621 = vpop.permute.xlu0 %1620
  %1622 = vrot.lane.b32.xlu0 %v169, 80
  %v1623 = vpop.permute.xlu0 %1622
  %v1624 = vsel %vm180, %v1621, 0
  %v1626 = vsel %vm180, %v1623, 0
  %1628 = vmatprep.subr.mxu0 0.0
  %1629 = vmatpush1.xpose.msra.mxu0 0.0
  %1630 = vmatprep.subr.mxu0 0.0
  %1631 = vmatpush1.xpose.msra.mxu0 0.0
  %1632 = vmatprep.subr.mxu0 0.0
  %1633 = vmatpush1.xpose.msra.mxu0 0.0
  %1634 = vmatprep.subr.mxu0 0.0
  %1635 = vmatpush1.xpose.msra.mxu0 0.0
  %1636 = vmatprep.subr.mxu0 0.0
  %1637 = vmatpush1.xpose.msra.mxu0 0.0
  %1638 = vmatprep.subr.mxu0 0.0
  %1639 = vmatpush1.xpose.msra.mxu0 0.0
  %1640 = vmatprep.subr.mxu0 0.0
  %1641 = vmatpush1.xpose.msra.mxu0 0.0
  %1642 = vmatprep.subr.mxu0 0.0
  %1643 = vmatpush1.xpose.msra.mxu0 0.0
  %1644 = vmatprep.subr.mxu0 0.0
  %1645 = vmatpush1.xpose.msra.mxu0 0.0
  %1646 = vmatprep.subr.mxu0 0.0
  %1647 = vmatpush1.xpose.msra.mxu0 0.0
  %1648 = vmatprep.subr.mxu0 0.0
  %1649 = vmatpush1.xpose.msra.mxu0 0.0
  %1650 = vmatprep.subr.mxu0 0.0
  %1651 = vmatpush1.xpose.msra.mxu0 0.0
  %1652 = vmatprep.subr.mxu0 0.0
  %1653 = vmatpush1.xpose.msra.mxu0 0.0
  %1654 = vmatprep.subr.mxu0 0.0
  %1655 = vmatpush1.xpose.msra.mxu0 0.0
  %1656 = vmatprep.subr.mxu0 0.0
  %1657 = vmatpush1.xpose.msra.mxu0 0.0
  %1658 = vmatprep.subr.mxu0 0.0
  %1659 = vmatpush1.xpose.msra.mxu0 %v1626
  %1660 = vmatprep.subr.mxu0 0.0
  %1661 = vmatpush2.xpose.msra.mxu0 0.0
  %1662 = vmatprep.subr.mxu0 0.0
  %1663 = vmatpush2.xpose.msra.mxu0 0.0
  %1664 = vmatprep.subr.mxu0 0.0
  %1665 = vmatpush2.xpose.msra.mxu0 0.0
  %1666 = vmatprep.subr.mxu0 0.0
  %1667 = vmatpush2.xpose.msra.mxu0 0.0
  %1668 = vmatprep.subr.mxu0 0.0
  %1669 = vmatpush2.xpose.msra.mxu0 0.0
  %1670 = vmatprep.subr.mxu0 0.0
  %1671 = vmatpush2.xpose.msra.mxu0 0.0
  %1672 = vmatprep.subr.mxu0 0.0
  %1673 = vmatpush2.xpose.msra.mxu0 0.0
  %1674 = vmatprep.subr.mxu0 0.0
  %1675 = vmatpush2.xpose.msra.mxu0 0.0
  %1676 = vmatprep.subr.mxu0 0.0
  %1677 = vmatpush2.xpose.msra.mxu0 0.0
  %1678 = vmatprep.subr.mxu0 0.0
  %1679 = vmatpush2.xpose.msra.mxu0 0.0
  %1680 = vmatprep.subr.mxu0 0.0
  %1681 = vmatpush2.xpose.msra.mxu0 0.0
  %1682 = vmatprep.subr.mxu0 0.0
  %1683 = vmatpush2.xpose.msra.mxu0 0.0
  %1684 = vmatprep.subr.mxu0 0.0
  %1685 = vmatpush2.xpose.msra.mxu0 0.0
  %1686 = vmatprep.subr.mxu0 0.0
  %1687 = vmatpush2.xpose.msra.mxu0 0.0
  %1688 = vmatprep.subr.mxu0 0.0
  %1689 = vmatpush2.xpose.msra.mxu0 0.0
  %1690 = vmatprep.subr.mxu0 0.0
  %1691 = vmatpush2.xpose.msra.mxu0 0.0
  %1692 = vmatprep.mubr.f32.mxu0 0.0
  %1693 = vmatmul.mubr.f32.gmra.mxu0 %v1624
  %v1694 = vpop.f32.mrf.mxu0
  %v1695 = vadd.f32 0.0, %v1694
  %v1696 = vpop.f32.mrf.mxu0
  %1697 = vdwg.mxu0
  %v1698 = vmul.f32 %v1695, 0.35355338
  %v1699 = vadd.f32 %v1698, %v1140
  %v1700 = vsel %vm180, %v1699, -inf
  %1701 = vmax.xlane.f32.xlu0 %v1700
  %v1702 = vpop.xlane.xlu0 %1701
  %v1703 = vsub.f32 %v1699, %v1702
  %v1704 = vmul.f32 %v1703, 1.442695
  %v1705 = vpow.pop %v1704
  %v1706 = vsel %vm180, %v1705, 0.0
  %1707 = vadd.xlane.f32.xlu0 %v1706
  %v1708 = vpop.xlane.xlu0 %1707
  %v1709 = vrcp.pop %v1708
  %v1710 = vmul.f32 %v1705, %v1709
  %1711 = vrot.lane.b32.xlu0 %v169, 48
  %v1712 = vpop.permute.xlu0 %1711
  %v1715 = vsel %vm180, %v1710, 0
  %1717 = vmatprep.subr.mxu0 0.0
  %1718 = vmatpush1.msra.mxu0 0.0
  %1719 = vmatprep.subr.mxu0 0.0
  %1720 = vmatpush1.msra.mxu0 0.0
  %1721 = vmatprep.subr.mxu0 0.0
  %1722 = vmatpush1.msra.mxu0 0.0
  %1723 = vmatprep.subr.mxu0 0.0
  %1724 = vmatpush1.msra.mxu0 0.0
  %1725 = vmatprep.subr.mxu0 0.0
  %1726 = vmatpush1.msra.mxu0 0.0
  %1727 = vmatprep.subr.mxu0 0.0
  %1728 = vmatpush1.msra.mxu0 0.0
  %1729 = vmatprep.subr.mxu0 0.0
  %1730 = vmatpush1.msra.mxu0 0.0
  %1731 = vmatprep.subr.mxu0 0.0
  %1732 = vmatpush1.msra.mxu0 0.0
  %1733 = vmatprep.subr.mxu0 0.0
  %1734 = vmatpush1.msra.mxu0 0.0
  %1735 = vmatprep.subr.mxu0 0.0
  %1736 = vmatpush1.msra.mxu0 0.0
  %1737 = vmatprep.subr.mxu0 0.0
  %1738 = vmatpush1.msra.mxu0 0.0
  %1739 = vmatprep.subr.mxu0 0.0
  %1740 = vmatpush1.msra.mxu0 0.0
  %1741 = vmatprep.subr.mxu0 0.0
  %1742 = vmatpush1.msra.mxu0 0.0
  %1743 = vmatprep.subr.mxu0 0.0
  %1744 = vmatpush1.msra.mxu0 0.0
  %1745 = vmatprep.subr.mxu0 0.0
  %1746 = vmatpush1.msra.mxu0 0.0
  %1747 = vmatprep.subr.mxu0 0.0
  %1748 = vmatpush1.msra.mxu0 %v1712
  %1749 = vmatprep.subr.mxu0 0.0
  %1750 = vmatpush2.msra.mxu0 0.0
  %1751 = vmatprep.subr.mxu0 0.0
  %1752 = vmatpush2.msra.mxu0 0.0
  %1753 = vmatprep.subr.mxu0 0.0
  %1754 = vmatpush2.msra.mxu0 0.0
  %1755 = vmatprep.subr.mxu0 0.0
  %1756 = vmatpush2.msra.mxu0 0.0
  %1757 = vmatprep.subr.mxu0 0.0
  %1758 = vmatpush2.msra.mxu0 0.0
  %1759 = vmatprep.subr.mxu0 0.0
  %1760 = vmatpush2.msra.mxu0 0.0
  %1761 = vmatprep.subr.mxu0 0.0
  %1762 = vmatpush2.msra.mxu0 0.0
  %1763 = vmatprep.subr.mxu0 0.0
  %1764 = vmatpush2.msra.mxu0 0.0
  %1765 = vmatprep.subr.mxu0 0.0
  %1766 = vmatpush2.msra.mxu0 0.0
  %1767 = vmatprep.subr.mxu0 0.0
  %1768 = vmatpush2.msra.mxu0 0.0
  %1769 = vmatprep.subr.mxu0 0.0
  %1770 = vmatpush2.msra.mxu0 0.0
  %1771 = vmatprep.subr.mxu0 0.0
  %1772 = vmatpush2.msra.mxu0 0.0
  %1773 = vmatprep.subr.mxu0 0.0
  %1774 = vmatpush2.msra.mxu0 0.0
  %1775 = vmatprep.subr.mxu0 0.0
  %1776 = vmatpush2.msra.mxu0 0.0
  %1777 = vmatprep.subr.mxu0 0.0
  %1778 = vmatpush2.msra.mxu0 0.0
  %1779 = vmatprep.subr.mxu0 0.0
  %1780 = vmatpush2.msra.mxu0 0.0
  %1781 = vmatprep.mubr.f32.mxu0 0.0
  %1782 = vmatmul.mubr.f32.gmra.mxu0 %v1715
  %v1783 = vpop.f32.mrf.mxu0
  %v1784 = vadd.f32 0.0, %v1783
  %v1785 = vpop.f32.mrf.mxu0
  %1786 = vdwg.mxu0
  %v1788 = vsel %vm180, %v1784, 0
  %1790 = vmatprep.subr.mxu0 0.0
  %1791 = vmatpush1.msra.mxu0 0.0
  %1792 = vmatprep.subr.mxu0 0.0
  %1793 = vmatpush1.msra.mxu0 0.0
  %1794 = vmatprep.subr.mxu0 0.0
  %1795 = vmatpush1.msra.mxu0 0.0
  %1796 = vmatprep.subr.mxu0 0.0
  %1797 = vmatpush1.msra.mxu0 0.0
  %1798 = vmatprep.subr.mxu0 0.0
  %1799 = vmatpush1.msra.mxu0 0.0
  %1800 = vmatprep.subr.mxu0 0.0
  %1801 = vmatpush1.msra.mxu0 0.0
  %1802 = vmatprep.subr.mxu0 0.0
  %1803 = vmatpush1.msra.mxu0 0.0
  %1804 = vmatprep.subr.mxu0 0.0
  %1805 = vmatpush1.msra.mxu0 0.0
  %1806 = vmatprep.subr.mxu0 0.0
  %1807 = vmatpush1.msra.mxu0 0.0
  %1808 = vmatprep.subr.mxu0 0.0
  %1809 = vmatpush1.msra.mxu0 0.0
  %1810 = vmatprep.subr.mxu0 0.0
  %1811 = vmatpush1.msra.mxu0 0.0
  %1812 = vmatprep.subr.mxu0 0.0
  %1813 = vmatpush1.msra.mxu0 0.0
  %1814 = vmatprep.subr.mxu0 0.0
  %1815 = vmatpush1.msra.mxu0 0.0
  %1816 = vmatprep.subr.mxu0 0.0
  %1817 = vmatpush1.msra.mxu0 0.0
  %1818 = vmatprep.subr.mxu0 0.0
  %1819 = vmatpush1.msra.mxu0 0.0
  %1820 = vmatprep.subr.mxu0 0.0
  %1821 = vmatpush1.msra.mxu0 %v174
  %1822 = vmatprep.subr.mxu0 0.0
  %1823 = vmatpush2.msra.mxu0 0.0
  %1824 = vmatprep.subr.mxu0 0.0
  %1825 = vmatpush2.msra.mxu0 0.0
  %1826 = vmatprep.subr.mxu0 0.0
  %1827 = vmatpush2.msra.mxu0 0.0
  %1828 = vmatprep.subr.mxu0 0.0
  %1829 = vmatpush2.msra.mxu0 0.0
  %1830 = vmatprep.subr.mxu0 0.0
  %1831 = vmatpush2.msra.mxu0 0.0
  %1832 = vmatprep.subr.mxu0 0.0
  %1833 = vmatpush2.msra.mxu0 0.0
  %1834 = vmatprep.subr.mxu0 0.0
  %1835 = vmatpush2.msra.mxu0 0.0
  %1836 = vmatprep.subr.mxu0 0.0
  %1837 = vmatpush2.msra.mxu0 0.0
  %1838 = vmatprep.subr.mxu0 0.0
  %1839 = vmatpush2.msra.mxu0 0.0
  %1840 = vmatprep.subr.mxu0 0.0
  %1841 = vmatpush2.msra.mxu0 0.0
  %1842 = vmatprep.subr.mxu0 0.0
  %1843 = vmatpush2.msra.mxu0 0.0
  %1844 = vmatprep.subr.mxu0 0.0
  %1845 = vmatpush2.msra.mxu0 0.0
  %1846 = vmatprep.subr.mxu0 0.0
  %1847 = vmatpush2.msra.mxu0 0.0
  %1848 = vmatprep.subr.mxu0 0.0
  %1849 = vmatpush2.msra.mxu0 0.0
  %1850 = vmatprep.subr.mxu0 0.0
  %1851 = vmatpush2.msra.mxu0 0.0
  %1852 = vmatprep.subr.mxu0 0.0
  %1853 = vmatpush2.msra.mxu0 0.0
  %1854 = vmatprep.mubr.f32.mxu0 0.0
  %1855 = vmatmul.mubr.f32.gmra.mxu0 %v1788
  %v1856 = vpop.f32.mrf.mxu0
  %v1857 = vadd.f32 0.0, %v1856
  %v1858 = vpop.f32.mrf.mxu0
  %1859 = vdwg.mxu0
  %v1860 = vadd.f32 %v1617, %v1857
  %1861 = vrot.lane.b32.xlu0 %v169, 104
  %v1862 = vpop.permute.xlu0 %1861
  %1863 = vrot.lane.b32.xlu0 %v169, 72
  %v1864 = vpop.permute.xlu0 %1863
  %v1865 = vsel %vm180, %v1862, 0
  %v1867 = vsel %vm180, %v1864, 0
  %1869 = vmatprep.subr.mxu0 0.0
  %1870 = vmatpush1.xpose.msra.mxu0 0.0
  %1871 = vmatprep.subr.mxu0 0.0
  %1872 = vmatpush1.xpose.msra.mxu0 0.0
  %1873 = vmatprep.subr.mxu0 0.0
  %1874 = vmatpush1.xpose.msra.mxu0 0.0
  %1875 = vmatprep.subr.mxu0 0.0
  %1876 = vmatpush1.xpose.msra.mxu0 0.0
  %1877 = vmatprep.subr.mxu0 0.0
  %1878 = vmatpush1.xpose.msra.mxu0 0.0
  %1879 = vmatprep.subr.mxu0 0.0
  %1880 = vmatpush1.xpose.msra.mxu0 0.0
  %1881 = vmatprep.subr.mxu0 0.0
  %1882 = vmatpush1.xpose.msra.mxu0 0.0
  %1883 = vmatprep.subr.mxu0 0.0
  %1884 = vmatpush1.xpose.msra.mxu0 0.0
  %1885 = vmatprep.subr.mxu0 0.0
  %1886 = vmatpush1.xpose.msra.mxu0 0.0
  %1887 = vmatprep.subr.mxu0 0.0
  %1888 = vmatpush1.xpose.msra.mxu0 0.0
  %1889 = vmatprep.subr.mxu0 0.0
  %1890 = vmatpush1.xpose.msra.mxu0 0.0
  %1891 = vmatprep.subr.mxu0 0.0
  %1892 = vmatpush1.xpose.msra.mxu0 0.0
  %1893 = vmatprep.subr.mxu0 0.0
  %1894 = vmatpush1.xpose.msra.mxu0 0.0
  %1895 = vmatprep.subr.mxu0 0.0
  %1896 = vmatpush1.xpose.msra.mxu0 0.0
  %1897 = vmatprep.subr.mxu0 0.0
  %1898 = vmatpush1.xpose.msra.mxu0 0.0
  %1899 = vmatprep.subr.mxu0 0.0
  %1900 = vmatpush1.xpose.msra.mxu0 %v1867
  %1901 = vmatprep.subr.mxu0 0.0
  %1902 = vmatpush2.xpose.msra.mxu0 0.0
  %1903 = vmatprep.subr.mxu0 0.0
  %1904 = vmatpush2.xpose.msra.mxu0 0.0
  %1905 = vmatprep.subr.mxu0 0.0
  %1906 = vmatpush2.xpose.msra.mxu0 0.0
  %1907 = vmatprep.subr.mxu0 0.0
  %1908 = vmatpush2.xpose.msra.mxu0 0.0
  %1909 = vmatprep.subr.mxu0 0.0
  %1910 = vmatpush2.xpose.msra.mxu0 0.0
  %1911 = vmatprep.subr.mxu0 0.0
  %1912 = vmatpush2.xpose.msra.mxu0 0.0
  %1913 = vmatprep.subr.mxu0 0.0
  %1914 = vmatpush2.xpose.msra.mxu0 0.0
  %1915 = vmatprep.subr.mxu0 0.0
  %1916 = vmatpush2.xpose.msra.mxu0 0.0
  %1917 = vmatprep.subr.mxu0 0.0
  %1918 = vmatpush2.xpose.msra.mxu0 0.0
  %1919 = vmatprep.subr.mxu0 0.0
  %1920 = vmatpush2.xpose.msra.mxu0 0.0
  %1921 = vmatprep.subr.mxu0 0.0
  %1922 = vmatpush2.xpose.msra.mxu0 0.0
  %1923 = vmatprep.subr.mxu0 0.0
  %1924 = vmatpush2.xpose.msra.mxu0 0.0
  %1925 = vmatprep.subr.mxu0 0.0
  %1926 = vmatpush2.xpose.msra.mxu0 0.0
  %1927 = vmatprep.subr.mxu0 0.0
  %1928 = vmatpush2.xpose.msra.mxu0 0.0
  %1929 = vmatprep.subr.mxu0 0.0
  %1930 = vmatpush2.xpose.msra.mxu0 0.0
  %1931 = vmatprep.subr.mxu0 0.0
  %1932 = vmatpush2.xpose.msra.mxu0 0.0
  %1933 = vmatprep.mubr.f32.mxu0 0.0
  %1934 = vmatmul.mubr.f32.gmra.mxu0 %v1865
  %v1935 = vpop.f32.mrf.mxu0
  %v1936 = vadd.f32 0.0, %v1935
  %v1937 = vpop.f32.mrf.mxu0
  %1938 = vdwg.mxu0
  %v1939 = vmul.f32 %v1936, 0.35355338
  %v1940 = vadd.f32 %v1939, %v1140
  %v1941 = vsel %vm180, %v1940, -inf
  %1942 = vmax.xlane.f32.xlu0 %v1941
  %v1943 = vpop.xlane.xlu0 %1942
  %v1944 = vsub.f32 %v1940, %v1943
  %v1945 = vmul.f32 %v1944, 1.442695
  %v1946 = vpow.pop %v1945
  %v1947 = vsel %vm180, %v1946, 0.0
  %1948 = vadd.xlane.f32.xlu0 %v1947
  %v1949 = vpop.xlane.xlu0 %1948
  %v1950 = vrcp.pop %v1949
  %v1951 = vmul.f32 %v1946, %v1950
  %1952 = vrot.lane.b32.xlu0 %v169, 40
  %v1953 = vpop.permute.xlu0 %1952
  %v1956 = vsel %vm180, %v1951, 0
  %1958 = vmatprep.subr.mxu0 0.0
  %1959 = vmatpush1.msra.mxu0 0.0
  %1960 = vmatprep.subr.mxu0 0.0
  %1961 = vmatpush1.msra.mxu0 0.0
  %1962 = vmatprep.subr.mxu0 0.0
  %1963 = vmatpush1.msra.mxu0 0.0
  %1964 = vmatprep.subr.mxu0 0.0
  %1965 = vmatpush1.msra.mxu0 0.0
  %1966 = vmatprep.subr.mxu0 0.0
  %1967 = vmatpush1.msra.mxu0 0.0
  %1968 = vmatprep.subr.mxu0 0.0
  %1969 = vmatpush1.msra.mxu0 0.0
  %1970 = vmatprep.subr.mxu0 0.0
  %1971 = vmatpush1.msra.mxu0 0.0
  %1972 = vmatprep.subr.mxu0 0.0
  %1973 = vmatpush1.msra.mxu0 0.0
  %1974 = vmatprep.subr.mxu0 0.0
  %1975 = vmatpush1.msra.mxu0 0.0
  %1976 = vmatprep.subr.mxu0 0.0
  %1977 = vmatpush1.msra.mxu0 0.0
  %1978 = vmatprep.subr.mxu0 0.0
  %1979 = vmatpush1.msra.mxu0 0.0
  %1980 = vmatprep.subr.mxu0 0.0
  %1981 = vmatpush1.msra.mxu0 0.0
  %1982 = vmatprep.subr.mxu0 0.0
  %1983 = vmatpush1.msra.mxu0 0.0
  %1984 = vmatprep.subr.mxu0 0.0
  %1985 = vmatpush1.msra.mxu0 0.0
  %1986 = vmatprep.subr.mxu0 0.0
  %1987 = vmatpush1.msra.mxu0 0.0
  %1988 = vmatprep.subr.mxu0 0.0
  %1989 = vmatpush1.msra.mxu0 %v1953
  %1990 = vmatprep.subr.mxu0 0.0
  %1991 = vmatpush2.msra.mxu0 0.0
  %1992 = vmatprep.subr.mxu0 0.0
  %1993 = vmatpush2.msra.mxu0 0.0
  %1994 = vmatprep.subr.mxu0 0.0
  %1995 = vmatpush2.msra.mxu0 0.0
  %1996 = vmatprep.subr.mxu0 0.0
  %1997 = vmatpush2.msra.mxu0 0.0
  %1998 = vmatprep.subr.mxu0 0.0
  %1999 = vmatpush2.msra.mxu0 0.0
  %2000 = vmatprep.subr.mxu0 0.0
  %2001 = vmatpush2.msra.mxu0 0.0
  %2002 = vmatprep.subr.mxu0 0.0
  %2003 = vmatpush2.msra.mxu0 0.0
  %2004 = vmatprep.subr.mxu0 0.0
  %2005 = vmatpush2.msra.mxu0 0.0
  %2006 = vmatprep.subr.mxu0 0.0
  %2007 = vmatpush2.msra.mxu0 0.0
  %2008 = vmatprep.subr.mxu0 0.0
  %2009 = vmatpush2.msra.mxu0 0.0
  %2010 = vmatprep.subr.mxu0 0.0
  %2011 = vmatpush2.msra.mxu0 0.0
  %2012 = vmatprep.subr.mxu0 0.0
  %2013 = vmatpush2.msra.mxu0 0.0
  %2014 = vmatprep.subr.mxu0 0.0
  %2015 = vmatpush2.msra.mxu0 0.0
  %2016 = vmatprep.subr.mxu0 0.0
  %2017 = vmatpush2.msra.mxu0 0.0
  %2018 = vmatprep.subr.mxu0 0.0
  %2019 = vmatpush2.msra.mxu0 0.0
  %2020 = vmatprep.subr.mxu0 0.0
  %2021 = vmatpush2.msra.mxu0 0.0
  %2022 = vmatprep.mubr.f32.mxu0 0.0
  %2023 = vmatmul.mubr.f32.gmra.mxu0 %v1956
  %v2024 = vpop.f32.mrf.mxu0
  %v2025 = vadd.f32 0.0, %v2024
  %v2026 = vpop.f32.mrf.mxu0
  %2027 = vdwg.mxu0
  %v2029 = vsel %vm180, %v2025, 0
  %2031 = vmatprep.subr.mxu0 0.0
  %2032 = vmatpush1.msra.mxu0 0.0
  %2033 = vmatprep.subr.mxu0 0.0
  %2034 = vmatpush1.msra.mxu0 0.0
  %2035 = vmatprep.subr.mxu0 0.0
  %2036 = vmatpush1.msra.mxu0 0.0
  %2037 = vmatprep.subr.mxu0 0.0
  %2038 = vmatpush1.msra.mxu0 0.0
  %2039 = vmatprep.subr.mxu0 0.0
  %2040 = vmatpush1.msra.mxu0 0.0
  %2041 = vmatprep.subr.mxu0 0.0
  %2042 = vmatpush1.msra.mxu0 0.0
  %2043 = vmatprep.subr.mxu0 0.0
  %2044 = vmatpush1.msra.mxu0 0.0
  %2045 = vmatprep.subr.mxu0 0.0
  %2046 = vmatpush1.msra.mxu0 0.0
  %2047 = vmatprep.subr.mxu0 0.0
  %2048 = vmatpush1.msra.mxu0 0.0
  %2049 = vmatprep.subr.mxu0 0.0
  %2050 = vmatpush1.msra.mxu0 0.0
  %2051 = vmatprep.subr.mxu0 0.0
  %2052 = vmatpush1.msra.mxu0 0.0
  %2053 = vmatprep.subr.mxu0 0.0
  %2054 = vmatpush1.msra.mxu0 0.0
  %2055 = vmatprep.subr.mxu0 0.0
  %2056 = vmatpush1.msra.mxu0 0.0
  %2057 = vmatprep.subr.mxu0 0.0
  %2058 = vmatpush1.msra.mxu0 0.0
  %2059 = vmatprep.subr.mxu0 0.0
  %2060 = vmatpush1.msra.mxu0 0.0
  %2061 = vmatprep.subr.mxu0 0.0
  %2062 = vmatpush1.msra.mxu0 %v175
  %2063 = vmatprep.subr.mxu0 0.0
  %2064 = vmatpush2.msra.mxu0 0.0
  %2065 = vmatprep.subr.mxu0 0.0
  %2066 = vmatpush2.msra.mxu0 0.0
  %2067 = vmatprep.subr.mxu0 0.0
  %2068 = vmatpush2.msra.mxu0 0.0
  %2069 = vmatprep.subr.mxu0 0.0
  %2070 = vmatpush2.msra.mxu0 0.0
  %2071 = vmatprep.subr.mxu0 0.0
  %2072 = vmatpush2.msra.mxu0 0.0
  %2073 = vmatprep.subr.mxu0 0.0
  %2074 = vmatpush2.msra.mxu0 0.0
  %2075 = vmatprep.subr.mxu0 0.0
  %2076 = vmatpush2.msra.mxu0 0.0
  %2077 = vmatprep.subr.mxu0 0.0
  %2078 = vmatpush2.msra.mxu0 0.0
  %2079 = vmatprep.subr.mxu0 0.0
  %2080 = vmatpush2.msra.mxu0 0.0
  %2081 = vmatprep.subr.mxu0 0.0
  %2082 = vmatpush2.msra.mxu0 0.0
  %2083 = vmatprep.subr.mxu0 0.0
  %2084 = vmatpush2.msra.mxu0 0.0
  %2085 = vmatprep.subr.mxu0 0.0
  %2086 = vmatpush2.msra.mxu0 0.0
  %2087 = vmatprep.subr.mxu0 0.0
  %2088 = vmatpush2.msra.mxu0 0.0
  %2089 = vmatprep.subr.mxu0 0.0
  %2090 = vmatpush2.msra.mxu0 0.0
  %2091 = vmatprep.subr.mxu0 0.0
  %2092 = vmatpush2.msra.mxu0 0.0
  %2093 = vmatprep.subr.mxu0 0.0
  %2094 = vmatpush2.msra.mxu0 0.0
  %2095 = vmatprep.mubr.f32.mxu0 0.0
  %2096 = vmatmul.mubr.f32.gmra.mxu0 %v2029
  %v2097 = vpop.f32.mrf.mxu0
  %v2098 = vadd.f32 0.0, %v2097
  %v2099 = vpop.f32.mrf.mxu0
  %2100 = vdwg.mxu0
  %v2101 = vadd.f32 %v1860, %v2098
  %v2102 = vld [vmem:[%s5] sm:$0x1]
  %v2104 = vlaneseq
  %v2105 = vshrl.u32 %v2104, 7
  %v2106 = vsub.s32 0, %v2105
  %v2107 = vrot.slane %v2102, %v2106
  %v2109 = vadd.f32 %v1138, %v2107
  %v2110 = vadd.f32 %v2101, %v2107
  %v2111 = vadd.f32 %v77, %v2109
  %v2112 = vadd.f32 %v78, %v2110
  %v2113 = vld [vmem:[%s14] sm:$0x1]
  %v2114 = vld [vmem:[%s15] sm:$0x1]
  %v2115 = vsel %vm90, %v2111, 0.0
  %2116 = vadd.xlane.f32.xlu0 %v2115
  %v2117 = vpop.xlane.xlu0 %2116
  %v2118 = vsel %vm90, %v2112, 0.0
  %2119 = vadd.xlane.f32.xlu0 %v2118
  %v2120 = vpop.xlane.xlu0 %2119
  %v2121 = vrcp.pop 32.0
  %v2122 = vmul.f32 %v2117, %v2121
  %v2123 = vmul.f32 %v2120, %v2121
  %v2124 = vsub.f32 %v2111, %v2122
  %v2125 = vsub.f32 %v2112, %v2123
  %v2126 = vmul.f32 %v2124, %v2124
  %v2127 = vmul.f32 %v2125, %v2125
  %v2128 = vsel %vm90, %v2126, 0.0
  %2129 = vadd.xlane.f32.xlu0 %v2128
  %v2130 = vpop.xlane.xlu0 %2129
  %v2131 = vsel %vm90, %v2127, 0.0
  %2132 = vadd.xlane.f32.xlu0 %v2131
  %v2133 = vpop.xlane.xlu0 %2132
  %v2134 = vmul.f32 %v2130, %v2121
  %v2135 = vmul.f32 %v2133, %v2121
  %v2136 = vadd.f32 %v2134, 1e-05
  %v2137 = vadd.f32 %v2135, 1e-05
  %v2138 = vrsqrt.pop %v2136
  %v2139 = vrsqrt.pop %v2137
  %v2140 = vmul.f32 %v2124, %v2138
  %v2141 = vmul.f32 %v2125, %v2139
  %v2143 = vlaneseq
  %v2144 = vshrl.u32 %v2143, 7
  %v2145 = vsub.s32 0, %v2144
  %v2146 = vrot.slane %v2113, %v2145
  %v2148 = vmul.f32 %v2140, %v2146
  %v2149 = vmul.f32 %v2141, %v2146
  %v2151 = vlaneseq
  %v2152 = vshrl.u32 %v2151, 7
  %v2153 = vsub.s32 0, %v2152
  %v2154 = vrot.slane %v2114, %v2153
  %v2156 = vadd.f32 %v2148, %v2154
  %v2157 = vadd.f32 %v2149, %v2154
  %v2158 = vld [vmem:[%s6] sm:$0xff]
  %v2159 = vld [vmem:[%s6 + $0x8] sm:$0xff]
  %v2160 = vld [vmem:[%s6 + $0x10] sm:$0xff]
  %v2161 = vld [vmem:[%s6 + $0x18] sm:$0xff]
  %v2162 = vld [vmem:[%s7] sm:$0x1]
  %v2164 = vlaneseq
  %v2165 = vshrl.u32 %v2164, 7
  %v2166 = vsub.s32 0, %v2165
  %v2167 = vrot.slane %v2162, %v2166
  %v2170 = vsel %vm90, %v2156, 0
  %v2173 = vsel %vm90, %v2157, 0
  %2175 = vmatprep.subr.mxu0 0.0
  %2176 = vmatpush1.msra.mxu0 0.0
  %2177 = vmatprep.subr.mxu0 0.0
  %2178 = vmatpush1.msra.mxu0 0.0
  %2179 = vmatprep.subr.mxu0 0.0
  %2180 = vmatpush1.msra.mxu0 0.0
  %2181 = vmatprep.subr.mxu0 0.0
  %2182 = vmatpush1.msra.mxu0 0.0
  %2183 = vmatprep.subr.mxu0 0.0
  %2184 = vmatpush1.msra.mxu0 0.0
  %2185 = vmatprep.subr.mxu0 0.0
  %2186 = vmatpush1.msra.mxu0 0.0
  %2187 = vmatprep.subr.mxu0 0.0
  %2188 = vmatpush1.msra.mxu0 0.0
  %2189 = vmatprep.subr.mxu0 0.0
  %2190 = vmatpush1.msra.mxu0 0.0
  %2191 = vmatprep.subr.mxu0 0.0
  %2192 = vmatpush1.msra.mxu0 0.0
  %2193 = vmatprep.subr.mxu0 0.0
  %2194 = vmatpush1.msra.mxu0 0.0
  %2195 = vmatprep.subr.mxu0 0.0
  %2196 = vmatpush1.msra.mxu0 0.0
  %2197 = vmatprep.subr.mxu0 0.0
  %2198 = vmatpush1.msra.mxu0 0.0
  %2199 = vmatprep.subr.mxu0 0.0
  %2200 = vmatpush1.msra.mxu0 %v2161
  %2201 = vmatprep.subr.mxu0 0.0
  %2202 = vmatpush1.msra.mxu0 %v2160
  %2203 = vmatprep.subr.mxu0 0.0
  %2204 = vmatpush1.msra.mxu0 %v2159
  %2205 = vmatprep.subr.mxu0 0.0
  %2206 = vmatpush1.msra.mxu0 %v2158
  %2207 = vmatprep.subr.mxu0 0.0
  %2208 = vmatpush2.msra.mxu0 0.0
  %2209 = vmatprep.subr.mxu0 0.0
  %2210 = vmatpush2.msra.mxu0 0.0
  %2211 = vmatprep.subr.mxu0 0.0
  %2212 = vmatpush2.msra.mxu0 0.0
  %2213 = vmatprep.subr.mxu0 0.0
  %2214 = vmatpush2.msra.mxu0 0.0
  %2215 = vmatprep.subr.mxu0 0.0
  %2216 = vmatpush2.msra.mxu0 0.0
  %2217 = vmatprep.subr.mxu0 0.0
  %2218 = vmatpush2.msra.mxu0 0.0
  %2219 = vmatprep.subr.mxu0 0.0
  %2220 = vmatpush2.msra.mxu0 0.0
  %2221 = vmatprep.subr.mxu0 0.0
  %2222 = vmatpush2.msra.mxu0 0.0
  %2223 = vmatprep.subr.mxu0 0.0
  %2224 = vmatpush2.msra.mxu0 0.0
  %2225 = vmatprep.subr.mxu0 0.0
  %2226 = vmatpush2.msra.mxu0 0.0
  %2227 = vmatprep.subr.mxu0 0.0
  %2228 = vmatpush2.msra.mxu0 0.0
  %2229 = vmatprep.subr.mxu0 0.0
  %2230 = vmatpush2.msra.mxu0 0.0
  %2231 = vmatprep.subr.mxu0 0.0
  %2232 = vmatpush2.msra.mxu0 0.0
  %2233 = vmatprep.subr.mxu0 0.0
  %2234 = vmatpush2.msra.mxu0 0.0
  %2235 = vmatprep.subr.mxu0 0.0
  %2236 = vmatpush2.msra.mxu0 0.0
  %2237 = vmatprep.subr.mxu0 0.0
  %2238 = vmatpush2.msra.mxu0 0.0
  %2239 = vmatprep.mubr.f32.mxu0 0.0
  %2240 = vmatmul.mubr.f32.gmra.mxu0 %v2170
  %v2241 = vpop.f32.mrf.mxu0
  %v2242 = vadd.f32 %v2167, %v2241
  %v2243 = vpop.f32.mrf.mxu0
  %2244 = vmatprep.mubr.f32.mxu0 0.0
  %2245 = vmatmul.mubr.f32.gmra.mxu0 %v2173
  %v2246 = vpop.f32.mrf.mxu0
  %v2247 = vadd.f32 %v2167, %v2246
  %v2248 = vpop.f32.mrf.mxu0
  %2249 = vdwg.mxu0
  %v2250 = vld [vmem:[%s1] sm:$0xff]
  %v2251 = vld [vmem:[%s1 + $0x8] sm:$0xff]
  %v2252 = vld [vmem:[%s1 + $0x10] sm:$0xff]
  %v2253 = vld [vmem:[%s1 + $0x18] sm:$0xff]
  %v2254 = vld [vmem:[%s8] sm:$0xff]
  %v2255 = vld [vmem:[%s8 + $0x8] sm:$0xff]
  %v2256 = vld [vmem:[%s8 + $0x10] sm:$0xff]
  %v2257 = vld [vmem:[%s8 + $0x18] sm:$0xff]
  %v2258 = vld [vmem:[%s23] sm:$0xff]
  %v2260 = vsel %vm180, %v2242, 0
  %v2263 = vsel %vm180, %v2250, 0
  %v2266 = vsel %vm180, %v2251, 0
  %2268 = vmatprep.subr.mxu0 0.0
  %2269 = vmatpush1.xpose.msra.mxu0 0.0
  %2270 = vmatprep.subr.mxu0 0.0
  %2271 = vmatpush1.xpose.msra.mxu0 0.0
  %2272 = vmatprep.subr.mxu0 0.0
  %2273 = vmatpush1.xpose.msra.mxu0 0.0
  %2274 = vmatprep.subr.mxu0 0.0
  %2275 = vmatpush1.xpose.msra.mxu0 0.0
  %2276 = vmatprep.subr.mxu0 0.0
  %2277 = vmatpush1.xpose.msra.mxu0 0.0
  %2278 = vmatprep.subr.mxu0 0.0
  %2279 = vmatpush1.xpose.msra.mxu0 0.0
  %2280 = vmatprep.subr.mxu0 0.0
  %2281 = vmatpush1.xpose.msra.mxu0 0.0
  %2282 = vmatprep.subr.mxu0 0.0
  %2283 = vmatpush1.xpose.msra.mxu0 0.0
  %2284 = vmatprep.subr.mxu0 0.0
  %2285 = vmatpush1.xpose.msra.mxu0 0.0
  %2286 = vmatprep.subr.mxu0 0.0
  %2287 = vmatpush1.xpose.msra.mxu0 0.0
  %2288 = vmatprep.subr.mxu0 0.0
  %2289 = vmatpush1.xpose.msra.mxu0 0.0
  %2290 = vmatprep.subr.mxu0 0.0
  %2291 = vmatpush1.xpose.msra.mxu0 0.0
  %2292 = vmatprep.subr.mxu0 0.0
  %2293 = vmatpush1.xpose.msra.mxu0 0.0
  %2294 = vmatprep.subr.mxu0 0.0
  %2295 = vmatpush1.xpose.msra.mxu0 0.0
  %2296 = vmatprep.subr.mxu0 0.0
  %2297 = vmatpush1.xpose.msra.mxu0 %v2266
  %2298 = vmatprep.subr.mxu0 0.0
  %2299 = vmatpush1.xpose.msra.mxu0 %v2263
  %2300 = vmatprep.subr.mxu0 0.0
  %2301 = vmatpush2.xpose.msra.mxu0 0.0
  %2302 = vmatprep.subr.mxu0 0.0
  %2303 = vmatpush2.xpose.msra.mxu0 0.0
  %2304 = vmatprep.subr.mxu0 0.0
  %2305 = vmatpush2.xpose.msra.mxu0 0.0
  %2306 = vmatprep.subr.mxu0 0.0
  %2307 = vmatpush2.xpose.msra.mxu0 0.0
  %2308 = vmatprep.subr.mxu0 0.0
  %2309 = vmatpush2.xpose.msra.mxu0 0.0
  %2310 = vmatprep.subr.mxu0 0.0
  %2311 = vmatpush2.xpose.msra.mxu0 0.0
  %2312 = vmatprep.subr.mxu0 0.0
  %2313 = vmatpush2.xpose.msra.mxu0 0.0
  %2314 = vmatprep.subr.mxu0 0.0
  %2315 = vmatpush2.xpose.msra.mxu0 0.0
  %2316 = vmatprep.subr.mxu0 0.0
  %2317 = vmatpush2.xpose.msra.mxu0 0.0
  %2318 = vmatprep.subr.mxu0 0.0
  %2319 = vmatpush2.xpose.msra.mxu0 0.0
  %2320 = vmatprep.subr.mxu0 0.0
  %2321 = vmatpush2.xpose.msra.mxu0 0.0
  %2322 = vmatprep.subr.mxu0 0.0
  %2323 = vmatpush2.xpose.msra.mxu0 0.0
  %2324 = vmatprep.subr.mxu0 0.0
  %2325 = vmatpush2.xpose.msra.mxu0 0.0
  %2326 = vmatprep.subr.mxu0 0.0
  %2327 = vmatpush2.xpose.msra.mxu0 0.0
  %2328 = vmatprep.subr.mxu0 0.0
  %2329 = vmatpush2.xpose.msra.mxu0 0.0
  %2330 = vmatprep.subr.mxu0 0.0
  %2331 = vmatpush2.xpose.msra.mxu0 0.0
  %2332 = vmatprep.mubr.f32.mxu0 0.0
  %2333 = vmatmul.mubr.f32.gmra.mxu0 %v2260
  %v2334 = vpop.f32.mrf.mxu0
  %v2335 = vadd.f32 0.0, %v2334
  %v2336 = vpop.f32.mrf.mxu0
  %2337 = vdwg.mxu0
  %v2338 = vmul.f32 %v2335, 0.35355338
  %v2339 = vadd.f32 %v2338, %v2258
  %vm2340 = vcmask 130048
  %v2341 = vsel %vm2340, %v2339, -inf
  %2342 = vmax.xlane.f32.xlu0 %v2341
  %v2343 = vpop.xlane.xlu0 %2342
  %v2344 = vsub.f32 %v2339, %v2343
  %v2345 = vmul.f32 %v2344, 1.442695
  %v2346 = vpow.pop %v2345
  %v2347 = vsel %vm2340, %v2346, 0.0
  %2348 = vadd.xlane.f32.xlu0 %v2347
  %v2349 = vpop.xlane.xlu0 %2348
  %v2350 = vrcp.pop %v2349
  %v2351 = vmul.f32 %v2346, %v2350
  %2352 = vrot.lane.b32.xlu0 %v2250, 96
  %v2353 = vpop.permute.xlu0 %2352
  %2354 = vrot.lane.b32.xlu0 %v2251, 96
  %v2355 = vpop.permute.xlu0 %2354
  %v2359 = vsel %vm2340, %v2351, 0
  %2361 = vmatprep.subr.mxu0 0.0
  %2362 = vmatpush1.msra.mxu0 0.0
  %2363 = vmatprep.subr.mxu0 0.0
  %2364 = vmatpush1.msra.mxu0 0.0
  %2365 = vmatprep.subr.mxu0 0.0
  %2366 = vmatpush1.msra.mxu0 0.0
  %2367 = vmatprep.subr.mxu0 0.0
  %2368 = vmatpush1.msra.mxu0 0.0
  %2369 = vmatprep.subr.mxu0 0.0
  %2370 = vmatpush1.msra.mxu0 0.0
  %2371 = vmatprep.subr.mxu0 0.0
  %2372 = vmatpush1.msra.mxu0 0.0
  %2373 = vmatprep.subr.mxu0 0.0
  %2374 = vmatpush1.msra.mxu0 0.0
  %2375 = vmatprep.subr.mxu0 0.0
  %2376 = vmatpush1.msra.mxu0 0.0
  %2377 = vmatprep.subr.mxu0 0.0
  %2378 = vmatpush1.msra.mxu0 0.0
  %2379 = vmatprep.subr.mxu0 0.0
  %2380 = vmatpush1.msra.mxu0 0.0
  %2381 = vmatprep.subr.mxu0 0.0
  %2382 = vmatpush1.msra.mxu0 0.0
  %2383 = vmatprep.subr.mxu0 0.0
  %2384 = vmatpush1.msra.mxu0 0.0
  %2385 = vmatprep.subr.mxu0 0.0
  %2386 = vmatpush1.msra.mxu0 0.0
  %2387 = vmatprep.subr.mxu0 0.0
  %2388 = vmatpush1.msra.mxu0 0.0
  %2389 = vmatprep.subr.mxu0 0.0
  %2390 = vmatpush1.msra.mxu0 %v2355
  %2391 = vmatprep.subr.mxu0 0.0
  %2392 = vmatpush1.msra.mxu0 %v2353
  %2393 = vmatprep.subr.mxu0 0.0
  %2394 = vmatpush2.msra.mxu0 0.0
  %2395 = vmatprep.subr.mxu0 0.0
  %2396 = vmatpush2.msra.mxu0 0.0
  %2397 = vmatprep.subr.mxu0 0.0
  %2398 = vmatpush2.msra.mxu0 0.0
  %2399 = vmatprep.subr.mxu0 0.0
  %2400 = vmatpush2.msra.mxu0 0.0
  %2401 = vmatprep.subr.mxu0 0.0
  %2402 = vmatpush2.msra.mxu0 0.0
  %2403 = vmatprep.subr.mxu0 0.0
  %2404 = vmatpush2.msra.mxu0 0.0
  %2405 = vmatprep.subr.mxu0 0.0
  %2406 = vmatpush2.msra.mxu0 0.0
  %2407 = vmatprep.subr.mxu0 0.0
  %2408 = vmatpush2.msra.mxu0 0.0
  %2409 = vmatprep.subr.mxu0 0.0
  %2410 = vmatpush2.msra.mxu0 0.0
  %2411 = vmatprep.subr.mxu0 0.0
  %2412 = vmatpush2.msra.mxu0 0.0
  %2413 = vmatprep.subr.mxu0 0.0
  %2414 = vmatpush2.msra.mxu0 0.0
  %2415 = vmatprep.subr.mxu0 0.0
  %2416 = vmatpush2.msra.mxu0 0.0
  %2417 = vmatprep.subr.mxu0 0.0
  %2418 = vmatpush2.msra.mxu0 0.0
  %2419 = vmatprep.subr.mxu0 0.0
  %2420 = vmatpush2.msra.mxu0 0.0
  %2421 = vmatprep.subr.mxu0 0.0
  %2422 = vmatpush2.msra.mxu0 0.0
  %2423 = vmatprep.subr.mxu0 0.0
  %2424 = vmatpush2.msra.mxu0 0.0
  %2425 = vmatprep.mubr.f32.mxu0 0.0
  %2426 = vmatmul.mubr.f32.gmra.mxu0 %v2359
  %v2427 = vpop.f32.mrf.mxu0
  %v2428 = vadd.f32 0.0, %v2427
  %v2429 = vpop.f32.mrf.mxu0
  %2430 = vdwg.mxu0
  %2431 = vrot.lane.b32.xlu0 %v2242, 120
  %v2432 = vpop.permute.xlu0 %2431
  %2433 = vrot.lane.b32.xlu0 %v2250, 120
  %v2434 = vpop.permute.xlu0 %2433
  %2435 = vrot.lane.b32.xlu0 %v2251, 120
  %v2436 = vpop.permute.xlu0 %2435
  %v2437 = vsel %vm180, %v2432, 0
  %v2439 = vsel %vm180, %v2434, 0
  %v2441 = vsel %vm180, %v2436, 0
  %2443 = vmatprep.subr.mxu0 0.0
  %2444 = vmatpush1.xpose.msra.mxu0 0.0
  %2445 = vmatprep.subr.mxu0 0.0
  %2446 = vmatpush1.xpose.msra.mxu0 0.0
  %2447 = vmatprep.subr.mxu0 0.0
  %2448 = vmatpush1.xpose.msra.mxu0 0.0
  %2449 = vmatprep.subr.mxu0 0.0
  %2450 = vmatpush1.xpose.msra.mxu0 0.0
  %2451 = vmatprep.subr.mxu0 0.0
  %2452 = vmatpush1.xpose.msra.mxu0 0.0
  %2453 = vmatprep.subr.mxu0 0.0
  %2454 = vmatpush1.xpose.msra.mxu0 0.0
  %2455 = vmatprep.subr.mxu0 0.0
  %2456 = vmatpush1.xpose.msra.mxu0 0.0
  %2457 = vmatprep.subr.mxu0 0.0
  %2458 = vmatpush1.xpose.msra.mxu0 0.0
  %2459 = vmatprep.subr.mxu0 0.0
  %2460 = vmatpush1.xpose.msra.mxu0 0.0
  %2461 = vmatprep.subr.mxu0 0.0
  %2462 = vmatpush1.xpose.msra.mxu0 0.0
  %2463 = vmatprep.subr.mxu0 0.0
  %2464 = vmatpush1.xpose.msra.mxu0 0.0
  %2465 = vmatprep.subr.mxu0 0.0
  %2466 = vmatpush1.xpose.msra.mxu0 0.0
  %2467 = vmatprep.subr.mxu0 0.0
  %2468 = vmatpush1.xpose.msra.mxu0 0.0
  %2469 = vmatprep.subr.mxu0 0.0
  %2470 = vmatpush1.xpose.msra.mxu0 0.0
  %2471 = vmatprep.subr.mxu0 0.0
  %2472 = vmatpush1.xpose.msra.mxu0 %v2441
  %2473 = vmatprep.subr.mxu0 0.0
  %2474 = vmatpush1.xpose.msra.mxu0 %v2439
  %2475 = vmatprep.subr.mxu0 0.0
  %2476 = vmatpush2.xpose.msra.mxu0 0.0
  %2477 = vmatprep.subr.mxu0 0.0
  %2478 = vmatpush2.xpose.msra.mxu0 0.0
  %2479 = vmatprep.subr.mxu0 0.0
  %2480 = vmatpush2.xpose.msra.mxu0 0.0
  %2481 = vmatprep.subr.mxu0 0.0
  %2482 = vmatpush2.xpose.msra.mxu0 0.0
  %2483 = vmatprep.subr.mxu0 0.0
  %2484 = vmatpush2.xpose.msra.mxu0 0.0
  %2485 = vmatprep.subr.mxu0 0.0
  %2486 = vmatpush2.xpose.msra.mxu0 0.0
  %2487 = vmatprep.subr.mxu0 0.0
  %2488 = vmatpush2.xpose.msra.mxu0 0.0
  %2489 = vmatprep.subr.mxu0 0.0
  %2490 = vmatpush2.xpose.msra.mxu0 0.0
  %2491 = vmatprep.subr.mxu0 0.0
  %2492 = vmatpush2.xpose.msra.mxu0 0.0
  %2493 = vmatprep.subr.mxu0 0.0
  %2494 = vmatpush2.xpose.msra.mxu0 0.0
  %2495 = vmatprep.subr.mxu0 0.0
  %2496 = vmatpush2.xpose.msra.mxu0 0.0
  %2497 = vmatprep.subr.mxu0 0.0
  %2498 = vmatpush2.xpose.msra.mxu0 0.0
  %2499 = vmatprep.subr.mxu0 0.0
  %2500 = vmatpush2.xpose.msra.mxu0 0.0
  %2501 = vmatprep.subr.mxu0 0.0
  %2502 = vmatpush2.xpose.msra.mxu0 0.0
  %2503 = vmatprep.subr.mxu0 0.0
  %2504 = vmatpush2.xpose.msra.mxu0 0.0
  %2505 = vmatprep.subr.mxu0 0.0
  %2506 = vmatpush2.xpose.msra.mxu0 0.0
  %2507 = vmatprep.mubr.f32.mxu0 0.0
  %2508 = vmatmul.mubr.f32.gmra.mxu0 %v2437
  %v2509 = vpop.f32.mrf.mxu0
  %v2510 = vadd.f32 0.0, %v2509
  %v2511 = vpop.f32.mrf.mxu0
  %2512 = vdwg.mxu0
  %v2513 = vmul.f32 %v2510, 0.35355338
  %v2514 = vadd.f32 %v2513, %v2258
  %v2515 = vsel %vm2340, %v2514, -inf
  %2516 = vmax.xlane.f32.xlu0 %v2515
  %v2517 = vpop.xlane.xlu0 %2516
  %v2518 = vsub.f32 %v2514, %v2517
  %v2519 = vmul.f32 %v2518, 1.442695
  %v2520 = vpow.pop %v2519
  %v2521 = vsel %vm2340, %v2520, 0.0
  %2522 = vadd.xlane.f32.xlu0 %v2521
  %v2523 = vpop.xlane.xlu0 %2522
  %v2524 = vrcp.pop %v2523
  %v2525 = vmul.f32 %v2520, %v2524
  %2526 = vrot.lane.b32.xlu0 %v2250, 88
  %v2527 = vpop.permute.xlu0 %2526
  %2528 = vrot.lane.b32.xlu0 %v2251, 88
  %v2529 = vpop.permute.xlu0 %2528
  %v2533 = vsel %vm2340, %v2525, 0
  %2535 = vmatprep.subr.mxu0 0.0
  %2536 = vmatpush1.msra.mxu0 0.0
  %2537 = vmatprep.subr.mxu0 0.0
  %2538 = vmatpush1.msra.mxu0 0.0
  %2539 = vmatprep.subr.mxu0 0.0
  %2540 = vmatpush1.msra.mxu0 0.0
  %2541 = vmatprep.subr.mxu0 0.0
  %2542 = vmatpush1.msra.mxu0 0.0
  %2543 = vmatprep.subr.mxu0 0.0
  %2544 = vmatpush1.msra.mxu0 0.0
  %2545 = vmatprep.subr.mxu0 0.0
  %2546 = vmatpush1.msra.mxu0 0.0
  %2547 = vmatprep.subr.mxu0 0.0
  %2548 = vmatpush1.msra.mxu0 0.0
  %2549 = vmatprep.subr.mxu0 0.0
  %2550 = vmatpush1.msra.mxu0 0.0
  %2551 = vmatprep.subr.mxu0 0.0
  %2552 = vmatpush1.msra.mxu0 0.0
  %2553 = vmatprep.subr.mxu0 0.0
  %2554 = vmatpush1.msra.mxu0 0.0
  %2555 = vmatprep.subr.mxu0 0.0
  %2556 = vmatpush1.msra.mxu0 0.0
  %2557 = vmatprep.subr.mxu0 0.0
  %2558 = vmatpush1.msra.mxu0 0.0
  %2559 = vmatprep.subr.mxu0 0.0
  %2560 = vmatpush1.msra.mxu0 0.0
  %2561 = vmatprep.subr.mxu0 0.0
  %2562 = vmatpush1.msra.mxu0 0.0
  %2563 = vmatprep.subr.mxu0 0.0
  %2564 = vmatpush1.msra.mxu0 %v2529
  %2565 = vmatprep.subr.mxu0 0.0
  %2566 = vmatpush1.msra.mxu0 %v2527
  %2567 = vmatprep.subr.mxu0 0.0
  %2568 = vmatpush2.msra.mxu0 0.0
  %2569 = vmatprep.subr.mxu0 0.0
  %2570 = vmatpush2.msra.mxu0 0.0
  %2571 = vmatprep.subr.mxu0 0.0
  %2572 = vmatpush2.msra.mxu0 0.0
  %2573 = vmatprep.subr.mxu0 0.0
  %2574 = vmatpush2.msra.mxu0 0.0
  %2575 = vmatprep.subr.mxu0 0.0
  %2576 = vmatpush2.msra.mxu0 0.0
  %2577 = vmatprep.subr.mxu0 0.0
  %2578 = vmatpush2.msra.mxu0 0.0
  %2579 = vmatprep.subr.mxu0 0.0
  %2580 = vmatpush2.msra.mxu0 0.0
  %2581 = vmatprep.subr.mxu0 0.0
  %2582 = vmatpush2.msra.mxu0 0.0
  %2583 = vmatprep.subr.mxu0 0.0
  %2584 = vmatpush2.msra.mxu0 0.0
  %2585 = vmatprep.subr.mxu0 0.0
  %2586 = vmatpush2.msra.mxu0 0.0
  %2587 = vmatprep.subr.mxu0 0.0
  %2588 = vmatpush2.msra.mxu0 0.0
  %2589 = vmatprep.subr.mxu0 0.0
  %2590 = vmatpush2.msra.mxu0 0.0
  %2591 = vmatprep.subr.mxu0 0.0
  %2592 = vmatpush2.msra.mxu0 0.0
  %2593 = vmatprep.subr.mxu0 0.0
  %2594 = vmatpush2.msra.mxu0 0.0
  %2595 = vmatprep.subr.mxu0 0.0
  %2596 = vmatpush2.msra.mxu0 0.0
  %2597 = vmatprep.subr.mxu0 0.0
  %2598 = vmatpush2.msra.mxu0 0.0
  %2599 = vmatprep.mubr.f32.mxu0 0.0
  %2600 = vmatmul.mubr.f32.gmra.mxu0 %v2533
  %v2601 = vpop.f32.mrf.mxu0
  %v2602 = vadd.f32 0.0, %v2601
  %v2603 = vpop.f32.mrf.mxu0
  %2604 = vdwg.mxu0
  %v2606 = vsel %vm180, %v2602, 0
  %2608 = vmatprep.subr.mxu0 0.0
  %2609 = vmatpush1.msra.mxu0 0.0
  %2610 = vmatprep.subr.mxu0 0.0
  %2611 = vmatpush1.msra.mxu0 0.0
  %2612 = vmatprep.subr.mxu0 0.0
  %2613 = vmatpush1.msra.mxu0 0.0
  %2614 = vmatprep.subr.mxu0 0.0
  %2615 = vmatpush1.msra.mxu0 0.0
  %2616 = vmatprep.subr.mxu0 0.0
  %2617 = vmatpush1.msra.mxu0 0.0
  %2618 = vmatprep.subr.mxu0 0.0
  %2619 = vmatpush1.msra.mxu0 0.0
  %2620 = vmatprep.subr.mxu0 0.0
  %2621 = vmatpush1.msra.mxu0 0.0
  %2622 = vmatprep.subr.mxu0 0.0
  %2623 = vmatpush1.msra.mxu0 0.0
  %2624 = vmatprep.subr.mxu0 0.0
  %2625 = vmatpush1.msra.mxu0 0.0
  %2626 = vmatprep.subr.mxu0 0.0
  %2627 = vmatpush1.msra.mxu0 0.0
  %2628 = vmatprep.subr.mxu0 0.0
  %2629 = vmatpush1.msra.mxu0 0.0
  %2630 = vmatprep.subr.mxu0 0.0
  %2631 = vmatpush1.msra.mxu0 0.0
  %2632 = vmatprep.subr.mxu0 0.0
  %2633 = vmatpush1.msra.mxu0 0.0
  %2634 = vmatprep.subr.mxu0 0.0
  %2635 = vmatpush1.msra.mxu0 0.0
  %2636 = vmatprep.subr.mxu0 0.0
  %2637 = vmatpush1.msra.mxu0 0.0
  %2638 = vmatprep.subr.mxu0 0.0
  %2639 = vmatpush1.msra.mxu0 %v2255
  %2640 = vmatprep.subr.mxu0 0.0
  %2641 = vmatpush2.msra.mxu0 0.0
  %2642 = vmatprep.subr.mxu0 0.0
  %2643 = vmatpush2.msra.mxu0 0.0
  %2644 = vmatprep.subr.mxu0 0.0
  %2645 = vmatpush2.msra.mxu0 0.0
  %2646 = vmatprep.subr.mxu0 0.0
  %2647 = vmatpush2.msra.mxu0 0.0
  %2648 = vmatprep.subr.mxu0 0.0
  %2649 = vmatpush2.msra.mxu0 0.0
  %2650 = vmatprep.subr.mxu0 0.0
  %2651 = vmatpush2.msra.mxu0 0.0
  %2652 = vmatprep.subr.mxu0 0.0
  %2653 = vmatpush2.msra.mxu0 0.0
  %2654 = vmatprep.subr.mxu0 0.0
  %2655 = vmatpush2.msra.mxu0 0.0
  %2656 = vmatprep.subr.mxu0 0.0
  %2657 = vmatpush2.msra.mxu0 0.0
  %2658 = vmatprep.subr.mxu0 0.0
  %2659 = vmatpush2.msra.mxu0 0.0
  %2660 = vmatprep.subr.mxu0 0.0
  %2661 = vmatpush2.msra.mxu0 0.0
  %2662 = vmatprep.subr.mxu0 0.0
  %2663 = vmatpush2.msra.mxu0 0.0
  %2664 = vmatprep.subr.mxu0 0.0
  %2665 = vmatpush2.msra.mxu0 0.0
  %2666 = vmatprep.subr.mxu0 0.0
  %2667 = vmatpush2.msra.mxu0 0.0
  %2668 = vmatprep.subr.mxu0 0.0
  %2669 = vmatpush2.msra.mxu0 0.0
  %2670 = vmatprep.subr.mxu0 0.0
  %2671 = vmatpush2.msra.mxu0 0.0
  %2672 = vmatprep.mubr.f32.mxu0 0.0
  %2673 = vmatmul.mubr.f32.gmra.mxu0 %v2606
  %v2674 = vpop.f32.mrf.mxu0
  %v2675 = vadd.f32 0.0, %v2674
  %v2676 = vpop.f32.mrf.mxu0
  %2677 = vdwg.mxu0
  %v2679 = vsel %vm180, %v2428, 0
  %2681 = vmatprep.subr.mxu0 0.0
  %2682 = vmatpush1.msra.mxu0 0.0
  %2683 = vmatprep.subr.mxu0 0.0
  %2684 = vmatpush1.msra.mxu0 0.0
  %2685 = vmatprep.subr.mxu0 0.0
  %2686 = vmatpush1.msra.mxu0 0.0
  %2687 = vmatprep.subr.mxu0 0.0
  %2688 = vmatpush1.msra.mxu0 0.0
  %2689 = vmatprep.subr.mxu0 0.0
  %2690 = vmatpush1.msra.mxu0 0.0
  %2691 = vmatprep.subr.mxu0 0.0
  %2692 = vmatpush1.msra.mxu0 0.0
  %2693 = vmatprep.subr.mxu0 0.0
  %2694 = vmatpush1.msra.mxu0 0.0
  %2695 = vmatprep.subr.mxu0 0.0
  %2696 = vmatpush1.msra.mxu0 0.0
  %2697 = vmatprep.subr.mxu0 0.0
  %2698 = vmatpush1.msra.mxu0 0.0
  %2699 = vmatprep.subr.mxu0 0.0
  %2700 = vmatpush1.msra.mxu0 0.0
  %2701 = vmatprep.subr.mxu0 0.0
  %2702 = vmatpush1.msra.mxu0 0.0
  %2703 = vmatprep.subr.mxu0 0.0
  %2704 = vmatpush1.msra.mxu0 0.0
  %2705 = vmatprep.subr.mxu0 0.0
  %2706 = vmatpush1.msra.mxu0 0.0
  %2707 = vmatprep.subr.mxu0 0.0
  %2708 = vmatpush1.msra.mxu0 0.0
  %2709 = vmatprep.subr.mxu0 0.0
  %2710 = vmatpush1.msra.mxu0 0.0
  %2711 = vmatprep.subr.mxu0 0.0
  %2712 = vmatpush1.msra.mxu0 %v2254
  %2713 = vmatprep.subr.mxu0 0.0
  %2714 = vmatpush2.msra.mxu0 0.0
  %2715 = vmatprep.subr.mxu0 0.0
  %2716 = vmatpush2.msra.mxu0 0.0
  %2717 = vmatprep.subr.mxu0 0.0
  %2718 = vmatpush2.msra.mxu0 0.0
  %2719 = vmatprep.subr.mxu0 0.0
  %2720 = vmatpush2.msra.mxu0 0.0
  %2721 = vmatprep.subr.mxu0 0.0
  %2722 = vmatpush2.msra.mxu0 0.0
  %2723 = vmatprep.subr.mxu0 0.0
  %2724 = vmatpush2.msra.mxu0 0.0
  %2725 = vmatprep.subr.mxu0 0.0
  %2726 = vmatpush2.msra.mxu0 0.0
  %2727 = vmatprep.subr.mxu0 0.0
  %2728 = vmatpush2.msra.mxu0 0.0
  %2729 = vmatprep.subr.mxu0 0.0
  %2730 = vmatpush2.msra.mxu0 0.0
  %2731 = vmatprep.subr.mxu0 0.0
  %2732 = vmatpush2.msra.mxu0 0.0
  %2733 = vmatprep.subr.mxu0 0.0
  %2734 = vmatpush2.msra.mxu0 0.0
  %2735 = vmatprep.subr.mxu0 0.0
  %2736 = vmatpush2.msra.mxu0 0.0
  %2737 = vmatprep.subr.mxu0 0.0
  %2738 = vmatpush2.msra.mxu0 0.0
  %2739 = vmatprep.subr.mxu0 0.0
  %2740 = vmatpush2.msra.mxu0 0.0
  %2741 = vmatprep.subr.mxu0 0.0
  %2742 = vmatpush2.msra.mxu0 0.0
  %2743 = vmatprep.subr.mxu0 0.0
  %2744 = vmatpush2.msra.mxu0 0.0
  %2745 = vmatprep.mubr.f32.mxu0 0.0
  %2746 = vmatmul.mubr.f32.gmra.mxu0 %v2679
  %v2747 = vpop.f32.mrf.mxu0
  %v2748 = vadd.f32 %v2675, %v2747
  %v2749 = vpop.f32.mrf.mxu0
  %2750 = vdwg.mxu0
  %2751 = vrot.lane.b32.xlu0 %v2242, 112
  %v2752 = vpop.permute.xlu0 %2751
  %2753 = vrot.lane.b32.xlu0 %v2250, 112
  %v2754 = vpop.permute.xlu0 %2753
  %2755 = vrot.lane.b32.xlu0 %v2251, 112
  %v2756 = vpop.permute.xlu0 %2755
  %v2757 = vsel %vm180, %v2752, 0
  %v2759 = vsel %vm180, %v2754, 0
  %v2761 = vsel %vm180, %v2756, 0
  %2763 = vmatprep.subr.mxu0 0.0
  %2764 = vmatpush1.xpose.msra.mxu0 0.0
  %2765 = vmatprep.subr.mxu0 0.0
  %2766 = vmatpush1.xpose.msra.mxu0 0.0
  %2767 = vmatprep.subr.mxu0 0.0
  %2768 = vmatpush1.xpose.msra.mxu0 0.0
  %2769 = vmatprep.subr.mxu0 0.0
  %2770 = vmatpush1.xpose.msra.mxu0 0.0
  %2771 = vmatprep.subr.mxu0 0.0
  %2772 = vmatpush1.xpose.msra.mxu0 0.0
  %2773 = vmatprep.subr.mxu0 0.0
  %2774 = vmatpush1.xpose.msra.mxu0 0.0
  %2775 = vmatprep.subr.mxu0 0.0
  %2776 = vmatpush1.xpose.msra.mxu0 0.0
  %2777 = vmatprep.subr.mxu0 0.0
  %2778 = vmatpush1.xpose.msra.mxu0 0.0
  %2779 = vmatprep.subr.mxu0 0.0
  %2780 = vmatpush1.xpose.msra.mxu0 0.0
  %2781 = vmatprep.subr.mxu0 0.0
  %2782 = vmatpush1.xpose.msra.mxu0 0.0
  %2783 = vmatprep.subr.mxu0 0.0
  %2784 = vmatpush1.xpose.msra.mxu0 0.0
  %2785 = vmatprep.subr.mxu0 0.0
  %2786 = vmatpush1.xpose.msra.mxu0 0.0
  %2787 = vmatprep.subr.mxu0 0.0
  %2788 = vmatpush1.xpose.msra.mxu0 0.0
  %2789 = vmatprep.subr.mxu0 0.0
  %2790 = vmatpush1.xpose.msra.mxu0 0.0
  %2791 = vmatprep.subr.mxu0 0.0
  %2792 = vmatpush1.xpose.msra.mxu0 %v2761
  %2793 = vmatprep.subr.mxu0 0.0
  %2794 = vmatpush1.xpose.msra.mxu0 %v2759
  %2795 = vmatprep.subr.mxu0 0.0
  %2796 = vmatpush2.xpose.msra.mxu0 0.0
  %2797 = vmatprep.subr.mxu0 0.0
  %2798 = vmatpush2.xpose.msra.mxu0 0.0
  %2799 = vmatprep.subr.mxu0 0.0
  %2800 = vmatpush2.xpose.msra.mxu0 0.0
  %2801 = vmatprep.subr.mxu0 0.0
  %2802 = vmatpush2.xpose.msra.mxu0 0.0
  %2803 = vmatprep.subr.mxu0 0.0
  %2804 = vmatpush2.xpose.msra.mxu0 0.0
  %2805 = vmatprep.subr.mxu0 0.0
  %2806 = vmatpush2.xpose.msra.mxu0 0.0
  %2807 = vmatprep.subr.mxu0 0.0
  %2808 = vmatpush2.xpose.msra.mxu0 0.0
  %2809 = vmatprep.subr.mxu0 0.0
  %2810 = vmatpush2.xpose.msra.mxu0 0.0
  %2811 = vmatprep.subr.mxu0 0.0
  %2812 = vmatpush2.xpose.msra.mxu0 0.0
  %2813 = vmatprep.subr.mxu0 0.0
  %2814 = vmatpush2.xpose.msra.mxu0 0.0
  %2815 = vmatprep.subr.mxu0 0.0
  %2816 = vmatpush2.xpose.msra.mxu0 0.0
  %2817 = vmatprep.subr.mxu0 0.0
  %2818 = vmatpush2.xpose.msra.mxu0 0.0
  %2819 = vmatprep.subr.mxu0 0.0
  %2820 = vmatpush2.xpose.msra.mxu0 0.0
  %2821 = vmatprep.subr.mxu0 0.0
  %2822 = vmatpush2.xpose.msra.mxu0 0.0
  %2823 = vmatprep.subr.mxu0 0.0
  %2824 = vmatpush2.xpose.msra.mxu0 0.0
  %2825 = vmatprep.subr.mxu0 0.0
  %2826 = vmatpush2.xpose.msra.mxu0 0.0
  %2827 = vmatprep.mubr.f32.mxu0 0.0
  %2828 = vmatmul.mubr.f32.gmra.mxu0 %v2757
  %v2829 = vpop.f32.mrf.mxu0
  %v2830 = vadd.f32 0.0, %v2829
  %v2831 = vpop.f32.mrf.mxu0
  %2832 = vdwg.mxu0
  %v2833 = vmul.f32 %v2830, 0.35355338
  %v2834 = vadd.f32 %v2833, %v2258
  %v2835 = vsel %vm2340, %v2834, -inf
  %2836 = vmax.xlane.f32.xlu0 %v2835
  %v2837 = vpop.xlane.xlu0 %2836
  %v2838 = vsub.f32 %v2834, %v2837
  %v2839 = vmul.f32 %v2838, 1.442695
  %v2840 = vpow.pop %v2839
  %v2841 = vsel %vm2340, %v2840, 0.0
  %2842 = vadd.xlane.f32.xlu0 %v2841
  %v2843 = vpop.xlane.xlu0 %2842
  %v2844 = vrcp.pop %v2843
  %v2845 = vmul.f32 %v2840, %v2844
  %2846 = vrot.lane.b32.xlu0 %v2250, 80
  %v2847 = vpop.permute.xlu0 %2846
  %2848 = vrot.lane.b32.xlu0 %v2251, 80
  %v2849 = vpop.permute.xlu0 %2848
  %v2853 = vsel %vm2340, %v2845, 0
  %2855 = vmatprep.subr.mxu0 0.0
  %2856 = vmatpush1.msra.mxu0 0.0
  %2857 = vmatprep.subr.mxu0 0.0
  %2858 = vmatpush1.msra.mxu0 0.0
  %2859 = vmatprep.subr.mxu0 0.0
  %2860 = vmatpush1.msra.mxu0 0.0
  %2861 = vmatprep.subr.mxu0 0.0
  %2862 = vmatpush1.msra.mxu0 0.0
  %2863 = vmatprep.subr.mxu0 0.0
  %2864 = vmatpush1.msra.mxu0 0.0
  %2865 = vmatprep.subr.mxu0 0.0
  %2866 = vmatpush1.msra.mxu0 0.0
  %2867 = vmatprep.subr.mxu0 0.0
  %2868 = vmatpush1.msra.mxu0 0.0
  %2869 = vmatprep.subr.mxu0 0.0
  %2870 = vmatpush1.msra.mxu0 0.0
  %2871 = vmatprep.subr.mxu0 0.0
  %2872 = vmatpush1.msra.mxu0 0.0
  %2873 = vmatprep.subr.mxu0 0.0
  %2874 = vmatpush1.msra.mxu0 0.0
  %2875 = vmatprep.subr.mxu0 0.0
  %2876 = vmatpush1.msra.mxu0 0.0
  %2877 = vmatprep.subr.mxu0 0.0
  %2878 = vmatpush1.msra.mxu0 0.0
  %2879 = vmatprep.subr.mxu0 0.0
  %2880 = vmatpush1.msra.mxu0 0.0
  %2881 = vmatprep.subr.mxu0 0.0
  %2882 = vmatpush1.msra.mxu0 0.0
  %2883 = vmatprep.subr.mxu0 0.0
  %2884 = vmatpush1.msra.mxu0 %v2849
  %2885 = vmatprep.subr.mxu0 0.0
  %2886 = vmatpush1.msra.mxu0 %v2847
  %2887 = vmatprep.subr.mxu0 0.0
  %2888 = vmatpush2.msra.mxu0 0.0
  %2889 = vmatprep.subr.mxu0 0.0
  %2890 = vmatpush2.msra.mxu0 0.0
  %2891 = vmatprep.subr.mxu0 0.0
  %2892 = vmatpush2.msra.mxu0 0.0
  %2893 = vmatprep.subr.mxu0 0.0
  %2894 = vmatpush2.msra.mxu0 0.0
  %2895 = vmatprep.subr.mxu0 0.0
  %2896 = vmatpush2.msra.mxu0 0.0
  %2897 = vmatprep.subr.mxu0 0.0
  %2898 = vmatpush2.msra.mxu0 0.0
  %2899 = vmatprep.subr.mxu0 0.0
  %2900 = vmatpush2.msra.mxu0 0.0
  %2901 = vmatprep.subr.mxu0 0.0
  %2902 = vmatpush2.msra.mxu0 0.0
  %2903 = vmatprep.subr.mxu0 0.0
  %2904 = vmatpush2.msra.mxu0 0.0
  %2905 = vmatprep.subr.mxu0 0.0
  %2906 = vmatpush2.msra.mxu0 0.0
  %2907 = vmatprep.subr.mxu0 0.0
  %2908 = vmatpush2.msra.mxu0 0.0
  %2909 = vmatprep.subr.mxu0 0.0
  %2910 = vmatpush2.msra.mxu0 0.0
  %2911 = vmatprep.subr.mxu0 0.0
  %2912 = vmatpush2.msra.mxu0 0.0
  %2913 = vmatprep.subr.mxu0 0.0
  %2914 = vmatpush2.msra.mxu0 0.0
  %2915 = vmatprep.subr.mxu0 0.0
  %2916 = vmatpush2.msra.mxu0 0.0
  %2917 = vmatprep.subr.mxu0 0.0
  %2918 = vmatpush2.msra.mxu0 0.0
  %2919 = vmatprep.mubr.f32.mxu0 0.0
  %2920 = vmatmul.mubr.f32.gmra.mxu0 %v2853
  %v2921 = vpop.f32.mrf.mxu0
  %v2922 = vadd.f32 0.0, %v2921
  %v2923 = vpop.f32.mrf.mxu0
  %2924 = vdwg.mxu0
  %v2926 = vsel %vm180, %v2922, 0
  %2928 = vmatprep.subr.mxu0 0.0
  %2929 = vmatpush1.msra.mxu0 0.0
  %2930 = vmatprep.subr.mxu0 0.0
  %2931 = vmatpush1.msra.mxu0 0.0
  %2932 = vmatprep.subr.mxu0 0.0
  %2933 = vmatpush1.msra.mxu0 0.0
  %2934 = vmatprep.subr.mxu0 0.0
  %2935 = vmatpush1.msra.mxu0 0.0
  %2936 = vmatprep.subr.mxu0 0.0
  %2937 = vmatpush1.msra.mxu0 0.0
  %2938 = vmatprep.subr.mxu0 0.0
  %2939 = vmatpush1.msra.mxu0 0.0
  %2940 = vmatprep.subr.mxu0 0.0
  %2941 = vmatpush1.msra.mxu0 0.0
  %2942 = vmatprep.subr.mxu0 0.0
  %2943 = vmatpush1.msra.mxu0 0.0
  %2944 = vmatprep.subr.mxu0 0.0
  %2945 = vmatpush1.msra.mxu0 0.0
  %2946 = vmatprep.subr.mxu0 0.0
  %2947 = vmatpush1.msra.mxu0 0.0
  %2948 = vmatprep.subr.mxu0 0.0
  %2949 = vmatpush1.msra.mxu0 0.0
  %2950 = vmatprep.subr.mxu0 0.0
  %2951 = vmatpush1.msra.mxu0 0.0
  %2952 = vmatprep.subr.mxu0 0.0
  %2953 = vmatpush1.msra.mxu0 0.0
  %2954 = vmatprep.subr.mxu0 0.0
  %2955 = vmatpush1.msra.mxu0 0.0
  %2956 = vmatprep.subr.mxu0 0.0
  %2957 = vmatpush1.msra.mxu0 0.0
  %2958 = vmatprep.subr.mxu0 0.0
  %2959 = vmatpush1.msra.mxu0 %v2256
  %2960 = vmatprep.subr.mxu0 0.0
  %2961 = vmatpush2.msra.mxu0 0.0
  %2962 = vmatprep.subr.mxu0 0.0
  %2963 = vmatpush2.msra.mxu0 0.0
  %2964 = vmatprep.subr.mxu0 0.0
  %2965 = vmatpush2.msra.mxu0 0.0
  %2966 = vmatprep.subr.mxu0 0.0
  %2967 = vmatpush2.msra.mxu0 0.0
  %2968 = vmatprep.subr.mxu0 0.0
  %2969 = vmatpush2.msra.mxu0 0.0
  %2970 = vmatprep.subr.mxu0 0.0
  %2971 = vmatpush2.msra.mxu0 0.0
  %2972 = vmatprep.subr.mxu0 0.0
  %2973 = vmatpush2.msra.mxu0 0.0
  %2974 = vmatprep.subr.mxu0 0.0
  %2975 = vmatpush2.msra.mxu0 0.0
  %2976 = vmatprep.subr.mxu0 0.0
  %2977 = vmatpush2.msra.mxu0 0.0
  %2978 = vmatprep.subr.mxu0 0.0
  %2979 = vmatpush2.msra.mxu0 0.0
  %2980 = vmatprep.subr.mxu0 0.0
  %2981 = vmatpush2.msra.mxu0 0.0
  %2982 = vmatprep.subr.mxu0 0.0
  %2983 = vmatpush2.msra.mxu0 0.0
  %2984 = vmatprep.subr.mxu0 0.0
  %2985 = vmatpush2.msra.mxu0 0.0
  %2986 = vmatprep.subr.mxu0 0.0
  %2987 = vmatpush2.msra.mxu0 0.0
  %2988 = vmatprep.subr.mxu0 0.0
  %2989 = vmatpush2.msra.mxu0 0.0
  %2990 = vmatprep.subr.mxu0 0.0
  %2991 = vmatpush2.msra.mxu0 0.0
  %2992 = vmatprep.mubr.f32.mxu0 0.0
  %2993 = vmatmul.mubr.f32.gmra.mxu0 %v2926
  %v2994 = vpop.f32.mrf.mxu0
  %v2995 = vadd.f32 0.0, %v2994
  %v2996 = vpop.f32.mrf.mxu0
  %2997 = vdwg.mxu0
  %v2998 = vadd.f32 %v2748, %v2995
  %2999 = vrot.lane.b32.xlu0 %v2242, 104
  %v3000 = vpop.permute.xlu0 %2999
  %3001 = vrot.lane.b32.xlu0 %v2250, 104
  %v3002 = vpop.permute.xlu0 %3001
  %3003 = vrot.lane.b32.xlu0 %v2251, 104
  %v3004 = vpop.permute.xlu0 %3003
  %v3005 = vsel %vm180, %v3000, 0
  %v3007 = vsel %vm180, %v3002, 0
  %v3009 = vsel %vm180, %v3004, 0
  %3011 = vmatprep.subr.mxu0 0.0
  %3012 = vmatpush1.xpose.msra.mxu0 0.0
  %3013 = vmatprep.subr.mxu0 0.0
  %3014 = vmatpush1.xpose.msra.mxu0 0.0
  %3015 = vmatprep.subr.mxu0 0.0
  %3016 = vmatpush1.xpose.msra.mxu0 0.0
  %3017 = vmatprep.subr.mxu0 0.0
  %3018 = vmatpush1.xpose.msra.mxu0 0.0
  %3019 = vmatprep.subr.mxu0 0.0
  %3020 = vmatpush1.xpose.msra.mxu0 0.0
  %3021 = vmatprep.subr.mxu0 0.0
  %3022 = vmatpush1.xpose.msra.mxu0 0.0
  %3023 = vmatprep.subr.mxu0 0.0
  %3024 = vmatpush1.xpose.msra.mxu0 0.0
  %3025 = vmatprep.subr.mxu0 0.0
  %3026 = vmatpush1.xpose.msra.mxu0 0.0
  %3027 = vmatprep.subr.mxu0 0.0
  %3028 = vmatpush1.xpose.msra.mxu0 0.0
  %3029 = vmatprep.subr.mxu0 0.0
  %3030 = vmatpush1.xpose.msra.mxu0 0.0
  %3031 = vmatprep.subr.mxu0 0.0
  %3032 = vmatpush1.xpose.msra.mxu0 0.0
  %3033 = vmatprep.subr.mxu0 0.0
  %3034 = vmatpush1.xpose.msra.mxu0 0.0
  %3035 = vmatprep.subr.mxu0 0.0
  %3036 = vmatpush1.xpose.msra.mxu0 0.0
  %3037 = vmatprep.subr.mxu0 0.0
  %3038 = vmatpush1.xpose.msra.mxu0 0.0
  %3039 = vmatprep.subr.mxu0 0.0
  %3040 = vmatpush1.xpose.msra.mxu0 %v3009
  %3041 = vmatprep.subr.mxu0 0.0
  %3042 = vmatpush1.xpose.msra.mxu0 %v3007
  %3043 = vmatprep.subr.mxu0 0.0
  %3044 = vmatpush2.xpose.msra.mxu0 0.0
  %3045 = vmatprep.subr.mxu0 0.0
  %3046 = vmatpush2.xpose.msra.mxu0 0.0
  %3047 = vmatprep.subr.mxu0 0.0
  %3048 = vmatpush2.xpose.msra.mxu0 0.0
  %3049 = vmatprep.subr.mxu0 0.0
  %3050 = vmatpush2.xpose.msra.mxu0 0.0
  %3051 = vmatprep.subr.mxu0 0.0
  %3052 = vmatpush2.xpose.msra.mxu0 0.0
  %3053 = vmatprep.subr.mxu0 0.0
  %3054 = vmatpush2.xpose.msra.mxu0 0.0
  %3055 = vmatprep.subr.mxu0 0.0
  %3056 = vmatpush2.xpose.msra.mxu0 0.0
  %3057 = vmatprep.subr.mxu0 0.0
  %3058 = vmatpush2.xpose.msra.mxu0 0.0
  %3059 = vmatprep.subr.mxu0 0.0
  %3060 = vmatpush2.xpose.msra.mxu0 0.0
  %3061 = vmatprep.subr.mxu0 0.0
  %3062 = vmatpush2.xpose.msra.mxu0 0.0
  %3063 = vmatprep.subr.mxu0 0.0
  %3064 = vmatpush2.xpose.msra.mxu0 0.0
  %3065 = vmatprep.subr.mxu0 0.0
  %3066 = vmatpush2.xpose.msra.mxu0 0.0
  %3067 = vmatprep.subr.mxu0 0.0
  %3068 = vmatpush2.xpose.msra.mxu0 0.0
  %3069 = vmatprep.subr.mxu0 0.0
  %3070 = vmatpush2.xpose.msra.mxu0 0.0
  %3071 = vmatprep.subr.mxu0 0.0
  %3072 = vmatpush2.xpose.msra.mxu0 0.0
  %3073 = vmatprep.subr.mxu0 0.0
  %3074 = vmatpush2.xpose.msra.mxu0 0.0
  %3075 = vmatprep.mubr.f32.mxu0 0.0
  %3076 = vmatmul.mubr.f32.gmra.mxu0 %v3005
  %v3077 = vpop.f32.mrf.mxu0
  %v3078 = vadd.f32 0.0, %v3077
  %v3079 = vpop.f32.mrf.mxu0
  %3080 = vdwg.mxu0
  %v3081 = vmul.f32 %v3078, 0.35355338
  %v3082 = vadd.f32 %v3081, %v2258
  %v3083 = vsel %vm2340, %v3082, -inf
  %3084 = vmax.xlane.f32.xlu0 %v3083
  %v3085 = vpop.xlane.xlu0 %3084
  %v3086 = vsub.f32 %v3082, %v3085
  %v3087 = vmul.f32 %v3086, 1.442695
  %v3088 = vpow.pop %v3087
  %v3089 = vsel %vm2340, %v3088, 0.0
  %3090 = vadd.xlane.f32.xlu0 %v3089
  %v3091 = vpop.xlane.xlu0 %3090
  %v3092 = vrcp.pop %v3091
  %v3093 = vmul.f32 %v3088, %v3092
  %3094 = vrot.lane.b32.xlu0 %v2250, 72
  %v3095 = vpop.permute.xlu0 %3094
  %3096 = vrot.lane.b32.xlu0 %v2251, 72
  %v3097 = vpop.permute.xlu0 %3096
  %v3101 = vsel %vm2340, %v3093, 0
  %3103 = vmatprep.subr.mxu0 0.0
  %3104 = vmatpush1.msra.mxu0 0.0
  %3105 = vmatprep.subr.mxu0 0.0
  %3106 = vmatpush1.msra.mxu0 0.0
  %3107 = vmatprep.subr.mxu0 0.0
  %3108 = vmatpush1.msra.mxu0 0.0
  %3109 = vmatprep.subr.mxu0 0.0
  %3110 = vmatpush1.msra.mxu0 0.0
  %3111 = vmatprep.subr.mxu0 0.0
  %3112 = vmatpush1.msra.mxu0 0.0
  %3113 = vmatprep.subr.mxu0 0.0
  %3114 = vmatpush1.msra.mxu0 0.0
  %3115 = vmatprep.subr.mxu0 0.0
  %3116 = vmatpush1.msra.mxu0 0.0
  %3117 = vmatprep.subr.mxu0 0.0
  %3118 = vmatpush1.msra.mxu0 0.0
  %3119 = vmatprep.subr.mxu0 0.0
  %3120 = vmatpush1.msra.mxu0 0.0
  %3121 = vmatprep.subr.mxu0 0.0
  %3122 = vmatpush1.msra.mxu0 0.0
  %3123 = vmatprep.subr.mxu0 0.0
  %3124 = vmatpush1.msra.mxu0 0.0
  %3125 = vmatprep.subr.mxu0 0.0
  %3126 = vmatpush1.msra.mxu0 0.0
  %3127 = vmatprep.subr.mxu0 0.0
  %3128 = vmatpush1.msra.mxu0 0.0
  %3129 = vmatprep.subr.mxu0 0.0
  %3130 = vmatpush1.msra.mxu0 0.0
  %3131 = vmatprep.subr.mxu0 0.0
  %3132 = vmatpush1.msra.mxu0 %v3097
  %3133 = vmatprep.subr.mxu0 0.0
  %3134 = vmatpush1.msra.mxu0 %v3095
  %3135 = vmatprep.subr.mxu0 0.0
  %3136 = vmatpush2.msra.mxu0 0.0
  %3137 = vmatprep.subr.mxu0 0.0
  %3138 = vmatpush2.msra.mxu0 0.0
  %3139 = vmatprep.subr.mxu0 0.0
  %3140 = vmatpush2.msra.mxu0 0.0
  %3141 = vmatprep.subr.mxu0 0.0
  %3142 = vmatpush2.msra.mxu0 0.0
  %3143 = vmatprep.subr.mxu0 0.0
  %3144 = vmatpush2.msra.mxu0 0.0
  %3145 = vmatprep.subr.mxu0 0.0
  %3146 = vmatpush2.msra.mxu0 0.0
  %3147 = vmatprep.subr.mxu0 0.0
  %3148 = vmatpush2.msra.mxu0 0.0
  %3149 = vmatprep.subr.mxu0 0.0
  %3150 = vmatpush2.msra.mxu0 0.0
  %3151 = vmatprep.subr.mxu0 0.0
  %3152 = vmatpush2.msra.mxu0 0.0
  %3153 = vmatprep.subr.mxu0 0.0
  %3154 = vmatpush2.msra.mxu0 0.0
  %3155 = vmatprep.subr.mxu0 0.0
  %3156 = vmatpush2.msra.mxu0 0.0
  %3157 = vmatprep.subr.mxu0 0.0
  %3158 = vmatpush2.msra.mxu0 0.0
  %3159 = vmatprep.subr.mxu0 0.0
  %3160 = vmatpush2.msra.mxu0 0.0
  %3161 = vmatprep.subr.mxu0 0.0
  %3162 = vmatpush2.msra.mxu0 0.0
  %3163 = vmatprep.subr.mxu0 0.0
  %3164 = vmatpush2.msra.mxu0 0.0
  %3165 = vmatprep.subr.mxu0 0.0
  %3166 = vmatpush2.msra.mxu0 0.0
  %3167 = vmatprep.mubr.f32.mxu0 0.0
  %3168 = vmatmul.mubr.f32.gmra.mxu0 %v3101
  %v3169 = vpop.f32.mrf.mxu0
  %v3170 = vadd.f32 0.0, %v3169
  %v3171 = vpop.f32.mrf.mxu0
  %3172 = vdwg.mxu0
  %v3174 = vsel %vm180, %v3170, 0
  %3176 = vmatprep.subr.mxu0 0.0
  %3177 = vmatpush1.msra.mxu0 0.0
  %3178 = vmatprep.subr.mxu0 0.0
  %3179 = vmatpush1.msra.mxu0 0.0
  %3180 = vmatprep.subr.mxu0 0.0
  %3181 = vmatpush1.msra.mxu0 0.0
  %3182 = vmatprep.subr.mxu0 0.0
  %3183 = vmatpush1.msra.mxu0 0.0
  %3184 = vmatprep.subr.mxu0 0.0
  %3185 = vmatpush1.msra.mxu0 0.0
  %3186 = vmatprep.subr.mxu0 0.0
  %3187 = vmatpush1.msra.mxu0 0.0
  %3188 = vmatprep.subr.mxu0 0.0
  %3189 = vmatpush1.msra.mxu0 0.0
  %3190 = vmatprep.subr.mxu0 0.0
  %3191 = vmatpush1.msra.mxu0 0.0
  %3192 = vmatprep.subr.mxu0 0.0
  %3193 = vmatpush1.msra.mxu0 0.0
  %3194 = vmatprep.subr.mxu0 0.0
  %3195 = vmatpush1.msra.mxu0 0.0
  %3196 = vmatprep.subr.mxu0 0.0
  %3197 = vmatpush1.msra.mxu0 0.0
  %3198 = vmatprep.subr.mxu0 0.0
  %3199 = vmatpush1.msra.mxu0 0.0
  %3200 = vmatprep.subr.mxu0 0.0
  %3201 = vmatpush1.msra.mxu0 0.0
  %3202 = vmatprep.subr.mxu0 0.0
  %3203 = vmatpush1.msra.mxu0 0.0
  %3204 = vmatprep.subr.mxu0 0.0
  %3205 = vmatpush1.msra.mxu0 0.0
  %3206 = vmatprep.subr.mxu0 0.0
  %3207 = vmatpush1.msra.mxu0 %v2257
  %3208 = vmatprep.subr.mxu0 0.0
  %3209 = vmatpush2.msra.mxu0 0.0
  %3210 = vmatprep.subr.mxu0 0.0
  %3211 = vmatpush2.msra.mxu0 0.0
  %3212 = vmatprep.subr.mxu0 0.0
  %3213 = vmatpush2.msra.mxu0 0.0
  %3214 = vmatprep.subr.mxu0 0.0
  %3215 = vmatpush2.msra.mxu0 0.0
  %3216 = vmatprep.subr.mxu0 0.0
  %3217 = vmatpush2.msra.mxu0 0.0
  %3218 = vmatprep.subr.mxu0 0.0
  %3219 = vmatpush2.msra.mxu0 0.0
  %3220 = vmatprep.subr.mxu0 0.0
  %3221 = vmatpush2.msra.mxu0 0.0
  %3222 = vmatprep.subr.mxu0 0.0
  %3223 = vmatpush2.msra.mxu0 0.0
  %3224 = vmatprep.subr.mxu0 0.0
  %3225 = vmatpush2.msra.mxu0 0.0
  %3226 = vmatprep.subr.mxu0 0.0
  %3227 = vmatpush2.msra.mxu0 0.0
  %3228 = vmatprep.subr.mxu0 0.0
  %3229 = vmatpush2.msra.mxu0 0.0
  %3230 = vmatprep.subr.mxu0 0.0
  %3231 = vmatpush2.msra.mxu0 0.0
  %3232 = vmatprep.subr.mxu0 0.0
  %3233 = vmatpush2.msra.mxu0 0.0
  %3234 = vmatprep.subr.mxu0 0.0
  %3235 = vmatpush2.msra.mxu0 0.0
  %3236 = vmatprep.subr.mxu0 0.0
  %3237 = vmatpush2.msra.mxu0 0.0
  %3238 = vmatprep.subr.mxu0 0.0
  %3239 = vmatpush2.msra.mxu0 0.0
  %3240 = vmatprep.mubr.f32.mxu0 0.0
  %3241 = vmatmul.mubr.f32.gmra.mxu0 %v3174
  %v3242 = vpop.f32.mrf.mxu0
  %v3243 = vadd.f32 0.0, %v3242
  %v3244 = vpop.f32.mrf.mxu0
  %3245 = vdwg.mxu0
  %v3246 = vadd.f32 %v2998, %v3243
  %s3247 = scalar_lea.vmem %s23, 8
  %v3248 = vld [vmem:[%s3247] sm:$0xff]
  %v3250 = vsel %vm180, %v2247, 0
  %v3253 = vsel %vm180, %v2252, 0
  %v3256 = vsel %vm180, %v2253, 0
  %3258 = vmatprep.subr.mxu0 0.0
  %3259 = vmatpush1.xpose.msra.mxu0 0.0
  %3260 = vmatprep.subr.mxu0 0.0
  %3261 = vmatpush1.xpose.msra.mxu0 0.0
  %3262 = vmatprep.subr.mxu0 0.0
  %3263 = vmatpush1.xpose.msra.mxu0 0.0
  %3264 = vmatprep.subr.mxu0 0.0
  %3265 = vmatpush1.xpose.msra.mxu0 0.0
  %3266 = vmatprep.subr.mxu0 0.0
  %3267 = vmatpush1.xpose.msra.mxu0 0.0
  %3268 = vmatprep.subr.mxu0 0.0
  %3269 = vmatpush1.xpose.msra.mxu0 0.0
  %3270 = vmatprep.subr.mxu0 0.0
  %3271 = vmatpush1.xpose.msra.mxu0 0.0
  %3272 = vmatprep.subr.mxu0 0.0
  %3273 = vmatpush1.xpose.msra.mxu0 0.0
  %3274 = vmatprep.subr.mxu0 0.0
  %3275 = vmatpush1.xpose.msra.mxu0 0.0
  %3276 = vmatprep.subr.mxu0 0.0
  %3277 = vmatpush1.xpose.msra.mxu0 0.0
  %3278 = vmatprep.subr.mxu0 0.0
  %3279 = vmatpush1.xpose.msra.mxu0 0.0
  %3280 = vmatprep.subr.mxu0 0.0
  %3281 = vmatpush1.xpose.msra.mxu0 0.0
  %3282 = vmatprep.subr.mxu0 0.0
  %3283 = vmatpush1.xpose.msra.mxu0 0.0
  %3284 = vmatprep.subr.mxu0 0.0
  %3285 = vmatpush1.xpose.msra.mxu0 0.0
  %3286 = vmatprep.subr.mxu0 0.0
  %3287 = vmatpush1.xpose.msra.mxu0 %v3256
  %3288 = vmatprep.subr.mxu0 0.0
  %3289 = vmatpush1.xpose.msra.mxu0 %v3253
  %3290 = vmatprep.subr.mxu0 0.0
  %3291 = vmatpush2.xpose.msra.mxu0 0.0
  %3292 = vmatprep.subr.mxu0 0.0
  %3293 = vmatpush2.xpose.msra.mxu0 0.0
  %3294 = vmatprep.subr.mxu0 0.0
  %3295 = vmatpush2.xpose.msra.mxu0 0.0
  %3296 = vmatprep.subr.mxu0 0.0
  %3297 = vmatpush2.xpose.msra.mxu0 0.0
  %3298 = vmatprep.subr.mxu0 0.0
  %3299 = vmatpush2.xpose.msra.mxu0 0.0
  %3300 = vmatprep.subr.mxu0 0.0
  %3301 = vmatpush2.xpose.msra.mxu0 0.0
  %3302 = vmatprep.subr.mxu0 0.0
  %3303 = vmatpush2.xpose.msra.mxu0 0.0
  %3304 = vmatprep.subr.mxu0 0.0
  %3305 = vmatpush2.xpose.msra.mxu0 0.0
  %3306 = vmatprep.subr.mxu0 0.0
  %3307 = vmatpush2.xpose.msra.mxu0 0.0
  %3308 = vmatprep.subr.mxu0 0.0
  %3309 = vmatpush2.xpose.msra.mxu0 0.0
  %3310 = vmatprep.subr.mxu0 0.0
  %3311 = vmatpush2.xpose.msra.mxu0 0.0
  %3312 = vmatprep.subr.mxu0 0.0
  %3313 = vmatpush2.xpose.msra.mxu0 0.0
  %3314 = vmatprep.subr.mxu0 0.0
  %3315 = vmatpush2.xpose.msra.mxu0 0.0
  %3316 = vmatprep.subr.mxu0 0.0
  %3317 = vmatpush2.xpose.msra.mxu0 0.0
  %3318 = vmatprep.subr.mxu0 0.0
  %3319 = vmatpush2.xpose.msra.mxu0 0.0
  %3320 = vmatprep.subr.mxu0 0.0
  %3321 = vmatpush2.xpose.msra.mxu0 0.0
  %3322 = vmatprep.mubr.f32.mxu0 0.0
  %3323 = vmatmul.mubr.f32.gmra.mxu0 %v3250
  %v3324 = vpop.f32.mrf.mxu0
  %v3325 = vadd.f32 0.0, %v3324
  %v3326 = vpop.f32.mrf.mxu0
  %3327 = vdwg.mxu0
  %v3328 = vmul.f32 %v3325, 0.35355338
  %v3329 = vadd.f32 %v3328, %v3248
  %v3330 = vsel %vm2340, %v3329, -inf
  %3331 = vmax.xlane.f32.xlu0 %v3330
  %v3332 = vpop.xlane.xlu0 %3331
  %v3333 = vsub.f32 %v3329, %v3332
  %v3334 = vmul.f32 %v3333, 1.442695
  %v3335 = vpow.pop %v3334
  %v3336 = vsel %vm2340, %v3335, 0.0
  %3337 = vadd.xlane.f32.xlu0 %v3336
  %v3338 = vpop.xlane.xlu0 %3337
  %v3339 = vrcp.pop %v3338
  %v3340 = vmul.f32 %v3335, %v3339
  %3341 = vrot.lane.b32.xlu0 %v2252, 96
  %v3342 = vpop.permute.xlu0 %3341
  %3343 = vrot.lane.b32.xlu0 %v2253, 96
  %v3344 = vpop.permute.xlu0 %3343
  %v3348 = vsel %vm2340, %v3340, 0
  %3350 = vmatprep.subr.mxu0 0.0
  %3351 = vmatpush1.msra.mxu0 0.0
  %3352 = vmatprep.subr.mxu0 0.0
  %3353 = vmatpush1.msra.mxu0 0.0
  %3354 = vmatprep.subr.mxu0 0.0
  %3355 = vmatpush1.msra.mxu0 0.0
  %3356 = vmatprep.subr.mxu0 0.0
  %3357 = vmatpush1.msra.mxu0 0.0
  %3358 = vmatprep.subr.mxu0 0.0
  %3359 = vmatpush1.msra.mxu0 0.0
  %3360 = vmatprep.subr.mxu0 0.0
  %3361 = vmatpush1.msra.mxu0 0.0
  %3362 = vmatprep.subr.mxu0 0.0
  %3363 = vmatpush1.msra.mxu0 0.0
  %3364 = vmatprep.subr.mxu0 0.0
  %3365 = vmatpush1.msra.mxu0 0.0
  %3366 = vmatprep.subr.mxu0 0.0
  %3367 = vmatpush1.msra.mxu0 0.0
  %3368 = vmatprep.subr.mxu0 0.0
  %3369 = vmatpush1.msra.mxu0 0.0
  %3370 = vmatprep.subr.mxu0 0.0
  %3371 = vmatpush1.msra.mxu0 0.0
  %3372 = vmatprep.subr.mxu0 0.0
  %3373 = vmatpush1.msra.mxu0 0.0
  %3374 = vmatprep.subr.mxu0 0.0
  %3375 = vmatpush1.msra.mxu0 0.0
  %3376 = vmatprep.subr.mxu0 0.0
  %3377 = vmatpush1.msra.mxu0 0.0
  %3378 = vmatprep.subr.mxu0 0.0
  %3379 = vmatpush1.msra.mxu0 %v3344
  %3380 = vmatprep.subr.mxu0 0.0
  %3381 = vmatpush1.msra.mxu0 %v3342
  %3382 = vmatprep.subr.mxu0 0.0
  %3383 = vmatpush2.msra.mxu0 0.0
  %3384 = vmatprep.subr.mxu0 0.0
  %3385 = vmatpush2.msra.mxu0 0.0
  %3386 = vmatprep.subr.mxu0 0.0
  %3387 = vmatpush2.msra.mxu0 0.0
  %3388 = vmatprep.subr.mxu0 0.0
  %3389 = vmatpush2.msra.mxu0 0.0
  %3390 = vmatprep.subr.mxu0 0.0
  %3391 = vmatpush2.msra.mxu0 0.0
  %3392 = vmatprep.subr.mxu0 0.0
  %3393 = vmatpush2.msra.mxu0 0.0
  %3394 = vmatprep.subr.mxu0 0.0
  %3395 = vmatpush2.msra.mxu0 0.0
  %3396 = vmatprep.subr.mxu0 0.0
  %3397 = vmatpush2.msra.mxu0 0.0
  %3398 = vmatprep.subr.mxu0 0.0
  %3399 = vmatpush2.msra.mxu0 0.0
  %3400 = vmatprep.subr.mxu0 0.0
  %3401 = vmatpush2.msra.mxu0 0.0
  %3402 = vmatprep.subr.mxu0 0.0
  %3403 = vmatpush2.msra.mxu0 0.0
  %3404 = vmatprep.subr.mxu0 0.0
  %3405 = vmatpush2.msra.mxu0 0.0
  %3406 = vmatprep.subr.mxu0 0.0
  %3407 = vmatpush2.msra.mxu0 0.0
  %3408 = vmatprep.subr.mxu0 0.0
  %3409 = vmatpush2.msra.mxu0 0.0
  %3410 = vmatprep.subr.mxu0 0.0
  %3411 = vmatpush2.msra.mxu0 0.0
  %3412 = vmatprep.subr.mxu0 0.0
  %3413 = vmatpush2.msra.mxu0 0.0
  %3414 = vmatprep.mubr.f32.mxu0 0.0
  %3415 = vmatmul.mubr.f32.gmra.mxu0 %v3348
  %v3416 = vpop.f32.mrf.mxu0
  %v3417 = vadd.f32 0.0, %v3416
  %v3418 = vpop.f32.mrf.mxu0
  %3419 = vdwg.mxu0
  %3420 = vrot.lane.b32.xlu0 %v2247, 120
  %v3421 = vpop.permute.xlu0 %3420
  %3422 = vrot.lane.b32.xlu0 %v2252, 120
  %v3423 = vpop.permute.xlu0 %3422
  %3424 = vrot.lane.b32.xlu0 %v2253, 120
  %v3425 = vpop.permute.xlu0 %3424
  %v3426 = vsel %vm180, %v3421, 0
  %v3428 = vsel %vm180, %v3423, 0
  %v3430 = vsel %vm180, %v3425, 0
  %3432 = vmatprep.subr.mxu0 0.0
  %3433 = vmatpush1.xpose.msra.mxu0 0.0
  %3434 = vmatprep.subr.mxu0 0.0
  %3435 = vmatpush1.xpose.msra.mxu0 0.0
  %3436 = vmatprep.subr.mxu0 0.0
  %3437 = vmatpush1.xpose.msra.mxu0 0.0
  %3438 = vmatprep.subr.mxu0 0.0
  %3439 = vmatpush1.xpose.msra.mxu0 0.0
  %3440 = vmatprep.subr.mxu0 0.0
  %3441 = vmatpush1.xpose.msra.mxu0 0.0
  %3442 = vmatprep.subr.mxu0 0.0
  %3443 = vmatpush1.xpose.msra.mxu0 0.0
  %3444 = vmatprep.subr.mxu0 0.0
  %3445 = vmatpush1.xpose.msra.mxu0 0.0
  %3446 = vmatprep.subr.mxu0 0.0
  %3447 = vmatpush1.xpose.msra.mxu0 0.0
  %3448 = vmatprep.subr.mxu0 0.0
  %3449 = vmatpush1.xpose.msra.mxu0 0.0
  %3450 = vmatprep.subr.mxu0 0.0
  %3451 = vmatpush1.xpose.msra.mxu0 0.0
  %3452 = vmatprep.subr.mxu0 0.0
  %3453 = vmatpush1.xpose.msra.mxu0 0.0
  %3454 = vmatprep.subr.mxu0 0.0
  %3455 = vmatpush1.xpose.msra.mxu0 0.0
  %3456 = vmatprep.subr.mxu0 0.0
  %3457 = vmatpush1.xpose.msra.mxu0 0.0
  %3458 = vmatprep.subr.mxu0 0.0
  %3459 = vmatpush1.xpose.msra.mxu0 0.0
  %3460 = vmatprep.subr.mxu0 0.0
  %3461 = vmatpush1.xpose.msra.mxu0 %v3430
  %3462 = vmatprep.subr.mxu0 0.0
  %3463 = vmatpush1.xpose.msra.mxu0 %v3428
  %3464 = vmatprep.subr.mxu0 0.0
  %3465 = vmatpush2.xpose.msra.mxu0 0.0
  %3466 = vmatprep.subr.mxu0 0.0
  %3467 = vmatpush2.xpose.msra.mxu0 0.0
  %3468 = vmatprep.subr.mxu0 0.0
  %3469 = vmatpush2.xpose.msra.mxu0 0.0
  %3470 = vmatprep.subr.mxu0 0.0
  %3471 = vmatpush2.xpose.msra.mxu0 0.0
  %3472 = vmatprep.subr.mxu0 0.0
  %3473 = vmatpush2.xpose.msra.mxu0 0.0
  %3474 = vmatprep.subr.mxu0 0.0
  %3475 = vmatpush2.xpose.msra.mxu0 0.0
  %3476 = vmatprep.subr.mxu0 0.0
  %3477 = vmatpush2.xpose.msra.mxu0 0.0
  %3478 = vmatprep.subr.mxu0 0.0
  %3479 = vmatpush2.xpose.msra.mxu0 0.0
  %3480 = vmatprep.subr.mxu0 0.0
  %3481 = vmatpush2.xpose.msra.mxu0 0.0
  %3482 = vmatprep.subr.mxu0 0.0
  %3483 = vmatpush2.xpose.msra.mxu0 0.0
  %3484 = vmatprep.subr.mxu0 0.0
  %3485 = vmatpush2.xpose.msra.mxu0 0.0
  %3486 = vmatprep.subr.mxu0 0.0
  %3487 = vmatpush2.xpose.msra.mxu0 0.0
  %3488 = vmatprep.subr.mxu0 0.0
  %3489 = vmatpush2.xpose.msra.mxu0 0.0
  %3490 = vmatprep.subr.mxu0 0.0
  %3491 = vmatpush2.xpose.msra.mxu0 0.0
  %3492 = vmatprep.subr.mxu0 0.0
  %3493 = vmatpush2.xpose.msra.mxu0 0.0
  %3494 = vmatprep.subr.mxu0 0.0
  %3495 = vmatpush2.xpose.msra.mxu0 0.0
  %3496 = vmatprep.mubr.f32.mxu0 0.0
  %3497 = vmatmul.mubr.f32.gmra.mxu0 %v3426
  %v3498 = vpop.f32.mrf.mxu0
  %v3499 = vadd.f32 0.0, %v3498
  %v3500 = vpop.f32.mrf.mxu0
  %3501 = vdwg.mxu0
  %v3502 = vmul.f32 %v3499, 0.35355338
  %v3503 = vadd.f32 %v3502, %v3248
  %v3504 = vsel %vm2340, %v3503, -inf
  %3505 = vmax.xlane.f32.xlu0 %v3504
  %v3506 = vpop.xlane.xlu0 %3505
  %v3507 = vsub.f32 %v3503, %v3506
  %v3508 = vmul.f32 %v3507, 1.442695
  %v3509 = vpow.pop %v3508
  %v3510 = vsel %vm2340, %v3509, 0.0
  %3511 = vadd.xlane.f32.xlu0 %v3510
  %v3512 = vpop.xlane.xlu0 %3511
  %v3513 = vrcp.pop %v3512
  %v3514 = vmul.f32 %v3509, %v3513
  %3515 = vrot.lane.b32.xlu0 %v2252, 88
  %v3516 = vpop.permute.xlu0 %3515
  %3517 = vrot.lane.b32.xlu0 %v2253, 88
  %v3518 = vpop.permute.xlu0 %3517
  %v3522 = vsel %vm2340, %v3514, 0
  %3524 = vmatprep.subr.mxu0 0.0
  %3525 = vmatpush1.msra.mxu0 0.0
  %3526 = vmatprep.subr.mxu0 0.0
  %3527 = vmatpush1.msra.mxu0 0.0
  %3528 = vmatprep.subr.mxu0 0.0
  %3529 = vmatpush1.msra.mxu0 0.0
  %3530 = vmatprep.subr.mxu0 0.0
  %3531 = vmatpush1.msra.mxu0 0.0
  %3532 = vmatprep.subr.mxu0 0.0
  %3533 = vmatpush1.msra.mxu0 0.0
  %3534 = vmatprep.subr.mxu0 0.0
  %3535 = vmatpush1.msra.mxu0 0.0
  %3536 = vmatprep.subr.mxu0 0.0
  %3537 = vmatpush1.msra.mxu0 0.0
  %3538 = vmatprep.subr.mxu0 0.0
  %3539 = vmatpush1.msra.mxu0 0.0
  %3540 = vmatprep.subr.mxu0 0.0
  %3541 = vmatpush1.msra.mxu0 0.0
  %3542 = vmatprep.subr.mxu0 0.0
  %3543 = vmatpush1.msra.mxu0 0.0
  %3544 = vmatprep.subr.mxu0 0.0
  %3545 = vmatpush1.msra.mxu0 0.0
  %3546 = vmatprep.subr.mxu0 0.0
  %3547 = vmatpush1.msra.mxu0 0.0
  %3548 = vmatprep.subr.mxu0 0.0
  %3549 = vmatpush1.msra.mxu0 0.0
  %3550 = vmatprep.subr.mxu0 0.0
  %3551 = vmatpush1.msra.mxu0 0.0
  %3552 = vmatprep.subr.mxu0 0.0
  %3553 = vmatpush1.msra.mxu0 %v3518
  %3554 = vmatprep.subr.mxu0 0.0
  %3555 = vmatpush1.msra.mxu0 %v3516
  %3556 = vmatprep.subr.mxu0 0.0
  %3557 = vmatpush2.msra.mxu0 0.0
  %3558 = vmatprep.subr.mxu0 0.0
  %3559 = vmatpush2.msra.mxu0 0.0
  %3560 = vmatprep.subr.mxu0 0.0
  %3561 = vmatpush2.msra.mxu0 0.0
  %3562 = vmatprep.subr.mxu0 0.0
  %3563 = vmatpush2.msra.mxu0 0.0
  %3564 = vmatprep.subr.mxu0 0.0
  %3565 = vmatpush2.msra.mxu0 0.0
  %3566 = vmatprep.subr.mxu0 0.0
  %3567 = vmatpush2.msra.mxu0 0.0
  %3568 = vmatprep.subr.mxu0 0.0
  %3569 = vmatpush2.msra.mxu0 0.0
  %3570 = vmatprep.subr.mxu0 0.0
  %3571 = vmatpush2.msra.mxu0 0.0
  %3572 = vmatprep.subr.mxu0 0.0
  %3573 = vmatpush2.msra.mxu0 0.0
  %3574 = vmatprep.subr.mxu0 0.0
  %3575 = vmatpush2.msra.mxu0 0.0
  %3576 = vmatprep.subr.mxu0 0.0
  %3577 = vmatpush2.msra.mxu0 0.0
  %3578 = vmatprep.subr.mxu0 0.0
  %3579 = vmatpush2.msra.mxu0 0.0
  %3580 = vmatprep.subr.mxu0 0.0
  %3581 = vmatpush2.msra.mxu0 0.0
  %3582 = vmatprep.subr.mxu0 0.0
  %3583 = vmatpush2.msra.mxu0 0.0
  %3584 = vmatprep.subr.mxu0 0.0
  %3585 = vmatpush2.msra.mxu0 0.0
  %3586 = vmatprep.subr.mxu0 0.0
  %3587 = vmatpush2.msra.mxu0 0.0
  %3588 = vmatprep.mubr.f32.mxu0 0.0
  %3589 = vmatmul.mubr.f32.gmra.mxu0 %v3522
  %v3590 = vpop.f32.mrf.mxu0
  %v3591 = vadd.f32 0.0, %v3590
  %v3592 = vpop.f32.mrf.mxu0
  %3593 = vdwg.mxu0
  %v3595 = vsel %vm180, %v3591, 0
  %3597 = vmatprep.subr.mxu0 0.0
  %3598 = vmatpush1.msra.mxu0 0.0
  %3599 = vmatprep.subr.mxu0 0.0
  %3600 = vmatpush1.msra.mxu0 0.0
  %3601 = vmatprep.subr.mxu0 0.0
  %3602 = vmatpush1.msra.mxu0 0.0
  %3603 = vmatprep.subr.mxu0 0.0
  %3604 = vmatpush1.msra.mxu0 0.0
  %3605 = vmatprep.subr.mxu0 0.0
  %3606 = vmatpush1.msra.mxu0 0.0
  %3607 = vmatprep.subr.mxu0 0.0
  %3608 = vmatpush1.msra.mxu0 0.0
  %3609 = vmatprep.subr.mxu0 0.0
  %3610 = vmatpush1.msra.mxu0 0.0
  %3611 = vmatprep.subr.mxu0 0.0
  %3612 = vmatpush1.msra.mxu0 0.0
  %3613 = vmatprep.subr.mxu0 0.0
  %3614 = vmatpush1.msra.mxu0 0.0
  %3615 = vmatprep.subr.mxu0 0.0
  %3616 = vmatpush1.msra.mxu0 0.0
  %3617 = vmatprep.subr.mxu0 0.0
  %3618 = vmatpush1.msra.mxu0 0.0
  %3619 = vmatprep.subr.mxu0 0.0
  %3620 = vmatpush1.msra.mxu0 0.0
  %3621 = vmatprep.subr.mxu0 0.0
  %3622 = vmatpush1.msra.mxu0 0.0
  %3623 = vmatprep.subr.mxu0 0.0
  %3624 = vmatpush1.msra.mxu0 0.0
  %3625 = vmatprep.subr.mxu0 0.0
  %3626 = vmatpush1.msra.mxu0 0.0
  %3627 = vmatprep.subr.mxu0 0.0
  %3628 = vmatpush1.msra.mxu0 %v2255
  %3629 = vmatprep.subr.mxu0 0.0
  %3630 = vmatpush2.msra.mxu0 0.0
  %3631 = vmatprep.subr.mxu0 0.0
  %3632 = vmatpush2.msra.mxu0 0.0
  %3633 = vmatprep.subr.mxu0 0.0
  %3634 = vmatpush2.msra.mxu0 0.0
  %3635 = vmatprep.subr.mxu0 0.0
  %3636 = vmatpush2.msra.mxu0 0.0
  %3637 = vmatprep.subr.mxu0 0.0
  %3638 = vmatpush2.msra.mxu0 0.0
  %3639 = vmatprep.subr.mxu0 0.0
  %3640 = vmatpush2.msra.mxu0 0.0
  %3641 = vmatprep.subr.mxu0 0.0
  %3642 = vmatpush2.msra.mxu0 0.0
  %3643 = vmatprep.subr.mxu0 0.0
  %3644 = vmatpush2.msra.mxu0 0.0
  %3645 = vmatprep.subr.mxu0 0.0
  %3646 = vmatpush2.msra.mxu0 0.0
  %3647 = vmatprep.subr.mxu0 0.0
  %3648 = vmatpush2.msra.mxu0 0.0
  %3649 = vmatprep.subr.mxu0 0.0
  %3650 = vmatpush2.msra.mxu0 0.0
  %3651 = vmatprep.subr.mxu0 0.0
  %3652 = vmatpush2.msra.mxu0 0.0
  %3653 = vmatprep.subr.mxu0 0.0
  %3654 = vmatpush2.msra.mxu0 0.0
  %3655 = vmatprep.subr.mxu0 0.0
  %3656 = vmatpush2.msra.mxu0 0.0
  %3657 = vmatprep.subr.mxu0 0.0
  %3658 = vmatpush2.msra.mxu0 0.0
  %3659 = vmatprep.subr.mxu0 0.0
  %3660 = vmatpush2.msra.mxu0 0.0
  %3661 = vmatprep.mubr.f32.mxu0 0.0
  %3662 = vmatmul.mubr.f32.gmra.mxu0 %v3595
  %v3663 = vpop.f32.mrf.mxu0
  %v3664 = vadd.f32 0.0, %v3663
  %v3665 = vpop.f32.mrf.mxu0
  %3666 = vdwg.mxu0
  %v3668 = vsel %vm180, %v3417, 0
  %3670 = vmatprep.subr.mxu0 0.0
  %3671 = vmatpush1.msra.mxu0 0.0
  %3672 = vmatprep.subr.mxu0 0.0
  %3673 = vmatpush1.msra.mxu0 0.0
  %3674 = vmatprep.subr.mxu0 0.0
  %3675 = vmatpush1.msra.mxu0 0.0
  %3676 = vmatprep.subr.mxu0 0.0
  %3677 = vmatpush1.msra.mxu0 0.0
  %3678 = vmatprep.subr.mxu0 0.0
  %3679 = vmatpush1.msra.mxu0 0.0
  %3680 = vmatprep.subr.mxu0 0.0
  %3681 = vmatpush1.msra.mxu0 0.0
  %3682 = vmatprep.subr.mxu0 0.0
  %3683 = vmatpush1.msra.mxu0 0.0
  %3684 = vmatprep.subr.mxu0 0.0
  %3685 = vmatpush1.msra.mxu0 0.0
  %3686 = vmatprep.subr.mxu0 0.0
  %3687 = vmatpush1.msra.mxu0 0.0
  %3688 = vmatprep.subr.mxu0 0.0
  %3689 = vmatpush1.msra.mxu0 0.0
  %3690 = vmatprep.subr.mxu0 0.0
  %3691 = vmatpush1.msra.mxu0 0.0
  %3692 = vmatprep.subr.mxu0 0.0
  %3693 = vmatpush1.msra.mxu0 0.0
  %3694 = vmatprep.subr.mxu0 0.0
  %3695 = vmatpush1.msra.mxu0 0.0
  %3696 = vmatprep.subr.mxu0 0.0
  %3697 = vmatpush1.msra.mxu0 0.0
  %3698 = vmatprep.subr.mxu0 0.0
  %3699 = vmatpush1.msra.mxu0 0.0
  %3700 = vmatprep.subr.mxu0 0.0
  %3701 = vmatpush1.msra.mxu0 %v2254
  %3702 = vmatprep.subr.mxu0 0.0
  %3703 = vmatpush2.msra.mxu0 0.0
  %3704 = vmatprep.subr.mxu0 0.0
  %3705 = vmatpush2.msra.mxu0 0.0
  %3706 = vmatprep.subr.mxu0 0.0
  %3707 = vmatpush2.msra.mxu0 0.0
  %3708 = vmatprep.subr.mxu0 0.0
  %3709 = vmatpush2.msra.mxu0 0.0
  %3710 = vmatprep.subr.mxu0 0.0
  %3711 = vmatpush2.msra.mxu0 0.0
  %3712 = vmatprep.subr.mxu0 0.0
  %3713 = vmatpush2.msra.mxu0 0.0
  %3714 = vmatprep.subr.mxu0 0.0
  %3715 = vmatpush2.msra.mxu0 0.0
  %3716 = vmatprep.subr.mxu0 0.0
  %3717 = vmatpush2.msra.mxu0 0.0
  %3718 = vmatprep.subr.mxu0 0.0
  %3719 = vmatpush2.msra.mxu0 0.0
  %3720 = vmatprep.subr.mxu0 0.0
  %3721 = vmatpush2.msra.mxu0 0.0
  %3722 = vmatprep.subr.mxu0 0.0
  %3723 = vmatpush2.msra.mxu0 0.0
  %3724 = vmatprep.subr.mxu0 0.0
  %3725 = vmatpush2.msra.mxu0 0.0
  %3726 = vmatprep.subr.mxu0 0.0
  %3727 = vmatpush2.msra.mxu0 0.0
  %3728 = vmatprep.subr.mxu0 0.0
  %3729 = vmatpush2.msra.mxu0 0.0
  %3730 = vmatprep.subr.mxu0 0.0
  %3731 = vmatpush2.msra.mxu0 0.0
  %3732 = vmatprep.subr.mxu0 0.0
  %3733 = vmatpush2.msra.mxu0 0.0
  %3734 = vmatprep.mubr.f32.mxu0 0.0
  %3735 = vmatmul.mubr.f32.gmra.mxu0 %v3668
  %v3736 = vpop.f32.mrf.mxu0
  %v3737 = vadd.f32 %v3664, %v3736
  %v3738 = vpop.f32.mrf.mxu0
  %3739 = vdwg.mxu0
  %3740 = vrot.lane.b32.xlu0 %v2247, 112
  %v3741 = vpop.permute.xlu0 %3740
  %3742 = vrot.lane.b32.xlu0 %v2252, 112
  %v3743 = vpop.permute.xlu0 %3742
  %3744 = vrot.lane.b32.xlu0 %v2253, 112
  %v3745 = vpop.permute.xlu0 %3744
  %v3746 = vsel %vm180, %v3741, 0
  %v3748 = vsel %vm180, %v3743, 0
  %v3750 = vsel %vm180, %v3745, 0
  %3752 = vmatprep.subr.mxu0 0.0
  %3753 = vmatpush1.xpose.msra.mxu0 0.0
  %3754 = vmatprep.subr.mxu0 0.0
  %3755 = vmatpush1.xpose.msra.mxu0 0.0
  %3756 = vmatprep.subr.mxu0 0.0
  %3757 = vmatpush1.xpose.msra.mxu0 0.0
  %3758 = vmatprep.subr.mxu0 0.0
  %3759 = vmatpush1.xpose.msra.mxu0 0.0
  %3760 = vmatprep.subr.mxu0 0.0
  %3761 = vmatpush1.xpose.msra.mxu0 0.0
  %3762 = vmatprep.subr.mxu0 0.0
  %3763 = vmatpush1.xpose.msra.mxu0 0.0
  %3764 = vmatprep.subr.mxu0 0.0
  %3765 = vmatpush1.xpose.msra.mxu0 0.0
  %3766 = vmatprep.subr.mxu0 0.0
  %3767 = vmatpush1.xpose.msra.mxu0 0.0
  %3768 = vmatprep.subr.mxu0 0.0
  %3769 = vmatpush1.xpose.msra.mxu0 0.0
  %3770 = vmatprep.subr.mxu0 0.0
  %3771 = vmatpush1.xpose.msra.mxu0 0.0
  %3772 = vmatprep.subr.mxu0 0.0
  %3773 = vmatpush1.xpose.msra.mxu0 0.0
  %3774 = vmatprep.subr.mxu0 0.0
  %3775 = vmatpush1.xpose.msra.mxu0 0.0
  %3776 = vmatprep.subr.mxu0 0.0
  %3777 = vmatpush1.xpose.msra.mxu0 0.0
  %3778 = vmatprep.subr.mxu0 0.0
  %3779 = vmatpush1.xpose.msra.mxu0 0.0
  %3780 = vmatprep.subr.mxu0 0.0
  %3781 = vmatpush1.xpose.msra.mxu0 %v3750
  %3782 = vmatprep.subr.mxu0 0.0
  %3783 = vmatpush1.xpose.msra.mxu0 %v3748
  %3784 = vmatprep.subr.mxu0 0.0
  %3785 = vmatpush2.xpose.msra.mxu0 0.0
  %3786 = vmatprep.subr.mxu0 0.0
  %3787 = vmatpush2.xpose.msra.mxu0 0.0
  %3788 = vmatprep.subr.mxu0 0.0
  %3789 = vmatpush2.xpose.msra.mxu0 0.0
  %3790 = vmatprep.subr.mxu0 0.0
  %3791 = vmatpush2.xpose.msra.mxu0 0.0
  %3792 = vmatprep.subr.mxu0 0.0
  %3793 = vmatpush2.xpose.msra.mxu0 0.0
  %3794 = vmatprep.subr.mxu0 0.0
  %3795 = vmatpush2.xpose.msra.mxu0 0.0
  %3796 = vmatprep.subr.mxu0 0.0
  %3797 = vmatpush2.xpose.msra.mxu0 0.0
  %3798 = vmatprep.subr.mxu0 0.0
  %3799 = vmatpush2.xpose.msra.mxu0 0.0
  %3800 = vmatprep.subr.mxu0 0.0
  %3801 = vmatpush2.xpose.msra.mxu0 0.0
  %3802 = vmatprep.subr.mxu0 0.0
  %3803 = vmatpush2.xpose.msra.mxu0 0.0
  %3804 = vmatprep.subr.mxu0 0.0
  %3805 = vmatpush2.xpose.msra.mxu0 0.0
  %3806 = vmatprep.subr.mxu0 0.0
  %3807 = vmatpush2.xpose.msra.mxu0 0.0
  %3808 = vmatprep.subr.mxu0 0.0
  %3809 = vmatpush2.xpose.msra.mxu0 0.0
  %3810 = vmatprep.subr.mxu0 0.0
  %3811 = vmatpush2.xpose.msra.mxu0 0.0
  %3812 = vmatprep.subr.mxu0 0.0
  %3813 = vmatpush2.xpose.msra.mxu0 0.0
  %3814 = vmatprep.subr.mxu0 0.0
  %3815 = vmatpush2.xpose.msra.mxu0 0.0
  %3816 = vmatprep.mubr.f32.mxu0 0.0
  %3817 = vmatmul.mubr.f32.gmra.mxu0 %v3746
  %v3818 = vpop.f32.mrf.mxu0
  %v3819 = vadd.f32 0.0, %v3818
  %v3820 = vpop.f32.mrf.mxu0
  %3821 = vdwg.mxu0
  %v3822 = vmul.f32 %v3819, 0.35355338
  %v3823 = vadd.f32 %v3822, %v3248
  %v3824 = vsel %vm2340, %v3823, -inf
  %3825 = vmax.xlane.f32.xlu0 %v3824
  %v3826 = vpop.xlane.xlu0 %3825
  %v3827 = vsub.f32 %v3823, %v3826
  %v3828 = vmul.f32 %v3827, 1.442695
  %v3829 = vpow.pop %v3828
  %v3830 = vsel %vm2340, %v3829, 0.0
  %3831 = vadd.xlane.f32.xlu0 %v3830
  %v3832 = vpop.xlane.xlu0 %3831
  %v3833 = vrcp.pop %v3832
  %v3834 = vmul.f32 %v3829, %v3833
  %3835 = vrot.lane.b32.xlu0 %v2252, 80
  %v3836 = vpop.permute.xlu0 %3835
  %3837 = vrot.lane.b32.xlu0 %v2253, 80
  %v3838 = vpop.permute.xlu0 %3837
  %v3842 = vsel %vm2340, %v3834, 0
  %3844 = vmatprep.subr.mxu0 0.0
  %3845 = vmatpush1.msra.mxu0 0.0
  %3846 = vmatprep.subr.mxu0 0.0
  %3847 = vmatpush1.msra.mxu0 0.0
  %3848 = vmatprep.subr.mxu0 0.0
  %3849 = vmatpush1.msra.mxu0 0.0
  %3850 = vmatprep.subr.mxu0 0.0
  %3851 = vmatpush1.msra.mxu0 0.0
  %3852 = vmatprep.subr.mxu0 0.0
  %3853 = vmatpush1.msra.mxu0 0.0
  %3854 = vmatprep.subr.mxu0 0.0
  %3855 = vmatpush1.msra.mxu0 0.0
  %3856 = vmatprep.subr.mxu0 0.0
  %3857 = vmatpush1.msra.mxu0 0.0
  %3858 = vmatprep.subr.mxu0 0.0
  %3859 = vmatpush1.msra.mxu0 0.0
  %3860 = vmatprep.subr.mxu0 0.0
  %3861 = vmatpush1.msra.mxu0 0.0
  %3862 = vmatprep.subr.mxu0 0.0
  %3863 = vmatpush1.msra.mxu0 0.0
  %3864 = vmatprep.subr.mxu0 0.0
  %3865 = vmatpush1.msra.mxu0 0.0
  %3866 = vmatprep.subr.mxu0 0.0
  %3867 = vmatpush1.msra.mxu0 0.0
  %3868 = vmatprep.subr.mxu0 0.0
  %3869 = vmatpush1.msra.mxu0 0.0
  %3870 = vmatprep.subr.mxu0 0.0
  %3871 = vmatpush1.msra.mxu0 0.0
  %3872 = vmatprep.subr.mxu0 0.0
  %3873 = vmatpush1.msra.mxu0 %v3838
  %3874 = vmatprep.subr.mxu0 0.0
  %3875 = vmatpush1.msra.mxu0 %v3836
  %3876 = vmatprep.subr.mxu0 0.0
  %3877 = vmatpush2.msra.mxu0 0.0
  %3878 = vmatprep.subr.mxu0 0.0
  %3879 = vmatpush2.msra.mxu0 0.0
  %3880 = vmatprep.subr.mxu0 0.0
  %3881 = vmatpush2.msra.mxu0 0.0
  %3882 = vmatprep.subr.mxu0 0.0
  %3883 = vmatpush2.msra.mxu0 0.0
  %3884 = vmatprep.subr.mxu0 0.0
  %3885 = vmatpush2.msra.mxu0 0.0
  %3886 = vmatprep.subr.mxu0 0.0
  %3887 = vmatpush2.msra.mxu0 0.0
  %3888 = vmatprep.subr.mxu0 0.0
  %3889 = vmatpush2.msra.mxu0 0.0
  %3890 = vmatprep.subr.mxu0 0.0
  %3891 = vmatpush2.msra.mxu0 0.0
  %3892 = vmatprep.subr.mxu0 0.0
  %3893 = vmatpush2.msra.mxu0 0.0
  %3894 = vmatprep.subr.mxu0 0.0
  %3895 = vmatpush2.msra.mxu0 0.0
  %3896 = vmatprep.subr.mxu0 0.0
  %3897 = vmatpush2.msra.mxu0 0.0
  %3898 = vmatprep.subr.mxu0 0.0
  %3899 = vmatpush2.msra.mxu0 0.0
  %3900 = vmatprep.subr.mxu0 0.0
  %3901 = vmatpush2.msra.mxu0 0.0
  %3902 = vmatprep.subr.mxu0 0.0
  %3903 = vmatpush2.msra.mxu0 0.0
  %3904 = vmatprep.subr.mxu0 0.0
  %3905 = vmatpush2.msra.mxu0 0.0
  %3906 = vmatprep.subr.mxu0 0.0
  %3907 = vmatpush2.msra.mxu0 0.0
  %3908 = vmatprep.mubr.f32.mxu0 0.0
  %3909 = vmatmul.mubr.f32.gmra.mxu0 %v3842
  %v3910 = vpop.f32.mrf.mxu0
  %v3911 = vadd.f32 0.0, %v3910
  %v3912 = vpop.f32.mrf.mxu0
  %3913 = vdwg.mxu0
  %v3915 = vsel %vm180, %v3911, 0
  %3917 = vmatprep.subr.mxu0 0.0
  %3918 = vmatpush1.msra.mxu0 0.0
  %3919 = vmatprep.subr.mxu0 0.0
  %3920 = vmatpush1.msra.mxu0 0.0
  %3921 = vmatprep.subr.mxu0 0.0
  %3922 = vmatpush1.msra.mxu0 0.0
  %3923 = vmatprep.subr.mxu0 0.0
  %3924 = vmatpush1.msra.mxu0 0.0
  %3925 = vmatprep.subr.mxu0 0.0
  %3926 = vmatpush1.msra.mxu0 0.0
  %3927 = vmatprep.subr.mxu0 0.0
  %3928 = vmatpush1.msra.mxu0 0.0
  %3929 = vmatprep.subr.mxu0 0.0
  %3930 = vmatpush1.msra.mxu0 0.0
  %3931 = vmatprep.subr.mxu0 0.0
  %3932 = vmatpush1.msra.mxu0 0.0
  %3933 = vmatprep.subr.mxu0 0.0
  %3934 = vmatpush1.msra.mxu0 0.0
  %3935 = vmatprep.subr.mxu0 0.0
  %3936 = vmatpush1.msra.mxu0 0.0
  %3937 = vmatprep.subr.mxu0 0.0
  %3938 = vmatpush1.msra.mxu0 0.0
  %3939 = vmatprep.subr.mxu0 0.0
  %3940 = vmatpush1.msra.mxu0 0.0
  %3941 = vmatprep.subr.mxu0 0.0
  %3942 = vmatpush1.msra.mxu0 0.0
  %3943 = vmatprep.subr.mxu0 0.0
  %3944 = vmatpush1.msra.mxu0 0.0
  %3945 = vmatprep.subr.mxu0 0.0
  %3946 = vmatpush1.msra.mxu0 0.0
  %3947 = vmatprep.subr.mxu0 0.0
  %3948 = vmatpush1.msra.mxu0 %v2256
  %3949 = vmatprep.subr.mxu0 0.0
  %3950 = vmatpush2.msra.mxu0 0.0
  %3951 = vmatprep.subr.mxu0 0.0
  %3952 = vmatpush2.msra.mxu0 0.0
  %3953 = vmatprep.subr.mxu0 0.0
  %3954 = vmatpush2.msra.mxu0 0.0
  %3955 = vmatprep.subr.mxu0 0.0
  %3956 = vmatpush2.msra.mxu0 0.0
  %3957 = vmatprep.subr.mxu0 0.0
  %3958 = vmatpush2.msra.mxu0 0.0
  %3959 = vmatprep.subr.mxu0 0.0
  %3960 = vmatpush2.msra.mxu0 0.0
  %3961 = vmatprep.subr.mxu0 0.0
  %3962 = vmatpush2.msra.mxu0 0.0
  %3963 = vmatprep.subr.mxu0 0.0
  %3964 = vmatpush2.msra.mxu0 0.0
  %3965 = vmatprep.subr.mxu0 0.0
  %3966 = vmatpush2.msra.mxu0 0.0
  %3967 = vmatprep.subr.mxu0 0.0
  %3968 = vmatpush2.msra.mxu0 0.0
  %3969 = vmatprep.subr.mxu0 0.0
  %3970 = vmatpush2.msra.mxu0 0.0
  %3971 = vmatprep.subr.mxu0 0.0
  %3972 = vmatpush2.msra.mxu0 0.0
  %3973 = vmatprep.subr.mxu0 0.0
  %3974 = vmatpush2.msra.mxu0 0.0
  %3975 = vmatprep.subr.mxu0 0.0
  %3976 = vmatpush2.msra.mxu0 0.0
  %3977 = vmatprep.subr.mxu0 0.0
  %3978 = vmatpush2.msra.mxu0 0.0
  %3979 = vmatprep.subr.mxu0 0.0
  %3980 = vmatpush2.msra.mxu0 0.0
  %3981 = vmatprep.mubr.f32.mxu0 0.0
  %3982 = vmatmul.mubr.f32.gmra.mxu0 %v3915
  %v3983 = vpop.f32.mrf.mxu0
  %v3984 = vadd.f32 0.0, %v3983
  %v3985 = vpop.f32.mrf.mxu0
  %3986 = vdwg.mxu0
  %v3987 = vadd.f32 %v3737, %v3984
  %3988 = vrot.lane.b32.xlu0 %v2247, 104
  %v3989 = vpop.permute.xlu0 %3988
  %3990 = vrot.lane.b32.xlu0 %v2252, 104
  %v3991 = vpop.permute.xlu0 %3990
  %3992 = vrot.lane.b32.xlu0 %v2253, 104
  %v3993 = vpop.permute.xlu0 %3992
  %v3994 = vsel %vm180, %v3989, 0
  %v3996 = vsel %vm180, %v3991, 0
  %v3998 = vsel %vm180, %v3993, 0
  %4000 = vmatprep.subr.mxu0 0.0
  %4001 = vmatpush1.xpose.msra.mxu0 0.0
  %4002 = vmatprep.subr.mxu0 0.0
  %4003 = vmatpush1.xpose.msra.mxu0 0.0
  %4004 = vmatprep.subr.mxu0 0.0
  %4005 = vmatpush1.xpose.msra.mxu0 0.0
  %4006 = vmatprep.subr.mxu0 0.0
  %4007 = vmatpush1.xpose.msra.mxu0 0.0
  %4008 = vmatprep.subr.mxu0 0.0
  %4009 = vmatpush1.xpose.msra.mxu0 0.0
  %4010 = vmatprep.subr.mxu0 0.0
  %4011 = vmatpush1.xpose.msra.mxu0 0.0
  %4012 = vmatprep.subr.mxu0 0.0
  %4013 = vmatpush1.xpose.msra.mxu0 0.0
  %4014 = vmatprep.subr.mxu0 0.0
  %4015 = vmatpush1.xpose.msra.mxu0 0.0
  %4016 = vmatprep.subr.mxu0 0.0
  %4017 = vmatpush1.xpose.msra.mxu0 0.0
  %4018 = vmatprep.subr.mxu0 0.0
  %4019 = vmatpush1.xpose.msra.mxu0 0.0
  %4020 = vmatprep.subr.mxu0 0.0
  %4021 = vmatpush1.xpose.msra.mxu0 0.0
  %4022 = vmatprep.subr.mxu0 0.0
  %4023 = vmatpush1.xpose.msra.mxu0 0.0
  %4024 = vmatprep.subr.mxu0 0.0
  %4025 = vmatpush1.xpose.msra.mxu0 0.0
  %4026 = vmatprep.subr.mxu0 0.0
  %4027 = vmatpush1.xpose.msra.mxu0 0.0
  %4028 = vmatprep.subr.mxu0 0.0
  %4029 = vmatpush1.xpose.msra.mxu0 %v3998
  %4030 = vmatprep.subr.mxu0 0.0
  %4031 = vmatpush1.xpose.msra.mxu0 %v3996
  %4032 = vmatprep.subr.mxu0 0.0
  %4033 = vmatpush2.xpose.msra.mxu0 0.0
  %4034 = vmatprep.subr.mxu0 0.0
  %4035 = vmatpush2.xpose.msra.mxu0 0.0
  %4036 = vmatprep.subr.mxu0 0.0
  %4037 = vmatpush2.xpose.msra.mxu0 0.0
  %4038 = vmatprep.subr.mxu0 0.0
  %4039 = vmatpush2.xpose.msra.mxu0 0.0
  %4040 = vmatprep.subr.mxu0 0.0
  %4041 = vmatpush2.xpose.msra.mxu0 0.0
  %4042 = vmatprep.subr.mxu0 0.0
  %4043 = vmatpush2.xpose.msra.mxu0 0.0
  %4044 = vmatprep.subr.mxu0 0.0
  %4045 = vmatpush2.xpose.msra.mxu0 0.0
  %4046 = vmatprep.subr.mxu0 0.0
  %4047 = vmatpush2.xpose.msra.mxu0 0.0
  %4048 = vmatprep.subr.mxu0 0.0
  %4049 = vmatpush2.xpose.msra.mxu0 0.0
  %4050 = vmatprep.subr.mxu0 0.0
  %4051 = vmatpush2.xpose.msra.mxu0 0.0
  %4052 = vmatprep.subr.mxu0 0.0
  %4053 = vmatpush2.xpose.msra.mxu0 0.0
  %4054 = vmatprep.subr.mxu0 0.0
  %4055 = vmatpush2.xpose.msra.mxu0 0.0
  %4056 = vmatprep.subr.mxu0 0.0
  %4057 = vmatpush2.xpose.msra.mxu0 0.0
  %4058 = vmatprep.subr.mxu0 0.0
  %4059 = vmatpush2.xpose.msra.mxu0 0.0
  %4060 = vmatprep.subr.mxu0 0.0
  %4061 = vmatpush2.xpose.msra.mxu0 0.0
  %4062 = vmatprep.subr.mxu0 0.0
  %4063 = vmatpush2.xpose.msra.mxu0 0.0
  %4064 = vmatprep.mubr.f32.mxu0 0.0
  %4065 = vmatmul.mubr.f32.gmra.mxu0 %v3994
  %v4066 = vpop.f32.mrf.mxu0
  %v4067 = vadd.f32 0.0, %v4066
  %v4068 = vpop.f32.mrf.mxu0
  %4069 = vdwg.mxu0
  %v4070 = vmul.f32 %v4067, 0.35355338
  %v4071 = vadd.f32 %v4070, %v3248
  %v4072 = vsel %vm2340, %v4071, -inf
  %4073 = vmax.xlane.f32.xlu0 %v4072
  %v4074 = vpop.xlane.xlu0 %4073
  %v4075 = vsub.f32 %v4071, %v4074
  %v4076 = vmul.f32 %v4075, 1.442695
  %v4077 = vpow.pop %v4076
  %v4078 = vsel %vm2340, %v4077, 0.0
  %4079 = vadd.xlane.f32.xlu0 %v4078
  %v4080 = vpop.xlane.xlu0 %4079
  %v4081 = vrcp.pop %v4080
  %v4082 = vmul.f32 %v4077, %v4081
  %4083 = vrot.lane.b32.xlu0 %v2252, 72
  %v4084 = vpop.permute.xlu0 %4083
  %4085 = vrot.lane.b32.xlu0 %v2253, 72
  %v4086 = vpop.permute.xlu0 %4085
  %v4090 = vsel %vm2340, %v4082, 0
  %4092 = vmatprep.subr.mxu0 0.0
  %4093 = vmatpush1.msra.mxu0 0.0
  %4094 = vmatprep.subr.mxu0 0.0
  %4095 = vmatpush1.msra.mxu0 0.0
  %4096 = vmatprep.subr.mxu0 0.0
  %4097 = vmatpush1.msra.mxu0 0.0
  %4098 = vmatprep.subr.mxu0 0.0
  %4099 = vmatpush1.msra.mxu0 0.0
  %4100 = vmatprep.subr.mxu0 0.0
  %4101 = vmatpush1.msra.mxu0 0.0
  %4102 = vmatprep.subr.mxu0 0.0
  %4103 = vmatpush1.msra.mxu0 0.0
  %4104 = vmatprep.subr.mxu0 0.0
  %4105 = vmatpush1.msra.mxu0 0.0
  %4106 = vmatprep.subr.mxu0 0.0
  %4107 = vmatpush1.msra.mxu0 0.0
  %4108 = vmatprep.subr.mxu0 0.0
  %4109 = vmatpush1.msra.mxu0 0.0
  %4110 = vmatprep.subr.mxu0 0.0
  %4111 = vmatpush1.msra.mxu0 0.0
  %4112 = vmatprep.subr.mxu0 0.0
  %4113 = vmatpush1.msra.mxu0 0.0
  %4114 = vmatprep.subr.mxu0 0.0
  %4115 = vmatpush1.msra.mxu0 0.0
  %4116 = vmatprep.subr.mxu0 0.0
  %4117 = vmatpush1.msra.mxu0 0.0
  %4118 = vmatprep.subr.mxu0 0.0
  %4119 = vmatpush1.msra.mxu0 0.0
  %4120 = vmatprep.subr.mxu0 0.0
  %4121 = vmatpush1.msra.mxu0 %v4086
  %4122 = vmatprep.subr.mxu0 0.0
  %4123 = vmatpush1.msra.mxu0 %v4084
  %4124 = vmatprep.subr.mxu0 0.0
  %4125 = vmatpush2.msra.mxu0 0.0
  %4126 = vmatprep.subr.mxu0 0.0
  %4127 = vmatpush2.msra.mxu0 0.0
  %4128 = vmatprep.subr.mxu0 0.0
  %4129 = vmatpush2.msra.mxu0 0.0
  %4130 = vmatprep.subr.mxu0 0.0
  %4131 = vmatpush2.msra.mxu0 0.0
  %4132 = vmatprep.subr.mxu0 0.0
  %4133 = vmatpush2.msra.mxu0 0.0
  %4134 = vmatprep.subr.mxu0 0.0
  %4135 = vmatpush2.msra.mxu0 0.0
  %4136 = vmatprep.subr.mxu0 0.0
  %4137 = vmatpush2.msra.mxu0 0.0
  %4138 = vmatprep.subr.mxu0 0.0
  %4139 = vmatpush2.msra.mxu0 0.0
  %4140 = vmatprep.subr.mxu0 0.0
  %4141 = vmatpush2.msra.mxu0 0.0
  %4142 = vmatprep.subr.mxu0 0.0
  %4143 = vmatpush2.msra.mxu0 0.0
  %4144 = vmatprep.subr.mxu0 0.0
  %4145 = vmatpush2.msra.mxu0 0.0
  %4146 = vmatprep.subr.mxu0 0.0
  %4147 = vmatpush2.msra.mxu0 0.0
  %4148 = vmatprep.subr.mxu0 0.0
  %4149 = vmatpush2.msra.mxu0 0.0
  %4150 = vmatprep.subr.mxu0 0.0
  %4151 = vmatpush2.msra.mxu0 0.0
  %4152 = vmatprep.subr.mxu0 0.0
  %4153 = vmatpush2.msra.mxu0 0.0
  %4154 = vmatprep.subr.mxu0 0.0
  %4155 = vmatpush2.msra.mxu0 0.0
  %4156 = vmatprep.mubr.f32.mxu0 0.0
  %4157 = vmatmul.mubr.f32.gmra.mxu0 %v4090
  %v4158 = vpop.f32.mrf.mxu0
  %v4159 = vadd.f32 0.0, %v4158
  %v4160 = vpop.f32.mrf.mxu0
  %4161 = vdwg.mxu0
  %v4163 = vsel %vm180, %v4159, 0
  %4165 = vmatprep.subr.mxu0 0.0
  %4166 = vmatpush1.msra.mxu0 0.0
  %4167 = vmatprep.subr.mxu0 0.0
  %4168 = vmatpush1.msra.mxu0 0.0
  %4169 = vmatprep.subr.mxu0 0.0
  %4170 = vmatpush1.msra.mxu0 0.0
  %4171 = vmatprep.subr.mxu0 0.0
  %4172 = vmatpush1.msra.mxu0 0.0
  %4173 = vmatprep.subr.mxu0 0.0
  %4174 = vmatpush1.msra.mxu0 0.0
  %4175 = vmatprep.subr.mxu0 0.0
  %4176 = vmatpush1.msra.mxu0 0.0
  %4177 = vmatprep.subr.mxu0 0.0
  %4178 = vmatpush1.msra.mxu0 0.0
  %4179 = vmatprep.subr.mxu0 0.0
  %4180 = vmatpush1.msra.mxu0 0.0
  %4181 = vmatprep.subr.mxu0 0.0
  %4182 = vmatpush1.msra.mxu0 0.0
  %4183 = vmatprep.subr.mxu0 0.0
  %4184 = vmatpush1.msra.mxu0 0.0
  %4185 = vmatprep.subr.mxu0 0.0
  %4186 = vmatpush1.msra.mxu0 0.0
  %4187 = vmatprep.subr.mxu0 0.0
  %4188 = vmatpush1.msra.mxu0 0.0
  %4189 = vmatprep.subr.mxu0 0.0
  %4190 = vmatpush1.msra.mxu0 0.0
  %4191 = vmatprep.subr.mxu0 0.0
  %4192 = vmatpush1.msra.mxu0 0.0
  %4193 = vmatprep.subr.mxu0 0.0
  %4194 = vmatpush1.msra.mxu0 0.0
  %4195 = vmatprep.subr.mxu0 0.0
  %4196 = vmatpush1.msra.mxu0 %v2257
  %4197 = vmatprep.subr.mxu0 0.0
  %4198 = vmatpush2.msra.mxu0 0.0
  %4199 = vmatprep.subr.mxu0 0.0
  %4200 = vmatpush2.msra.mxu0 0.0
  %4201 = vmatprep.subr.mxu0 0.0
  %4202 = vmatpush2.msra.mxu0 0.0
  %4203 = vmatprep.subr.mxu0 0.0
  %4204 = vmatpush2.msra.mxu0 0.0
  %4205 = vmatprep.subr.mxu0 0.0
  %4206 = vmatpush2.msra.mxu0 0.0
  %4207 = vmatprep.subr.mxu0 0.0
  %4208 = vmatpush2.msra.mxu0 0.0
  %4209 = vmatprep.subr.mxu0 0.0
  %4210 = vmatpush2.msra.mxu0 0.0
  %4211 = vmatprep.subr.mxu0 0.0
  %4212 = vmatpush2.msra.mxu0 0.0
  %4213 = vmatprep.subr.mxu0 0.0
  %4214 = vmatpush2.msra.mxu0 0.0
  %4215 = vmatprep.subr.mxu0 0.0
  %4216 = vmatpush2.msra.mxu0 0.0
  %4217 = vmatprep.subr.mxu0 0.0
  %4218 = vmatpush2.msra.mxu0 0.0
  %4219 = vmatprep.subr.mxu0 0.0
  %4220 = vmatpush2.msra.mxu0 0.0
  %4221 = vmatprep.subr.mxu0 0.0
  %4222 = vmatpush2.msra.mxu0 0.0
  %4223 = vmatprep.subr.mxu0 0.0
  %4224 = vmatpush2.msra.mxu0 0.0
  %4225 = vmatprep.subr.mxu0 0.0
  %4226 = vmatpush2.msra.mxu0 0.0
  %4227 = vmatprep.subr.mxu0 0.0
  %4228 = vmatpush2.msra.mxu0 0.0
  %4229 = vmatprep.mubr.f32.mxu0 0.0
  %4230 = vmatmul.mubr.f32.gmra.mxu0 %v4163
  %v4231 = vpop.f32.mrf.mxu0
  %v4232 = vadd.f32 0.0, %v4231
  %v4233 = vpop.f32.mrf.mxu0
  %4234 = vdwg.mxu0
  %v4235 = vadd.f32 %v3987, %v4232
  %v4236 = vld [vmem:[%s9] sm:$0x1]
  %v4238 = vlaneseq
  %v4239 = vshrl.u32 %v4238, 7
  %v4240 = vsub.s32 0, %v4239
  %v4241 = vrot.slane %v4236, %v4240
  %v4243 = vadd.f32 %v3246, %v4241
  %v4244 = vadd.f32 %v4235, %v4241
  %v4245 = vadd.f32 %v2156, %v4243
  %v4246 = vadd.f32 %v2157, %v4244
  %v4247 = vld [vmem:[%s16] sm:$0x1]
  %v4248 = vld [vmem:[%s17] sm:$0x1]
  %v4249 = vsel %vm90, %v4245, 0.0
  %4250 = vadd.xlane.f32.xlu0 %v4249
  %v4251 = vpop.xlane.xlu0 %4250
  %v4252 = vsel %vm90, %v4246, 0.0
  %4253 = vadd.xlane.f32.xlu0 %v4252
  %v4254 = vpop.xlane.xlu0 %4253
  %v4255 = vmul.f32 %v4251, %v2121
  %v4256 = vmul.f32 %v4254, %v2121
  %v4257 = vsub.f32 %v4245, %v4255
  %v4258 = vsub.f32 %v4246, %v4256
  %v4259 = vmul.f32 %v4257, %v4257
  %v4260 = vmul.f32 %v4258, %v4258
  %v4261 = vsel %vm90, %v4259, 0.0
  %4262 = vadd.xlane.f32.xlu0 %v4261
  %v4263 = vpop.xlane.xlu0 %4262
  %v4264 = vsel %vm90, %v4260, 0.0
  %4265 = vadd.xlane.f32.xlu0 %v4264
  %v4266 = vpop.xlane.xlu0 %4265
  %v4267 = vmul.f32 %v4263, %v2121
  %v4268 = vmul.f32 %v4266, %v2121
  %v4269 = vadd.f32 %v4267, 1e-05
  %v4270 = vadd.f32 %v4268, 1e-05
  %v4271 = vrsqrt.pop %v4269
  %v4272 = vrsqrt.pop %v4270
  %v4273 = vmul.f32 %v4257, %v4271
  %v4274 = vmul.f32 %v4258, %v4272
  %v4276 = vlaneseq
  %v4277 = vshrl.u32 %v4276, 7
  %v4278 = vsub.s32 0, %v4277
  %v4279 = vrot.slane %v4247, %v4278
  %v4281 = vmul.f32 %v4273, %v4279
  %v4282 = vmul.f32 %v4274, %v4279
  %v4284 = vlaneseq
  %v4285 = vshrl.u32 %v4284, 7
  %v4286 = vsub.s32 0, %v4285
  %v4287 = vrot.slane %v4248, %v4286
  %v4289 = vadd.f32 %v4281, %v4287
  %v4290 = vadd.f32 %v4282, %v4287
  %v4291 = vld [vmem:[%s10] sm:$0xff]
  %v4292 = vld [vmem:[%s10 + $0x8] sm:$0xff]
  %v4293 = vld [vmem:[%s10 + $0x10] sm:$0xff]
  %v4294 = vld [vmem:[%s10 + $0x18] sm:$0xff]
  %v4295 = vld [vmem:[%s11] sm:$0x1]
  %v4297 = vlaneseq
  %v4298 = vshrl.u32 %v4297, 7
  %v4299 = vsub.s32 0, %v4298
  %v4300 = vrot.slane %v4295, %v4299
  %v4303 = vsel %vm90, %v4289, 0
  %v4306 = vsel %vm90, %v4290, 0
  %4308 = vmatprep.subr.mxu0 0.0
  %4309 = vmatpush1.msra.mxu0 0.0
  %4310 = vmatprep.subr.mxu0 0.0
  %4311 = vmatpush1.msra.mxu0 0.0
  %4312 = vmatprep.subr.mxu0 0.0
  %4313 = vmatpush1.msra.mxu0 0.0
  %4314 = vmatprep.subr.mxu0 0.0
  %4315 = vmatpush1.msra.mxu0 0.0
  %4316 = vmatprep.subr.mxu0 0.0
  %4317 = vmatpush1.msra.mxu0 0.0
  %4318 = vmatprep.subr.mxu0 0.0
  %4319 = vmatpush1.msra.mxu0 0.0
  %4320 = vmatprep.subr.mxu0 0.0
  %4321 = vmatpush1.msra.mxu0 0.0
  %4322 = vmatprep.subr.mxu0 0.0
  %4323 = vmatpush1.msra.mxu0 0.0
  %4324 = vmatprep.subr.mxu0 0.0
  %4325 = vmatpush1.msra.mxu0 0.0
  %4326 = vmatprep.subr.mxu0 0.0
  %4327 = vmatpush1.msra.mxu0 0.0
  %4328 = vmatprep.subr.mxu0 0.0
  %4329 = vmatpush1.msra.mxu0 0.0
  %4330 = vmatprep.subr.mxu0 0.0
  %4331 = vmatpush1.msra.mxu0 0.0
  %4332 = vmatprep.subr.mxu0 0.0
  %4333 = vmatpush1.msra.mxu0 %v4294
  %4334 = vmatprep.subr.mxu0 0.0
  %4335 = vmatpush1.msra.mxu0 %v4293
  %4336 = vmatprep.subr.mxu0 0.0
  %4337 = vmatpush1.msra.mxu0 %v4292
  %4338 = vmatprep.subr.mxu0 0.0
  %4339 = vmatpush1.msra.mxu0 %v4291
  %4340 = vmatprep.subr.mxu0 0.0
  %4341 = vmatpush2.msra.mxu0 0.0
  %4342 = vmatprep.subr.mxu0 0.0
  %4343 = vmatpush2.msra.mxu0 0.0
  %4344 = vmatprep.subr.mxu0 0.0
  %4345 = vmatpush2.msra.mxu0 0.0
  %4346 = vmatprep.subr.mxu0 0.0
  %4347 = vmatpush2.msra.mxu0 0.0
  %4348 = vmatprep.subr.mxu0 0.0
  %4349 = vmatpush2.msra.mxu0 0.0
  %4350 = vmatprep.subr.mxu0 0.0
  %4351 = vmatpush2.msra.mxu0 0.0
  %4352 = vmatprep.subr.mxu0 0.0
  %4353 = vmatpush2.msra.mxu0 0.0
  %4354 = vmatprep.subr.mxu0 0.0
  %4355 = vmatpush2.msra.mxu0 0.0
  %4356 = vmatprep.subr.mxu0 0.0
  %4357 = vmatpush2.msra.mxu0 0.0
  %4358 = vmatprep.subr.mxu0 0.0
  %4359 = vmatpush2.msra.mxu0 0.0
  %4360 = vmatprep.subr.mxu0 0.0
  %4361 = vmatpush2.msra.mxu0 0.0
  %4362 = vmatprep.subr.mxu0 0.0
  %4363 = vmatpush2.msra.mxu0 0.0
  %4364 = vmatprep.subr.mxu0 0.0
  %4365 = vmatpush2.msra.mxu0 0.0
  %4366 = vmatprep.subr.mxu0 0.0
  %4367 = vmatpush2.msra.mxu0 0.0
  %4368 = vmatprep.subr.mxu0 0.0
  %4369 = vmatpush2.msra.mxu0 0.0
  %4370 = vmatprep.subr.mxu0 0.0
  %4371 = vmatpush2.msra.mxu0 0.0
  %4372 = vmatprep.mubr.f32.mxu0 0.0
  %4373 = vmatmul.mubr.f32.gmra.mxu0 %v4303
  %v4374 = vpop.f32.mrf.mxu0
  %v4375 = vadd.f32 %v4300, %v4374
  %v4376 = vpop.f32.mrf.mxu0
  %4377 = vmatprep.mubr.f32.mxu0 0.0
  %4378 = vmatmul.mubr.f32.gmra.mxu0 %v4306
  %v4379 = vpop.f32.mrf.mxu0
  %v4380 = vadd.f32 %v4300, %v4379
  %v4381 = vpop.f32.mrf.mxu0
  %4382 = vdwg.mxu0
  %v4383 = vmax.f32 %v4375, 0.0
  %v4384 = vmax.f32 %v4380, 0.0
  %v4385 = vld [vmem:[%s12] sm:$0xff]
  %v4386 = vld [vmem:[%s12 + $0x8] sm:$0xff]
  %v4387 = vld [vmem:[%s12 + $0x10] sm:$0xff]
  %v4388 = vld [vmem:[%s12 + $0x18] sm:$0xff]
  %v4389 = vld [vmem:[%s12 + $0x20] sm:$0xff]
  %v4390 = vld [vmem:[%s12 + $0x28] sm:$0xff]
  %v4391 = vld [vmem:[%s12 + $0x30] sm:$0xff]
  %v4392 = vld [vmem:[%s12 + $0x38] sm:$0xff]
  %v4393 = vld [vmem:[%s13] sm:$0x1]
  %v4395 = vlaneseq
  %v4396 = vshrl.u32 %v4395, 7
  %v4397 = vsub.s32 0, %v4396
  %v4398 = vrot.slane %v4393, %v4397
  %vm4400 = vcmask 523264
  %v4402 = vsel %vm4400, %v4383, 0
  %v4405 = vsel %vm4400, %v4384, 0
  %4407 = vmatprep.subr.mxu0 0.0
  %4408 = vmatpush1.msra.mxu0 0.0
  %4409 = vmatprep.subr.mxu0 0.0
  %4410 = vmatpush1.msra.mxu0 0.0
  %4411 = vmatprep.subr.mxu0 0.0
  %4412 = vmatpush1.msra.mxu0 0.0
  %4413 = vmatprep.subr.mxu0 0.0
  %4414 = vmatpush1.msra.mxu0 0.0
  %4415 = vmatprep.subr.mxu0 0.0
  %4416 = vmatpush1.msra.mxu0 0.0
  %4417 = vmatprep.subr.mxu0 0.0
  %4418 = vmatpush1.msra.mxu0 0.0
  %4419 = vmatprep.subr.mxu0 0.0
  %4420 = vmatpush1.msra.mxu0 0.0
  %4421 = vmatprep.subr.mxu0 0.0
  %4422 = vmatpush1.msra.mxu0 0.0
  %4423 = vmatprep.subr.mxu0 0.0
  %4424 = vmatpush1.msra.mxu0 %v4392
  %4425 = vmatprep.subr.mxu0 0.0
  %4426 = vmatpush1.msra.mxu0 %v4391
  %4427 = vmatprep.subr.mxu0 0.0
  %4428 = vmatpush1.msra.mxu0 %v4390
  %4429 = vmatprep.subr.mxu0 0.0
  %4430 = vmatpush1.msra.mxu0 %v4389
  %4431 = vmatprep.subr.mxu0 0.0
  %4432 = vmatpush1.msra.mxu0 %v4388
  %4433 = vmatprep.subr.mxu0 0.0
  %4434 = vmatpush1.msra.mxu0 %v4387
  %4435 = vmatprep.subr.mxu0 0.0
  %4436 = vmatpush1.msra.mxu0 %v4386
  %4437 = vmatprep.subr.mxu0 0.0
  %4438 = vmatpush1.msra.mxu0 %v4385
  %4439 = vmatprep.subr.mxu0 0.0
  %4440 = vmatpush2.msra.mxu0 0.0
  %4441 = vmatprep.subr.mxu0 0.0
  %4442 = vmatpush2.msra.mxu0 0.0
  %4443 = vmatprep.subr.mxu0 0.0
  %4444 = vmatpush2.msra.mxu0 0.0
  %4445 = vmatprep.subr.mxu0 0.0
  %4446 = vmatpush2.msra.mxu0 0.0
  %4447 = vmatprep.subr.mxu0 0.0
  %4448 = vmatpush2.msra.mxu0 0.0
  %4449 = vmatprep.subr.mxu0 0.0
  %4450 = vmatpush2.msra.mxu0 0.0
  %4451 = vmatprep.subr.mxu0 0.0
  %4452 = vmatpush2.msra.mxu0 0.0
  %4453 = vmatprep.subr.mxu0 0.0
  %4454 = vmatpush2.msra.mxu0 0.0
  %4455 = vmatprep.subr.mxu0 0.0
  %4456 = vmatpush2.msra.mxu0 0.0
  %4457 = vmatprep.subr.mxu0 0.0
  %4458 = vmatpush2.msra.mxu0 0.0
  %4459 = vmatprep.subr.mxu0 0.0
  %4460 = vmatpush2.msra.mxu0 0.0
  %4461 = vmatprep.subr.mxu0 0.0
  %4462 = vmatpush2.msra.mxu0 0.0
  %4463 = vmatprep.subr.mxu0 0.0
  %4464 = vmatpush2.msra.mxu0 0.0
  %4465 = vmatprep.subr.mxu0 0.0
  %4466 = vmatpush2.msra.mxu0 0.0
  %4467 = vmatprep.subr.mxu0 0.0
  %4468 = vmatpush2.msra.mxu0 0.0
  %4469 = vmatprep.subr.mxu0 0.0
  %4470 = vmatpush2.msra.mxu0 0.0
  %4471 = vmatprep.mubr.f32.mxu0 0.0
  %4472 = vmatmul.mubr.f32.gmra.mxu0 %v4402
  %v4473 = vpop.f32.mrf.mxu0
  %v4474 = vadd.f32 %v4398, %v4473
  %v4475 = vpop.f32.mrf.mxu0
  %4476 = vmatprep.mubr.f32.mxu0 0.0
  %4477 = vmatmul.mubr.f32.gmra.mxu0 %v4405
  %v4478 = vpop.f32.mrf.mxu0
  %v4479 = vadd.f32 %v4398, %v4478
  %v4480 = vpop.f32.mrf.mxu0
  %4481 = vdwg.mxu0
  %v4482 = vadd.f32 %v4289, %v4474
  %v4483 = vadd.f32 %v4290, %v4479
  %v4484 = vld [vmem:[%s18] sm:$0x1]
  %v4485 = vld [vmem:[%s19] sm:$0x1]
  %v4486 = vsel %vm90, %v4482, 0.0
  %4487 = vadd.xlane.f32.xlu0 %v4486
  %v4488 = vpop.xlane.xlu0 %4487
  %v4489 = vsel %vm90, %v4483, 0.0
  %4490 = vadd.xlane.f32.xlu0 %v4489
  %v4491 = vpop.xlane.xlu0 %4490
  %v4492 = vmul.f32 %v4488, %v2121
  %v4493 = vmul.f32 %v4491, %v2121
  %v4494 = vsub.f32 %v4482, %v4492
  %v4495 = vsub.f32 %v4483, %v4493
  %v4496 = vmul.f32 %v4494, %v4494
  %v4497 = vmul.f32 %v4495, %v4495
  %v4498 = vsel %vm90, %v4496, 0.0
  %4499 = vadd.xlane.f32.xlu0 %v4498
  %v4500 = vpop.xlane.xlu0 %4499
  %v4501 = vsel %vm90, %v4497, 0.0
  %4502 = vadd.xlane.f32.xlu0 %v4501
  %v4503 = vpop.xlane.xlu0 %4502
  %v4504 = vmul.f32 %v4500, %v2121
  %v4505 = vmul.f32 %v4503, %v2121
  %v4506 = vadd.f32 %v4504, 1e-05
  %v4507 = vadd.f32 %v4505, 1e-05
  %v4508 = vrsqrt.pop %v4506
  %v4509 = vrsqrt.pop %v4507
  %v4510 = vmul.f32 %v4494, %v4508
  %v4511 = vmul.f32 %v4495, %v4509
  %v4513 = vlaneseq
  %v4514 = vshrl.u32 %v4513, 7
  %v4515 = vsub.s32 0, %v4514
  %v4516 = vrot.slane %v4484, %v4515
  %v4518 = vmul.f32 %v4510, %v4516
  %v4519 = vmul.f32 %v4511, %v4516
  %v4521 = vlaneseq
  %v4522 = vshrl.u32 %v4521, 7
  %v4523 = vsub.s32 0, %v4522
  %v4524 = vrot.slane %v4485, %v4523
  %v4526 = vadd.f32 %v4518, %v4524
  %v4527 = vadd.f32 %v4519, %v4524
  %4528 = vst.msk [vmem:[%s24] sm:$0xff] %vm90, %v4526
  %4529 = vst.msk [vmem:[%s24 + $0x8] sm:$0xff] %vm90, %v4527
  // Predicated region
  $region98: #{run.4} parent=0 // pred_check
    _
  $region99: #{run.4} parent=0 // pred_check_branch
    %4531 = sbr.rel (0) target = $region101
  $region100: #{run.4} parent=0 // pred_region
    _
  $region101: #{run.4} parent=0 // pred_fallthru
    _
  // Predicated region
  $region102: #{run.4} parent=0 // pred_check
    _
  $region103: #{run.4} parent=0 // pred_check_branch
    %4533 = sbr.rel (0) target = $region105
  $region104: #{run.4} parent=0 // pred_region
    _
  $region105: #{run.4} parent=0 // pred_fallthru
    _

// kernel: run.5
$region0: #{run.5}
  #allocation0 [shape = 'u32[]', space=smem, size = 0x4, offset = 0x4, fixed_abs, tag = 'smem constant byte address 0x4 - core index']
  #allocation1 [shape = 'u32[144,128]{1,0:T(1,128)}', space=vmem, size = 0x12000, scoped, tag = 'internal scratch']
  %s0 = inlined_call_operand.vmem [shape: f32[16,32], index: 0, kind: input, shape index: {}]
  %s1 = inlined_call_operand.vmem [shape: f32[32,128], index: 1, kind: input, shape index: {}]
  %s2 = inlined_call_operand.vmem [shape: f32[32,96], index: 2, kind: input, shape index: {}]
  %s3 = inlined_call_operand.vmem [shape: f32[1,96], index: 3, kind: input, shape index: {}]
  %s4 = inlined_call_operand.vmem [shape: f32[32,32], index: 4, kind: input, shape index: {}]
  %s5 = inlined_call_operand.vmem [shape: f32[1,32], index: 5, kind: input, shape index: {}]
  %s6 = inlined_call_operand.vmem [shape: f32[32,32], index: 6, kind: input, shape index: {}]
  %s7 = inlined_call_operand.vmem [shape: f32[1,32], index: 7, kind: input, shape index: {}]
  %s8 = inlined_call_operand.vmem [shape: f32[32,32], index: 8, kind: input, shape index: {}]
  %s9 = inlined_call_operand.vmem [shape: f32[1,32], index: 9, kind: input, shape index: {}]
  %s10 = inlined_call_operand.vmem [shape: f32[32,64], index: 10, kind: input, shape index: {}]
  %s11 = inlined_call_operand.vmem [shape: f32[1,64], index: 11, kind: input, shape index: {}]
  %s12 = inlined_call_operand.vmem [shape: f32[64,32], index: 12, kind: input, shape index: {}]
  %s13 = inlined_call_operand.vmem [shape: f32[1,32], index: 13, kind: input, shape index: {}]
  %s14 = inlined_call_operand.vmem [shape: f32[1,32], index: 14, kind: input, shape index: {}]
  %s15 = inlined_call_operand.vmem [shape: f32[1,32], index: 15, kind: input, shape index: {}]
  %s16 = inlined_call_operand.vmem [shape: f32[1,32], index: 16, kind: input, shape index: {}]
  %s17 = inlined_call_operand.vmem [shape: f32[1,32], index: 17, kind: input, shape index: {}]
  %s18 = inlined_call_operand.vmem [shape: f32[1,32], index: 18, kind: input, shape index: {}]
  %s19 = inlined_call_operand.vmem [shape: f32[1,32], index: 19, kind: input, shape index: {}]
  %s20 = inlined_call_operand.vmem [shape: f32[1,32], index: 20, kind: input, shape index: {}]
  %s21 = inlined_call_operand.vmem [shape: f32[1,32], index: 21, kind: input, shape index: {}]
  %s22 = inlined_call_operand.vmem [shape: f32[2,8,8], index: 22, kind: input, shape index: {}]
  %s23 = inlined_call_operand.vmem [shape: f32[2,8,16], index: 23, kind: input, shape index: {}]
  %s24 = inlined_call_operand.vmem [shape: f32[16,32], index: 24, kind: output, shape index: {0}]
  %s25 = inlined_call_operand.hbm [shape: f32[2,8,16], index: 25, kind: output, shape index: {1}]
  %26 = xla_tuple %s24, %s25
  %s27 = sld [smem:[#allocation0]]
  $region114: #{run.5} parent=0
    _
  %s29 = ssub.s32 1, %s27
  %s30 = scalar_select 0, %s29, %s27
  $region1: #{run.5} parent=0
    #allocation2 [shape = 'u8[8192]{0}', space=vmem, size = 0x2000, scoped, tag = 'output window, operand 1, single buffered']
    #allocation3 [shape = 's32[1]{0}', space=sflag, size = 0x4, scoped, tag = 'scoped memory for run.5']
    %31 = vsyncpa [#allocation3], 0
    // Predicated region
    $region2: #{run.5} parent=1 // pred_check
      _
    $region3: #{run.5} parent=1 // pred_check_branch
      %33 = sbr.rel (0) target = $region5
    $region4: #{run.5} parent=1 // pred_region
      _
    $region5: #{run.5} parent=1 // pred_fallthru
      _
    // Predicated region
    $region6: #{run.5} parent=1 // pred_check
      _
    $region7: #{run.5} parent=1 // pred_check_branch
      %35 = sbr.rel (0) target = $region9
    $region8: #{run.5} parent=1 // pred_region
      _
    $region9: #{run.5} parent=1 // pred_fallthru
      _
    // Predicated region
    $region10: #{run.5} parent=1 // pred_check
      _
    $region11: #{run.5} parent=1 // pred_check_branch
      %37 = sbr.rel (0) target = $region13
    $region12: #{run.5} parent=1 // pred_region
      _
    $region13: #{run.5} parent=1 // pred_fallthru
      _
    // Predicated region
    $region14: #{run.5} parent=1 // pred_check
      _
    $region15: #{run.5} parent=1 // pred_check_branch
      %39 = sbr.rel (0) target = $region17
    $region16: #{run.5} parent=1 // pred_region
      _
    $region17: #{run.5} parent=1 // pred_fallthru
      _
    // Predicated region
    $region18: #{run.5} parent=1 // pred_check
      _
    $region19: #{run.5} parent=1 // pred_check_branch
      %41 = sbr.rel (0) target = $region21
    $region20: #{run.5} parent=1 // pred_region
      _
    $region21: #{run.5} parent=1 // pred_fallthru
      _
    // Predicated region
    $region22: #{run.5} parent=1 // pred_check
      _
    $region23: #{run.5} parent=1 // pred_check_branch
      %43 = sbr.rel (0) target = $region25
    $region24: #{run.5} parent=1 // pred_region
      _
    $region25: #{run.5} parent=1 // pred_fallthru
      _
    // Predicated region
    $region26: #{run.5} parent=1 // pred_check
      _
    $region27: #{run.5} parent=1 // pred_check_branch
      %45 = sbr.rel (0) target = $region29
    $region28: #{run.5} parent=1 // pred_region
      _
    $region29: #{run.5} parent=1 // pred_fallthru
      _
    // Predicated region
    $region30: #{run.5} parent=1 // pred_check
      _
    $region31: #{run.5} parent=1 // pred_check_branch
      %47 = sbr.rel (0) target = $region33
    $region32: #{run.5} parent=1 // pred_region
      _
    $region33: #{run.5} parent=1 // pred_fallthru
      _
    // Predicated region
    $region34: #{run.5} parent=1 // pred_check
      _
    $region35: #{run.5} parent=1 // pred_check_branch
      %49 = sbr.rel (0) target = $region37
    $region36: #{run.5} parent=1 // pred_region
      _
    $region37: #{run.5} parent=1 // pred_fallthru
      _
    // Predicated region
    $region38: #{run.5} parent=1 // pred_check
      _
    $region39: #{run.5} parent=1 // pred_check_branch
      %51 = sbr.rel (0) target = $region41
    $region40: #{run.5} parent=1 // pred_region
      _
    $region41: #{run.5} parent=1 // pred_fallthru
      _
    // Predicated region
    $region42: #{run.5} parent=1 // pred_check
      _
    $region43: #{run.5} parent=1 // pred_check_branch
      %53 = sbr.rel (0) target = $region45
    $region44: #{run.5} parent=1 // pred_region
      _
    $region45: #{run.5} parent=1 // pred_fallthru
      _
    // Predicated region
    $region46: #{run.5} parent=1 // pred_check
      _
    $region47: #{run.5} parent=1 // pred_check_branch
      %55 = sbr.rel (0) target = $region49
    $region48: #{run.5} parent=1 // pred_region
      _
    $region49: #{run.5} parent=1 // pred_fallthru
      _
    // Predicated region
    $region50: #{run.5} parent=1 // pred_check
      _
    $region51: #{run.5} parent=1 // pred_check_branch
      %57 = sbr.rel (0) target = $region53
    $region52: #{run.5} parent=1 // pred_region
      _
    $region53: #{run.5} parent=1 // pred_fallthru
      _
    // Predicated region
    $region54: #{run.5} parent=1 // pred_check
      _
    $region55: #{run.5} parent=1 // pred_check_branch
      %59 = sbr.rel (0) target = $region57
    $region56: #{run.5} parent=1 // pred_region
      _
    $region57: #{run.5} parent=1 // pred_fallthru
      _
    // Predicated region
    $region58: #{run.5} parent=1 // pred_check
      _
    $region59: #{run.5} parent=1 // pred_check_branch
      %61 = sbr.rel (0) target = $region61
    $region60: #{run.5} parent=1 // pred_region
      _
    $region61: #{run.5} parent=1 // pred_fallthru
      _
    // Predicated region
    $region62: #{run.5} parent=1 // pred_check
      _
    $region63: #{run.5} parent=1 // pred_check_branch
      %63 = sbr.rel (0) target = $region65
    $region64: #{run.5} parent=1 // pred_region
      _
    $region65: #{run.5} parent=1 // pred_fallthru
      _
    // Predicated region
    $region66: #{run.5} parent=1 // pred_check
      _
    $region67: #{run.5} parent=1 // pred_check_branch
      %65 = sbr.rel (0) target = $region69
    $region68: #{run.5} parent=1 // pred_region
      _
    $region69: #{run.5} parent=1 // pred_fallthru
      _
    // Predicated region
    $region70: #{run.5} parent=1 // pred_check
      _
    $region71: #{run.5} parent=1 // pred_check_branch
      %67 = sbr.rel (0) target = $region73
    $region72: #{run.5} parent=1 // pred_region
      _
    $region73: #{run.5} parent=1 // pred_fallthru
      _
    // Predicated region
    $region74: #{run.5} parent=1 // pred_check
      _
    $region75: #{run.5} parent=1 // pred_check_branch
      %69 = sbr.rel (0) target = $region77
    $region76: #{run.5} parent=1 // pred_region
      _
    $region77: #{run.5} parent=1 // pred_fallthru
      _
    // Predicated region
    $region78: #{run.5} parent=1 // pred_check
      _
    $region79: #{run.5} parent=1 // pred_check_branch
      %71 = sbr.rel (0) target = $region81
    $region80: #{run.5} parent=1 // pred_region
      _
    $region81: #{run.5} parent=1 // pred_fallthru
      _
    // Predicated region
    $region82: #{run.5} parent=1 // pred_check
      _
    $region83: #{run.5} parent=1 // pred_check_branch
      %73 = sbr.rel (0) target = $region85
    $region84: #{run.5} parent=1 // pred_region
      _
    $region85: #{run.5} parent=1 // pred_fallthru
      _
    // Predicated region
    $region86: #{run.5} parent=1 // pred_check
      _
    $region87: #{run.5} parent=1 // pred_check_branch
      %75 = sbr.rel (0) target = $region89
    $region88: #{run.5} parent=1 // pred_region
      _
    $region89: #{run.5} parent=1 // pred_fallthru
      _
    // Predicated region
    $region90: #{run.5} parent=1 // pred_check
      _
    $region91: #{run.5} parent=1 // pred_check_branch
      %77 = sbr.rel (0) target = $region93
    $region92: #{run.5} parent=1 // pred_region
      _
    $region93: #{run.5} parent=1 // pred_fallthru
      _
    // Predicated region
    $region94: #{run.5} parent=1 // pred_check
      _
    $region95: #{run.5} parent=1 // pred_check_branch
      %79 = sbr.rel (0) target = $region97
    $region96: #{run.5} parent=1 // pred_region
      _
    $region97: #{run.5} parent=1 // pred_fallthru
      _
    %v80 = vld [vmem:[%s0] sm:$0xff]
    %v81 = vld [vmem:[%s0 + $0x8] sm:$0xff]
    %v82 = vld [vmem:[%s2] sm:$0xff]
    %v83 = vld [vmem:[%s2 + $0x8] sm:$0xff]
    %v84 = vld [vmem:[%s2 + $0x10] sm:$0xff]
    %v85 = vld [vmem:[%s2 + $0x18] sm:$0xff]
    %v86 = vld [vmem:[%s3] sm:$0x1]
    %v88 = vlaneseq
    %v89 = vshrl.u32 %v88, 7
    %v90 = vsub.s32 0, %v89
    %v91 = vrot.slane %v86, %v90
    %vm93 = vcmask 261120
    %v95 = vsel %vm93, %v80, 0
    %v98 = vsel %vm93, %v81, 0
    %100 = vmatprep.subr.mxu0 0.0
    %101 = vmatpush1.msra.mxu0 0.0
    %102 = vmatprep.subr.mxu0 0.0
    %103 = vmatpush1.msra.mxu0 0.0
    %104 = vmatprep.subr.mxu0 0.0
    %105 = vmatpush1.msra.mxu0 0.0
    %106 = vmatprep.subr.mxu0 0.0
    %107 = vmatpush1.msra.mxu0 0.0
    %108 = vmatprep.subr.mxu0 0.0
    %109 = vmatpush1.msra.mxu0 0.0
    %110 = vmatprep.subr.mxu0 0.0
    %111 = vmatpush1.msra.mxu0 0.0
    %112 = vmatprep.subr.mxu0 0.0
    %113 = vmatpush1.msra.mxu0 0.0
    %114 = vmatprep.subr.mxu0 0.0
    %115 = vmatpush1.msra.mxu0 0.0
    %116 = vmatprep.subr.mxu0 0.0
    %117 = vmatpush1.msra.mxu0 0.0
    %118 = vmatprep.subr.mxu0 0.0
    %119 = vmatpush1.msra.mxu0 0.0
    %120 = vmatprep.subr.mxu0 0.0
    %121 = vmatpush1.msra.mxu0 0.0
    %122 = vmatprep.subr.mxu0 0.0
    %123 = vmatpush1.msra.mxu0 0.0
    %124 = vmatprep.subr.mxu0 0.0
    %125 = vmatpush1.msra.mxu0 %v85
    %126 = vmatprep.subr.mxu0 0.0
    %127 = vmatpush1.msra.mxu0 %v84
    %128 = vmatprep.subr.mxu0 0.0
    %129 = vmatpush1.msra.mxu0 %v83
    %130 = vmatprep.subr.mxu0 0.0
    %131 = vmatpush1.msra.mxu0 %v82
    %132 = vmatprep.subr.mxu0 0.0
    %133 = vmatpush2.msra.mxu0 0.0
    %134 = vmatprep.subr.mxu0 0.0
    %135 = vmatpush2.msra.mxu0 0.0
    %136 = vmatprep.subr.mxu0 0.0
    %137 = vmatpush2.msra.mxu0 0.0
    %138 = vmatprep.subr.mxu0 0.0
    %139 = vmatpush2.msra.mxu0 0.0
    %140 = vmatprep.subr.mxu0 0.0
    %141 = vmatpush2.msra.mxu0 0.0
    %142 = vmatprep.subr.mxu0 0.0
    %143 = vmatpush2.msra.mxu0 0.0
    %144 = vmatprep.subr.mxu0 0.0
    %145 = vmatpush2.msra.mxu0 0.0
    %146 = vmatprep.subr.mxu0 0.0
    %147 = vmatpush2.msra.mxu0 0.0
    %148 = vmatprep.subr.mxu0 0.0
    %149 = vmatpush2.msra.mxu0 0.0
    %150 = vmatprep.subr.mxu0 0.0
    %151 = vmatpush2.msra.mxu0 0.0
    %152 = vmatprep.subr.mxu0 0.0
    %153 = vmatpush2.msra.mxu0 0.0
    %154 = vmatprep.subr.mxu0 0.0
    %155 = vmatpush2.msra.mxu0 0.0
    %156 = vmatprep.subr.mxu0 0.0
    %157 = vmatpush2.msra.mxu0 0.0
    %158 = vmatprep.subr.mxu0 0.0
    %159 = vmatpush2.msra.mxu0 0.0
    %160 = vmatprep.subr.mxu0 0.0
    %161 = vmatpush2.msra.mxu0 0.0
    %162 = vmatprep.subr.mxu0 0.0
    %163 = vmatpush2.msra.mxu0 0.0
    %164 = vmatprep.mubr.f32.mxu0 0.0
    %165 = vmatmul.mubr.f32.gmra.mxu0 %v95
    %v166 = vpop.f32.mrf.mxu0
    %v167 = vadd.f32 %v91, %v166
    %v168 = vpop.f32.mrf.mxu0
    %169 = vmatprep.mubr.f32.mxu0 0.0
    %170 = vmatmul.mubr.f32.gmra.mxu0 %v98
    %v171 = vpop.f32.mrf.mxu0
    %v172 = vadd.f32 %v91, %v171
    %v173 = vpop.f32.mrf.mxu0
    %174 = vdwg.mxu0
    %v175 = vld [vmem:[%s4] sm:$0xff]
    %v176 = vld [vmem:[%s4 + $0x8] sm:$0xff]
    %v177 = vld [vmem:[%s4 + $0x10] sm:$0xff]
    %v178 = vld [vmem:[%s4 + $0x18] sm:$0xff]
    %v179 = vld [vmem:[%s22] sm:$0xff]
    %181 = vrot.lane.b32.xlu0 %v167, 96
    %v182 = vpop.permute.xlu0 %181
    %vm183 = vcmask 64512
    %v184 = vsel %vm183, %v167, 0
    %v186 = vsel %vm183, %v182, 0
    %188 = vmatprep.subr.mxu0 0.0
    %189 = vmatpush1.xpose.msra.mxu0 0.0
    %190 = vmatprep.subr.mxu0 0.0
    %191 = vmatpush1.xpose.msra.mxu0 0.0
    %192 = vmatprep.subr.mxu0 0.0
    %193 = vmatpush1.xpose.msra.mxu0 0.0
    %194 = vmatprep.subr.mxu0 0.0
    %195 = vmatpush1.xpose.msra.mxu0 0.0
    %196 = vmatprep.subr.mxu0 0.0
    %197 = vmatpush1.xpose.msra.mxu0 0.0
    %198 = vmatprep.subr.mxu0 0.0
    %199 = vmatpush1.xpose.msra.mxu0 0.0
    %200 = vmatprep.subr.mxu0 0.0
    %201 = vmatpush1.xpose.msra.mxu0 0.0
    %202 = vmatprep.subr.mxu0 0.0
    %203 = vmatpush1.xpose.msra.mxu0 0.0
    %204 = vmatprep.subr.mxu0 0.0
    %205 = vmatpush1.xpose.msra.mxu0 0.0
    %206 = vmatprep.subr.mxu0 0.0
    %207 = vmatpush1.xpose.msra.mxu0 0.0
    %208 = vmatprep.subr.mxu0 0.0
    %209 = vmatpush1.xpose.msra.mxu0 0.0
    %210 = vmatprep.subr.mxu0 0.0
    %211 = vmatpush1.xpose.msra.mxu0 0.0
    %212 = vmatprep.subr.mxu0 0.0
    %213 = vmatpush1.xpose.msra.mxu0 0.0
    %214 = vmatprep.subr.mxu0 0.0
    %215 = vmatpush1.xpose.msra.mxu0 0.0
    %216 = vmatprep.subr.mxu0 0.0
    %217 = vmatpush1.xpose.msra.mxu0 0.0
    %218 = vmatprep.subr.mxu0 0.0
    %219 = vmatpush1.xpose.msra.mxu0 %v186
    %220 = vmatprep.subr.mxu0 0.0
    %221 = vmatpush2.xpose.msra.mxu0 0.0
    %222 = vmatprep.subr.mxu0 0.0
    %223 = vmatpush2.xpose.msra.mxu0 0.0
    %224 = vmatprep.subr.mxu0 0.0
    %225 = vmatpush2.xpose.msra.mxu0 0.0
    %226 = vmatprep.subr.mxu0 0.0
    %227 = vmatpush2.xpose.msra.mxu0 0.0
    %228 = vmatprep.subr.mxu0 0.0
    %229 = vmatpush2.xpose.msra.mxu0 0.0
    %230 = vmatprep.subr.mxu0 0.0
    %231 = vmatpush2.xpose.msra.mxu0 0.0
    %232 = vmatprep.subr.mxu0 0.0
    %233 = vmatpush2.xpose.msra.mxu0 0.0
    %234 = vmatprep.subr.mxu0 0.0
    %235 = vmatpush2.xpose.msra.mxu0 0.0
    %236 = vmatprep.subr.mxu0 0.0
    %237 = vmatpush2.xpose.msra.mxu0 0.0
    %238 = vmatprep.subr.mxu0 0.0
    %239 = vmatpush2.xpose.msra.mxu0 0.0
    %240 = vmatprep.subr.mxu0 0.0
    %241 = vmatpush2.xpose.msra.mxu0 0.0
    %242 = vmatprep.subr.mxu0 0.0
    %243 = vmatpush2.xpose.msra.mxu0 0.0
    %244 = vmatprep.subr.mxu0 0.0
    %245 = vmatpush2.xpose.msra.mxu0 0.0
    %246 = vmatprep.subr.mxu0 0.0
    %247 = vmatpush2.xpose.msra.mxu0 0.0
    %248 = vmatprep.subr.mxu0 0.0
    %249 = vmatpush2.xpose.msra.mxu0 0.0
    %250 = vmatprep.subr.mxu0 0.0
    %251 = vmatpush2.xpose.msra.mxu0 0.0
    %252 = vmatprep.mubr.f32.mxu0 0.0
    %253 = vmatmul.mubr.f32.gmra.mxu0 %v184
    %v254 = vpop.f32.mrf.mxu0
    %v255 = vadd.f32 0.0, %v254
    %v256 = vpop.f32.mrf.mxu0
    %257 = vdwg.mxu0
    %v258 = vmul.f32 %v255, 0.35355338
    %v259 = vadd.f32 %v258, %v179
    %v260 = vsel %vm183, %v259, -inf
    %261 = vmax.xlane.f32.xlu0 %v260
    %v262 = vpop.xlane.xlu0 %261
    %v263 = vsub.f32 %v259, %v262
    %v264 = vmul.f32 %v263, 1.442695
    %v265 = vpow.pop %v264
    %v266 = vsel %vm183, %v265, 0.0
    %267 = vadd.xlane.f32.xlu0 %v266
    %v268 = vpop.xlane.xlu0 %267
    %v269 = vrcp.pop %v268
    %v270 = vmul.f32 %v265, %v269
    %271 = vrot.lane.b32.xlu0 %v167, 64
    %v272 = vpop.permute.xlu0 %271
    %v275 = vsel %vm183, %v270, 0
    %277 = vmatprep.subr.mxu0 0.0
    %278 = vmatpush1.msra.mxu0 0.0
    %279 = vmatprep.subr.mxu0 0.0
    %280 = vmatpush1.msra.mxu0 0.0
    %281 = vmatprep.subr.mxu0 0.0
    %282 = vmatpush1.msra.mxu0 0.0
    %283 = vmatprep.subr.mxu0 0.0
    %284 = vmatpush1.msra.mxu0 0.0
    %285 = vmatprep.subr.mxu0 0.0
    %286 = vmatpush1.msra.mxu0 0.0
    %287 = vmatprep.subr.mxu0 0.0
    %288 = vmatpush1.msra.mxu0 0.0
    %289 = vmatprep.subr.mxu0 0.0
    %290 = vmatpush1.msra.mxu0 0.0
    %291 = vmatprep.subr.mxu0 0.0
    %292 = vmatpush1.msra.mxu0 0.0
    %293 = vmatprep.subr.mxu0 0.0
    %294 = vmatpush1.msra.mxu0 0.0
    %295 = vmatprep.subr.mxu0 0.0
    %296 = vmatpush1.msra.mxu0 0.0
    %297 = vmatprep.subr.mxu0 0.0
    %298 = vmatpush1.msra.mxu0 0.0
    %299 = vmatprep.subr.mxu0 0.0
    %300 = vmatpush1.msra.mxu0 0.0
    %301 = vmatprep.subr.mxu0 0.0
    %302 = vmatpush1.msra.mxu0 0.0
    %303 = vmatprep.subr.mxu0 0.0
    %304 = vmatpush1.msra.mxu0 0.0
    %305 = vmatprep.subr.mxu0 0.0
    %306 = vmatpush1.msra.mxu0 0.0
    %307 = vmatprep.subr.mxu0 0.0
    %308 = vmatpush1.msra.mxu0 %v272
    %309 = vmatprep.subr.mxu0 0.0
    %310 = vmatpush2.msra.mxu0 0.0
    %311 = vmatprep.subr.mxu0 0.0
    %312 = vmatpush2.msra.mxu0 0.0
    %313 = vmatprep.subr.mxu0 0.0
    %314 = vmatpush2.msra.mxu0 0.0
    %315 = vmatprep.subr.mxu0 0.0
    %316 = vmatpush2.msra.mxu0 0.0
    %317 = vmatprep.subr.mxu0 0.0
    %318 = vmatpush2.msra.mxu0 0.0
    %319 = vmatprep.subr.mxu0 0.0
    %320 = vmatpush2.msra.mxu0 0.0
    %321 = vmatprep.subr.mxu0 0.0
    %322 = vmatpush2.msra.mxu0 0.0
    %323 = vmatprep.subr.mxu0 0.0
    %324 = vmatpush2.msra.mxu0 0.0
    %325 = vmatprep.subr.mxu0 0.0
    %326 = vmatpush2.msra.mxu0 0.0
    %327 = vmatprep.subr.mxu0 0.0
    %328 = vmatpush2.msra.mxu0 0.0
    %329 = vmatprep.subr.mxu0 0.0
    %330 = vmatpush2.msra.mxu0 0.0
    %331 = vmatprep.subr.mxu0 0.0
    %332 = vmatpush2.msra.mxu0 0.0
    %333 = vmatprep.subr.mxu0 0.0
    %334 = vmatpush2.msra.mxu0 0.0
    %335 = vmatprep.subr.mxu0 0.0
    %336 = vmatpush2.msra.mxu0 0.0
    %337 = vmatprep.subr.mxu0 0.0
    %338 = vmatpush2.msra.mxu0 0.0
    %339 = vmatprep.subr.mxu0 0.0
    %340 = vmatpush2.msra.mxu0 0.0
    %341 = vmatprep.mubr.f32.mxu0 0.0
    %342 = vmatmul.mubr.f32.gmra.mxu0 %v275
    %v343 = vpop.f32.mrf.mxu0
    %v344 = vadd.f32 0.0, %v343
    %v345 = vpop.f32.mrf.mxu0
    %346 = vdwg.mxu0
    %347 = vrot.lane.b32.xlu0 %v167, 120
    %v348 = vpop.permute.xlu0 %347
    %349 = vrot.lane.b32.xlu0 %v167, 88
    %v350 = vpop.permute.xlu0 %349
    %v351 = vsel %vm183, %v348, 0
    %v353 = vsel %vm183, %v350, 0
    %355 = vmatprep.subr.mxu0 0.0
    %356 = vmatpush1.xpose.msra.mxu0 0.0
    %357 = vmatprep.subr.mxu0 0.0
    %358 = vmatpush1.xpose.msra.mxu0 0.0
    %359 = vmatprep.subr.mxu0 0.0
    %360 = vmatpush1.xpose.msra.mxu0 0.0
    %361 = vmatprep.subr.mxu0 0.0
    %362 = vmatpush1.xpose.msra.mxu0 0.0
    %363 = vmatprep.subr.mxu0 0.0
    %364 = vmatpush1.xpose.msra.mxu0 0.0
    %365 = vmatprep.subr.mxu0 0.0
    %366 = vmatpush1.xpose.msra.mxu0 0.0
    %367 = vmatprep.subr.mxu0 0.0
    %368 = vmatpush1.xpose.msra.mxu0 0.0
    %369 = vmatprep.subr.mxu0 0.0
    %370 = vmatpush1.xpose.msra.mxu0 0.0
    %371 = vmatprep.subr.mxu0 0.0
    %372 = vmatpush1.xpose.msra.mxu0 0.0
    %373 = vmatprep.subr.mxu0 0.0
    %374 = vmatpush1.xpose.msra.mxu0 0.0
    %375 = vmatprep.subr.mxu0 0.0
    %376 = vmatpush1.xpose.msra.mxu0 0.0
    %377 = vmatprep.subr.mxu0 0.0
    %378 = vmatpush1.xpose.msra.mxu0 0.0
    %379 = vmatprep.subr.mxu0 0.0
    %380 = vmatpush1.xpose.msra.mxu0 0.0
    %381 = vmatprep.subr.mxu0 0.0
    %382 = vmatpush1.xpose.msra.mxu0 0.0
    %383 = vmatprep.subr.mxu0 0.0
    %384 = vmatpush1.xpose.msra.mxu0 0.0
    %385 = vmatprep.subr.mxu0 0.0
    %386 = vmatpush1.xpose.msra.mxu0 %v353
    %387 = vmatprep.subr.mxu0 0.0
    %388 = vmatpush2.xpose.msra.mxu0 0.0
    %389 = vmatprep.subr.mxu0 0.0
    %390 = vmatpush2.xpose.msra.mxu0 0.0
    %391 = vmatprep.subr.mxu0 0.0
    %392 = vmatpush2.xpose.msra.mxu0 0.0
    %393 = vmatprep.subr.mxu0 0.0
    %394 = vmatpush2.xpose.msra.mxu0 0.0
    %395 = vmatprep.subr.mxu0 0.0
    %396 = vmatpush2.xpose.msra.mxu0 0.0
    %397 = vmatprep.subr.mxu0 0.0
    %398 = vmatpush2.xpose.msra.mxu0 0.0
    %399 = vmatprep.subr.mxu0 0.0
    %400 = vmatpush2.xpose.msra.mxu0 0.0
    %401 = vmatprep.subr.mxu0 0.0
    %402 = vmatpush2.xpose.msra.mxu0 0.0
    %403 = vmatprep.subr.mxu0 0.0
    %404 = vmatpush2.xpose.msra.mxu0 0.0
    %405 = vmatprep.subr.mxu0 0.0
    %406 = vmatpush2.xpose.msra.mxu0 0.0
    %407 = vmatprep.subr.mxu0 0.0
    %408 = vmatpush2.xpose.msra.mxu0 0.0
    %409 = vmatprep.subr.mxu0 0.0
    %410 = vmatpush2.xpose.msra.mxu0 0.0
    %411 = vmatprep.subr.mxu0 0.0
    %412 = vmatpush2.xpose.msra.mxu0 0.0
    %413 = vmatprep.subr.mxu0 0.0
    %414 = vmatpush2.xpose.msra.mxu0 0.0
    %415 = vmatprep.subr.mxu0 0.0
    %416 = vmatpush2.xpose.msra.mxu0 0.0
    %417 = vmatprep.subr.mxu0 0.0
    %418 = vmatpush2.xpose.msra.mxu0 0.0
    %419 = vmatprep.mubr.f32.mxu0 0.0
    %420 = vmatmul.mubr.f32.gmra.mxu0 %v351
    %v421 = vpop.f32.mrf.mxu0
    %v422 = vadd.f32 0.0, %v421
    %v423 = vpop.f32.mrf.mxu0
    %424 = vdwg.mxu0
    %v425 = vmul.f32 %v422, 0.35355338
    %v426 = vadd.f32 %v425, %v179
    %v427 = vsel %vm183, %v426, -inf
    %428 = vmax.xlane.f32.xlu0 %v427
    %v429 = vpop.xlane.xlu0 %428
    %v430 = vsub.f32 %v426, %v429
    %v431 = vmul.f32 %v430, 1.442695
    %v432 = vpow.pop %v431
    %v433 = vsel %vm183, %v432, 0.0
    %434 = vadd.xlane.f32.xlu0 %v433
    %v435 = vpop.xlane.xlu0 %434
    %v436 = vrcp.pop %v435
    %v437 = vmul.f32 %v432, %v436
    %438 = vrot.lane.b32.xlu0 %v167, 56
    %v439 = vpop.permute.xlu0 %438
    %v442 = vsel %vm183, %v437, 0
    %444 = vmatprep.subr.mxu0 0.0
    %445 = vmatpush1.msra.mxu0 0.0
    %446 = vmatprep.subr.mxu0 0.0
    %447 = vmatpush1.msra.mxu0 0.0
    %448 = vmatprep.subr.mxu0 0.0
    %449 = vmatpush1.msra.mxu0 0.0
    %450 = vmatprep.subr.mxu0 0.0
    %451 = vmatpush1.msra.mxu0 0.0
    %452 = vmatprep.subr.mxu0 0.0
    %453 = vmatpush1.msra.mxu0 0.0
    %454 = vmatprep.subr.mxu0 0.0
    %455 = vmatpush1.msra.mxu0 0.0
    %456 = vmatprep.subr.mxu0 0.0
    %457 = vmatpush1.msra.mxu0 0.0
    %458 = vmatprep.subr.mxu0 0.0
    %459 = vmatpush1.msra.mxu0 0.0
    %460 = vmatprep.subr.mxu0 0.0
    %461 = vmatpush1.msra.mxu0 0.0
    %462 = vmatprep.subr.mxu0 0.0
    %463 = vmatpush1.msra.mxu0 0.0
    %464 = vmatprep.subr.mxu0 0.0
    %465 = vmatpush1.msra.mxu0 0.0
    %466 = vmatprep.subr.mxu0 0.0
    %467 = vmatpush1.msra.mxu0 0.0
    %468 = vmatprep.subr.mxu0 0.0
    %469 = vmatpush1.msra.mxu0 0.0
    %470 = vmatprep.subr.mxu0 0.0
    %471 = vmatpush1.msra.mxu0 0.0
    %472 = vmatprep.subr.mxu0 0.0
    %473 = vmatpush1.msra.mxu0 0.0
    %474 = vmatprep.subr.mxu0 0.0
    %475 = vmatpush1.msra.mxu0 %v439
    %476 = vmatprep.subr.mxu0 0.0
    %477 = vmatpush2.msra.mxu0 0.0
    %478 = vmatprep.subr.mxu0 0.0
    %479 = vmatpush2.msra.mxu0 0.0
    %480 = vmatprep.subr.mxu0 0.0
    %481 = vmatpush2.msra.mxu0 0.0
    %482 = vmatprep.subr.mxu0 0.0
    %483 = vmatpush2.msra.mxu0 0.0
    %484 = vmatprep.subr.mxu0 0.0
    %485 = vmatpush2.msra.mxu0 0.0
    %486 = vmatprep.subr.mxu0 0.0
    %487 = vmatpush2.msra.mxu0 0.0
    %488 = vmatprep.subr.mxu0 0.0
    %489 = vmatpush2.msra.mxu0 0.0
    %490 = vmatprep.subr.mxu0 0.0
    %491 = vmatpush2.msra.mxu0 0.0
    %492 = vmatprep.subr.mxu0 0.0
    %493 = vmatpush2.msra.mxu0 0.0
    %494 = vmatprep.subr.mxu0 0.0
    %495 = vmatpush2.msra.mxu0 0.0
    %496 = vmatprep.subr.mxu0 0.0
    %497 = vmatpush2.msra.mxu0 0.0
    %498 = vmatprep.subr.mxu0 0.0
    %499 = vmatpush2.msra.mxu0 0.0
    %500 = vmatprep.subr.mxu0 0.0
    %501 = vmatpush2.msra.mxu0 0.0
    %502 = vmatprep.subr.mxu0 0.0
    %503 = vmatpush2.msra.mxu0 0.0
    %504 = vmatprep.subr.mxu0 0.0
    %505 = vmatpush2.msra.mxu0 0.0
    %506 = vmatprep.subr.mxu0 0.0
    %507 = vmatpush2.msra.mxu0 0.0
    %508 = vmatprep.mubr.f32.mxu0 0.0
    %509 = vmatmul.mubr.f32.gmra.mxu0 %v442
    %v510 = vpop.f32.mrf.mxu0
    %v511 = vadd.f32 0.0, %v510
    %v512 = vpop.f32.mrf.mxu0
    %513 = vdwg.mxu0
    %v515 = vsel %vm183, %v511, 0
    %517 = vmatprep.subr.mxu0 0.0
    %518 = vmatpush1.msra.mxu0 0.0
    %519 = vmatprep.subr.mxu0 0.0
    %520 = vmatpush1.msra.mxu0 0.0
    %521 = vmatprep.subr.mxu0 0.0
    %522 = vmatpush1.msra.mxu0 0.0
    %523 = vmatprep.subr.mxu0 0.0
    %524 = vmatpush1.msra.mxu0 0.0
    %525 = vmatprep.subr.mxu0 0.0
    %526 = vmatpush1.msra.mxu0 0.0
    %527 = vmatprep.subr.mxu0 0.0
    %528 = vmatpush1.msra.mxu0 0.0
    %529 = vmatprep.subr.mxu0 0.0
    %530 = vmatpush1.msra.mxu0 0.0
    %531 = vmatprep.subr.mxu0 0.0
    %532 = vmatpush1.msra.mxu0 0.0
    %533 = vmatprep.subr.mxu0 0.0
    %534 = vmatpush1.msra.mxu0 0.0
    %535 = vmatprep.subr.mxu0 0.0
    %536 = vmatpush1.msra.mxu0 0.0
    %537 = vmatprep.subr.mxu0 0.0
    %538 = vmatpush1.msra.mxu0 0.0
    %539 = vmatprep.subr.mxu0 0.0
    %540 = vmatpush1.msra.mxu0 0.0
    %541 = vmatprep.subr.mxu0 0.0
    %542 = vmatpush1.msra.mxu0 0.0
    %543 = vmatprep.subr.mxu0 0.0
    %544 = vmatpush1.msra.mxu0 0.0
    %545 = vmatprep.subr.mxu0 0.0
    %546 = vmatpush1.msra.mxu0 0.0
    %547 = vmatprep.subr.mxu0 0.0
    %548 = vmatpush1.msra.mxu0 %v176
    %549 = vmatprep.subr.mxu0 0.0
    %550 = vmatpush2.msra.mxu0 0.0
    %551 = vmatprep.subr.mxu0 0.0
    %552 = vmatpush2.msra.mxu0 0.0
    %553 = vmatprep.subr.mxu0 0.0
    %554 = vmatpush2.msra.mxu0 0.0
    %555 = vmatprep.subr.mxu0 0.0
    %556 = vmatpush2.msra.mxu0 0.0
    %557 = vmatprep.subr.mxu0 0.0
    %558 = vmatpush2.msra.mxu0 0.0
    %559 = vmatprep.subr.mxu0 0.0
    %560 = vmatpush2.msra.mxu0 0.0
    %561 = vmatprep.subr.mxu0 0.0
    %562 = vmatpush2.msra.mxu0 0.0
    %563 = vmatprep.subr.mxu0 0.0
    %564 = vmatpush2.msra.mxu0 0.0
    %565 = vmatprep.subr.mxu0 0.0
    %566 = vmatpush2.msra.mxu0 0.0
    %567 = vmatprep.subr.mxu0 0.0
    %568 = vmatpush2.msra.mxu0 0.0
    %569 = vmatprep.subr.mxu0 0.0
    %570 = vmatpush2.msra.mxu0 0.0
    %571 = vmatprep.subr.mxu0 0.0
    %572 = vmatpush2.msra.mxu0 0.0
    %573 = vmatprep.subr.mxu0 0.0
    %574 = vmatpush2.msra.mxu0 0.0
    %575 = vmatprep.subr.mxu0 0.0
    %576 = vmatpush2.msra.mxu0 0.0
    %577 = vmatprep.subr.mxu0 0.0
    %578 = vmatpush2.msra.mxu0 0.0
    %579 = vmatprep.subr.mxu0 0.0
    %580 = vmatpush2.msra.mxu0 0.0
    %581 = vmatprep.mubr.f32.mxu0 0.0
    %582 = vmatmul.mubr.f32.gmra.mxu0 %v515
    %v583 = vpop.f32.mrf.mxu0
    %v584 = vadd.f32 0.0, %v583
    %v585 = vpop.f32.mrf.mxu0
    %586 = vdwg.mxu0
    %v588 = vsel %vm183, %v344, 0
    %590 = vmatprep.subr.mxu0 0.0
    %591 = vmatpush1.msra.mxu0 0.0
    %592 = vmatprep.subr.mxu0 0.0
    %593 = vmatpush1.msra.mxu0 0.0
    %594 = vmatprep.subr.mxu0 0.0
    %595 = vmatpush1.msra.mxu0 0.0
    %596 = vmatprep.subr.mxu0 0.0
    %597 = vmatpush1.msra.mxu0 0.0
    %598 = vmatprep.subr.mxu0 0.0
    %599 = vmatpush1.msra.mxu0 0.0
    %600 = vmatprep.subr.mxu0 0.0
    %601 = vmatpush1.msra.mxu0 0.0
    %602 = vmatprep.subr.mxu0 0.0
    %603 = vmatpush1.msra.mxu0 0.0
    %604 = vmatprep.subr.mxu0 0.0
    %605 = vmatpush1.msra.mxu0 0.0
    %606 = vmatprep.subr.mxu0 0.0
    %607 = vmatpush1.msra.mxu0 0.0
    %608 = vmatprep.subr.mxu0 0.0
    %609 = vmatpush1.msra.mxu0 0.0
    %610 = vmatprep.subr.mxu0 0.0
    %611 = vmatpush1.msra.mxu0 0.0
    %612 = vmatprep.subr.mxu0 0.0
    %613 = vmatpush1.msra.mxu0 0.0
    %614 = vmatprep.subr.mxu0 0.0
    %615 = vmatpush1.msra.mxu0 0.0
    %616 = vmatprep.subr.mxu0 0.0
    %617 = vmatpush1.msra.mxu0 0.0
    %618 = vmatprep.subr.mxu0 0.0
    %619 = vmatpush1.msra.mxu0 0.0
    %620 = vmatprep.subr.mxu0 0.0
    %621 = vmatpush1.msra.mxu0 %v175
    %622 = vmatprep.subr.mxu0 0.0
    %623 = vmatpush2.msra.mxu0 0.0
    %624 = vmatprep.subr.mxu0 0.0
    %625 = vmatpush2.msra.mxu0 0.0
    %626 = vmatprep.subr.mxu0 0.0
    %627 = vmatpush2.msra.mxu0 0.0
    %628 = vmatprep.subr.mxu0 0.0
    %629 = vmatpush2.msra.mxu0 0.0
    %630 = vmatprep.subr.mxu0 0.0
    %631 = vmatpush2.msra.mxu0 0.0
    %632 = vmatprep.subr.mxu0 0.0
    %633 = vmatpush2.msra.mxu0 0.0
    %634 = vmatprep.subr.mxu0 0.0
    %635 = vmatpush2.msra.mxu0 0.0
    %636 = vmatprep.subr.mxu0 0.0
    %637 = vmatpush2.msra.mxu0 0.0
    %638 = vmatprep.subr.mxu0 0.0
    %639 = vmatpush2.msra.mxu0 0.0
    %640 = vmatprep.subr.mxu0 0.0
    %641 = vmatpush2.msra.mxu0 0.0
    %642 = vmatprep.subr.mxu0 0.0
    %643 = vmatpush2.msra.mxu0 0.0
    %644 = vmatprep.subr.mxu0 0.0
    %645 = vmatpush2.msra.mxu0 0.0
    %646 = vmatprep.subr.mxu0 0.0
    %647 = vmatpush2.msra.mxu0 0.0
    %648 = vmatprep.subr.mxu0 0.0
    %649 = vmatpush2.msra.mxu0 0.0
    %650 = vmatprep.subr.mxu0 0.0
    %651 = vmatpush2.msra.mxu0 0.0
    %652 = vmatprep.subr.mxu0 0.0
    %653 = vmatpush2.msra.mxu0 0.0
    %654 = vmatprep.mubr.f32.mxu0 0.0
    %655 = vmatmul.mubr.f32.gmra.mxu0 %v588
    %v656 = vpop.f32.mrf.mxu0
    %v657 = vadd.f32 %v584, %v656
    %v658 = vpop.f32.mrf.mxu0
    %659 = vdwg.mxu0
    %660 = vrot.lane.b32.xlu0 %v167, 112
    %v661 = vpop.permute.xlu0 %660
    %662 = vrot.lane.b32.xlu0 %v167, 80
    %v663 = vpop.permute.xlu0 %662
    %v664 = vsel %vm183, %v661, 0
    %v666 = vsel %vm183, %v663, 0
    %668 = vmatprep.subr.mxu0 0.0
    %669 = vmatpush1.xpose.msra.mxu0 0.0
    %670 = vmatprep.subr.mxu0 0.0
    %671 = vmatpush1.xpose.msra.mxu0 0.0
    %672 = vmatprep.subr.mxu0 0.0
    %673 = vmatpush1.xpose.msra.mxu0 0.0
    %674 = vmatprep.subr.mxu0 0.0
    %675 = vmatpush1.xpose.msra.mxu0 0.0
    %676 = vmatprep.subr.mxu0 0.0
    %677 = vmatpush1.xpose.msra.mxu0 0.0
    %678 = vmatprep.subr.mxu0 0.0
    %679 = vmatpush1.xpose.msra.mxu0 0.0
    %680 = vmatprep.subr.mxu0 0.0
    %681 = vmatpush1.xpose.msra.mxu0 0.0
    %682 = vmatprep.subr.mxu0 0.0
    %683 = vmatpush1.xpose.msra.mxu0 0.0
    %684 = vmatprep.subr.mxu0 0.0
    %685 = vmatpush1.xpose.msra.mxu0 0.0
    %686 = vmatprep.subr.mxu0 0.0
    %687 = vmatpush1.xpose.msra.mxu0 0.0
    %688 = vmatprep.subr.mxu0 0.0
    %689 = vmatpush1.xpose.msra.mxu0 0.0
    %690 = vmatprep.subr.mxu0 0.0
    %691 = vmatpush1.xpose.msra.mxu0 0.0
    %692 = vmatprep.subr.mxu0 0.0
    %693 = vmatpush1.xpose.msra.mxu0 0.0
    %694 = vmatprep.subr.mxu0 0.0
    %695 = vmatpush1.xpose.msra.mxu0 0.0
    %696 = vmatprep.subr.mxu0 0.0
    %697 = vmatpush1.xpose.msra.mxu0 0.0
    %698 = vmatprep.subr.mxu0 0.0
    %699 = vmatpush1.xpose.msra.mxu0 %v666
    %700 = vmatprep.subr.mxu0 0.0
    %701 = vmatpush2.xpose.msra.mxu0 0.0
    %702 = vmatprep.subr.mxu0 0.0
    %703 = vmatpush2.xpose.msra.mxu0 0.0
    %704 = vmatprep.subr.mxu0 0.0
    %705 = vmatpush2.xpose.msra.mxu0 0.0
    %706 = vmatprep.subr.mxu0 0.0
    %707 = vmatpush2.xpose.msra.mxu0 0.0
    %708 = vmatprep.subr.mxu0 0.0
    %709 = vmatpush2.xpose.msra.mxu0 0.0
    %710 = vmatprep.subr.mxu0 0.0
    %711 = vmatpush2.xpose.msra.mxu0 0.0
    %712 = vmatprep.subr.mxu0 0.0
    %713 = vmatpush2.xpose.msra.mxu0 0.0
    %714 = vmatprep.subr.mxu0 0.0
    %715 = vmatpush2.xpose.msra.mxu0 0.0
    %716 = vmatprep.subr.mxu0 0.0
    %717 = vmatpush2.xpose.msra.mxu0 0.0
    %718 = vmatprep.subr.mxu0 0.0
    %719 = vmatpush2.xpose.msra.mxu0 0.0
    %720 = vmatprep.subr.mxu0 0.0
    %721 = vmatpush2.xpose.msra.mxu0 0.0
    %722 = vmatprep.subr.mxu0 0.0
    %723 = vmatpush2.xpose.msra.mxu0 0.0
    %724 = vmatprep.subr.mxu0 0.0
    %725 = vmatpush2.xpose.msra.mxu0 0.0
    %726 = vmatprep.subr.mxu0 0.0
    %727 = vmatpush2.xpose.msra.mxu0 0.0
    %728 = vmatprep.subr.mxu0 0.0
    %729 = vmatpush2.xpose.msra.mxu0 0.0
    %730 = vmatprep.subr.mxu0 0.0
    %731 = vmatpush2.xpose.msra.mxu0 0.0
    %732 = vmatprep.mubr.f32.mxu0 0.0
    %733 = vmatmul.mubr.f32.gmra.mxu0 %v664
    %v734 = vpop.f32.mrf.mxu0
    %v735 = vadd.f32 0.0, %v734
    %v736 = vpop.f32.mrf.mxu0
    %737 = vdwg.mxu0
    %v738 = vmul.f32 %v735, 0.35355338
    %v739 = vadd.f32 %v738, %v179
    %v740 = vsel %vm183, %v739, -inf
    %741 = vmax.xlane.f32.xlu0 %v740
    %v742 = vpop.xlane.xlu0 %741
    %v743 = vsub.f32 %v739, %v742
    %v744 = vmul.f32 %v743, 1.442695
    %v745 = vpow.pop %v744
    %v746 = vsel %vm183, %v745, 0.0
    %747 = vadd.xlane.f32.xlu0 %v746
    %v748 = vpop.xlane.xlu0 %747
    %v749 = vrcp.pop %v748
    %v750 = vmul.f32 %v745, %v749
    %751 = vrot.lane.b32.xlu0 %v167, 48
    %v752 = vpop.permute.xlu0 %751
    %v755 = vsel %vm183, %v750, 0
    %757 = vmatprep.subr.mxu0 0.0
    %758 = vmatpush1.msra.mxu0 0.0
    %759 = vmatprep.subr.mxu0 0.0
    %760 = vmatpush1.msra.mxu0 0.0
    %761 = vmatprep.subr.mxu0 0.0
    %762 = vmatpush1.msra.mxu0 0.0
    %763 = vmatprep.subr.mxu0 0.0
    %764 = vmatpush1.msra.mxu0 0.0
    %765 = vmatprep.subr.mxu0 0.0
    %766 = vmatpush1.msra.mxu0 0.0
    %767 = vmatprep.subr.mxu0 0.0
    %768 = vmatpush1.msra.mxu0 0.0
    %769 = vmatprep.subr.mxu0 0.0
    %770 = vmatpush1.msra.mxu0 0.0
    %771 = vmatprep.subr.mxu0 0.0
    %772 = vmatpush1.msra.mxu0 0.0
    %773 = vmatprep.subr.mxu0 0.0
    %774 = vmatpush1.msra.mxu0 0.0
    %775 = vmatprep.subr.mxu0 0.0
    %776 = vmatpush1.msra.mxu0 0.0
    %777 = vmatprep.subr.mxu0 0.0
    %778 = vmatpush1.msra.mxu0 0.0
    %779 = vmatprep.subr.mxu0 0.0
    %780 = vmatpush1.msra.mxu0 0.0
    %781 = vmatprep.subr.mxu0 0.0
    %782 = vmatpush1.msra.mxu0 0.0
    %783 = vmatprep.subr.mxu0 0.0
    %784 = vmatpush1.msra.mxu0 0.0
    %785 = vmatprep.subr.mxu0 0.0
    %786 = vmatpush1.msra.mxu0 0.0
    %787 = vmatprep.subr.mxu0 0.0
    %788 = vmatpush1.msra.mxu0 %v752
    %789 = vmatprep.subr.mxu0 0.0
    %790 = vmatpush2.msra.mxu0 0.0
    %791 = vmatprep.subr.mxu0 0.0
    %792 = vmatpush2.msra.mxu0 0.0
    %793 = vmatprep.subr.mxu0 0.0
    %794 = vmatpush2.msra.mxu0 0.0
    %795 = vmatprep.subr.mxu0 0.0
    %796 = vmatpush2.msra.mxu0 0.0
    %797 = vmatprep.subr.mxu0 0.0
    %798 = vmatpush2.msra.mxu0 0.0
    %799 = vmatprep.subr.mxu0 0.0
    %800 = vmatpush2.msra.mxu0 0.0
    %801 = vmatprep.subr.mxu0 0.0
    %802 = vmatpush2.msra.mxu0 0.0
    %803 = vmatprep.subr.mxu0 0.0
    %804 = vmatpush2.msra.mxu0 0.0
    %805 = vmatprep.subr.mxu0 0.0
    %806 = vmatpush2.msra.mxu0 0.0
    %807 = vmatprep.subr.mxu0 0.0
    %808 = vmatpush2.msra.mxu0 0.0
    %809 = vmatprep.subr.mxu0 0.0
    %810 = vmatpush2.msra.mxu0 0.0
    %811 = vmatprep.subr.mxu0 0.0
    %812 = vmatpush2.msra.mxu0 0.0
    %813 = vmatprep.subr.mxu0 0.0
    %814 = vmatpush2.msra.mxu0 0.0
    %815 = vmatprep.subr.mxu0 0.0
    %816 = vmatpush2.msra.mxu0 0.0
    %817 = vmatprep.subr.mxu0 0.0
    %818 = vmatpush2.msra.mxu0 0.0
    %819 = vmatprep.subr.mxu0 0.0
    %820 = vmatpush2.msra.mxu0 0.0
    %821 = vmatprep.mubr.f32.mxu0 0.0
    %822 = vmatmul.mubr.f32.gmra.mxu0 %v755
    %v823 = vpop.f32.mrf.mxu0
    %v824 = vadd.f32 0.0, %v823
    %v825 = vpop.f32.mrf.mxu0
    %826 = vdwg.mxu0
    %v828 = vsel %vm183, %v824, 0
    %830 = vmatprep.subr.mxu0 0.0
    %831 = vmatpush1.msra.mxu0 0.0
    %832 = vmatprep.subr.mxu0 0.0
    %833 = vmatpush1.msra.mxu0 0.0
    %834 = vmatprep.subr.mxu0 0.0
    %835 = vmatpush1.msra.mxu0 0.0
    %836 = vmatprep.subr.mxu0 0.0
    %837 = vmatpush1.msra.mxu0 0.0
    %838 = vmatprep.subr.mxu0 0.0
    %839 = vmatpush1.msra.mxu0 0.0
    %840 = vmatprep.subr.mxu0 0.0
    %841 = vmatpush1.msra.mxu0 0.0
    %842 = vmatprep.subr.mxu0 0.0
    %843 = vmatpush1.msra.mxu0 0.0
    %844 = vmatprep.subr.mxu0 0.0
    %845 = vmatpush1.msra.mxu0 0.0
    %846 = vmatprep.subr.mxu0 0.0
    %847 = vmatpush1.msra.mxu0 0.0
    %848 = vmatprep.subr.mxu0 0.0
    %849 = vmatpush1.msra.mxu0 0.0
    %850 = vmatprep.subr.mxu0 0.0
    %851 = vmatpush1.msra.mxu0 0.0
    %852 = vmatprep.subr.mxu0 0.0
    %853 = vmatpush1.msra.mxu0 0.0
    %854 = vmatprep.subr.mxu0 0.0
    %855 = vmatpush1.msra.mxu0 0.0
    %856 = vmatprep.subr.mxu0 0.0
    %857 = vmatpush1.msra.mxu0 0.0
    %858 = vmatprep.subr.mxu0 0.0
    %859 = vmatpush1.msra.mxu0 0.0
    %860 = vmatprep.subr.mxu0 0.0
    %861 = vmatpush1.msra.mxu0 %v177
    %862 = vmatprep.subr.mxu0 0.0
    %863 = vmatpush2.msra.mxu0 0.0
    %864 = vmatprep.subr.mxu0 0.0
    %865 = vmatpush2.msra.mxu0 0.0
    %866 = vmatprep.subr.mxu0 0.0
    %867 = vmatpush2.msra.mxu0 0.0
    %868 = vmatprep.subr.mxu0 0.0
    %869 = vmatpush2.msra.mxu0 0.0
    %870 = vmatprep.subr.mxu0 0.0
    %871 = vmatpush2.msra.mxu0 0.0
    %872 = vmatprep.subr.mxu0 0.0
    %873 = vmatpush2.msra.mxu0 0.0
    %874 = vmatprep.subr.mxu0 0.0
    %875 = vmatpush2.msra.mxu0 0.0
    %876 = vmatprep.subr.mxu0 0.0
    %877 = vmatpush2.msra.mxu0 0.0
    %878 = vmatprep.subr.mxu0 0.0
    %879 = vmatpush2.msra.mxu0 0.0
    %880 = vmatprep.subr.mxu0 0.0
    %881 = vmatpush2.msra.mxu0 0.0
    %882 = vmatprep.subr.mxu0 0.0
    %883 = vmatpush2.msra.mxu0 0.0
    %884 = vmatprep.subr.mxu0 0.0
    %885 = vmatpush2.msra.mxu0 0.0
    %886 = vmatprep.subr.mxu0 0.0
    %887 = vmatpush2.msra.mxu0 0.0
    %888 = vmatprep.subr.mxu0 0.0
    %889 = vmatpush2.msra.mxu0 0.0
    %890 = vmatprep.subr.mxu0 0.0
    %891 = vmatpush2.msra.mxu0 0.0
    %892 = vmatprep.subr.mxu0 0.0
    %893 = vmatpush2.msra.mxu0 0.0
    %894 = vmatprep.mubr.f32.mxu0 0.0
    %895 = vmatmul.mubr.f32.gmra.mxu0 %v828
    %v896 = vpop.f32.mrf.mxu0
    %v897 = vadd.f32 0.0, %v896
    %v898 = vpop.f32.mrf.mxu0
    %899 = vdwg.mxu0
    %v900 = vadd.f32 %v657, %v897
    %901 = vrot.lane.b32.xlu0 %v167, 104
    %v902 = vpop.permute.xlu0 %901
    %903 = vrot.lane.b32.xlu0 %v167, 72
    %v904 = vpop.permute.xlu0 %903
    %v905 = vsel %vm183, %v902, 0
    %v907 = vsel %vm183, %v904, 0
    %909 = vmatprep.subr.mxu0 0.0
    %910 = vmatpush1.xpose.msra.mxu0 0.0
    %911 = vmatprep.subr.mxu0 0.0
    %912 = vmatpush1.xpose.msra.mxu0 0.0
    %913 = vmatprep.subr.mxu0 0.0
    %914 = vmatpush1.xpose.msra.mxu0 0.0
    %915 = vmatprep.subr.mxu0 0.0
    %916 = vmatpush1.xpose.msra.mxu0 0.0
    %917 = vmatprep.subr.mxu0 0.0
    %918 = vmatpush1.xpose.msra.mxu0 0.0
    %919 = vmatprep.subr.mxu0 0.0
    %920 = vmatpush1.xpose.msra.mxu0 0.0
    %921 = vmatprep.subr.mxu0 0.0
    %922 = vmatpush1.xpose.msra.mxu0 0.0
    %923 = vmatprep.subr.mxu0 0.0
    %924 = vmatpush1.xpose.msra.mxu0 0.0
    %925 = vmatprep.subr.mxu0 0.0
    %926 = vmatpush1.xpose.msra.mxu0 0.0
    %927 = vmatprep.subr.mxu0 0.0
    %928 = vmatpush1.xpose.msra.mxu0 0.0
    %929 = vmatprep.subr.mxu0 0.0
    %930 = vmatpush1.xpose.msra.mxu0 0.0
    %931 = vmatprep.subr.mxu0 0.0
    %932 = vmatpush1.xpose.msra.mxu0 0.0
    %933 = vmatprep.subr.mxu0 0.0
    %934 = vmatpush1.xpose.msra.mxu0 0.0
    %935 = vmatprep.subr.mxu0 0.0
    %936 = vmatpush1.xpose.msra.mxu0 0.0
    %937 = vmatprep.subr.mxu0 0.0
    %938 = vmatpush1.xpose.msra.mxu0 0.0
    %939 = vmatprep.subr.mxu0 0.0
    %940 = vmatpush1.xpose.msra.mxu0 %v907
    %941 = vmatprep.subr.mxu0 0.0
    %942 = vmatpush2.xpose.msra.mxu0 0.0
    %943 = vmatprep.subr.mxu0 0.0
    %944 = vmatpush2.xpose.msra.mxu0 0.0
    %945 = vmatprep.subr.mxu0 0.0
    %946 = vmatpush2.xpose.msra.mxu0 0.0
    %947 = vmatprep.subr.mxu0 0.0
    %948 = vmatpush2.xpose.msra.mxu0 0.0
    %949 = vmatprep.subr.mxu0 0.0
    %950 = vmatpush2.xpose.msra.mxu0 0.0
    %951 = vmatprep.subr.mxu0 0.0
    %952 = vmatpush2.xpose.msra.mxu0 0.0
    %953 = vmatprep.subr.mxu0 0.0
    %954 = vmatpush2.xpose.msra.mxu0 0.0
    %955 = vmatprep.subr.mxu0 0.0
    %956 = vmatpush2.xpose.msra.mxu0 0.0
    %957 = vmatprep.subr.mxu0 0.0
    %958 = vmatpush2.xpose.msra.mxu0 0.0
    %959 = vmatprep.subr.mxu0 0.0
    %960 = vmatpush2.xpose.msra.mxu0 0.0
    %961 = vmatprep.subr.mxu0 0.0
    %962 = vmatpush2.xpose.msra.mxu0 0.0
    %963 = vmatprep.subr.mxu0 0.0
    %964 = vmatpush2.xpose.msra.mxu0 0.0
    %965 = vmatprep.subr.mxu0 0.0
    %966 = vmatpush2.xpose.msra.mxu0 0.0
    %967 = vmatprep.subr.mxu0 0.0
    %968 = vmatpush2.xpose.msra.mxu0 0.0
    %969 = vmatprep.subr.mxu0 0.0
    %970 = vmatpush2.xpose.msra.mxu0 0.0
    %971 = vmatprep.subr.mxu0 0.0
    %972 = vmatpush2.xpose.msra.mxu0 0.0
    %973 = vmatprep.mubr.f32.mxu0 0.0
    %974 = vmatmul.mubr.f32.gmra.mxu0 %v905
    %v975 = vpop.f32.mrf.mxu0
    %v976 = vadd.f32 0.0, %v975
    %v977 = vpop.f32.mrf.mxu0
    %978 = vdwg.mxu0
    %v979 = vmul.f32 %v976, 0.35355338
    %v980 = vadd.f32 %v979, %v179
    %v981 = vsel %vm183, %v980, -inf
    %982 = vmax.xlane.f32.xlu0 %v981
    %v983 = vpop.xlane.xlu0 %982
    %v984 = vsub.f32 %v980, %v983
    %v985 = vmul.f32 %v984, 1.442695
    %v986 = vpow.pop %v985
    %v987 = vsel %vm183, %v986, 0.0
    %988 = vadd.xlane.f32.xlu0 %v987
    %v989 = vpop.xlane.xlu0 %988
    %v990 = vrcp.pop %v989
    %v991 = vmul.f32 %v986, %v990
    %992 = vrot.lane.b32.xlu0 %v167, 40
    %v993 = vpop.permute.xlu0 %992
    %v996 = vsel %vm183, %v991, 0
    %998 = vmatprep.subr.mxu0 0.0
    %999 = vmatpush1.msra.mxu0 0.0
    %1000 = vmatprep.subr.mxu0 0.0
    %1001 = vmatpush1.msra.mxu0 0.0
    %1002 = vmatprep.subr.mxu0 0.0
    %1003 = vmatpush1.msra.mxu0 0.0
    %1004 = vmatprep.subr.mxu0 0.0
    %1005 = vmatpush1.msra.mxu0 0.0
    %1006 = vmatprep.subr.mxu0 0.0
    %1007 = vmatpush1.msra.mxu0 0.0
    %1008 = vmatprep.subr.mxu0 0.0
    %1009 = vmatpush1.msra.mxu0 0.0
    %1010 = vmatprep.subr.mxu0 0.0
    %1011 = vmatpush1.msra.mxu0 0.0
    %1012 = vmatprep.subr.mxu0 0.0
    %1013 = vmatpush1.msra.mxu0 0.0
    %1014 = vmatprep.subr.mxu0 0.0
    %1015 = vmatpush1.msra.mxu0 0.0
    %1016 = vmatprep.subr.mxu0 0.0
    %1017 = vmatpush1.msra.mxu0 0.0
    %1018 = vmatprep.subr.mxu0 0.0
    %1019 = vmatpush1.msra.mxu0 0.0
    %1020 = vmatprep.subr.mxu0 0.0
    %1021 = vmatpush1.msra.mxu0 0.0
    %1022 = vmatprep.subr.mxu0 0.0
    %1023 = vmatpush1.msra.mxu0 0.0
    %1024 = vmatprep.subr.mxu0 0.0
    %1025 = vmatpush1.msra.mxu0 0.0
    %1026 = vmatprep.subr.mxu0 0.0
    %1027 = vmatpush1.msra.mxu0 0.0
    %1028 = vmatprep.subr.mxu0 0.0
    %1029 = vmatpush1.msra.mxu0 %v993
    %1030 = vmatprep.subr.mxu0 0.0
    %1031 = vmatpush2.msra.mxu0 0.0
    %1032 = vmatprep.subr.mxu0 0.0
    %1033 = vmatpush2.msra.mxu0 0.0
    %1034 = vmatprep.subr.mxu0 0.0
    %1035 = vmatpush2.msra.mxu0 0.0
    %1036 = vmatprep.subr.mxu0 0.0
    %1037 = vmatpush2.msra.mxu0 0.0
    %1038 = vmatprep.subr.mxu0 0.0
    %1039 = vmatpush2.msra.mxu0 0.0
    %1040 = vmatprep.subr.mxu0 0.0
    %1041 = vmatpush2.msra.mxu0 0.0
    %1042 = vmatprep.subr.mxu0 0.0
    %1043 = vmatpush2.msra.mxu0 0.0
    %1044 = vmatprep.subr.mxu0 0.0
    %1045 = vmatpush2.msra.mxu0 0.0
    %1046 = vmatprep.subr.mxu0 0.0
    %1047 = vmatpush2.msra.mxu0 0.0
    %1048 = vmatprep.subr.mxu0 0.0
    %1049 = vmatpush2.msra.mxu0 0.0
    %1050 = vmatprep.subr.mxu0 0.0
    %1051 = vmatpush2.msra.mxu0 0.0
    %1052 = vmatprep.subr.mxu0 0.0
    %1053 = vmatpush2.msra.mxu0 0.0
    %1054 = vmatprep.subr.mxu0 0.0
    %1055 = vmatpush2.msra.mxu0 0.0
    %1056 = vmatprep.subr.mxu0 0.0
    %1057 = vmatpush2.msra.mxu0 0.0
    %1058 = vmatprep.subr.mxu0 0.0
    %1059 = vmatpush2.msra.mxu0 0.0
    %1060 = vmatprep.subr.mxu0 0.0
    %1061 = vmatpush2.msra.mxu0 0.0
    %1062 = vmatprep.mubr.f32.mxu0 0.0
    %1063 = vmatmul.mubr.f32.gmra.mxu0 %v996
    %v1064 = vpop.f32.mrf.mxu0
    %v1065 = vadd.f32 0.0, %v1064
    %v1066 = vpop.f32.mrf.mxu0
    %1067 = vdwg.mxu0
    %v1069 = vsel %vm183, %v1065, 0
    %1071 = vmatprep.subr.mxu0 0.0
    %1072 = vmatpush1.msra.mxu0 0.0
    %1073 = vmatprep.subr.mxu0 0.0
    %1074 = vmatpush1.msra.mxu0 0.0
    %1075 = vmatprep.subr.mxu0 0.0
    %1076 = vmatpush1.msra.mxu0 0.0
    %1077 = vmatprep.subr.mxu0 0.0
    %1078 = vmatpush1.msra.mxu0 0.0
    %1079 = vmatprep.subr.mxu0 0.0
    %1080 = vmatpush1.msra.mxu0 0.0
    %1081 = vmatprep.subr.mxu0 0.0
    %1082 = vmatpush1.msra.mxu0 0.0
    %1083 = vmatprep.subr.mxu0 0.0
    %1084 = vmatpush1.msra.mxu0 0.0
    %1085 = vmatprep.subr.mxu0 0.0
    %1086 = vmatpush1.msra.mxu0 0.0
    %1087 = vmatprep.subr.mxu0 0.0
    %1088 = vmatpush1.msra.mxu0 0.0
    %1089 = vmatprep.subr.mxu0 0.0
    %1090 = vmatpush1.msra.mxu0 0.0
    %1091 = vmatprep.subr.mxu0 0.0
    %1092 = vmatpush1.msra.mxu0 0.0
    %1093 = vmatprep.subr.mxu0 0.0
    %1094 = vmatpush1.msra.mxu0 0.0
    %1095 = vmatprep.subr.mxu0 0.0
    %1096 = vmatpush1.msra.mxu0 0.0
    %1097 = vmatprep.subr.mxu0 0.0
    %1098 = vmatpush1.msra.mxu0 0.0
    %1099 = vmatprep.subr.mxu0 0.0
    %1100 = vmatpush1.msra.mxu0 0.0
    %1101 = vmatprep.subr.mxu0 0.0
    %1102 = vmatpush1.msra.mxu0 %v178
    %1103 = vmatprep.subr.mxu0 0.0
    %1104 = vmatpush2.msra.mxu0 0.0
    %1105 = vmatprep.subr.mxu0 0.0
    %1106 = vmatpush2.msra.mxu0 0.0
    %1107 = vmatprep.subr.mxu0 0.0
    %1108 = vmatpush2.msra.mxu0 0.0
    %1109 = vmatprep.subr.mxu0 0.0
    %1110 = vmatpush2.msra.mxu0 0.0
    %1111 = vmatprep.subr.mxu0 0.0
    %1112 = vmatpush2.msra.mxu0 0.0
    %1113 = vmatprep.subr.mxu0 0.0
    %1114 = vmatpush2.msra.mxu0 0.0
    %1115 = vmatprep.subr.mxu0 0.0
    %1116 = vmatpush2.msra.mxu0 0.0
    %1117 = vmatprep.subr.mxu0 0.0
    %1118 = vmatpush2.msra.mxu0 0.0
    %1119 = vmatprep.subr.mxu0 0.0
    %1120 = vmatpush2.msra.mxu0 0.0
    %1121 = vmatprep.subr.mxu0 0.0
    %1122 = vmatpush2.msra.mxu0 0.0
    %1123 = vmatprep.subr.mxu0 0.0
    %1124 = vmatpush2.msra.mxu0 0.0
    %1125 = vmatprep.subr.mxu0 0.0
    %1126 = vmatpush2.msra.mxu0 0.0
    %1127 = vmatprep.subr.mxu0 0.0
    %1128 = vmatpush2.msra.mxu0 0.0
    %1129 = vmatprep.subr.mxu0 0.0
    %1130 = vmatpush2.msra.mxu0 0.0
    %1131 = vmatprep.subr.mxu0 0.0
    %1132 = vmatpush2.msra.mxu0 0.0
    %1133 = vmatprep.subr.mxu0 0.0
    %1134 = vmatpush2.msra.mxu0 0.0
    %1135 = vmatprep.mubr.f32.mxu0 0.0
    %1136 = vmatmul.mubr.f32.gmra.mxu0 %v1069
    %v1137 = vpop.f32.mrf.mxu0
    %v1138 = vadd.f32 0.0, %v1137
    %v1139 = vpop.f32.mrf.mxu0
    %1140 = vdwg.mxu0
    %v1141 = vadd.f32 %v900, %v1138
    %s1142 = scalar_lea.vmem %s22, 8
    %v1143 = vld [vmem:[%s1142] sm:$0xff]
    %1145 = vrot.lane.b32.xlu0 %v172, 96
    %v1146 = vpop.permute.xlu0 %1145
    %v1147 = vsel %vm183, %v172, 0
    %v1149 = vsel %vm183, %v1146, 0
    %1151 = vmatprep.subr.mxu0 0.0
    %1152 = vmatpush1.xpose.msra.mxu0 0.0
    %1153 = vmatprep.subr.mxu0 0.0
    %1154 = vmatpush1.xpose.msra.mxu0 0.0
    %1155 = vmatprep.subr.mxu0 0.0
    %1156 = vmatpush1.xpose.msra.mxu0 0.0
    %1157 = vmatprep.subr.mxu0 0.0
    %1158 = vmatpush1.xpose.msra.mxu0 0.0
    %1159 = vmatprep.subr.mxu0 0.0
    %1160 = vmatpush1.xpose.msra.mxu0 0.0
    %1161 = vmatprep.subr.mxu0 0.0
    %1162 = vmatpush1.xpose.msra.mxu0 0.0
    %1163 = vmatprep.subr.mxu0 0.0
    %1164 = vmatpush1.xpose.msra.mxu0 0.0
    %1165 = vmatprep.subr.mxu0 0.0
    %1166 = vmatpush1.xpose.msra.mxu0 0.0
    %1167 = vmatprep.subr.mxu0 0.0
    %1168 = vmatpush1.xpose.msra.mxu0 0.0
    %1169 = vmatprep.subr.mxu0 0.0
    %1170 = vmatpush1.xpose.msra.mxu0 0.0
    %1171 = vmatprep.subr.mxu0 0.0
    %1172 = vmatpush1.xpose.msra.mxu0 0.0
    %1173 = vmatprep.subr.mxu0 0.0
    %1174 = vmatpush1.xpose.msra.mxu0 0.0
    %1175 = vmatprep.subr.mxu0 0.0
    %1176 = vmatpush1.xpose.msra.mxu0 0.0
    %1177 = vmatprep.subr.mxu0 0.0
    %1178 = vmatpush1.xpose.msra.mxu0 0.0
    %1179 = vmatprep.subr.mxu0 0.0
    %1180 = vmatpush1.xpose.msra.mxu0 0.0
    %1181 = vmatprep.subr.mxu0 0.0
    %1182 = vmatpush1.xpose.msra.mxu0 %v1149
    %1183 = vmatprep.subr.mxu0 0.0
    %1184 = vmatpush2.xpose.msra.mxu0 0.0
    %1185 = vmatprep.subr.mxu0 0.0
    %1186 = vmatpush2.xpose.msra.mxu0 0.0
    %1187 = vmatprep.subr.mxu0 0.0
    %1188 = vmatpush2.xpose.msra.mxu0 0.0
    %1189 = vmatprep.subr.mxu0 0.0
    %1190 = vmatpush2.xpose.msra.mxu0 0.0
    %1191 = vmatprep.subr.mxu0 0.0
    %1192 = vmatpush2.xpose.msra.mxu0 0.0
    %1193 = vmatprep.subr.mxu0 0.0
    %1194 = vmatpush2.xpose.msra.mxu0 0.0
    %1195 = vmatprep.subr.mxu0 0.0
    %1196 = vmatpush2.xpose.msra.mxu0 0.0
    %1197 = vmatprep.subr.mxu0 0.0
    %1198 = vmatpush2.xpose.msra.mxu0 0.0
    %1199 = vmatprep.subr.mxu0 0.0
    %1200 = vmatpush2.xpose.msra.mxu0 0.0
    %1201 = vmatprep.subr.mxu0 0.0
    %1202 = vmatpush2.xpose.msra.mxu0 0.0
    %1203 = vmatprep.subr.mxu0 0.0
    %1204 = vmatpush2.xpose.msra.mxu0 0.0
    %1205 = vmatprep.subr.mxu0 0.0
    %1206 = vmatpush2.xpose.msra.mxu0 0.0
    %1207 = vmatprep.subr.mxu0 0.0
    %1208 = vmatpush2.xpose.msra.mxu0 0.0
    %1209 = vmatprep.subr.mxu0 0.0
    %1210 = vmatpush2.xpose.msra.mxu0 0.0
    %1211 = vmatprep.subr.mxu0 0.0
    %1212 = vmatpush2.xpose.msra.mxu0 0.0
    %1213 = vmatprep.subr.mxu0 0.0
    %1214 = vmatpush2.xpose.msra.mxu0 0.0
    %1215 = vmatprep.mubr.f32.mxu0 0.0
    %1216 = vmatmul.mubr.f32.gmra.mxu0 %v1147
    %v1217 = vpop.f32.mrf.mxu0
    %v1218 = vadd.f32 0.0, %v1217
    %v1219 = vpop.f32.mrf.mxu0
    %1220 = vdwg.mxu0
    %v1221 = vmul.f32 %v1218, 0.35355338
    %v1222 = vadd.f32 %v1221, %v1143
    %v1223 = vsel %vm183, %v1222, -inf
    %1224 = vmax.xlane.f32.xlu0 %v1223
    %v1225 = vpop.xlane.xlu0 %1224
    %v1226 = vsub.f32 %v1222, %v1225
    %v1227 = vmul.f32 %v1226, 1.442695
    %v1228 = vpow.pop %v1227
    %v1229 = vsel %vm183, %v1228, 0.0
    %1230 = vadd.xlane.f32.xlu0 %v1229
    %v1231 = vpop.xlane.xlu0 %1230
    %v1232 = vrcp.pop %v1231
    %v1233 = vmul.f32 %v1228, %v1232
    %1234 = vrot.lane.b32.xlu0 %v172, 64
    %v1235 = vpop.permute.xlu0 %1234
    %v1238 = vsel %vm183, %v1233, 0
    %1240 = vmatprep.subr.mxu0 0.0
    %1241 = vmatpush1.msra.mxu0 0.0
    %1242 = vmatprep.subr.mxu0 0.0
    %1243 = vmatpush1.msra.mxu0 0.0
    %1244 = vmatprep.subr.mxu0 0.0
    %1245 = vmatpush1.msra.mxu0 0.0
    %1246 = vmatprep.subr.mxu0 0.0
    %1247 = vmatpush1.msra.mxu0 0.0
    %1248 = vmatprep.subr.mxu0 0.0
    %1249 = vmatpush1.msra.mxu0 0.0
    %1250 = vmatprep.subr.mxu0 0.0
    %1251 = vmatpush1.msra.mxu0 0.0
    %1252 = vmatprep.subr.mxu0 0.0
    %1253 = vmatpush1.msra.mxu0 0.0
    %1254 = vmatprep.subr.mxu0 0.0
    %1255 = vmatpush1.msra.mxu0 0.0
    %1256 = vmatprep.subr.mxu0 0.0
    %1257 = vmatpush1.msra.mxu0 0.0
    %1258 = vmatprep.subr.mxu0 0.0
    %1259 = vmatpush1.msra.mxu0 0.0
    %1260 = vmatprep.subr.mxu0 0.0
    %1261 = vmatpush1.msra.mxu0 0.0
    %1262 = vmatprep.subr.mxu0 0.0
    %1263 = vmatpush1.msra.mxu0 0.0
    %1264 = vmatprep.subr.mxu0 0.0
    %1265 = vmatpush1.msra.mxu0 0.0
    %1266 = vmatprep.subr.mxu0 0.0
    %1267 = vmatpush1.msra.mxu0 0.0
    %1268 = vmatprep.subr.mxu0 0.0
    %1269 = vmatpush1.msra.mxu0 0.0
    %1270 = vmatprep.subr.mxu0 0.0
    %1271 = vmatpush1.msra.mxu0 %v1235
    %1272 = vmatprep.subr.mxu0 0.0
    %1273 = vmatpush2.msra.mxu0 0.0
    %1274 = vmatprep.subr.mxu0 0.0
    %1275 = vmatpush2.msra.mxu0 0.0
    %1276 = vmatprep.subr.mxu0 0.0
    %1277 = vmatpush2.msra.mxu0 0.0
    %1278 = vmatprep.subr.mxu0 0.0
    %1279 = vmatpush2.msra.mxu0 0.0
    %1280 = vmatprep.subr.mxu0 0.0
    %1281 = vmatpush2.msra.mxu0 0.0
    %1282 = vmatprep.subr.mxu0 0.0
    %1283 = vmatpush2.msra.mxu0 0.0
    %1284 = vmatprep.subr.mxu0 0.0
    %1285 = vmatpush2.msra.mxu0 0.0
    %1286 = vmatprep.subr.mxu0 0.0
    %1287 = vmatpush2.msra.mxu0 0.0
    %1288 = vmatprep.subr.mxu0 0.0
    %1289 = vmatpush2.msra.mxu0 0.0
    %1290 = vmatprep.subr.mxu0 0.0
    %1291 = vmatpush2.msra.mxu0 0.0
    %1292 = vmatprep.subr.mxu0 0.0
    %1293 = vmatpush2.msra.mxu0 0.0
    %1294 = vmatprep.subr.mxu0 0.0
    %1295 = vmatpush2.msra.mxu0 0.0
    %1296 = vmatprep.subr.mxu0 0.0
    %1297 = vmatpush2.msra.mxu0 0.0
    %1298 = vmatprep.subr.mxu0 0.0
    %1299 = vmatpush2.msra.mxu0 0.0
    %1300 = vmatprep.subr.mxu0 0.0
    %1301 = vmatpush2.msra.mxu0 0.0
    %1302 = vmatprep.subr.mxu0 0.0
    %1303 = vmatpush2.msra.mxu0 0.0
    %1304 = vmatprep.mubr.f32.mxu0 0.0
    %1305 = vmatmul.mubr.f32.gmra.mxu0 %v1238
    %v1306 = vpop.f32.mrf.mxu0
    %v1307 = vadd.f32 0.0, %v1306
    %v1308 = vpop.f32.mrf.mxu0
    %1309 = vdwg.mxu0
    %1310 = vrot.lane.b32.xlu0 %v172, 120
    %v1311 = vpop.permute.xlu0 %1310
    %1312 = vrot.lane.b32.xlu0 %v172, 88
    %v1313 = vpop.permute.xlu0 %1312
    %v1314 = vsel %vm183, %v1311, 0
    %v1316 = vsel %vm183, %v1313, 0
    %1318 = vmatprep.subr.mxu0 0.0
    %1319 = vmatpush1.xpose.msra.mxu0 0.0
    %1320 = vmatprep.subr.mxu0 0.0
    %1321 = vmatpush1.xpose.msra.mxu0 0.0
    %1322 = vmatprep.subr.mxu0 0.0
    %1323 = vmatpush1.xpose.msra.mxu0 0.0
    %1324 = vmatprep.subr.mxu0 0.0
    %1325 = vmatpush1.xpose.msra.mxu0 0.0
    %1326 = vmatprep.subr.mxu0 0.0
    %1327 = vmatpush1.xpose.msra.mxu0 0.0
    %1328 = vmatprep.subr.mxu0 0.0
    %1329 = vmatpush1.xpose.msra.mxu0 0.0
    %1330 = vmatprep.subr.mxu0 0.0
    %1331 = vmatpush1.xpose.msra.mxu0 0.0
    %1332 = vmatprep.subr.mxu0 0.0
    %1333 = vmatpush1.xpose.msra.mxu0 0.0
    %1334 = vmatprep.subr.mxu0 0.0
    %1335 = vmatpush1.xpose.msra.mxu0 0.0
    %1336 = vmatprep.subr.mxu0 0.0
    %1337 = vmatpush1.xpose.msra.mxu0 0.0
    %1338 = vmatprep.subr.mxu0 0.0
    %1339 = vmatpush1.xpose.msra.mxu0 0.0
    %1340 = vmatprep.subr.mxu0 0.0
    %1341 = vmatpush1.xpose.msra.mxu0 0.0
    %1342 = vmatprep.subr.mxu0 0.0
    %1343 = vmatpush1.xpose.msra.mxu0 0.0
    %1344 = vmatprep.subr.mxu0 0.0
    %1345 = vmatpush1.xpose.msra.mxu0 0.0
    %1346 = vmatprep.subr.mxu0 0.0
    %1347 = vmatpush1.xpose.msra.mxu0 0.0
    %1348 = vmatprep.subr.mxu0 0.0
    %1349 = vmatpush1.xpose.msra.mxu0 %v1316
    %1350 = vmatprep.subr.mxu0 0.0
    %1351 = vmatpush2.xpose.msra.mxu0 0.0
    %1352 = vmatprep.subr.mxu0 0.0
    %1353 = vmatpush2.xpose.msra.mxu0 0.0
    %1354 = vmatprep.subr.mxu0 0.0
    %1355 = vmatpush2.xpose.msra.mxu0 0.0
    %1356 = vmatprep.subr.mxu0 0.0
    %1357 = vmatpush2.xpose.msra.mxu0 0.0
    %1358 = vmatprep.subr.mxu0 0.0
    %1359 = vmatpush2.xpose.msra.mxu0 0.0
    %1360 = vmatprep.subr.mxu0 0.0
    %1361 = vmatpush2.xpose.msra.mxu0 0.0
    %1362 = vmatprep.subr.mxu0 0.0
    %1363 = vmatpush2.xpose.msra.mxu0 0.0
    %1364 = vmatprep.subr.mxu0 0.0
    %1365 = vmatpush2.xpose.msra.mxu0 0.0
    %1366 = vmatprep.subr.mxu0 0.0
    %1367 = vmatpush2.xpose.msra.mxu0 0.0
    %1368 = vmatprep.subr.mxu0 0.0
    %1369 = vmatpush2.xpose.msra.mxu0 0.0
    %1370 = vmatprep.subr.mxu0 0.0
    %1371 = vmatpush2.xpose.msra.mxu0 0.0
    %1372 = vmatprep.subr.mxu0 0.0
    %1373 = vmatpush2.xpose.msra.mxu0 0.0
    %1374 = vmatprep.subr.mxu0 0.0
    %1375 = vmatpush2.xpose.msra.mxu0 0.0
    %1376 = vmatprep.subr.mxu0 0.0
    %1377 = vmatpush2.xpose.msra.mxu0 0.0
    %1378 = vmatprep.subr.mxu0 0.0
    %1379 = vmatpush2.xpose.msra.mxu0 0.0
    %1380 = vmatprep.subr.mxu0 0.0
    %1381 = vmatpush2.xpose.msra.mxu0 0.0
    %1382 = vmatprep.mubr.f32.mxu0 0.0
    %1383 = vmatmul.mubr.f32.gmra.mxu0 %v1314
    %v1384 = vpop.f32.mrf.mxu0
    %v1385 = vadd.f32 0.0, %v1384
    %v1386 = vpop.f32.mrf.mxu0
    %1387 = vdwg.mxu0
    %v1388 = vmul.f32 %v1385, 0.35355338
    %v1389 = vadd.f32 %v1388, %v1143
    %v1390 = vsel %vm183, %v1389, -inf
    %1391 = vmax.xlane.f32.xlu0 %v1390
    %v1392 = vpop.xlane.xlu0 %1391
    %v1393 = vsub.f32 %v1389, %v1392
    %v1394 = vmul.f32 %v1393, 1.442695
    %v1395 = vpow.pop %v1394
    %v1396 = vsel %vm183, %v1395, 0.0
    %1397 = vadd.xlane.f32.xlu0 %v1396
    %v1398 = vpop.xlane.xlu0 %1397
    %v1399 = vrcp.pop %v1398
    %v1400 = vmul.f32 %v1395, %v1399
    %1401 = vrot.lane.b32.xlu0 %v172, 56
    %v1402 = vpop.permute.xlu0 %1401
    %v1405 = vsel %vm183, %v1400, 0
    %1407 = vmatprep.subr.mxu0 0.0
    %1408 = vmatpush1.msra.mxu0 0.0
    %1409 = vmatprep.subr.mxu0 0.0
    %1410 = vmatpush1.msra.mxu0 0.0
    %1411 = vmatprep.subr.mxu0 0.0
    %1412 = vmatpush1.msra.mxu0 0.0
    %1413 = vmatprep.subr.mxu0 0.0
    %1414 = vmatpush1.msra.mxu0 0.0
    %1415 = vmatprep.subr.mxu0 0.0
    %1416 = vmatpush1.msra.mxu0 0.0
    %1417 = vmatprep.subr.mxu0 0.0
    %1418 = vmatpush1.msra.mxu0 0.0
    %1419 = vmatprep.subr.mxu0 0.0
    %1420 = vmatpush1.msra.mxu0 0.0
    %1421 = vmatprep.subr.mxu0 0.0
    %1422 = vmatpush1.msra.mxu0 0.0
    %1423 = vmatprep.subr.mxu0 0.0
    %1424 = vmatpush1.msra.mxu0 0.0
    %1425 = vmatprep.subr.mxu0 0.0
    %1426 = vmatpush1.msra.mxu0 0.0
    %1427 = vmatprep.subr.mxu0 0.0
    %1428 = vmatpush1.msra.mxu0 0.0
    %1429 = vmatprep.subr.mxu0 0.0
    %1430 = vmatpush1.msra.mxu0 0.0
    %1431 = vmatprep.subr.mxu0 0.0
    %1432 = vmatpush1.msra.mxu0 0.0
    %1433 = vmatprep.subr.mxu0 0.0
    %1434 = vmatpush1.msra.mxu0 0.0
    %1435 = vmatprep.subr.mxu0 0.0
    %1436 = vmatpush1.msra.mxu0 0.0
    %1437 = vmatprep.subr.mxu0 0.0
    %1438 = vmatpush1.msra.mxu0 %v1402
    %1439 = vmatprep.subr.mxu0 0.0
    %1440 = vmatpush2.msra.mxu0 0.0
    %1441 = vmatprep.subr.mxu0 0.0
    %1442 = vmatpush2.msra.mxu0 0.0
    %1443 = vmatprep.subr.mxu0 0.0
    %1444 = vmatpush2.msra.mxu0 0.0
    %1445 = vmatprep.subr.mxu0 0.0
    %1446 = vmatpush2.msra.mxu0 0.0
    %1447 = vmatprep.subr.mxu0 0.0
    %1448 = vmatpush2.msra.mxu0 0.0
    %1449 = vmatprep.subr.mxu0 0.0
    %1450 = vmatpush2.msra.mxu0 0.0
    %1451 = vmatprep.subr.mxu0 0.0
    %1452 = vmatpush2.msra.mxu0 0.0
    %1453 = vmatprep.subr.mxu0 0.0
    %1454 = vmatpush2.msra.mxu0 0.0
    %1455 = vmatprep.subr.mxu0 0.0
    %1456 = vmatpush2.msra.mxu0 0.0
    %1457 = vmatprep.subr.mxu0 0.0
    %1458 = vmatpush2.msra.mxu0 0.0
    %1459 = vmatprep.subr.mxu0 0.0
    %1460 = vmatpush2.msra.mxu0 0.0
    %1461 = vmatprep.subr.mxu0 0.0
    %1462 = vmatpush2.msra.mxu0 0.0
    %1463 = vmatprep.subr.mxu0 0.0
    %1464 = vmatpush2.msra.mxu0 0.0
    %1465 = vmatprep.subr.mxu0 0.0
    %1466 = vmatpush2.msra.mxu0 0.0
    %1467 = vmatprep.subr.mxu0 0.0
    %1468 = vmatpush2.msra.mxu0 0.0
    %1469 = vmatprep.subr.mxu0 0.0
    %1470 = vmatpush2.msra.mxu0 0.0
    %1471 = vmatprep.mubr.f32.mxu0 0.0
    %1472 = vmatmul.mubr.f32.gmra.mxu0 %v1405
    %v1473 = vpop.f32.mrf.mxu0
    %v1474 = vadd.f32 0.0, %v1473
    %v1475 = vpop.f32.mrf.mxu0
    %1476 = vdwg.mxu0
    %v1478 = vsel %vm183, %v1474, 0
    %1480 = vmatprep.subr.mxu0 0.0
    %1481 = vmatpush1.msra.mxu0 0.0
    %1482 = vmatprep.subr.mxu0 0.0
    %1483 = vmatpush1.msra.mxu0 0.0
    %1484 = vmatprep.subr.mxu0 0.0
    %1485 = vmatpush1.msra.mxu0 0.0
    %1486 = vmatprep.subr.mxu0 0.0
    %1487 = vmatpush1.msra.mxu0 0.0
    %1488 = vmatprep.subr.mxu0 0.0
    %1489 = vmatpush1.msra.mxu0 0.0
    %1490 = vmatprep.subr.mxu0 0.0
    %1491 = vmatpush1.msra.mxu0 0.0
    %1492 = vmatprep.subr.mxu0 0.0
    %1493 = vmatpush1.msra.mxu0 0.0
    %1494 = vmatprep.subr.mxu0 0.0
    %1495 = vmatpush1.msra.mxu0 0.0
    %1496 = vmatprep.subr.mxu0 0.0
    %1497 = vmatpush1.msra.mxu0 0.0
    %1498 = vmatprep.subr.mxu0 0.0
    %1499 = vmatpush1.msra.mxu0 0.0
    %1500 = vmatprep.subr.mxu0 0.0
    %1501 = vmatpush1.msra.mxu0 0.0
    %1502 = vmatprep.subr.mxu0 0.0
    %1503 = vmatpush1.msra.mxu0 0.0
    %1504 = vmatprep.subr.mxu0 0.0
    %1505 = vmatpush1.msra.mxu0 0.0
    %1506 = vmatprep.subr.mxu0 0.0
    %1507 = vmatpush1.msra.mxu0 0.0
    %1508 = vmatprep.subr.mxu0 0.0
    %1509 = vmatpush1.msra.mxu0 0.0
    %1510 = vmatprep.subr.mxu0 0.0
    %1511 = vmatpush1.msra.mxu0 %v176
    %1512 = vmatprep.subr.mxu0 0.0
    %1513 = vmatpush2.msra.mxu0 0.0
    %1514 = vmatprep.subr.mxu0 0.0
    %1515 = vmatpush2.msra.mxu0 0.0
    %1516 = vmatprep.subr.mxu0 0.0
    %1517 = vmatpush2.msra.mxu0 0.0
    %1518 = vmatprep.subr.mxu0 0.0
    %1519 = vmatpush2.msra.mxu0 0.0
    %1520 = vmatprep.subr.mxu0 0.0
    %1521 = vmatpush2.msra.mxu0 0.0
    %1522 = vmatprep.subr.mxu0 0.0
    %1523 = vmatpush2.msra.mxu0 0.0
    %1524 = vmatprep.subr.mxu0 0.0
    %1525 = vmatpush2.msra.mxu0 0.0
    %1526 = vmatprep.subr.mxu0 0.0
    %1527 = vmatpush2.msra.mxu0 0.0
    %1528 = vmatprep.subr.mxu0 0.0
    %1529 = vmatpush2.msra.mxu0 0.0
    %1530 = vmatprep.subr.mxu0 0.0
    %1531 = vmatpush2.msra.mxu0 0.0
    %1532 = vmatprep.subr.mxu0 0.0
    %1533 = vmatpush2.msra.mxu0 0.0
    %1534 = vmatprep.subr.mxu0 0.0
    %1535 = vmatpush2.msra.mxu0 0.0
    %1536 = vmatprep.subr.mxu0 0.0
    %1537 = vmatpush2.msra.mxu0 0.0
    %1538 = vmatprep.subr.mxu0 0.0
    %1539 = vmatpush2.msra.mxu0 0.0
    %1540 = vmatprep.subr.mxu0 0.0
    %1541 = vmatpush2.msra.mxu0 0.0
    %1542 = vmatprep.subr.mxu0 0.0
    %1543 = vmatpush2.msra.mxu0 0.0
    %1544 = vmatprep.mubr.f32.mxu0 0.0
    %1545 = vmatmul.mubr.f32.gmra.mxu0 %v1478
    %v1546 = vpop.f32.mrf.mxu0
    %v1547 = vadd.f32 0.0, %v1546
    %v1548 = vpop.f32.mrf.mxu0
    %1549 = vdwg.mxu0
    %v1551 = vsel %vm183, %v1307, 0
    %1553 = vmatprep.subr.mxu0 0.0
    %1554 = vmatpush1.msra.mxu0 0.0
    %1555 = vmatprep.subr.mxu0 0.0
    %1556 = vmatpush1.msra.mxu0 0.0
    %1557 = vmatprep.subr.mxu0 0.0
    %1558 = vmatpush1.msra.mxu0 0.0
    %1559 = vmatprep.subr.mxu0 0.0
    %1560 = vmatpush1.msra.mxu0 0.0
    %1561 = vmatprep.subr.mxu0 0.0
    %1562 = vmatpush1.msra.mxu0 0.0
    %1563 = vmatprep.subr.mxu0 0.0
    %1564 = vmatpush1.msra.mxu0 0.0
    %1565 = vmatprep.subr.mxu0 0.0
    %1566 = vmatpush1.msra.mxu0 0.0
    %1567 = vmatprep.subr.mxu0 0.0
    %1568 = vmatpush1.msra.mxu0 0.0
    %1569 = vmatprep.subr.mxu0 0.0
    %1570 = vmatpush1.msra.mxu0 0.0
    %1571 = vmatprep.subr.mxu0 0.0
    %1572 = vmatpush1.msra.mxu0 0.0
    %1573 = vmatprep.subr.mxu0 0.0
    %1574 = vmatpush1.msra.mxu0 0.0
    %1575 = vmatprep.subr.mxu0 0.0
    %1576 = vmatpush1.msra.mxu0 0.0
    %1577 = vmatprep.subr.mxu0 0.0
    %1578 = vmatpush1.msra.mxu0 0.0
    %1579 = vmatprep.subr.mxu0 0.0
    %1580 = vmatpush1.msra.mxu0 0.0
    %1581 = vmatprep.subr.mxu0 0.0
    %1582 = vmatpush1.msra.mxu0 0.0
    %1583 = vmatprep.subr.mxu0 0.0
    %1584 = vmatpush1.msra.mxu0 %v175
    %1585 = vmatprep.subr.mxu0 0.0
    %1586 = vmatpush2.msra.mxu0 0.0
    %1587 = vmatprep.subr.mxu0 0.0
    %1588 = vmatpush2.msra.mxu0 0.0
    %1589 = vmatprep.subr.mxu0 0.0
    %1590 = vmatpush2.msra.mxu0 0.0
    %1591 = vmatprep.subr.mxu0 0.0
    %1592 = vmatpush2.msra.mxu0 0.0
    %1593 = vmatprep.subr.mxu0 0.0
    %1594 = vmatpush2.msra.mxu0 0.0
    %1595 = vmatprep.subr.mxu0 0.0
    %1596 = vmatpush2.msra.mxu0 0.0
    %1597 = vmatprep.subr.mxu0 0.0
    %1598 = vmatpush2.msra.mxu0 0.0
    %1599 = vmatprep.subr.mxu0 0.0
    %1600 = vmatpush2.msra.mxu0 0.0
    %1601 = vmatprep.subr.mxu0 0.0
    %1602 = vmatpush2.msra.mxu0 0.0
    %1603 = vmatprep.subr.mxu0 0.0
    %1604 = vmatpush2.msra.mxu0 0.0
    %1605 = vmatprep.subr.mxu0 0.0
    %1606 = vmatpush2.msra.mxu0 0.0
    %1607 = vmatprep.subr.mxu0 0.0
    %1608 = vmatpush2.msra.mxu0 0.0
    %1609 = vmatprep.subr.mxu0 0.0
    %1610 = vmatpush2.msra.mxu0 0.0
    %1611 = vmatprep.subr.mxu0 0.0
    %1612 = vmatpush2.msra.mxu0 0.0
    %1613 = vmatprep.subr.mxu0 0.0
    %1614 = vmatpush2.msra.mxu0 0.0
    %1615 = vmatprep.subr.mxu0 0.0
    %1616 = vmatpush2.msra.mxu0 0.0
    %1617 = vmatprep.mubr.f32.mxu0 0.0
    %1618 = vmatmul.mubr.f32.gmra.mxu0 %v1551
    %v1619 = vpop.f32.mrf.mxu0
    %v1620 = vadd.f32 %v1547, %v1619
    %v1621 = vpop.f32.mrf.mxu0
    %1622 = vdwg.mxu0
    %1623 = vrot.lane.b32.xlu0 %v172, 112
    %v1624 = vpop.permute.xlu0 %1623
    %1625 = vrot.lane.b32.xlu0 %v172, 80
    %v1626 = vpop.permute.xlu0 %1625
    %v1627 = vsel %vm183, %v1624, 0
    %v1629 = vsel %vm183, %v1626, 0
    %1631 = vmatprep.subr.mxu0 0.0
    %1632 = vmatpush1.xpose.msra.mxu0 0.0
    %1633 = vmatprep.subr.mxu0 0.0
    %1634 = vmatpush1.xpose.msra.mxu0 0.0
    %1635 = vmatprep.subr.mxu0 0.0
    %1636 = vmatpush1.xpose.msra.mxu0 0.0
    %1637 = vmatprep.subr.mxu0 0.0
    %1638 = vmatpush1.xpose.msra.mxu0 0.0
    %1639 = vmatprep.subr.mxu0 0.0
    %1640 = vmatpush1.xpose.msra.mxu0 0.0
    %1641 = vmatprep.subr.mxu0 0.0
    %1642 = vmatpush1.xpose.msra.mxu0 0.0
    %1643 = vmatprep.subr.mxu0 0.0
    %1644 = vmatpush1.xpose.msra.mxu0 0.0
    %1645 = vmatprep.subr.mxu0 0.0
    %1646 = vmatpush1.xpose.msra.mxu0 0.0
    %1647 = vmatprep.subr.mxu0 0.0
    %1648 = vmatpush1.xpose.msra.mxu0 0.0
    %1649 = vmatprep.subr.mxu0 0.0
    %1650 = vmatpush1.xpose.msra.mxu0 0.0
    %1651 = vmatprep.subr.mxu0 0.0
    %1652 = vmatpush1.xpose.msra.mxu0 0.0
    %1653 = vmatprep.subr.mxu0 0.0
    %1654 = vmatpush1.xpose.msra.mxu0 0.0
    %1655 = vmatprep.subr.mxu0 0.0
    %1656 = vmatpush1.xpose.msra.mxu0 0.0
    %1657 = vmatprep.subr.mxu0 0.0
    %1658 = vmatpush1.xpose.msra.mxu0 0.0
    %1659 = vmatprep.subr.mxu0 0.0
    %1660 = vmatpush1.xpose.msra.mxu0 0.0
    %1661 = vmatprep.subr.mxu0 0.0
    %1662 = vmatpush1.xpose.msra.mxu0 %v1629
    %1663 = vmatprep.subr.mxu0 0.0
    %1664 = vmatpush2.xpose.msra.mxu0 0.0
    %1665 = vmatprep.subr.mxu0 0.0
    %1666 = vmatpush2.xpose.msra.mxu0 0.0
    %1667 = vmatprep.subr.mxu0 0.0
    %1668 = vmatpush2.xpose.msra.mxu0 0.0
    %1669 = vmatprep.subr.mxu0 0.0
    %1670 = vmatpush2.xpose.msra.mxu0 0.0
    %1671 = vmatprep.subr.mxu0 0.0
    %1672 = vmatpush2.xpose.msra.mxu0 0.0
    %1673 = vmatprep.subr.mxu0 0.0
    %1674 = vmatpush2.xpose.msra.mxu0 0.0
    %1675 = vmatprep.subr.mxu0 0.0
    %1676 = vmatpush2.xpose.msra.mxu0 0.0
    %1677 = vmatprep.subr.mxu0 0.0
    %1678 = vmatpush2.xpose.msra.mxu0 0.0
    %1679 = vmatprep.subr.mxu0 0.0
    %1680 = vmatpush2.xpose.msra.mxu0 0.0
    %1681 = vmatprep.subr.mxu0 0.0
    %1682 = vmatpush2.xpose.msra.mxu0 0.0
    %1683 = vmatprep.subr.mxu0 0.0
    %1684 = vmatpush2.xpose.msra.mxu0 0.0
    %1685 = vmatprep.subr.mxu0 0.0
    %1686 = vmatpush2.xpose.msra.mxu0 0.0
    %1687 = vmatprep.subr.mxu0 0.0
    %1688 = vmatpush2.xpose.msra.mxu0 0.0
    %1689 = vmatprep.subr.mxu0 0.0
    %1690 = vmatpush2.xpose.msra.mxu0 0.0
    %1691 = vmatprep.subr.mxu0 0.0
    %1692 = vmatpush2.xpose.msra.mxu0 0.0
    %1693 = vmatprep.subr.mxu0 0.0
    %1694 = vmatpush2.xpose.msra.mxu0 0.0
    %1695 = vmatprep.mubr.f32.mxu0 0.0
    %1696 = vmatmul.mubr.f32.gmra.mxu0 %v1627
    %v1697 = vpop.f32.mrf.mxu0
    %v1698 = vadd.f32 0.0, %v1697
    %v1699 = vpop.f32.mrf.mxu0
    %1700 = vdwg.mxu0
    %v1701 = vmul.f32 %v1698, 0.35355338
    %v1702 = vadd.f32 %v1701, %v1143
    %v1703 = vsel %vm183, %v1702, -inf
    %1704 = vmax.xlane.f32.xlu0 %v1703
    %v1705 = vpop.xlane.xlu0 %1704
    %v1706 = vsub.f32 %v1702, %v1705
    %v1707 = vmul.f32 %v1706, 1.442695
    %v1708 = vpow.pop %v1707
    %v1709 = vsel %vm183, %v1708, 0.0
    %1710 = vadd.xlane.f32.xlu0 %v1709
    %v1711 = vpop.xlane.xlu0 %1710
    %v1712 = vrcp.pop %v1711
    %v1713 = vmul.f32 %v1708, %v1712
    %1714 = vrot.lane.b32.xlu0 %v172, 48
    %v1715 = vpop.permute.xlu0 %1714
    %v1718 = vsel %vm183, %v1713, 0
    %1720 = vmatprep.subr.mxu0 0.0
    %1721 = vmatpush1.msra.mxu0 0.0
    %1722 = vmatprep.subr.mxu0 0.0
    %1723 = vmatpush1.msra.mxu0 0.0
    %1724 = vmatprep.subr.mxu0 0.0
    %1725 = vmatpush1.msra.mxu0 0.0
    %1726 = vmatprep.subr.mxu0 0.0
    %1727 = vmatpush1.msra.mxu0 0.0
    %1728 = vmatprep.subr.mxu0 0.0
    %1729 = vmatpush1.msra.mxu0 0.0
    %1730 = vmatprep.subr.mxu0 0.0
    %1731 = vmatpush1.msra.mxu0 0.0
    %1732 = vmatprep.subr.mxu0 0.0
    %1733 = vmatpush1.msra.mxu0 0.0
    %1734 = vmatprep.subr.mxu0 0.0
    %1735 = vmatpush1.msra.mxu0 0.0
    %1736 = vmatprep.subr.mxu0 0.0
    %1737 = vmatpush1.msra.mxu0 0.0
    %1738 = vmatprep.subr.mxu0 0.0
    %1739 = vmatpush1.msra.mxu0 0.0
    %1740 = vmatprep.subr.mxu0 0.0
    %1741 = vmatpush1.msra.mxu0 0.0
    %1742 = vmatprep.subr.mxu0 0.0
    %1743 = vmatpush1.msra.mxu0 0.0
    %1744 = vmatprep.subr.mxu0 0.0
    %1745 = vmatpush1.msra.mxu0 0.0
    %1746 = vmatprep.subr.mxu0 0.0
    %1747 = vmatpush1.msra.mxu0 0.0
    %1748 = vmatprep.subr.mxu0 0.0
    %1749 = vmatpush1.msra.mxu0 0.0
    %1750 = vmatprep.subr.mxu0 0.0
    %1751 = vmatpush1.msra.mxu0 %v1715
    %1752 = vmatprep.subr.mxu0 0.0
    %1753 = vmatpush2.msra.mxu0 0.0
    %1754 = vmatprep.subr.mxu0 0.0
    %1755 = vmatpush2.msra.mxu0 0.0
    %1756 = vmatprep.subr.mxu0 0.0
    %1757 = vmatpush2.msra.mxu0 0.0
    %1758 = vmatprep.subr.mxu0 0.0
    %1759 = vmatpush2.msra.mxu0 0.0
    %1760 = vmatprep.subr.mxu0 0.0
    %1761 = vmatpush2.msra.mxu0 0.0
    %1762 = vmatprep.subr.mxu0 0.0
    %1763 = vmatpush2.msra.mxu0 0.0
    %1764 = vmatprep.subr.mxu0 0.0
    %1765 = vmatpush2.msra.mxu0 0.0
    %1766 = vmatprep.subr.mxu0 0.0
    %1767 = vmatpush2.msra.mxu0 0.0
    %1768 = vmatprep.subr.mxu0 0.0
    %1769 = vmatpush2.msra.mxu0 0.0
    %1770 = vmatprep.subr.mxu0 0.0
    %1771 = vmatpush2.msra.mxu0 0.0
    %1772 = vmatprep.subr.mxu0 0.0
    %1773 = vmatpush2.msra.mxu0 0.0
    %1774 = vmatprep.subr.mxu0 0.0
    %1775 = vmatpush2.msra.mxu0 0.0
    %1776 = vmatprep.subr.mxu0 0.0
    %1777 = vmatpush2.msra.mxu0 0.0
    %1778 = vmatprep.subr.mxu0 0.0
    %1779 = vmatpush2.msra.mxu0 0.0
    %1780 = vmatprep.subr.mxu0 0.0
    %1781 = vmatpush2.msra.mxu0 0.0
    %1782 = vmatprep.subr.mxu0 0.0
    %1783 = vmatpush2.msra.mxu0 0.0
    %1784 = vmatprep.mubr.f32.mxu0 0.0
    %1785 = vmatmul.mubr.f32.gmra.mxu0 %v1718
    %v1786 = vpop.f32.mrf.mxu0
    %v1787 = vadd.f32 0.0, %v1786
    %v1788 = vpop.f32.mrf.mxu0
    %1789 = vdwg.mxu0
    %v1791 = vsel %vm183, %v1787, 0
    %1793 = vmatprep.subr.mxu0 0.0
    %1794 = vmatpush1.msra.mxu0 0.0
    %1795 = vmatprep.subr.mxu0 0.0
    %1796 = vmatpush1.msra.mxu0 0.0
    %1797 = vmatprep.subr.mxu0 0.0
    %1798 = vmatpush1.msra.mxu0 0.0
    %1799 = vmatprep.subr.mxu0 0.0
    %1800 = vmatpush1.msra.mxu0 0.0
    %1801 = vmatprep.subr.mxu0 0.0
    %1802 = vmatpush1.msra.mxu0 0.0
    %1803 = vmatprep.subr.mxu0 0.0
    %1804 = vmatpush1.msra.mxu0 0.0
    %1805 = vmatprep.subr.mxu0 0.0
    %1806 = vmatpush1.msra.mxu0 0.0
    %1807 = vmatprep.subr.mxu0 0.0
    %1808 = vmatpush1.msra.mxu0 0.0
    %1809 = vmatprep.subr.mxu0 0.0
    %1810 = vmatpush1.msra.mxu0 0.0
    %1811 = vmatprep.subr.mxu0 0.0
    %1812 = vmatpush1.msra.mxu0 0.0
    %1813 = vmatprep.subr.mxu0 0.0
    %1814 = vmatpush1.msra.mxu0 0.0
    %1815 = vmatprep.subr.mxu0 0.0
    %1816 = vmatpush1.msra.mxu0 0.0
    %1817 = vmatprep.subr.mxu0 0.0
    %1818 = vmatpush1.msra.mxu0 0.0
    %1819 = vmatprep.subr.mxu0 0.0
    %1820 = vmatpush1.msra.mxu0 0.0
    %1821 = vmatprep.subr.mxu0 0.0
    %1822 = vmatpush1.msra.mxu0 0.0
    %1823 = vmatprep.subr.mxu0 0.0
    %1824 = vmatpush1.msra.mxu0 %v177
    %1825 = vmatprep.subr.mxu0 0.0
    %1826 = vmatpush2.msra.mxu0 0.0
    %1827 = vmatprep.subr.mxu0 0.0
    %1828 = vmatpush2.msra.mxu0 0.0
    %1829 = vmatprep.subr.mxu0 0.0
    %1830 = vmatpush2.msra.mxu0 0.0
    %1831 = vmatprep.subr.mxu0 0.0
    %1832 = vmatpush2.msra.mxu0 0.0
    %1833 = vmatprep.subr.mxu0 0.0
    %1834 = vmatpush2.msra.mxu0 0.0
    %1835 = vmatprep.subr.mxu0 0.0
    %1836 = vmatpush2.msra.mxu0 0.0
    %1837 = vmatprep.subr.mxu0 0.0
    %1838 = vmatpush2.msra.mxu0 0.0
    %1839 = vmatprep.subr.mxu0 0.0
    %1840 = vmatpush2.msra.mxu0 0.0
    %1841 = vmatprep.subr.mxu0 0.0
    %1842 = vmatpush2.msra.mxu0 0.0
    %1843 = vmatprep.subr.mxu0 0.0
    %1844 = vmatpush2.msra.mxu0 0.0
    %1845 = vmatprep.subr.mxu0 0.0
    %1846 = vmatpush2.msra.mxu0 0.0
    %1847 = vmatprep.subr.mxu0 0.0
    %1848 = vmatpush2.msra.mxu0 0.0
    %1849 = vmatprep.subr.mxu0 0.0
    %1850 = vmatpush2.msra.mxu0 0.0
    %1851 = vmatprep.subr.mxu0 0.0
    %1852 = vmatpush2.msra.mxu0 0.0
    %1853 = vmatprep.subr.mxu0 0.0
    %1854 = vmatpush2.msra.mxu0 0.0
    %1855 = vmatprep.subr.mxu0 0.0
    %1856 = vmatpush2.msra.mxu0 0.0
    %1857 = vmatprep.mubr.f32.mxu0 0.0
    %1858 = vmatmul.mubr.f32.gmra.mxu0 %v1791
    %v1859 = vpop.f32.mrf.mxu0
    %v1860 = vadd.f32 0.0, %v1859
    %v1861 = vpop.f32.mrf.mxu0
    %1862 = vdwg.mxu0
    %v1863 = vadd.f32 %v1620, %v1860
    %1864 = vrot.lane.b32.xlu0 %v172, 104
    %v1865 = vpop.permute.xlu0 %1864
    %1866 = vrot.lane.b32.xlu0 %v172, 72
    %v1867 = vpop.permute.xlu0 %1866
    %v1868 = vsel %vm183, %v1865, 0
    %v1870 = vsel %vm183, %v1867, 0
    %1872 = vmatprep.subr.mxu0 0.0
    %1873 = vmatpush1.xpose.msra.mxu0 0.0
    %1874 = vmatprep.subr.mxu0 0.0
    %1875 = vmatpush1.xpose.msra.mxu0 0.0
    %1876 = vmatprep.subr.mxu0 0.0
    %1877 = vmatpush1.xpose.msra.mxu0 0.0
    %1878 = vmatprep.subr.mxu0 0.0
    %1879 = vmatpush1.xpose.msra.mxu0 0.0
    %1880 = vmatprep.subr.mxu0 0.0
    %1881 = vmatpush1.xpose.msra.mxu0 0.0
    %1882 = vmatprep.subr.mxu0 0.0
    %1883 = vmatpush1.xpose.msra.mxu0 0.0
    %1884 = vmatprep.subr.mxu0 0.0
    %1885 = vmatpush1.xpose.msra.mxu0 0.0
    %1886 = vmatprep.subr.mxu0 0.0
    %1887 = vmatpush1.xpose.msra.mxu0 0.0
    %1888 = vmatprep.subr.mxu0 0.0
    %1889 = vmatpush1.xpose.msra.mxu0 0.0
    %1890 = vmatprep.subr.mxu0 0.0
    %1891 = vmatpush1.xpose.msra.mxu0 0.0
    %1892 = vmatprep.subr.mxu0 0.0
    %1893 = vmatpush1.xpose.msra.mxu0 0.0
    %1894 = vmatprep.subr.mxu0 0.0
    %1895 = vmatpush1.xpose.msra.mxu0 0.0
    %1896 = vmatprep.subr.mxu0 0.0
    %1897 = vmatpush1.xpose.msra.mxu0 0.0
    %1898 = vmatprep.subr.mxu0 0.0
    %1899 = vmatpush1.xpose.msra.mxu0 0.0
    %1900 = vmatprep.subr.mxu0 0.0
    %1901 = vmatpush1.xpose.msra.mxu0 0.0
    %1902 = vmatprep.subr.mxu0 0.0
    %1903 = vmatpush1.xpose.msra.mxu0 %v1870
    %1904 = vmatprep.subr.mxu0 0.0
    %1905 = vmatpush2.xpose.msra.mxu0 0.0
    %1906 = vmatprep.subr.mxu0 0.0
    %1907 = vmatpush2.xpose.msra.mxu0 0.0
    %1908 = vmatprep.subr.mxu0 0.0
    %1909 = vmatpush2.xpose.msra.mxu0 0.0
    %1910 = vmatprep.subr.mxu0 0.0
    %1911 = vmatpush2.xpose.msra.mxu0 0.0
    %1912 = vmatprep.subr.mxu0 0.0
    %1913 = vmatpush2.xpose.msra.mxu0 0.0
    %1914 = vmatprep.subr.mxu0 0.0
    %1915 = vmatpush2.xpose.msra.mxu0 0.0
    %1916 = vmatprep.subr.mxu0 0.0
    %1917 = vmatpush2.xpose.msra.mxu0 0.0
    %1918 = vmatprep.subr.mxu0 0.0
    %1919 = vmatpush2.xpose.msra.mxu0 0.0
    %1920 = vmatprep.subr.mxu0 0.0
    %1921 = vmatpush2.xpose.msra.mxu0 0.0
    %1922 = vmatprep.subr.mxu0 0.0
    %1923 = vmatpush2.xpose.msra.mxu0 0.0
    %1924 = vmatprep.subr.mxu0 0.0
    %1925 = vmatpush2.xpose.msra.mxu0 0.0
    %1926 = vmatprep.subr.mxu0 0.0
    %1927 = vmatpush2.xpose.msra.mxu0 0.0
    %1928 = vmatprep.subr.mxu0 0.0
    %1929 = vmatpush2.xpose.msra.mxu0 0.0
    %1930 = vmatprep.subr.mxu0 0.0
    %1931 = vmatpush2.xpose.msra.mxu0 0.0
    %1932 = vmatprep.subr.mxu0 0.0
    %1933 = vmatpush2.xpose.msra.mxu0 0.0
    %1934 = vmatprep.subr.mxu0 0.0
    %1935 = vmatpush2.xpose.msra.mxu0 0.0
    %1936 = vmatprep.mubr.f32.mxu0 0.0
    %1937 = vmatmul.mubr.f32.gmra.mxu0 %v1868
    %v1938 = vpop.f32.mrf.mxu0
    %v1939 = vadd.f32 0.0, %v1938
    %v1940 = vpop.f32.mrf.mxu0
    %1941 = vdwg.mxu0
    %v1942 = vmul.f32 %v1939, 0.35355338
    %v1943 = vadd.f32 %v1942, %v1143
    %v1944 = vsel %vm183, %v1943, -inf
    %1945 = vmax.xlane.f32.xlu0 %v1944
    %v1946 = vpop.xlane.xlu0 %1945
    %v1947 = vsub.f32 %v1943, %v1946
    %v1948 = vmul.f32 %v1947, 1.442695
    %v1949 = vpow.pop %v1948
    %v1950 = vsel %vm183, %v1949, 0.0
    %1951 = vadd.xlane.f32.xlu0 %v1950
    %v1952 = vpop.xlane.xlu0 %1951
    %v1953 = vrcp.pop %v1952
    %v1954 = vmul.f32 %v1949, %v1953
    %1955 = vrot.lane.b32.xlu0 %v172, 40
    %v1956 = vpop.permute.xlu0 %1955
    %v1959 = vsel %vm183, %v1954, 0
    %1961 = vmatprep.subr.mxu0 0.0
    %1962 = vmatpush1.msra.mxu0 0.0
    %1963 = vmatprep.subr.mxu0 0.0
    %1964 = vmatpush1.msra.mxu0 0.0
    %1965 = vmatprep.subr.mxu0 0.0
    %1966 = vmatpush1.msra.mxu0 0.0
    %1967 = vmatprep.subr.mxu0 0.0
    %1968 = vmatpush1.msra.mxu0 0.0
    %1969 = vmatprep.subr.mxu0 0.0
    %1970 = vmatpush1.msra.mxu0 0.0
    %1971 = vmatprep.subr.mxu0 0.0
    %1972 = vmatpush1.msra.mxu0 0.0
    %1973 = vmatprep.subr.mxu0 0.0
    %1974 = vmatpush1.msra.mxu0 0.0
    %1975 = vmatprep.subr.mxu0 0.0
    %1976 = vmatpush1.msra.mxu0 0.0
    %1977 = vmatprep.subr.mxu0 0.0
    %1978 = vmatpush1.msra.mxu0 0.0
    %1979 = vmatprep.subr.mxu0 0.0
    %1980 = vmatpush1.msra.mxu0 0.0
    %1981 = vmatprep.subr.mxu0 0.0
    %1982 = vmatpush1.msra.mxu0 0.0
    %1983 = vmatprep.subr.mxu0 0.0
    %1984 = vmatpush1.msra.mxu0 0.0
    %1985 = vmatprep.subr.mxu0 0.0
    %1986 = vmatpush1.msra.mxu0 0.0
    %1987 = vmatprep.subr.mxu0 0.0
    %1988 = vmatpush1.msra.mxu0 0.0
    %1989 = vmatprep.subr.mxu0 0.0
    %1990 = vmatpush1.msra.mxu0 0.0
    %1991 = vmatprep.subr.mxu0 0.0
    %1992 = vmatpush1.msra.mxu0 %v1956
    %1993 = vmatprep.subr.mxu0 0.0
    %1994 = vmatpush2.msra.mxu0 0.0
    %1995 = vmatprep.subr.mxu0 0.0
    %1996 = vmatpush2.msra.mxu0 0.0
    %1997 = vmatprep.subr.mxu0 0.0
    %1998 = vmatpush2.msra.mxu0 0.0
    %1999 = vmatprep.subr.mxu0 0.0
    %2000 = vmatpush2.msra.mxu0 0.0
    %2001 = vmatprep.subr.mxu0 0.0
    %2002 = vmatpush2.msra.mxu0 0.0
    %2003 = vmatprep.subr.mxu0 0.0
    %2004 = vmatpush2.msra.mxu0 0.0
    %2005 = vmatprep.subr.mxu0 0.0
    %2006 = vmatpush2.msra.mxu0 0.0
    %2007 = vmatprep.subr.mxu0 0.0
    %2008 = vmatpush2.msra.mxu0 0.0
    %2009 = vmatprep.subr.mxu0 0.0
    %2010 = vmatpush2.msra.mxu0 0.0
    %2011 = vmatprep.subr.mxu0 0.0
    %2012 = vmatpush2.msra.mxu0 0.0
    %2013 = vmatprep.subr.mxu0 0.0
    %2014 = vmatpush2.msra.mxu0 0.0
    %2015 = vmatprep.subr.mxu0 0.0
    %2016 = vmatpush2.msra.mxu0 0.0
    %2017 = vmatprep.subr.mxu0 0.0
    %2018 = vmatpush2.msra.mxu0 0.0
    %2019 = vmatprep.subr.mxu0 0.0
    %2020 = vmatpush2.msra.mxu0 0.0
    %2021 = vmatprep.subr.mxu0 0.0
    %2022 = vmatpush2.msra.mxu0 0.0
    %2023 = vmatprep.subr.mxu0 0.0
    %2024 = vmatpush2.msra.mxu0 0.0
    %2025 = vmatprep.mubr.f32.mxu0 0.0
    %2026 = vmatmul.mubr.f32.gmra.mxu0 %v1959
    %v2027 = vpop.f32.mrf.mxu0
    %v2028 = vadd.f32 0.0, %v2027
    %v2029 = vpop.f32.mrf.mxu0
    %2030 = vdwg.mxu0
    %v2032 = vsel %vm183, %v2028, 0
    %2034 = vmatprep.subr.mxu0 0.0
    %2035 = vmatpush1.msra.mxu0 0.0
    %2036 = vmatprep.subr.mxu0 0.0
    %2037 = vmatpush1.msra.mxu0 0.0
    %2038 = vmatprep.subr.mxu0 0.0
    %2039 = vmatpush1.msra.mxu0 0.0
    %2040 = vmatprep.subr.mxu0 0.0
    %2041 = vmatpush1.msra.mxu0 0.0
    %2042 = vmatprep.subr.mxu0 0.0
    %2043 = vmatpush1.msra.mxu0 0.0
    %2044 = vmatprep.subr.mxu0 0.0
    %2045 = vmatpush1.msra.mxu0 0.0
    %2046 = vmatprep.subr.mxu0 0.0
    %2047 = vmatpush1.msra.mxu0 0.0
    %2048 = vmatprep.subr.mxu0 0.0
    %2049 = vmatpush1.msra.mxu0 0.0
    %2050 = vmatprep.subr.mxu0 0.0
    %2051 = vmatpush1.msra.mxu0 0.0
    %2052 = vmatprep.subr.mxu0 0.0
    %2053 = vmatpush1.msra.mxu0 0.0
    %2054 = vmatprep.subr.mxu0 0.0
    %2055 = vmatpush1.msra.mxu0 0.0
    %2056 = vmatprep.subr.mxu0 0.0
    %2057 = vmatpush1.msra.mxu0 0.0
    %2058 = vmatprep.subr.mxu0 0.0
    %2059 = vmatpush1.msra.mxu0 0.0
    %2060 = vmatprep.subr.mxu0 0.0
    %2061 = vmatpush1.msra.mxu0 0.0
    %2062 = vmatprep.subr.mxu0 0.0
    %2063 = vmatpush1.msra.mxu0 0.0
    %2064 = vmatprep.subr.mxu0 0.0
    %2065 = vmatpush1.msra.mxu0 %v178
    %2066 = vmatprep.subr.mxu0 0.0
    %2067 = vmatpush2.msra.mxu0 0.0
    %2068 = vmatprep.subr.mxu0 0.0
    %2069 = vmatpush2.msra.mxu0 0.0
    %2070 = vmatprep.subr.mxu0 0.0
    %2071 = vmatpush2.msra.mxu0 0.0
    %2072 = vmatprep.subr.mxu0 0.0
    %2073 = vmatpush2.msra.mxu0 0.0
    %2074 = vmatprep.subr.mxu0 0.0
    %2075 = vmatpush2.msra.mxu0 0.0
    %2076 = vmatprep.subr.mxu0 0.0
    %2077 = vmatpush2.msra.mxu0 0.0
    %2078 = vmatprep.subr.mxu0 0.0
    %2079 = vmatpush2.msra.mxu0 0.0
    %2080 = vmatprep.subr.mxu0 0.0
    %2081 = vmatpush2.msra.mxu0 0.0
    %2082 = vmatprep.subr.mxu0 0.0
    %2083 = vmatpush2.msra.mxu0 0.0
    %2084 = vmatprep.subr.mxu0 0.0
    %2085 = vmatpush2.msra.mxu0 0.0
    %2086 = vmatprep.subr.mxu0 0.0
    %2087 = vmatpush2.msra.mxu0 0.0
    %2088 = vmatprep.subr.mxu0 0.0
    %2089 = vmatpush2.msra.mxu0 0.0
    %2090 = vmatprep.subr.mxu0 0.0
    %2091 = vmatpush2.msra.mxu0 0.0
    %2092 = vmatprep.subr.mxu0 0.0
    %2093 = vmatpush2.msra.mxu0 0.0
    %2094 = vmatprep.subr.mxu0 0.0
    %2095 = vmatpush2.msra.mxu0 0.0
    %2096 = vmatprep.subr.mxu0 0.0
    %2097 = vmatpush2.msra.mxu0 0.0
    %2098 = vmatprep.mubr.f32.mxu0 0.0
    %2099 = vmatmul.mubr.f32.gmra.mxu0 %v2032
    %v2100 = vpop.f32.mrf.mxu0
    %v2101 = vadd.f32 0.0, %v2100
    %v2102 = vpop.f32.mrf.mxu0
    %2103 = vdwg.mxu0
    %v2104 = vadd.f32 %v1863, %v2101
    %v2105 = vld [vmem:[%s5] sm:$0x1]
    %v2107 = vlaneseq
    %v2108 = vshrl.u32 %v2107, 7
    %v2109 = vsub.s32 0, %v2108
    %v2110 = vrot.slane %v2105, %v2109
    %v2112 = vadd.f32 %v1141, %v2110
    %v2113 = vadd.f32 %v2104, %v2110
    %v2114 = vadd.f32 %v80, %v2112
    %v2115 = vadd.f32 %v81, %v2113
    %v2116 = vld [vmem:[%s14] sm:$0x1]
    %v2117 = vld [vmem:[%s15] sm:$0x1]
    %v2118 = vsel %vm93, %v2114, 0.0
    %2119 = vadd.xlane.f32.xlu0 %v2118
    %v2120 = vpop.xlane.xlu0 %2119
    %v2121 = vsel %vm93, %v2115, 0.0
    %2122 = vadd.xlane.f32.xlu0 %v2121
    %v2123 = vpop.xlane.xlu0 %2122
    %v2124 = vrcp.pop 32.0
    %v2125 = vmul.f32 %v2120, %v2124
    %v2126 = vmul.f32 %v2123, %v2124
    %v2127 = vsub.f32 %v2114, %v2125
    %v2128 = vsub.f32 %v2115, %v2126
    %v2129 = vmul.f32 %v2127, %v2127
    %v2130 = vmul.f32 %v2128, %v2128
    %v2131 = vsel %vm93, %v2129, 0.0
    %2132 = vadd.xlane.f32.xlu0 %v2131
    %v2133 = vpop.xlane.xlu0 %2132
    %v2134 = vsel %vm93, %v2130, 0.0
    %2135 = vadd.xlane.f32.xlu0 %v2134
    %v2136 = vpop.xlane.xlu0 %2135
    %v2137 = vmul.f32 %v2133, %v2124
    %v2138 = vmul.f32 %v2136, %v2124
    %v2139 = vadd.f32 %v2137, 1e-05
    %v2140 = vadd.f32 %v2138, 1e-05
    %v2141 = vrsqrt.pop %v2139
    %v2142 = vrsqrt.pop %v2140
    %v2143 = vmul.f32 %v2127, %v2141
    %v2144 = vmul.f32 %v2128, %v2142
    %v2146 = vlaneseq
    %v2147 = vshrl.u32 %v2146, 7
    %v2148 = vsub.s32 0, %v2147
    %v2149 = vrot.slane %v2116, %v2148
    %v2151 = vmul.f32 %v2143, %v2149
    %v2152 = vmul.f32 %v2144, %v2149
    %v2154 = vlaneseq
    %v2155 = vshrl.u32 %v2154, 7
    %v2156 = vsub.s32 0, %v2155
    %v2157 = vrot.slane %v2117, %v2156
    %v2159 = vadd.f32 %v2151, %v2157
    %v2160 = vadd.f32 %v2152, %v2157
    %v2161 = vld [vmem:[%s6] sm:$0xff]
    %v2162 = vld [vmem:[%s6 + $0x8] sm:$0xff]
    %v2163 = vld [vmem:[%s6 + $0x10] sm:$0xff]
    %v2164 = vld [vmem:[%s6 + $0x18] sm:$0xff]
    %v2165 = vld [vmem:[%s7] sm:$0x1]
    %v2167 = vlaneseq
    %v2168 = vshrl.u32 %v2167, 7
    %v2169 = vsub.s32 0, %v2168
    %v2170 = vrot.slane %v2165, %v2169
    %v2173 = vsel %vm93, %v2159, 0
    %v2176 = vsel %vm93, %v2160, 0
    %2178 = vmatprep.subr.mxu0 0.0
    %2179 = vmatpush1.msra.mxu0 0.0
    %2180 = vmatprep.subr.mxu0 0.0
    %2181 = vmatpush1.msra.mxu0 0.0
    %2182 = vmatprep.subr.mxu0 0.0
    %2183 = vmatpush1.msra.mxu0 0.0
    %2184 = vmatprep.subr.mxu0 0.0
    %2185 = vmatpush1.msra.mxu0 0.0
    %2186 = vmatprep.subr.mxu0 0.0
    %2187 = vmatpush1.msra.mxu0 0.0
    %2188 = vmatprep.subr.mxu0 0.0
    %2189 = vmatpush1.msra.mxu0 0.0
    %2190 = vmatprep.subr.mxu0 0.0
    %2191 = vmatpush1.msra.mxu0 0.0
    %2192 = vmatprep.subr.mxu0 0.0
    %2193 = vmatpush1.msra.mxu0 0.0
    %2194 = vmatprep.subr.mxu0 0.0
    %2195 = vmatpush1.msra.mxu0 0.0
    %2196 = vmatprep.subr.mxu0 0.0
    %2197 = vmatpush1.msra.mxu0 0.0
    %2198 = vmatprep.subr.mxu0 0.0
    %2199 = vmatpush1.msra.mxu0 0.0
    %2200 = vmatprep.subr.mxu0 0.0
    %2201 = vmatpush1.msra.mxu0 0.0
    %2202 = vmatprep.subr.mxu0 0.0
    %2203 = vmatpush1.msra.mxu0 %v2164
    %2204 = vmatprep.subr.mxu0 0.0
    %2205 = vmatpush1.msra.mxu0 %v2163
    %2206 = vmatprep.subr.mxu0 0.0
    %2207 = vmatpush1.msra.mxu0 %v2162
    %2208 = vmatprep.subr.mxu0 0.0
    %2209 = vmatpush1.msra.mxu0 %v2161
    %2210 = vmatprep.subr.mxu0 0.0
    %2211 = vmatpush2.msra.mxu0 0.0
    %2212 = vmatprep.subr.mxu0 0.0
    %2213 = vmatpush2.msra.mxu0 0.0
    %2214 = vmatprep.subr.mxu0 0.0
    %2215 = vmatpush2.msra.mxu0 0.0
    %2216 = vmatprep.subr.mxu0 0.0
    %2217 = vmatpush2.msra.mxu0 0.0
    %2218 = vmatprep.subr.mxu0 0.0
    %2219 = vmatpush2.msra.mxu0 0.0
    %2220 = vmatprep.subr.mxu0 0.0
    %2221 = vmatpush2.msra.mxu0 0.0
    %2222 = vmatprep.subr.mxu0 0.0
    %2223 = vmatpush2.msra.mxu0 0.0
    %2224 = vmatprep.subr.mxu0 0.0
    %2225 = vmatpush2.msra.mxu0 0.0
    %2226 = vmatprep.subr.mxu0 0.0
    %2227 = vmatpush2.msra.mxu0 0.0
    %2228 = vmatprep.subr.mxu0 0.0
    %2229 = vmatpush2.msra.mxu0 0.0
    %2230 = vmatprep.subr.mxu0 0.0
    %2231 = vmatpush2.msra.mxu0 0.0
    %2232 = vmatprep.subr.mxu0 0.0
    %2233 = vmatpush2.msra.mxu0 0.0
    %2234 = vmatprep.subr.mxu0 0.0
    %2235 = vmatpush2.msra.mxu0 0.0
    %2236 = vmatprep.subr.mxu0 0.0
    %2237 = vmatpush2.msra.mxu0 0.0
    %2238 = vmatprep.subr.mxu0 0.0
    %2239 = vmatpush2.msra.mxu0 0.0
    %2240 = vmatprep.subr.mxu0 0.0
    %2241 = vmatpush2.msra.mxu0 0.0
    %2242 = vmatprep.mubr.f32.mxu0 0.0
    %2243 = vmatmul.mubr.f32.gmra.mxu0 %v2173
    %v2244 = vpop.f32.mrf.mxu0
    %v2245 = vadd.f32 %v2170, %v2244
    %v2246 = vpop.f32.mrf.mxu0
    %2247 = vmatprep.mubr.f32.mxu0 0.0
    %2248 = vmatmul.mubr.f32.gmra.mxu0 %v2176
    %v2249 = vpop.f32.mrf.mxu0
    %v2250 = vadd.f32 %v2170, %v2249
    %v2251 = vpop.f32.mrf.mxu0
    %2252 = vdwg.mxu0
    %v2253 = vld [vmem:[%s1] sm:$0xff]
    %v2254 = vld [vmem:[%s1 + $0x8] sm:$0xff]
    %v2255 = vld [vmem:[%s1 + $0x10] sm:$0xff]
    %v2256 = vld [vmem:[%s1 + $0x18] sm:$0xff]
    %v2257 = vld [vmem:[%s8] sm:$0xff]
    %v2258 = vld [vmem:[%s8 + $0x8] sm:$0xff]
    %v2259 = vld [vmem:[%s8 + $0x10] sm:$0xff]
    %v2260 = vld [vmem:[%s8 + $0x18] sm:$0xff]
    %v2261 = vld [vmem:[%s23] sm:$0xff]
    %2264 = vrot.lane.b32.xlu0 %v2253, 64
    %v2265 = vpop.permute.xlu0 %2264
    %2266 = vrot.lane.b32.xlu0 %v2254, 64
    %v2267 = vpop.permute.xlu0 %2266
    %v2269 = vsel %vm183, %v2245, 0
    %v2271 = vsel %vm183, %v2265, 0
    %v2273 = vsel %vm183, %v2267, 0
    %2275 = vmatprep.subr.mxu0 0.0
    %2276 = vmatpush1.xpose.msra.mxu0 0.0
    %2277 = vmatprep.subr.mxu0 0.0
    %2278 = vmatpush1.xpose.msra.mxu0 0.0
    %2279 = vmatprep.subr.mxu0 0.0
    %2280 = vmatpush1.xpose.msra.mxu0 0.0
    %2281 = vmatprep.subr.mxu0 0.0
    %2282 = vmatpush1.xpose.msra.mxu0 0.0
    %2283 = vmatprep.subr.mxu0 0.0
    %2284 = vmatpush1.xpose.msra.mxu0 0.0
    %2285 = vmatprep.subr.mxu0 0.0
    %2286 = vmatpush1.xpose.msra.mxu0 0.0
    %2287 = vmatprep.subr.mxu0 0.0
    %2288 = vmatpush1.xpose.msra.mxu0 0.0
    %2289 = vmatprep.subr.mxu0 0.0
    %2290 = vmatpush1.xpose.msra.mxu0 0.0
    %2291 = vmatprep.subr.mxu0 0.0
    %2292 = vmatpush1.xpose.msra.mxu0 0.0
    %2293 = vmatprep.subr.mxu0 0.0
    %2294 = vmatpush1.xpose.msra.mxu0 0.0
    %2295 = vmatprep.subr.mxu0 0.0
    %2296 = vmatpush1.xpose.msra.mxu0 0.0
    %2297 = vmatprep.subr.mxu0 0.0
    %2298 = vmatpush1.xpose.msra.mxu0 0.0
    %2299 = vmatprep.subr.mxu0 0.0
    %2300 = vmatpush1.xpose.msra.mxu0 0.0
    %2301 = vmatprep.subr.mxu0 0.0
    %2302 = vmatpush1.xpose.msra.mxu0 0.0
    %2303 = vmatprep.subr.mxu0 0.0
    %2304 = vmatpush1.xpose.msra.mxu0 %v2273
    %2305 = vmatprep.subr.mxu0 0.0
    %2306 = vmatpush1.xpose.msra.mxu0 %v2271
    %2307 = vmatprep.subr.mxu0 0.0
    %2308 = vmatpush2.xpose.msra.mxu0 0.0
    %2309 = vmatprep.subr.mxu0 0.0
    %2310 = vmatpush2.xpose.msra.mxu0 0.0
    %2311 = vmatprep.subr.mxu0 0.0
    %2312 = vmatpush2.xpose.msra.mxu0 0.0
    %2313 = vmatprep.subr.mxu0 0.0
    %2314 = vmatpush2.xpose.msra.mxu0 0.0
    %2315 = vmatprep.subr.mxu0 0.0
    %2316 = vmatpush2.xpose.msra.mxu0 0.0
    %2317 = vmatprep.subr.mxu0 0.0
    %2318 = vmatpush2.xpose.msra.mxu0 0.0
    %2319 = vmatprep.subr.mxu0 0.0
    %2320 = vmatpush2.xpose.msra.mxu0 0.0
    %2321 = vmatprep.subr.mxu0 0.0
    %2322 = vmatpush2.xpose.msra.mxu0 0.0
    %2323 = vmatprep.subr.mxu0 0.0
    %2324 = vmatpush2.xpose.msra.mxu0 0.0
    %2325 = vmatprep.subr.mxu0 0.0
    %2326 = vmatpush2.xpose.msra.mxu0 0.0
    %2327 = vmatprep.subr.mxu0 0.0
    %2328 = vmatpush2.xpose.msra.mxu0 0.0
    %2329 = vmatprep.subr.mxu0 0.0
    %2330 = vmatpush2.xpose.msra.mxu0 0.0
    %2331 = vmatprep.subr.mxu0 0.0
    %2332 = vmatpush2.xpose.msra.mxu0 0.0
    %2333 = vmatprep.subr.mxu0 0.0
    %2334 = vmatpush2.xpose.msra.mxu0 0.0
    %2335 = vmatprep.subr.mxu0 0.0
    %2336 = vmatpush2.xpose.msra.mxu0 0.0
    %2337 = vmatprep.subr.mxu0 0.0
    %2338 = vmatpush2.xpose.msra.mxu0 0.0
    %2339 = vmatprep.mubr.f32.mxu0 0.0
    %2340 = vmatmul.mubr.f32.gmra.mxu0 %v2269
    %v2341 = vpop.f32.mrf.mxu0
    %v2342 = vadd.f32 0.0, %v2341
    %v2343 = vpop.f32.mrf.mxu0
    %2344 = vdwg.mxu0
    %v2345 = vmul.f32 %v2342, 0.35355338
    %v2346 = vadd.f32 %v2345, %v2261
    %vm2347 = vcmask 130048
    %v2348 = vsel %vm2347, %v2346, -inf
    %2349 = vmax.xlane.f32.xlu0 %v2348
    %v2350 = vpop.xlane.xlu0 %2349
    %v2351 = vsub.f32 %v2346, %v2350
    %v2352 = vmul.f32 %v2351, 1.442695
    %v2353 = vpow.pop %v2352
    %v2354 = vsel %vm2347, %v2353, 0.0
    %2355 = vadd.xlane.f32.xlu0 %v2354
    %v2356 = vpop.xlane.xlu0 %2355
    %v2357 = vrcp.pop %v2356
    %v2358 = vmul.f32 %v2353, %v2357
    %2359 = vrot.lane.b32.xlu0 %v2253, 32
    %v2360 = vpop.permute.xlu0 %2359
    %2361 = vrot.lane.b32.xlu0 %v2254, 32
    %v2362 = vpop.permute.xlu0 %2361
    %v2366 = vsel %vm2347, %v2358, 0
    %2368 = vmatprep.subr.mxu0 0.0
    %2369 = vmatpush1.msra.mxu0 0.0
    %2370 = vmatprep.subr.mxu0 0.0
    %2371 = vmatpush1.msra.mxu0 0.0
    %2372 = vmatprep.subr.mxu0 0.0
    %2373 = vmatpush1.msra.mxu0 0.0
    %2374 = vmatprep.subr.mxu0 0.0
    %2375 = vmatpush1.msra.mxu0 0.0
    %2376 = vmatprep.subr.mxu0 0.0
    %2377 = vmatpush1.msra.mxu0 0.0
    %2378 = vmatprep.subr.mxu0 0.0
    %2379 = vmatpush1.msra.mxu0 0.0
    %2380 = vmatprep.subr.mxu0 0.0
    %2381 = vmatpush1.msra.mxu0 0.0
    %2382 = vmatprep.subr.mxu0 0.0
    %2383 = vmatpush1.msra.mxu0 0.0
    %2384 = vmatprep.subr.mxu0 0.0
    %2385 = vmatpush1.msra.mxu0 0.0
    %2386 = vmatprep.subr.mxu0 0.0
    %2387 = vmatpush1.msra.mxu0 0.0
    %2388 = vmatprep.subr.mxu0 0.0
    %2389 = vmatpush1.msra.mxu0 0.0
    %2390 = vmatprep.subr.mxu0 0.0
    %2391 = vmatpush1.msra.mxu0 0.0
    %2392 = vmatprep.subr.mxu0 0.0
    %2393 = vmatpush1.msra.mxu0 0.0
    %2394 = vmatprep.subr.mxu0 0.0
    %2395 = vmatpush1.msra.mxu0 0.0
    %2396 = vmatprep.subr.mxu0 0.0
    %2397 = vmatpush1.msra.mxu0 %v2362
    %2398 = vmatprep.subr.mxu0 0.0
    %2399 = vmatpush1.msra.mxu0 %v2360
    %2400 = vmatprep.subr.mxu0 0.0
    %2401 = vmatpush2.msra.mxu0 0.0
    %2402 = vmatprep.subr.mxu0 0.0
    %2403 = vmatpush2.msra.mxu0 0.0
    %2404 = vmatprep.subr.mxu0 0.0
    %2405 = vmatpush2.msra.mxu0 0.0
    %2406 = vmatprep.subr.mxu0 0.0
    %2407 = vmatpush2.msra.mxu0 0.0
    %2408 = vmatprep.subr.mxu0 0.0
    %2409 = vmatpush2.msra.mxu0 0.0
    %2410 = vmatprep.subr.mxu0 0.0
    %2411 = vmatpush2.msra.mxu0 0.0
    %2412 = vmatprep.subr.mxu0 0.0
    %2413 = vmatpush2.msra.mxu0 0.0
    %2414 = vmatprep.subr.mxu0 0.0
    %2415 = vmatpush2.msra.mxu0 0.0
    %2416 = vmatprep.subr.mxu0 0.0
    %2417 = vmatpush2.msra.mxu0 0.0
    %2418 = vmatprep.subr.mxu0 0.0
    %2419 = vmatpush2.msra.mxu0 0.0
    %2420 = vmatprep.subr.mxu0 0.0
    %2421 = vmatpush2.msra.mxu0 0.0
    %2422 = vmatprep.subr.mxu0 0.0
    %2423 = vmatpush2.msra.mxu0 0.0
    %2424 = vmatprep.subr.mxu0 0.0
    %2425 = vmatpush2.msra.mxu0 0.0
    %2426 = vmatprep.subr.mxu0 0.0
    %2427 = vmatpush2.msra.mxu0 0.0
    %2428 = vmatprep.subr.mxu0 0.0
    %2429 = vmatpush2.msra.mxu0 0.0
    %2430 = vmatprep.subr.mxu0 0.0
    %2431 = vmatpush2.msra.mxu0 0.0
    %2432 = vmatprep.mubr.f32.mxu0 0.0
    %2433 = vmatmul.mubr.f32.gmra.mxu0 %v2366
    %v2434 = vpop.f32.mrf.mxu0
    %v2435 = vadd.f32 0.0, %v2434
    %v2436 = vpop.f32.mrf.mxu0
    %2437 = vdwg.mxu0
    %2438 = vrot.lane.b32.xlu0 %v2245, 120
    %v2439 = vpop.permute.xlu0 %2438
    %2440 = vrot.lane.b32.xlu0 %v2253, 56
    %v2441 = vpop.permute.xlu0 %2440
    %2442 = vrot.lane.b32.xlu0 %v2254, 56
    %v2443 = vpop.permute.xlu0 %2442
    %v2444 = vsel %vm183, %v2439, 0
    %v2446 = vsel %vm183, %v2441, 0
    %v2448 = vsel %vm183, %v2443, 0
    %2450 = vmatprep.subr.mxu0 0.0
    %2451 = vmatpush1.xpose.msra.mxu0 0.0
    %2452 = vmatprep.subr.mxu0 0.0
    %2453 = vmatpush1.xpose.msra.mxu0 0.0
    %2454 = vmatprep.subr.mxu0 0.0
    %2455 = vmatpush1.xpose.msra.mxu0 0.0
    %2456 = vmatprep.subr.mxu0 0.0
    %2457 = vmatpush1.xpose.msra.mxu0 0.0
    %2458 = vmatprep.subr.mxu0 0.0
    %2459 = vmatpush1.xpose.msra.mxu0 0.0
    %2460 = vmatprep.subr.mxu0 0.0
    %2461 = vmatpush1.xpose.msra.mxu0 0.0
    %2462 = vmatprep.subr.mxu0 0.0
    %2463 = vmatpush1.xpose.msra.mxu0 0.0
    %2464 = vmatprep.subr.mxu0 0.0
    %2465 = vmatpush1.xpose.msra.mxu0 0.0
    %2466 = vmatprep.subr.mxu0 0.0
    %2467 = vmatpush1.xpose.msra.mxu0 0.0
    %2468 = vmatprep.subr.mxu0 0.0
    %2469 = vmatpush1.xpose.msra.mxu0 0.0
    %2470 = vmatprep.subr.mxu0 0.0
    %2471 = vmatpush1.xpose.msra.mxu0 0.0
    %2472 = vmatprep.subr.mxu0 0.0
    %2473 = vmatpush1.xpose.msra.mxu0 0.0
    %2474 = vmatprep.subr.mxu0 0.0
    %2475 = vmatpush1.xpose.msra.mxu0 0.0
    %2476 = vmatprep.subr.mxu0 0.0
    %2477 = vmatpush1.xpose.msra.mxu0 0.0
    %2478 = vmatprep.subr.mxu0 0.0
    %2479 = vmatpush1.xpose.msra.mxu0 %v2448
    %2480 = vmatprep.subr.mxu0 0.0
    %2481 = vmatpush1.xpose.msra.mxu0 %v2446
    %2482 = vmatprep.subr.mxu0 0.0
    %2483 = vmatpush2.xpose.msra.mxu0 0.0
    %2484 = vmatprep.subr.mxu0 0.0
    %2485 = vmatpush2.xpose.msra.mxu0 0.0
    %2486 = vmatprep.subr.mxu0 0.0
    %2487 = vmatpush2.xpose.msra.mxu0 0.0
    %2488 = vmatprep.subr.mxu0 0.0
    %2489 = vmatpush2.xpose.msra.mxu0 0.0
    %2490 = vmatprep.subr.mxu0 0.0
    %2491 = vmatpush2.xpose.msra.mxu0 0.0
    %2492 = vmatprep.subr.mxu0 0.0
    %2493 = vmatpush2.xpose.msra.mxu0 0.0
    %2494 = vmatprep.subr.mxu0 0.0
    %2495 = vmatpush2.xpose.msra.mxu0 0.0
    %2496 = vmatprep.subr.mxu0 0.0
    %2497 = vmatpush2.xpose.msra.mxu0 0.0
    %2498 = vmatprep.subr.mxu0 0.0
    %2499 = vmatpush2.xpose.msra.mxu0 0.0
    %2500 = vmatprep.subr.mxu0 0.0
    %2501 = vmatpush2.xpose.msra.mxu0 0.0
    %2502 = vmatprep.subr.mxu0 0.0
    %2503 = vmatpush2.xpose.msra.mxu0 0.0
    %2504 = vmatprep.subr.mxu0 0.0
    %2505 = vmatpush2.xpose.msra.mxu0 0.0
    %2506 = vmatprep.subr.mxu0 0.0
    %2507 = vmatpush2.xpose.msra.mxu0 0.0
    %2508 = vmatprep.subr.mxu0 0.0
    %2509 = vmatpush2.xpose.msra.mxu0 0.0
    %2510 = vmatprep.subr.mxu0 0.0
    %2511 = vmatpush2.xpose.msra.mxu0 0.0
    %2512 = vmatprep.subr.mxu0 0.0
    %2513 = vmatpush2.xpose.msra.mxu0 0.0
    %2514 = vmatprep.mubr.f32.mxu0 0.0
    %2515 = vmatmul.mubr.f32.gmra.mxu0 %v2444
    %v2516 = vpop.f32.mrf.mxu0
    %v2517 = vadd.f32 0.0, %v2516
    %v2518 = vpop.f32.mrf.mxu0
    %2519 = vdwg.mxu0
    %v2520 = vmul.f32 %v2517, 0.35355338
    %v2521 = vadd.f32 %v2520, %v2261
    %v2522 = vsel %vm2347, %v2521, -inf
    %2523 = vmax.xlane.f32.xlu0 %v2522
    %v2524 = vpop.xlane.xlu0 %2523
    %v2525 = vsub.f32 %v2521, %v2524
    %v2526 = vmul.f32 %v2525, 1.442695
    %v2527 = vpow.pop %v2526
    %v2528 = vsel %vm2347, %v2527, 0.0
    %2529 = vadd.xlane.f32.xlu0 %v2528
    %v2530 = vpop.xlane.xlu0 %2529
    %v2531 = vrcp.pop %v2530
    %v2532 = vmul.f32 %v2527, %v2531
    %v2533 = vadd.f32 %v2358, %v2532
    %2534 = vrot.lane.b32.xlu0 %v2253, 24
    %v2535 = vpop.permute.xlu0 %2534
    %2536 = vrot.lane.b32.xlu0 %v2254, 24
    %v2537 = vpop.permute.xlu0 %2536
    %v2541 = vsel %vm2347, %v2532, 0
    %2543 = vmatprep.subr.mxu0 0.0
    %2544 = vmatpush1.msra.mxu0 0.0
    %2545 = vmatprep.subr.mxu0 0.0
    %2546 = vmatpush1.msra.mxu0 0.0
    %2547 = vmatprep.subr.mxu0 0.0
    %2548 = vmatpush1.msra.mxu0 0.0
    %2549 = vmatprep.subr.mxu0 0.0
    %2550 = vmatpush1.msra.mxu0 0.0
    %2551 = vmatprep.subr.mxu0 0.0
    %2552 = vmatpush1.msra.mxu0 0.0
    %2553 = vmatprep.subr.mxu0 0.0
    %2554 = vmatpush1.msra.mxu0 0.0
    %2555 = vmatprep.subr.mxu0 0.0
    %2556 = vmatpush1.msra.mxu0 0.0
    %2557 = vmatprep.subr.mxu0 0.0
    %2558 = vmatpush1.msra.mxu0 0.0
    %2559 = vmatprep.subr.mxu0 0.0
    %2560 = vmatpush1.msra.mxu0 0.0
    %2561 = vmatprep.subr.mxu0 0.0
    %2562 = vmatpush1.msra.mxu0 0.0
    %2563 = vmatprep.subr.mxu0 0.0
    %2564 = vmatpush1.msra.mxu0 0.0
    %2565 = vmatprep.subr.mxu0 0.0
    %2566 = vmatpush1.msra.mxu0 0.0
    %2567 = vmatprep.subr.mxu0 0.0
    %2568 = vmatpush1.msra.mxu0 0.0
    %2569 = vmatprep.subr.mxu0 0.0
    %2570 = vmatpush1.msra.mxu0 0.0
    %2571 = vmatprep.subr.mxu0 0.0
    %2572 = vmatpush1.msra.mxu0 %v2537
    %2573 = vmatprep.subr.mxu0 0.0
    %2574 = vmatpush1.msra.mxu0 %v2535
    %2575 = vmatprep.subr.mxu0 0.0
    %2576 = vmatpush2.msra.mxu0 0.0
    %2577 = vmatprep.subr.mxu0 0.0
    %2578 = vmatpush2.msra.mxu0 0.0
    %2579 = vmatprep.subr.mxu0 0.0
    %2580 = vmatpush2.msra.mxu0 0.0
    %2581 = vmatprep.subr.mxu0 0.0
    %2582 = vmatpush2.msra.mxu0 0.0
    %2583 = vmatprep.subr.mxu0 0.0
    %2584 = vmatpush2.msra.mxu0 0.0
    %2585 = vmatprep.subr.mxu0 0.0
    %2586 = vmatpush2.msra.mxu0 0.0
    %2587 = vmatprep.subr.mxu0 0.0
    %2588 = vmatpush2.msra.mxu0 0.0
    %2589 = vmatprep.subr.mxu0 0.0
    %2590 = vmatpush2.msra.mxu0 0.0
    %2591 = vmatprep.subr.mxu0 0.0
    %2592 = vmatpush2.msra.mxu0 0.0
    %2593 = vmatprep.subr.mxu0 0.0
    %2594 = vmatpush2.msra.mxu0 0.0
    %2595 = vmatprep.subr.mxu0 0.0
    %2596 = vmatpush2.msra.mxu0 0.0
    %2597 = vmatprep.subr.mxu0 0.0
    %2598 = vmatpush2.msra.mxu0 0.0
    %2599 = vmatprep.subr.mxu0 0.0
    %2600 = vmatpush2.msra.mxu0 0.0
    %2601 = vmatprep.subr.mxu0 0.0
    %2602 = vmatpush2.msra.mxu0 0.0
    %2603 = vmatprep.subr.mxu0 0.0
    %2604 = vmatpush2.msra.mxu0 0.0
    %2605 = vmatprep.subr.mxu0 0.0
    %2606 = vmatpush2.msra.mxu0 0.0
    %2607 = vmatprep.mubr.f32.mxu0 0.0
    %2608 = vmatmul.mubr.f32.gmra.mxu0 %v2541
    %v2609 = vpop.f32.mrf.mxu0
    %v2610 = vadd.f32 0.0, %v2609
    %v2611 = vpop.f32.mrf.mxu0
    %2612 = vdwg.mxu0
    %v2614 = vsel %vm183, %v2610, 0
    %2616 = vmatprep.subr.mxu0 0.0
    %2617 = vmatpush1.msra.mxu0 0.0
    %2618 = vmatprep.subr.mxu0 0.0
    %2619 = vmatpush1.msra.mxu0 0.0
    %2620 = vmatprep.subr.mxu0 0.0
    %2621 = vmatpush1.msra.mxu0 0.0
    %2622 = vmatprep.subr.mxu0 0.0
    %2623 = vmatpush1.msra.mxu0 0.0
    %2624 = vmatprep.subr.mxu0 0.0
    %2625 = vmatpush1.msra.mxu0 0.0
    %2626 = vmatprep.subr.mxu0 0.0
    %2627 = vmatpush1.msra.mxu0 0.0
    %2628 = vmatprep.subr.mxu0 0.0
    %2629 = vmatpush1.msra.mxu0 0.0
    %2630 = vmatprep.subr.mxu0 0.0
    %2631 = vmatpush1.msra.mxu0 0.0
    %2632 = vmatprep.subr.mxu0 0.0
    %2633 = vmatpush1.msra.mxu0 0.0
    %2634 = vmatprep.subr.mxu0 0.0
    %2635 = vmatpush1.msra.mxu0 0.0
    %2636 = vmatprep.subr.mxu0 0.0
    %2637 = vmatpush1.msra.mxu0 0.0
    %2638 = vmatprep.subr.mxu0 0.0
    %2639 = vmatpush1.msra.mxu0 0.0
    %2640 = vmatprep.subr.mxu0 0.0
    %2641 = vmatpush1.msra.mxu0 0.0
    %2642 = vmatprep.subr.mxu0 0.0
    %2643 = vmatpush1.msra.mxu0 0.0
    %2644 = vmatprep.subr.mxu0 0.0
    %2645 = vmatpush1.msra.mxu0 0.0
    %2646 = vmatprep.subr.mxu0 0.0
    %2647 = vmatpush1.msra.mxu0 %v2258
    %2648 = vmatprep.subr.mxu0 0.0
    %2649 = vmatpush2.msra.mxu0 0.0
    %2650 = vmatprep.subr.mxu0 0.0
    %2651 = vmatpush2.msra.mxu0 0.0
    %2652 = vmatprep.subr.mxu0 0.0
    %2653 = vmatpush2.msra.mxu0 0.0
    %2654 = vmatprep.subr.mxu0 0.0
    %2655 = vmatpush2.msra.mxu0 0.0
    %2656 = vmatprep.subr.mxu0 0.0
    %2657 = vmatpush2.msra.mxu0 0.0
    %2658 = vmatprep.subr.mxu0 0.0
    %2659 = vmatpush2.msra.mxu0 0.0
    %2660 = vmatprep.subr.mxu0 0.0
    %2661 = vmatpush2.msra.mxu0 0.0
    %2662 = vmatprep.subr.mxu0 0.0
    %2663 = vmatpush2.msra.mxu0 0.0
    %2664 = vmatprep.subr.mxu0 0.0
    %2665 = vmatpush2.msra.mxu0 0.0
    %2666 = vmatprep.subr.mxu0 0.0
    %2667 = vmatpush2.msra.mxu0 0.0
    %2668 = vmatprep.subr.mxu0 0.0
    %2669 = vmatpush2.msra.mxu0 0.0
    %2670 = vmatprep.subr.mxu0 0.0
    %2671 = vmatpush2.msra.mxu0 0.0
    %2672 = vmatprep.subr.mxu0 0.0
    %2673 = vmatpush2.msra.mxu0 0.0
    %2674 = vmatprep.subr.mxu0 0.0
    %2675 = vmatpush2.msra.mxu0 0.0
    %2676 = vmatprep.subr.mxu0 0.0
    %2677 = vmatpush2.msra.mxu0 0.0
    %2678 = vmatprep.subr.mxu0 0.0
    %2679 = vmatpush2.msra.mxu0 0.0
    %2680 = vmatprep.mubr.f32.mxu0 0.0
    %2681 = vmatmul.mubr.f32.gmra.mxu0 %v2614
    %v2682 = vpop.f32.mrf.mxu0
    %v2683 = vadd.f32 0.0, %v2682
    %v2684 = vpop.f32.mrf.mxu0
    %2685 = vdwg.mxu0
    %v2687 = vsel %vm183, %v2435, 0
    %2689 = vmatprep.subr.mxu0 0.0
    %2690 = vmatpush1.msra.mxu0 0.0
    %2691 = vmatprep.subr.mxu0 0.0
    %2692 = vmatpush1.msra.mxu0 0.0
    %2693 = vmatprep.subr.mxu0 0.0
    %2694 = vmatpush1.msra.mxu0 0.0
    %2695 = vmatprep.subr.mxu0 0.0
    %2696 = vmatpush1.msra.mxu0 0.0
    %2697 = vmatprep.subr.mxu0 0.0
    %2698 = vmatpush1.msra.mxu0 0.0
    %2699 = vmatprep.subr.mxu0 0.0
    %2700 = vmatpush1.msra.mxu0 0.0
    %2701 = vmatprep.subr.mxu0 0.0
    %2702 = vmatpush1.msra.mxu0 0.0
    %2703 = vmatprep.subr.mxu0 0.0
    %2704 = vmatpush1.msra.mxu0 0.0
    %2705 = vmatprep.subr.mxu0 0.0
    %2706 = vmatpush1.msra.mxu0 0.0
    %2707 = vmatprep.subr.mxu0 0.0
    %2708 = vmatpush1.msra.mxu0 0.0
    %2709 = vmatprep.subr.mxu0 0.0
    %2710 = vmatpush1.msra.mxu0 0.0
    %2711 = vmatprep.subr.mxu0 0.0
    %2712 = vmatpush1.msra.mxu0 0.0
    %2713 = vmatprep.subr.mxu0 0.0
    %2714 = vmatpush1.msra.mxu0 0.0
    %2715 = vmatprep.subr.mxu0 0.0
    %2716 = vmatpush1.msra.mxu0 0.0
    %2717 = vmatprep.subr.mxu0 0.0
    %2718 = vmatpush1.msra.mxu0 0.0
    %2719 = vmatprep.subr.mxu0 0.0
    %2720 = vmatpush1.msra.mxu0 %v2257
    %2721 = vmatprep.subr.mxu0 0.0
    %2722 = vmatpush2.msra.mxu0 0.0
    %2723 = vmatprep.subr.mxu0 0.0
    %2724 = vmatpush2.msra.mxu0 0.0
    %2725 = vmatprep.subr.mxu0 0.0
    %2726 = vmatpush2.msra.mxu0 0.0
    %2727 = vmatprep.subr.mxu0 0.0
    %2728 = vmatpush2.msra.mxu0 0.0
    %2729 = vmatprep.subr.mxu0 0.0
    %2730 = vmatpush2.msra.mxu0 0.0
    %2731 = vmatprep.subr.mxu0 0.0
    %2732 = vmatpush2.msra.mxu0 0.0
    %2733 = vmatprep.subr.mxu0 0.0
    %2734 = vmatpush2.msra.mxu0 0.0
    %2735 = vmatprep.subr.mxu0 0.0
    %2736 = vmatpush2.msra.mxu0 0.0
    %2737 = vmatprep.subr.mxu0 0.0
    %2738 = vmatpush2.msra.mxu0 0.0
    %2739 = vmatprep.subr.mxu0 0.0
    %2740 = vmatpush2.msra.mxu0 0.0
    %2741 = vmatprep.subr.mxu0 0.0
    %2742 = vmatpush2.msra.mxu0 0.0
    %2743 = vmatprep.subr.mxu0 0.0
    %2744 = vmatpush2.msra.mxu0 0.0
    %2745 = vmatprep.subr.mxu0 0.0
    %2746 = vmatpush2.msra.mxu0 0.0
    %2747 = vmatprep.subr.mxu0 0.0
    %2748 = vmatpush2.msra.mxu0 0.0
    %2749 = vmatprep.subr.mxu0 0.0
    %2750 = vmatpush2.msra.mxu0 0.0
    %2751 = vmatprep.subr.mxu0 0.0
    %2752 = vmatpush2.msra.mxu0 0.0
    %2753 = vmatprep.mubr.f32.mxu0 0.0
    %2754 = vmatmul.mubr.f32.gmra.mxu0 %v2687
    %v2755 = vpop.f32.mrf.mxu0
    %v2756 = vadd.f32 %v2683, %v2755
    %v2757 = vpop.f32.mrf.mxu0
    %2758 = vdwg.mxu0
    %2759 = vrot.lane.b32.xlu0 %v2245, 112
    %v2760 = vpop.permute.xlu0 %2759
    %2761 = vrot.lane.b32.xlu0 %v2253, 48
    %v2762 = vpop.permute.xlu0 %2761
    %2763 = vrot.lane.b32.xlu0 %v2254, 48
    %v2764 = vpop.permute.xlu0 %2763
    %v2765 = vsel %vm183, %v2760, 0
    %v2767 = vsel %vm183, %v2762, 0
    %v2769 = vsel %vm183, %v2764, 0
    %2771 = vmatprep.subr.mxu0 0.0
    %2772 = vmatpush1.xpose.msra.mxu0 0.0
    %2773 = vmatprep.subr.mxu0 0.0
    %2774 = vmatpush1.xpose.msra.mxu0 0.0
    %2775 = vmatprep.subr.mxu0 0.0
    %2776 = vmatpush1.xpose.msra.mxu0 0.0
    %2777 = vmatprep.subr.mxu0 0.0
    %2778 = vmatpush1.xpose.msra.mxu0 0.0
    %2779 = vmatprep.subr.mxu0 0.0
    %2780 = vmatpush1.xpose.msra.mxu0 0.0
    %2781 = vmatprep.subr.mxu0 0.0
    %2782 = vmatpush1.xpose.msra.mxu0 0.0
    %2783 = vmatprep.subr.mxu0 0.0
    %2784 = vmatpush1.xpose.msra.mxu0 0.0
    %2785 = vmatprep.subr.mxu0 0.0
    %2786 = vmatpush1.xpose.msra.mxu0 0.0
    %2787 = vmatprep.subr.mxu0 0.0
    %2788 = vmatpush1.xpose.msra.mxu0 0.0
    %2789 = vmatprep.subr.mxu0 0.0
    %2790 = vmatpush1.xpose.msra.mxu0 0.0
    %2791 = vmatprep.subr.mxu0 0.0
    %2792 = vmatpush1.xpose.msra.mxu0 0.0
    %2793 = vmatprep.subr.mxu0 0.0
    %2794 = vmatpush1.xpose.msra.mxu0 0.0
    %2795 = vmatprep.subr.mxu0 0.0
    %2796 = vmatpush1.xpose.msra.mxu0 0.0
    %2797 = vmatprep.subr.mxu0 0.0
    %2798 = vmatpush1.xpose.msra.mxu0 0.0
    %2799 = vmatprep.subr.mxu0 0.0
    %2800 = vmatpush1.xpose.msra.mxu0 %v2769
    %2801 = vmatprep.subr.mxu0 0.0
    %2802 = vmatpush1.xpose.msra.mxu0 %v2767
    %2803 = vmatprep.subr.mxu0 0.0
    %2804 = vmatpush2.xpose.msra.mxu0 0.0
    %2805 = vmatprep.subr.mxu0 0.0
    %2806 = vmatpush2.xpose.msra.mxu0 0.0
    %2807 = vmatprep.subr.mxu0 0.0
    %2808 = vmatpush2.xpose.msra.mxu0 0.0
    %2809 = vmatprep.subr.mxu0 0.0
    %2810 = vmatpush2.xpose.msra.mxu0 0.0
    %2811 = vmatprep.subr.mxu0 0.0
    %2812 = vmatpush2.xpose.msra.mxu0 0.0
    %2813 = vmatprep.subr.mxu0 0.0
    %2814 = vmatpush2.xpose.msra.mxu0 0.0
    %2815 = vmatprep.subr.mxu0 0.0
    %2816 = vmatpush2.xpose.msra.mxu0 0.0
    %2817 = vmatprep.subr.mxu0 0.0
    %2818 = vmatpush2.xpose.msra.mxu0 0.0
    %2819 = vmatprep.subr.mxu0 0.0
    %2820 = vmatpush2.xpose.msra.mxu0 0.0
    %2821 = vmatprep.subr.mxu0 0.0
    %2822 = vmatpush2.xpose.msra.mxu0 0.0
    %2823 = vmatprep.subr.mxu0 0.0
    %2824 = vmatpush2.xpose.msra.mxu0 0.0
    %2825 = vmatprep.subr.mxu0 0.0
    %2826 = vmatpush2.xpose.msra.mxu0 0.0
    %2827 = vmatprep.subr.mxu0 0.0
    %2828 = vmatpush2.xpose.msra.mxu0 0.0
    %2829 = vmatprep.subr.mxu0 0.0
    %2830 = vmatpush2.xpose.msra.mxu0 0.0
    %2831 = vmatprep.subr.mxu0 0.0
    %2832 = vmatpush2.xpose.msra.mxu0 0.0
    %2833 = vmatprep.subr.mxu0 0.0
    %2834 = vmatpush2.xpose.msra.mxu0 0.0
    %2835 = vmatprep.mubr.f32.mxu0 0.0
    %2836 = vmatmul.mubr.f32.gmra.mxu0 %v2765
    %v2837 = vpop.f32.mrf.mxu0
    %v2838 = vadd.f32 0.0, %v2837
    %v2839 = vpop.f32.mrf.mxu0
    %2840 = vdwg.mxu0
    %v2841 = vmul.f32 %v2838, 0.35355338
    %v2842 = vadd.f32 %v2841, %v2261
    %v2843 = vsel %vm2347, %v2842, -inf
    %2844 = vmax.xlane.f32.xlu0 %v2843
    %v2845 = vpop.xlane.xlu0 %2844
    %v2846 = vsub.f32 %v2842, %v2845
    %v2847 = vmul.f32 %v2846, 1.442695
    %v2848 = vpow.pop %v2847
    %v2849 = vsel %vm2347, %v2848, 0.0
    %2850 = vadd.xlane.f32.xlu0 %v2849
    %v2851 = vpop.xlane.xlu0 %2850
    %v2852 = vrcp.pop %v2851
    %v2853 = vmul.f32 %v2848, %v2852
    %v2854 = vadd.f32 %v2533, %v2853
    %2855 = vrot.lane.b32.xlu0 %v2253, 16
    %v2856 = vpop.permute.xlu0 %2855
    %2857 = vrot.lane.b32.xlu0 %v2254, 16
    %v2858 = vpop.permute.xlu0 %2857
    %v2862 = vsel %vm2347, %v2853, 0
    %2864 = vmatprep.subr.mxu0 0.0
    %2865 = vmatpush1.msra.mxu0 0.0
    %2866 = vmatprep.subr.mxu0 0.0
    %2867 = vmatpush1.msra.mxu0 0.0
    %2868 = vmatprep.subr.mxu0 0.0
    %2869 = vmatpush1.msra.mxu0 0.0
    %2870 = vmatprep.subr.mxu0 0.0
    %2871 = vmatpush1.msra.mxu0 0.0
    %2872 = vmatprep.subr.mxu0 0.0
    %2873 = vmatpush1.msra.mxu0 0.0
    %2874 = vmatprep.subr.mxu0 0.0
    %2875 = vmatpush1.msra.mxu0 0.0
    %2876 = vmatprep.subr.mxu0 0.0
    %2877 = vmatpush1.msra.mxu0 0.0
    %2878 = vmatprep.subr.mxu0 0.0
    %2879 = vmatpush1.msra.mxu0 0.0
    %2880 = vmatprep.subr.mxu0 0.0
    %2881 = vmatpush1.msra.mxu0 0.0
    %2882 = vmatprep.subr.mxu0 0.0
    %2883 = vmatpush1.msra.mxu0 0.0
    %2884 = vmatprep.subr.mxu0 0.0
    %2885 = vmatpush1.msra.mxu0 0.0
    %2886 = vmatprep.subr.mxu0 0.0
    %2887 = vmatpush1.msra.mxu0 0.0
    %2888 = vmatprep.subr.mxu0 0.0
    %2889 = vmatpush1.msra.mxu0 0.0
    %2890 = vmatprep.subr.mxu0 0.0
    %2891 = vmatpush1.msra.mxu0 0.0
    %2892 = vmatprep.subr.mxu0 0.0
    %2893 = vmatpush1.msra.mxu0 %v2858
    %2894 = vmatprep.subr.mxu0 0.0
    %2895 = vmatpush1.msra.mxu0 %v2856
    %2896 = vmatprep.subr.mxu0 0.0
    %2897 = vmatpush2.msra.mxu0 0.0
    %2898 = vmatprep.subr.mxu0 0.0
    %2899 = vmatpush2.msra.mxu0 0.0
    %2900 = vmatprep.subr.mxu0 0.0
    %2901 = vmatpush2.msra.mxu0 0.0
    %2902 = vmatprep.subr.mxu0 0.0
    %2903 = vmatpush2.msra.mxu0 0.0
    %2904 = vmatprep.subr.mxu0 0.0
    %2905 = vmatpush2.msra.mxu0 0.0
    %2906 = vmatprep.subr.mxu0 0.0
    %2907 = vmatpush2.msra.mxu0 0.0
    %2908 = vmatprep.subr.mxu0 0.0
    %2909 = vmatpush2.msra.mxu0 0.0
    %2910 = vmatprep.subr.mxu0 0.0
    %2911 = vmatpush2.msra.mxu0 0.0
    %2912 = vmatprep.subr.mxu0 0.0
    %2913 = vmatpush2.msra.mxu0 0.0
    %2914 = vmatprep.subr.mxu0 0.0
    %2915 = vmatpush2.msra.mxu0 0.0
    %2916 = vmatprep.subr.mxu0 0.0
    %2917 = vmatpush2.msra.mxu0 0.0
    %2918 = vmatprep.subr.mxu0 0.0
    %2919 = vmatpush2.msra.mxu0 0.0
    %2920 = vmatprep.subr.mxu0 0.0
    %2921 = vmatpush2.msra.mxu0 0.0
    %2922 = vmatprep.subr.mxu0 0.0
    %2923 = vmatpush2.msra.mxu0 0.0
    %2924 = vmatprep.subr.mxu0 0.0
    %2925 = vmatpush2.msra.mxu0 0.0
    %2926 = vmatprep.subr.mxu0 0.0
    %2927 = vmatpush2.msra.mxu0 0.0
    %2928 = vmatprep.mubr.f32.mxu0 0.0
    %2929 = vmatmul.mubr.f32.gmra.mxu0 %v2862
    %v2930 = vpop.f32.mrf.mxu0
    %v2931 = vadd.f32 0.0, %v2930
    %v2932 = vpop.f32.mrf.mxu0
    %2933 = vdwg.mxu0
    %v2935 = vsel %vm183, %v2931, 0
    %2937 = vmatprep.subr.mxu0 0.0
    %2938 = vmatpush1.msra.mxu0 0.0
    %2939 = vmatprep.subr.mxu0 0.0
    %2940 = vmatpush1.msra.mxu0 0.0
    %2941 = vmatprep.subr.mxu0 0.0
    %2942 = vmatpush1.msra.mxu0 0.0
    %2943 = vmatprep.subr.mxu0 0.0
    %2944 = vmatpush1.msra.mxu0 0.0
    %2945 = vmatprep.subr.mxu0 0.0
    %2946 = vmatpush1.msra.mxu0 0.0
    %2947 = vmatprep.subr.mxu0 0.0
    %2948 = vmatpush1.msra.mxu0 0.0
    %2949 = vmatprep.subr.mxu0 0.0
    %2950 = vmatpush1.msra.mxu0 0.0
    %2951 = vmatprep.subr.mxu0 0.0
    %2952 = vmatpush1.msra.mxu0 0.0
    %2953 = vmatprep.subr.mxu0 0.0
    %2954 = vmatpush1.msra.mxu0 0.0
    %2955 = vmatprep.subr.mxu0 0.0
    %2956 = vmatpush1.msra.mxu0 0.0
    %2957 = vmatprep.subr.mxu0 0.0
    %2958 = vmatpush1.msra.mxu0 0.0
    %2959 = vmatprep.subr.mxu0 0.0
    %2960 = vmatpush1.msra.mxu0 0.0
    %2961 = vmatprep.subr.mxu0 0.0
    %2962 = vmatpush1.msra.mxu0 0.0
    %2963 = vmatprep.subr.mxu0 0.0
    %2964 = vmatpush1.msra.mxu0 0.0
    %2965 = vmatprep.subr.mxu0 0.0
    %2966 = vmatpush1.msra.mxu0 0.0
    %2967 = vmatprep.subr.mxu0 0.0
    %2968 = vmatpush1.msra.mxu0 %v2259
    %2969 = vmatprep.subr.mxu0 0.0
    %2970 = vmatpush2.msra.mxu0 0.0
    %2971 = vmatprep.subr.mxu0 0.0
    %2972 = vmatpush2.msra.mxu0 0.0
    %2973 = vmatprep.subr.mxu0 0.0
    %2974 = vmatpush2.msra.mxu0 0.0
    %2975 = vmatprep.subr.mxu0 0.0
    %2976 = vmatpush2.msra.mxu0 0.0
    %2977 = vmatprep.subr.mxu0 0.0
    %2978 = vmatpush2.msra.mxu0 0.0
    %2979 = vmatprep.subr.mxu0 0.0
    %2980 = vmatpush2.msra.mxu0 0.0
    %2981 = vmatprep.subr.mxu0 0.0
    %2982 = vmatpush2.msra.mxu0 0.0
    %2983 = vmatprep.subr.mxu0 0.0
    %2984 = vmatpush2.msra.mxu0 0.0
    %2985 = vmatprep.subr.mxu0 0.0
    %2986 = vmatpush2.msra.mxu0 0.0
    %2987 = vmatprep.subr.mxu0 0.0
    %2988 = vmatpush2.msra.mxu0 0.0
    %2989 = vmatprep.subr.mxu0 0.0
    %2990 = vmatpush2.msra.mxu0 0.0
    %2991 = vmatprep.subr.mxu0 0.0
    %2992 = vmatpush2.msra.mxu0 0.0
    %2993 = vmatprep.subr.mxu0 0.0
    %2994 = vmatpush2.msra.mxu0 0.0
    %2995 = vmatprep.subr.mxu0 0.0
    %2996 = vmatpush2.msra.mxu0 0.0
    %2997 = vmatprep.subr.mxu0 0.0
    %2998 = vmatpush2.msra.mxu0 0.0
    %2999 = vmatprep.subr.mxu0 0.0
    %3000 = vmatpush2.msra.mxu0 0.0
    %3001 = vmatprep.mubr.f32.mxu0 0.0
    %3002 = vmatmul.mubr.f32.gmra.mxu0 %v2935
    %v3003 = vpop.f32.mrf.mxu0
    %v3004 = vadd.f32 0.0, %v3003
    %v3005 = vpop.f32.mrf.mxu0
    %3006 = vdwg.mxu0
    %v3007 = vadd.f32 %v2756, %v3004
    %3008 = vrot.lane.b32.xlu0 %v2245, 104
    %v3009 = vpop.permute.xlu0 %3008
    %3010 = vrot.lane.b32.xlu0 %v2253, 40
    %v3011 = vpop.permute.xlu0 %3010
    %3012 = vrot.lane.b32.xlu0 %v2254, 40
    %v3013 = vpop.permute.xlu0 %3012
    %v3014 = vsel %vm183, %v3009, 0
    %v3016 = vsel %vm183, %v3011, 0
    %v3018 = vsel %vm183, %v3013, 0
    %3020 = vmatprep.subr.mxu0 0.0
    %3021 = vmatpush1.xpose.msra.mxu0 0.0
    %3022 = vmatprep.subr.mxu0 0.0
    %3023 = vmatpush1.xpose.msra.mxu0 0.0
    %3024 = vmatprep.subr.mxu0 0.0
    %3025 = vmatpush1.xpose.msra.mxu0 0.0
    %3026 = vmatprep.subr.mxu0 0.0
    %3027 = vmatpush1.xpose.msra.mxu0 0.0
    %3028 = vmatprep.subr.mxu0 0.0
    %3029 = vmatpush1.xpose.msra.mxu0 0.0
    %3030 = vmatprep.subr.mxu0 0.0
    %3031 = vmatpush1.xpose.msra.mxu0 0.0
    %3032 = vmatprep.subr.mxu0 0.0
    %3033 = vmatpush1.xpose.msra.mxu0 0.0
    %3034 = vmatprep.subr.mxu0 0.0
    %3035 = vmatpush1.xpose.msra.mxu0 0.0
    %3036 = vmatprep.subr.mxu0 0.0
    %3037 = vmatpush1.xpose.msra.mxu0 0.0
    %3038 = vmatprep.subr.mxu0 0.0
    %3039 = vmatpush1.xpose.msra.mxu0 0.0
    %3040 = vmatprep.subr.mxu0 0.0
    %3041 = vmatpush1.xpose.msra.mxu0 0.0
    %3042 = vmatprep.subr.mxu0 0.0
    %3043 = vmatpush1.xpose.msra.mxu0 0.0
    %3044 = vmatprep.subr.mxu0 0.0
    %3045 = vmatpush1.xpose.msra.mxu0 0.0
    %3046 = vmatprep.subr.mxu0 0.0
    %3047 = vmatpush1.xpose.msra.mxu0 0.0
    %3048 = vmatprep.subr.mxu0 0.0
    %3049 = vmatpush1.xpose.msra.mxu0 %v3018
    %3050 = vmatprep.subr.mxu0 0.0
    %3051 = vmatpush1.xpose.msra.mxu0 %v3016
    %3052 = vmatprep.subr.mxu0 0.0
    %3053 = vmatpush2.xpose.msra.mxu0 0.0
    %3054 = vmatprep.subr.mxu0 0.0
    %3055 = vmatpush2.xpose.msra.mxu0 0.0
    %3056 = vmatprep.subr.mxu0 0.0
    %3057 = vmatpush2.xpose.msra.mxu0 0.0
    %3058 = vmatprep.subr.mxu0 0.0
    %3059 = vmatpush2.xpose.msra.mxu0 0.0
    %3060 = vmatprep.subr.mxu0 0.0
    %3061 = vmatpush2.xpose.msra.mxu0 0.0
    %3062 = vmatprep.subr.mxu0 0.0
    %3063 = vmatpush2.xpose.msra.mxu0 0.0
    %3064 = vmatprep.subr.mxu0 0.0
    %3065 = vmatpush2.xpose.msra.mxu0 0.0
    %3066 = vmatprep.subr.mxu0 0.0
    %3067 = vmatpush2.xpose.msra.mxu0 0.0
    %3068 = vmatprep.subr.mxu0 0.0
    %3069 = vmatpush2.xpose.msra.mxu0 0.0
    %3070 = vmatprep.subr.mxu0 0.0
    %3071 = vmatpush2.xpose.msra.mxu0 0.0
    %3072 = vmatprep.subr.mxu0 0.0
    %3073 = vmatpush2.xpose.msra.mxu0 0.0
    %3074 = vmatprep.subr.mxu0 0.0
    %3075 = vmatpush2.xpose.msra.mxu0 0.0
    %3076 = vmatprep.subr.mxu0 0.0
    %3077 = vmatpush2.xpose.msra.mxu0 0.0
    %3078 = vmatprep.subr.mxu0 0.0
    %3079 = vmatpush2.xpose.msra.mxu0 0.0
    %3080 = vmatprep.subr.mxu0 0.0
    %3081 = vmatpush2.xpose.msra.mxu0 0.0
    %3082 = vmatprep.subr.mxu0 0.0
    %3083 = vmatpush2.xpose.msra.mxu0 0.0
    %3084 = vmatprep.mubr.f32.mxu0 0.0
    %3085 = vmatmul.mubr.f32.gmra.mxu0 %v3014
    %v3086 = vpop.f32.mrf.mxu0
    %v3087 = vadd.f32 0.0, %v3086
    %v3088 = vpop.f32.mrf.mxu0
    %3089 = vdwg.mxu0
    %v3090 = vmul.f32 %v3087, 0.35355338
    %v3091 = vadd.f32 %v3090, %v2261
    %v3092 = vsel %vm2347, %v3091, -inf
    %3093 = vmax.xlane.f32.xlu0 %v3092
    %v3094 = vpop.xlane.xlu0 %3093
    %v3095 = vsub.f32 %v3091, %v3094
    %v3096 = vmul.f32 %v3095, 1.442695
    %v3097 = vpow.pop %v3096
    %v3098 = vsel %vm2347, %v3097, 0.0
    %3099 = vadd.xlane.f32.xlu0 %v3098
    %v3100 = vpop.xlane.xlu0 %3099
    %v3101 = vrcp.pop %v3100
    %v3102 = vmul.f32 %v3097, %v3101
    %v3103 = vadd.f32 %v2854, %v3102
    %3104 = vrot.lane.b32.xlu0 %v2253, 8
    %v3105 = vpop.permute.xlu0 %3104
    %3106 = vrot.lane.b32.xlu0 %v2254, 8
    %v3107 = vpop.permute.xlu0 %3106
    %v3111 = vsel %vm2347, %v3102, 0
    %3113 = vmatprep.subr.mxu0 0.0
    %3114 = vmatpush1.msra.mxu0 0.0
    %3115 = vmatprep.subr.mxu0 0.0
    %3116 = vmatpush1.msra.mxu0 0.0
    %3117 = vmatprep.subr.mxu0 0.0
    %3118 = vmatpush1.msra.mxu0 0.0
    %3119 = vmatprep.subr.mxu0 0.0
    %3120 = vmatpush1.msra.mxu0 0.0
    %3121 = vmatprep.subr.mxu0 0.0
    %3122 = vmatpush1.msra.mxu0 0.0
    %3123 = vmatprep.subr.mxu0 0.0
    %3124 = vmatpush1.msra.mxu0 0.0
    %3125 = vmatprep.subr.mxu0 0.0
    %3126 = vmatpush1.msra.mxu0 0.0
    %3127 = vmatprep.subr.mxu0 0.0
    %3128 = vmatpush1.msra.mxu0 0.0
    %3129 = vmatprep.subr.mxu0 0.0
    %3130 = vmatpush1.msra.mxu0 0.0
    %3131 = vmatprep.subr.mxu0 0.0
    %3132 = vmatpush1.msra.mxu0 0.0
    %3133 = vmatprep.subr.mxu0 0.0
    %3134 = vmatpush1.msra.mxu0 0.0
    %3135 = vmatprep.subr.mxu0 0.0
    %3136 = vmatpush1.msra.mxu0 0.0
    %3137 = vmatprep.subr.mxu0 0.0
    %3138 = vmatpush1.msra.mxu0 0.0
    %3139 = vmatprep.subr.mxu0 0.0
    %3140 = vmatpush1.msra.mxu0 0.0
    %3141 = vmatprep.subr.mxu0 0.0
    %3142 = vmatpush1.msra.mxu0 %v3107
    %3143 = vmatprep.subr.mxu0 0.0
    %3144 = vmatpush1.msra.mxu0 %v3105
    %3145 = vmatprep.subr.mxu0 0.0
    %3146 = vmatpush2.msra.mxu0 0.0
    %3147 = vmatprep.subr.mxu0 0.0
    %3148 = vmatpush2.msra.mxu0 0.0
    %3149 = vmatprep.subr.mxu0 0.0
    %3150 = vmatpush2.msra.mxu0 0.0
    %3151 = vmatprep.subr.mxu0 0.0
    %3152 = vmatpush2.msra.mxu0 0.0
    %3153 = vmatprep.subr.mxu0 0.0
    %3154 = vmatpush2.msra.mxu0 0.0
    %3155 = vmatprep.subr.mxu0 0.0
    %3156 = vmatpush2.msra.mxu0 0.0
    %3157 = vmatprep.subr.mxu0 0.0
    %3158 = vmatpush2.msra.mxu0 0.0
    %3159 = vmatprep.subr.mxu0 0.0
    %3160 = vmatpush2.msra.mxu0 0.0
    %3161 = vmatprep.subr.mxu0 0.0
    %3162 = vmatpush2.msra.mxu0 0.0
    %3163 = vmatprep.subr.mxu0 0.0
    %3164 = vmatpush2.msra.mxu0 0.0
    %3165 = vmatprep.subr.mxu0 0.0
    %3166 = vmatpush2.msra.mxu0 0.0
    %3167 = vmatprep.subr.mxu0 0.0
    %3168 = vmatpush2.msra.mxu0 0.0
    %3169 = vmatprep.subr.mxu0 0.0
    %3170 = vmatpush2.msra.mxu0 0.0
    %3171 = vmatprep.subr.mxu0 0.0
    %3172 = vmatpush2.msra.mxu0 0.0
    %3173 = vmatprep.subr.mxu0 0.0
    %3174 = vmatpush2.msra.mxu0 0.0
    %3175 = vmatprep.subr.mxu0 0.0
    %3176 = vmatpush2.msra.mxu0 0.0
    %3177 = vmatprep.mubr.f32.mxu0 0.0
    %3178 = vmatmul.mubr.f32.gmra.mxu0 %v3111
    %v3179 = vpop.f32.mrf.mxu0
    %v3180 = vadd.f32 0.0, %v3179
    %v3181 = vpop.f32.mrf.mxu0
    %3182 = vdwg.mxu0
    %v3184 = vsel %vm183, %v3180, 0
    %3186 = vmatprep.subr.mxu0 0.0
    %3187 = vmatpush1.msra.mxu0 0.0
    %3188 = vmatprep.subr.mxu0 0.0
    %3189 = vmatpush1.msra.mxu0 0.0
    %3190 = vmatprep.subr.mxu0 0.0
    %3191 = vmatpush1.msra.mxu0 0.0
    %3192 = vmatprep.subr.mxu0 0.0
    %3193 = vmatpush1.msra.mxu0 0.0
    %3194 = vmatprep.subr.mxu0 0.0
    %3195 = vmatpush1.msra.mxu0 0.0
    %3196 = vmatprep.subr.mxu0 0.0
    %3197 = vmatpush1.msra.mxu0 0.0
    %3198 = vmatprep.subr.mxu0 0.0
    %3199 = vmatpush1.msra.mxu0 0.0
    %3200 = vmatprep.subr.mxu0 0.0
    %3201 = vmatpush1.msra.mxu0 0.0
    %3202 = vmatprep.subr.mxu0 0.0
    %3203 = vmatpush1.msra.mxu0 0.0
    %3204 = vmatprep.subr.mxu0 0.0
    %3205 = vmatpush1.msra.mxu0 0.0
    %3206 = vmatprep.subr.mxu0 0.0
    %3207 = vmatpush1.msra.mxu0 0.0
    %3208 = vmatprep.subr.mxu0 0.0
    %3209 = vmatpush1.msra.mxu0 0.0
    %3210 = vmatprep.subr.mxu0 0.0
    %3211 = vmatpush1.msra.mxu0 0.0
    %3212 = vmatprep.subr.mxu0 0.0
    %3213 = vmatpush1.msra.mxu0 0.0
    %3214 = vmatprep.subr.mxu0 0.0
    %3215 = vmatpush1.msra.mxu0 0.0
    %3216 = vmatprep.subr.mxu0 0.0
    %3217 = vmatpush1.msra.mxu0 %v2260
    %3218 = vmatprep.subr.mxu0 0.0
    %3219 = vmatpush2.msra.mxu0 0.0
    %3220 = vmatprep.subr.mxu0 0.0
    %3221 = vmatpush2.msra.mxu0 0.0
    %3222 = vmatprep.subr.mxu0 0.0
    %3223 = vmatpush2.msra.mxu0 0.0
    %3224 = vmatprep.subr.mxu0 0.0
    %3225 = vmatpush2.msra.mxu0 0.0
    %3226 = vmatprep.subr.mxu0 0.0
    %3227 = vmatpush2.msra.mxu0 0.0
    %3228 = vmatprep.subr.mxu0 0.0
    %3229 = vmatpush2.msra.mxu0 0.0
    %3230 = vmatprep.subr.mxu0 0.0
    %3231 = vmatpush2.msra.mxu0 0.0
    %3232 = vmatprep.subr.mxu0 0.0
    %3233 = vmatpush2.msra.mxu0 0.0
    %3234 = vmatprep.subr.mxu0 0.0
    %3235 = vmatpush2.msra.mxu0 0.0
    %3236 = vmatprep.subr.mxu0 0.0
    %3237 = vmatpush2.msra.mxu0 0.0
    %3238 = vmatprep.subr.mxu0 0.0
    %3239 = vmatpush2.msra.mxu0 0.0
    %3240 = vmatprep.subr.mxu0 0.0
    %3241 = vmatpush2.msra.mxu0 0.0
    %3242 = vmatprep.subr.mxu0 0.0
    %3243 = vmatpush2.msra.mxu0 0.0
    %3244 = vmatprep.subr.mxu0 0.0
    %3245 = vmatpush2.msra.mxu0 0.0
    %3246 = vmatprep.subr.mxu0 0.0
    %3247 = vmatpush2.msra.mxu0 0.0
    %3248 = vmatprep.subr.mxu0 0.0
    %3249 = vmatpush2.msra.mxu0 0.0
    %3250 = vmatprep.mubr.f32.mxu0 0.0
    %3251 = vmatmul.mubr.f32.gmra.mxu0 %v3184
    %v3252 = vpop.f32.mrf.mxu0
    %v3253 = vadd.f32 0.0, %v3252
    %v3254 = vpop.f32.mrf.mxu0
    %3255 = vdwg.mxu0
    %v3256 = vadd.f32 %v3007, %v3253
    %v3257 = vmul.f32 %v3103, 0.25
    %3258 = vst.msk [vmem:[#allocation2] sm:$0xff] %vm2347, %v3257
    %s3259 = scalar_lea.vmem %s23, 8
    %v3260 = vld [vmem:[%s3259] sm:$0xff]
    %3263 = vrot.lane.b32.xlu0 %v2255, 64
    %v3264 = vpop.permute.xlu0 %3263
    %3265 = vrot.lane.b32.xlu0 %v2256, 64
    %v3266 = vpop.permute.xlu0 %3265
    %v3268 = vsel %vm183, %v2250, 0
    %v3270 = vsel %vm183, %v3264, 0
    %v3272 = vsel %vm183, %v3266, 0
    %3274 = vmatprep.subr.mxu0 0.0
    %3275 = vmatpush1.xpose.msra.mxu0 0.0
    %3276 = vmatprep.subr.mxu0 0.0
    %3277 = vmatpush1.xpose.msra.mxu0 0.0
    %3278 = vmatprep.subr.mxu0 0.0
    %3279 = vmatpush1.xpose.msra.mxu0 0.0
    %3280 = vmatprep.subr.mxu0 0.0
    %3281 = vmatpush1.xpose.msra.mxu0 0.0
    %3282 = vmatprep.subr.mxu0 0.0
    %3283 = vmatpush1.xpose.msra.mxu0 0.0
    %3284 = vmatprep.subr.mxu0 0.0
    %3285 = vmatpush1.xpose.msra.mxu0 0.0
    %3286 = vmatprep.subr.mxu0 0.0
    %3287 = vmatpush1.xpose.msra.mxu0 0.0
    %3288 = vmatprep.subr.mxu0 0.0
    %3289 = vmatpush1.xpose.msra.mxu0 0.0
    %3290 = vmatprep.subr.mxu0 0.0
    %3291 = vmatpush1.xpose.msra.mxu0 0.0
    %3292 = vmatprep.subr.mxu0 0.0
    %3293 = vmatpush1.xpose.msra.mxu0 0.0
    %3294 = vmatprep.subr.mxu0 0.0
    %3295 = vmatpush1.xpose.msra.mxu0 0.0
    %3296 = vmatprep.subr.mxu0 0.0
    %3297 = vmatpush1.xpose.msra.mxu0 0.0
    %3298 = vmatprep.subr.mxu0 0.0
    %3299 = vmatpush1.xpose.msra.mxu0 0.0
    %3300 = vmatprep.subr.mxu0 0.0
    %3301 = vmatpush1.xpose.msra.mxu0 0.0
    %3302 = vmatprep.subr.mxu0 0.0
    %3303 = vmatpush1.xpose.msra.mxu0 %v3272
    %3304 = vmatprep.subr.mxu0 0.0
    %3305 = vmatpush1.xpose.msra.mxu0 %v3270
    %3306 = vmatprep.subr.mxu0 0.0
    %3307 = vmatpush2.xpose.msra.mxu0 0.0
    %3308 = vmatprep.subr.mxu0 0.0
    %3309 = vmatpush2.xpose.msra.mxu0 0.0
    %3310 = vmatprep.subr.mxu0 0.0
    %3311 = vmatpush2.xpose.msra.mxu0 0.0
    %3312 = vmatprep.subr.mxu0 0.0
    %3313 = vmatpush2.xpose.msra.mxu0 0.0
    %3314 = vmatprep.subr.mxu0 0.0
    %3315 = vmatpush2.xpose.msra.mxu0 0.0
    %3316 = vmatprep.subr.mxu0 0.0
    %3317 = vmatpush2.xpose.msra.mxu0 0.0
    %3318 = vmatprep.subr.mxu0 0.0
    %3319 = vmatpush2.xpose.msra.mxu0 0.0
    %3320 = vmatprep.subr.mxu0 0.0
    %3321 = vmatpush2.xpose.msra.mxu0 0.0
    %3322 = vmatprep.subr.mxu0 0.0
    %3323 = vmatpush2.xpose.msra.mxu0 0.0
    %3324 = vmatprep.subr.mxu0 0.0
    %3325 = vmatpush2.xpose.msra.mxu0 0.0
    %3326 = vmatprep.subr.mxu0 0.0
    %3327 = vmatpush2.xpose.msra.mxu0 0.0
    %3328 = vmatprep.subr.mxu0 0.0
    %3329 = vmatpush2.xpose.msra.mxu0 0.0
    %3330 = vmatprep.subr.mxu0 0.0
    %3331 = vmatpush2.xpose.msra.mxu0 0.0
    %3332 = vmatprep.subr.mxu0 0.0
    %3333 = vmatpush2.xpose.msra.mxu0 0.0
    %3334 = vmatprep.subr.mxu0 0.0
    %3335 = vmatpush2.xpose.msra.mxu0 0.0
    %3336 = vmatprep.subr.mxu0 0.0
    %3337 = vmatpush2.xpose.msra.mxu0 0.0
    %3338 = vmatprep.mubr.f32.mxu0 0.0
    %3339 = vmatmul.mubr.f32.gmra.mxu0 %v3268
    %v3340 = vpop.f32.mrf.mxu0
    %v3341 = vadd.f32 0.0, %v3340
    %v3342 = vpop.f32.mrf.mxu0
    %3343 = vdwg.mxu0
    %v3344 = vmul.f32 %v3341, 0.35355338
    %v3345 = vadd.f32 %v3344, %v3260
    %v3346 = vsel %vm2347, %v3345, -inf
    %3347 = vmax.xlane.f32.xlu0 %v3346
    %v3348 = vpop.xlane.xlu0 %3347
    %v3349 = vsub.f32 %v3345, %v3348
    %v3350 = vmul.f32 %v3349, 1.442695
    %v3351 = vpow.pop %v3350
    %v3352 = vsel %vm2347, %v3351, 0.0
    %3353 = vadd.xlane.f32.xlu0 %v3352
    %v3354 = vpop.xlane.xlu0 %3353
    %v3355 = vrcp.pop %v3354
    %v3356 = vmul.f32 %v3351, %v3355
    %3357 = vrot.lane.b32.xlu0 %v2255, 32
    %v3358 = vpop.permute.xlu0 %3357
    %3359 = vrot.lane.b32.xlu0 %v2256, 32
    %v3360 = vpop.permute.xlu0 %3359
    %v3364 = vsel %vm2347, %v3356, 0
    %3366 = vmatprep.subr.mxu0 0.0
    %3367 = vmatpush1.msra.mxu0 0.0
    %3368 = vmatprep.subr.mxu0 0.0
    %3369 = vmatpush1.msra.mxu0 0.0
    %3370 = vmatprep.subr.mxu0 0.0
    %3371 = vmatpush1.msra.mxu0 0.0
    %3372 = vmatprep.subr.mxu0 0.0
    %3373 = vmatpush1.msra.mxu0 0.0
    %3374 = vmatprep.subr.mxu0 0.0
    %3375 = vmatpush1.msra.mxu0 0.0
    %3376 = vmatprep.subr.mxu0 0.0
    %3377 = vmatpush1.msra.mxu0 0.0
    %3378 = vmatprep.subr.mxu0 0.0
    %3379 = vmatpush1.msra.mxu0 0.0
    %3380 = vmatprep.subr.mxu0 0.0
    %3381 = vmatpush1.msra.mxu0 0.0
    %3382 = vmatprep.subr.mxu0 0.0
    %3383 = vmatpush1.msra.mxu0 0.0
    %3384 = vmatprep.subr.mxu0 0.0
    %3385 = vmatpush1.msra.mxu0 0.0
    %3386 = vmatprep.subr.mxu0 0.0
    %3387 = vmatpush1.msra.mxu0 0.0
    %3388 = vmatprep.subr.mxu0 0.0
    %3389 = vmatpush1.msra.mxu0 0.0
    %3390 = vmatprep.subr.mxu0 0.0
    %3391 = vmatpush1.msra.mxu0 0.0
    %3392 = vmatprep.subr.mxu0 0.0
    %3393 = vmatpush1.msra.mxu0 0.0
    %3394 = vmatprep.subr.mxu0 0.0
    %3395 = vmatpush1.msra.mxu0 %v3360
    %3396 = vmatprep.subr.mxu0 0.0
    %3397 = vmatpush1.msra.mxu0 %v3358
    %3398 = vmatprep.subr.mxu0 0.0
    %3399 = vmatpush2.msra.mxu0 0.0
    %3400 = vmatprep.subr.mxu0 0.0
    %3401 = vmatpush2.msra.mxu0 0.0
    %3402 = vmatprep.subr.mxu0 0.0
    %3403 = vmatpush2.msra.mxu0 0.0
    %3404 = vmatprep.subr.mxu0 0.0
    %3405 = vmatpush2.msra.mxu0 0.0
    %3406 = vmatprep.subr.mxu0 0.0
    %3407 = vmatpush2.msra.mxu0 0.0
    %3408 = vmatprep.subr.mxu0 0.0
    %3409 = vmatpush2.msra.mxu0 0.0
    %3410 = vmatprep.subr.mxu0 0.0
    %3411 = vmatpush2.msra.mxu0 0.0
    %3412 = vmatprep.subr.mxu0 0.0
    %3413 = vmatpush2.msra.mxu0 0.0
    %3414 = vmatprep.subr.mxu0 0.0
    %3415 = vmatpush2.msra.mxu0 0.0
    %3416 = vmatprep.subr.mxu0 0.0
    %3417 = vmatpush2.msra.mxu0 0.0
    %3418 = vmatprep.subr.mxu0 0.0
    %3419 = vmatpush2.msra.mxu0 0.0
    %3420 = vmatprep.subr.mxu0 0.0
    %3421 = vmatpush2.msra.mxu0 0.0
    %3422 = vmatprep.subr.mxu0 0.0
    %3423 = vmatpush2.msra.mxu0 0.0
    %3424 = vmatprep.subr.mxu0 0.0
    %3425 = vmatpush2.msra.mxu0 0.0
    %3426 = vmatprep.subr.mxu0 0.0
    %3427 = vmatpush2.msra.mxu0 0.0
    %3428 = vmatprep.subr.mxu0 0.0
    %3429 = vmatpush2.msra.mxu0 0.0
    %3430 = vmatprep.mubr.f32.mxu0 0.0
    %3431 = vmatmul.mubr.f32.gmra.mxu0 %v3364
    %v3432 = vpop.f32.mrf.mxu0
    %v3433 = vadd.f32 0.0, %v3432
    %v3434 = vpop.f32.mrf.mxu0
    %3435 = vdwg.mxu0
    %3436 = vrot.lane.b32.xlu0 %v2250, 120
    %v3437 = vpop.permute.xlu0 %3436
    %3438 = vrot.lane.b32.xlu0 %v2255, 56
    %v3439 = vpop.permute.xlu0 %3438
    %3440 = vrot.lane.b32.xlu0 %v2256, 56
    %v3441 = vpop.permute.xlu0 %3440
    %v3442 = vsel %vm183, %v3437, 0
    %v3444 = vsel %vm183, %v3439, 0
    %v3446 = vsel %vm183, %v3441, 0
    %3448 = vmatprep.subr.mxu0 0.0
    %3449 = vmatpush1.xpose.msra.mxu0 0.0
    %3450 = vmatprep.subr.mxu0 0.0
    %3451 = vmatpush1.xpose.msra.mxu0 0.0
    %3452 = vmatprep.subr.mxu0 0.0
    %3453 = vmatpush1.xpose.msra.mxu0 0.0
    %3454 = vmatprep.subr.mxu0 0.0
    %3455 = vmatpush1.xpose.msra.mxu0 0.0
    %3456 = vmatprep.subr.mxu0 0.0
    %3457 = vmatpush1.xpose.msra.mxu0 0.0
    %3458 = vmatprep.subr.mxu0 0.0
    %3459 = vmatpush1.xpose.msra.mxu0 0.0
    %3460 = vmatprep.subr.mxu0 0.0
    %3461 = vmatpush1.xpose.msra.mxu0 0.0
    %3462 = vmatprep.subr.mxu0 0.0
    %3463 = vmatpush1.xpose.msra.mxu0 0.0
    %3464 = vmatprep.subr.mxu0 0.0
    %3465 = vmatpush1.xpose.msra.mxu0 0.0
    %3466 = vmatprep.subr.mxu0 0.0
    %3467 = vmatpush1.xpose.msra.mxu0 0.0
    %3468 = vmatprep.subr.mxu0 0.0
    %3469 = vmatpush1.xpose.msra.mxu0 0.0
    %3470 = vmatprep.subr.mxu0 0.0
    %3471 = vmatpush1.xpose.msra.mxu0 0.0
    %3472 = vmatprep.subr.mxu0 0.0
    %3473 = vmatpush1.xpose.msra.mxu0 0.0
    %3474 = vmatprep.subr.mxu0 0.0
    %3475 = vmatpush1.xpose.msra.mxu0 0.0
    %3476 = vmatprep.subr.mxu0 0.0
    %3477 = vmatpush1.xpose.msra.mxu0 %v3446
    %3478 = vmatprep.subr.mxu0 0.0
    %3479 = vmatpush1.xpose.msra.mxu0 %v3444
    %3480 = vmatprep.subr.mxu0 0.0
    %3481 = vmatpush2.xpose.msra.mxu0 0.0
    %3482 = vmatprep.subr.mxu0 0.0
    %3483 = vmatpush2.xpose.msra.mxu0 0.0
    %3484 = vmatprep.subr.mxu0 0.0
    %3485 = vmatpush2.xpose.msra.mxu0 0.0
    %3486 = vmatprep.subr.mxu0 0.0
    %3487 = vmatpush2.xpose.msra.mxu0 0.0
    %3488 = vmatprep.subr.mxu0 0.0
    %3489 = vmatpush2.xpose.msra.mxu0 0.0
    %3490 = vmatprep.subr.mxu0 0.0
    %3491 = vmatpush2.xpose.msra.mxu0 0.0
    %3492 = vmatprep.subr.mxu0 0.0
    %3493 = vmatpush2.xpose.msra.mxu0 0.0
    %3494 = vmatprep.subr.mxu0 0.0
    %3495 = vmatpush2.xpose.msra.mxu0 0.0
    %3496 = vmatprep.subr.mxu0 0.0
    %3497 = vmatpush2.xpose.msra.mxu0 0.0
    %3498 = vmatprep.subr.mxu0 0.0
    %3499 = vmatpush2.xpose.msra.mxu0 0.0
    %3500 = vmatprep.subr.mxu0 0.0
    %3501 = vmatpush2.xpose.msra.mxu0 0.0
    %3502 = vmatprep.subr.mxu0 0.0
    %3503 = vmatpush2.xpose.msra.mxu0 0.0
    %3504 = vmatprep.subr.mxu0 0.0
    %3505 = vmatpush2.xpose.msra.mxu0 0.0
    %3506 = vmatprep.subr.mxu0 0.0
    %3507 = vmatpush2.xpose.msra.mxu0 0.0
    %3508 = vmatprep.subr.mxu0 0.0
    %3509 = vmatpush2.xpose.msra.mxu0 0.0
    %3510 = vmatprep.subr.mxu0 0.0
    %3511 = vmatpush2.xpose.msra.mxu0 0.0
    %3512 = vmatprep.mubr.f32.mxu0 0.0
    %3513 = vmatmul.mubr.f32.gmra.mxu0 %v3442
    %v3514 = vpop.f32.mrf.mxu0
    %v3515 = vadd.f32 0.0, %v3514
    %v3516 = vpop.f32.mrf.mxu0
    %3517 = vdwg.mxu0
    %v3518 = vmul.f32 %v3515, 0.35355338
    %v3519 = vadd.f32 %v3518, %v3260
    %v3520 = vsel %vm2347, %v3519, -inf
    %3521 = vmax.xlane.f32.xlu0 %v3520
    %v3522 = vpop.xlane.xlu0 %3521
    %v3523 = vsub.f32 %v3519, %v3522
    %v3524 = vmul.f32 %v3523, 1.442695
    %v3525 = vpow.pop %v3524
    %v3526 = vsel %vm2347, %v3525, 0.0
    %3527 = vadd.xlane.f32.xlu0 %v3526
    %v3528 = vpop.xlane.xlu0 %3527
    %v3529 = vrcp.pop %v3528
    %v3530 = vmul.f32 %v3525, %v3529
    %v3531 = vadd.f32 %v3356, %v3530
    %3532 = vrot.lane.b32.xlu0 %v2255, 24
    %v3533 = vpop.permute.xlu0 %3532
    %3534 = vrot.lane.b32.xlu0 %v2256, 24
    %v3535 = vpop.permute.xlu0 %3534
    %v3539 = vsel %vm2347, %v3530, 0
    %3541 = vmatprep.subr.mxu0 0.0
    %3542 = vmatpush1.msra.mxu0 0.0
    %3543 = vmatprep.subr.mxu0 0.0
    %3544 = vmatpush1.msra.mxu0 0.0
    %3545 = vmatprep.subr.mxu0 0.0
    %3546 = vmatpush1.msra.mxu0 0.0
    %3547 = vmatprep.subr.mxu0 0.0
    %3548 = vmatpush1.msra.mxu0 0.0
    %3549 = vmatprep.subr.mxu0 0.0
    %3550 = vmatpush1.msra.mxu0 0.0
    %3551 = vmatprep.subr.mxu0 0.0
    %3552 = vmatpush1.msra.mxu0 0.0
    %3553 = vmatprep.subr.mxu0 0.0
    %3554 = vmatpush1.msra.mxu0 0.0
    %3555 = vmatprep.subr.mxu0 0.0
    %3556 = vmatpush1.msra.mxu0 0.0
    %3557 = vmatprep.subr.mxu0 0.0
    %3558 = vmatpush1.msra.mxu0 0.0
    %3559 = vmatprep.subr.mxu0 0.0
    %3560 = vmatpush1.msra.mxu0 0.0
    %3561 = vmatprep.subr.mxu0 0.0
    %3562 = vmatpush1.msra.mxu0 0.0
    %3563 = vmatprep.subr.mxu0 0.0
    %3564 = vmatpush1.msra.mxu0 0.0
    %3565 = vmatprep.subr.mxu0 0.0
    %3566 = vmatpush1.msra.mxu0 0.0
    %3567 = vmatprep.subr.mxu0 0.0
    %3568 = vmatpush1.msra.mxu0 0.0
    %3569 = vmatprep.subr.mxu0 0.0
    %3570 = vmatpush1.msra.mxu0 %v3535
    %3571 = vmatprep.subr.mxu0 0.0
    %3572 = vmatpush1.msra.mxu0 %v3533
    %3573 = vmatprep.subr.mxu0 0.0
    %3574 = vmatpush2.msra.mxu0 0.0
    %3575 = vmatprep.subr.mxu0 0.0
    %3576 = vmatpush2.msra.mxu0 0.0
    %3577 = vmatprep.subr.mxu0 0.0
    %3578 = vmatpush2.msra.mxu0 0.0
    %3579 = vmatprep.subr.mxu0 0.0
    %3580 = vmatpush2.msra.mxu0 0.0
    %3581 = vmatprep.subr.mxu0 0.0
    %3582 = vmatpush2.msra.mxu0 0.0
    %3583 = vmatprep.subr.mxu0 0.0
    %3584 = vmatpush2.msra.mxu0 0.0
    %3585 = vmatprep.subr.mxu0 0.0
    %3586 = vmatpush2.msra.mxu0 0.0
    %3587 = vmatprep.subr.mxu0 0.0
    %3588 = vmatpush2.msra.mxu0 0.0
    %3589 = vmatprep.subr.mxu0 0.0
    %3590 = vmatpush2.msra.mxu0 0.0
    %3591 = vmatprep.subr.mxu0 0.0
    %3592 = vmatpush2.msra.mxu0 0.0
    %3593 = vmatprep.subr.mxu0 0.0
    %3594 = vmatpush2.msra.mxu0 0.0
    %3595 = vmatprep.subr.mxu0 0.0
    %3596 = vmatpush2.msra.mxu0 0.0
    %3597 = vmatprep.subr.mxu0 0.0
    %3598 = vmatpush2.msra.mxu0 0.0
    %3599 = vmatprep.subr.mxu0 0.0
    %3600 = vmatpush2.msra.mxu0 0.0
    %3601 = vmatprep.subr.mxu0 0.0
    %3602 = vmatpush2.msra.mxu0 0.0
    %3603 = vmatprep.subr.mxu0 0.0
    %3604 = vmatpush2.msra.mxu0 0.0
    %3605 = vmatprep.mubr.f32.mxu0 0.0
    %3606 = vmatmul.mubr.f32.gmra.mxu0 %v3539
    %v3607 = vpop.f32.mrf.mxu0
    %v3608 = vadd.f32 0.0, %v3607
    %v3609 = vpop.f32.mrf.mxu0
    %3610 = vdwg.mxu0
    %v3612 = vsel %vm183, %v3608, 0
    %3614 = vmatprep.subr.mxu0 0.0
    %3615 = vmatpush1.msra.mxu0 0.0
    %3616 = vmatprep.subr.mxu0 0.0
    %3617 = vmatpush1.msra.mxu0 0.0
    %3618 = vmatprep.subr.mxu0 0.0
    %3619 = vmatpush1.msra.mxu0 0.0
    %3620 = vmatprep.subr.mxu0 0.0
    %3621 = vmatpush1.msra.mxu0 0.0
    %3622 = vmatprep.subr.mxu0 0.0
    %3623 = vmatpush1.msra.mxu0 0.0
    %3624 = vmatprep.subr.mxu0 0.0
    %3625 = vmatpush1.msra.mxu0 0.0
    %3626 = vmatprep.subr.mxu0 0.0
    %3627 = vmatpush1.msra.mxu0 0.0
    %3628 = vmatprep.subr.mxu0 0.0
    %3629 = vmatpush1.msra.mxu0 0.0
    %3630 = vmatprep.subr.mxu0 0.0
    %3631 = vmatpush1.msra.mxu0 0.0
    %3632 = vmatprep.subr.mxu0 0.0
    %3633 = vmatpush1.msra.mxu0 0.0
    %3634 = vmatprep.subr.mxu0 0.0
    %3635 = vmatpush1.msra.mxu0 0.0
    %3636 = vmatprep.subr.mxu0 0.0
    %3637 = vmatpush1.msra.mxu0 0.0
    %3638 = vmatprep.subr.mxu0 0.0
    %3639 = vmatpush1.msra.mxu0 0.0
    %3640 = vmatprep.subr.mxu0 0.0
    %3641 = vmatpush1.msra.mxu0 0.0
    %3642 = vmatprep.subr.mxu0 0.0
    %3643 = vmatpush1.msra.mxu0 0.0
    %3644 = vmatprep.subr.mxu0 0.0
    %3645 = vmatpush1.msra.mxu0 %v2258
    %3646 = vmatprep.subr.mxu0 0.0
    %3647 = vmatpush2.msra.mxu0 0.0
    %3648 = vmatprep.subr.mxu0 0.0
    %3649 = vmatpush2.msra.mxu0 0.0
    %3650 = vmatprep.subr.mxu0 0.0
    %3651 = vmatpush2.msra.mxu0 0.0
    %3652 = vmatprep.subr.mxu0 0.0
    %3653 = vmatpush2.msra.mxu0 0.0
    %3654 = vmatprep.subr.mxu0 0.0
    %3655 = vmatpush2.msra.mxu0 0.0
    %3656 = vmatprep.subr.mxu0 0.0
    %3657 = vmatpush2.msra.mxu0 0.0
    %3658 = vmatprep.subr.mxu0 0.0
    %3659 = vmatpush2.msra.mxu0 0.0
    %3660 = vmatprep.subr.mxu0 0.0
    %3661 = vmatpush2.msra.mxu0 0.0
    %3662 = vmatprep.subr.mxu0 0.0
    %3663 = vmatpush2.msra.mxu0 0.0
    %3664 = vmatprep.subr.mxu0 0.0
    %3665 = vmatpush2.msra.mxu0 0.0
    %3666 = vmatprep.subr.mxu0 0.0
    %3667 = vmatpush2.msra.mxu0 0.0
    %3668 = vmatprep.subr.mxu0 0.0
    %3669 = vmatpush2.msra.mxu0 0.0
    %3670 = vmatprep.subr.mxu0 0.0
    %3671 = vmatpush2.msra.mxu0 0.0
    %3672 = vmatprep.subr.mxu0 0.0
    %3673 = vmatpush2.msra.mxu0 0.0
    %3674 = vmatprep.subr.mxu0 0.0
    %3675 = vmatpush2.msra.mxu0 0.0
    %3676 = vmatprep.subr.mxu0 0.0
    %3677 = vmatpush2.msra.mxu0 0.0
    %3678 = vmatprep.mubr.f32.mxu0 0.0
    %3679 = vmatmul.mubr.f32.gmra.mxu0 %v3612
    %v3680 = vpop.f32.mrf.mxu0
    %v3681 = vadd.f32 0.0, %v3680
    %v3682 = vpop.f32.mrf.mxu0
    %3683 = vdwg.mxu0
    %v3685 = vsel %vm183, %v3433, 0
    %3687 = vmatprep.subr.mxu0 0.0
    %3688 = vmatpush1.msra.mxu0 0.0
    %3689 = vmatprep.subr.mxu0 0.0
    %3690 = vmatpush1.msra.mxu0 0.0
    %3691 = vmatprep.subr.mxu0 0.0
    %3692 = vmatpush1.msra.mxu0 0.0
    %3693 = vmatprep.subr.mxu0 0.0
    %3694 = vmatpush1.msra.mxu0 0.0
    %3695 = vmatprep.subr.mxu0 0.0
    %3696 = vmatpush1.msra.mxu0 0.0
    %3697 = vmatprep.subr.mxu0 0.0
    %3698 = vmatpush1.msra.mxu0 0.0
    %3699 = vmatprep.subr.mxu0 0.0
    %3700 = vmatpush1.msra.mxu0 0.0
    %3701 = vmatprep.subr.mxu0 0.0
    %3702 = vmatpush1.msra.mxu0 0.0
    %3703 = vmatprep.subr.mxu0 0.0
    %3704 = vmatpush1.msra.mxu0 0.0
    %3705 = vmatprep.subr.mxu0 0.0
    %3706 = vmatpush1.msra.mxu0 0.0
    %3707 = vmatprep.subr.mxu0 0.0
    %3708 = vmatpush1.msra.mxu0 0.0
    %3709 = vmatprep.subr.mxu0 0.0
    %3710 = vmatpush1.msra.mxu0 0.0
    %3711 = vmatprep.subr.mxu0 0.0
    %3712 = vmatpush1.msra.mxu0 0.0
    %3713 = vmatprep.subr.mxu0 0.0
    %3714 = vmatpush1.msra.mxu0 0.0
    %3715 = vmatprep.subr.mxu0 0.0
    %3716 = vmatpush1.msra.mxu0 0.0
    %3717 = vmatprep.subr.mxu0 0.0
    %3718 = vmatpush1.msra.mxu0 %v2257
    %3719 = vmatprep.subr.mxu0 0.0
    %3720 = vmatpush2.msra.mxu0 0.0
    %3721 = vmatprep.subr.mxu0 0.0
    %3722 = vmatpush2.msra.mxu0 0.0
    %3723 = vmatprep.subr.mxu0 0.0
    %3724 = vmatpush2.msra.mxu0 0.0
    %3725 = vmatprep.subr.mxu0 0.0
    %3726 = vmatpush2.msra.mxu0 0.0
    %3727 = vmatprep.subr.mxu0 0.0
    %3728 = vmatpush2.msra.mxu0 0.0
    %3729 = vmatprep.subr.mxu0 0.0
    %3730 = vmatpush2.msra.mxu0 0.0
    %3731 = vmatprep.subr.mxu0 0.0
    %3732 = vmatpush2.msra.mxu0 0.0
    %3733 = vmatprep.subr.mxu0 0.0
    %3734 = vmatpush2.msra.mxu0 0.0
    %3735 = vmatprep.subr.mxu0 0.0
    %3736 = vmatpush2.msra.mxu0 0.0
    %3737 = vmatprep.subr.mxu0 0.0
    %3738 = vmatpush2.msra.mxu0 0.0
    %3739 = vmatprep.subr.mxu0 0.0
    %3740 = vmatpush2.msra.mxu0 0.0
    %3741 = vmatprep.subr.mxu0 0.0
    %3742 = vmatpush2.msra.mxu0 0.0
    %3743 = vmatprep.subr.mxu0 0.0
    %3744 = vmatpush2.msra.mxu0 0.0
    %3745 = vmatprep.subr.mxu0 0.0
    %3746 = vmatpush2.msra.mxu0 0.0
    %3747 = vmatprep.subr.mxu0 0.0
    %3748 = vmatpush2.msra.mxu0 0.0
    %3749 = vmatprep.subr.mxu0 0.0
    %3750 = vmatpush2.msra.mxu0 0.0
    %3751 = vmatprep.mubr.f32.mxu0 0.0
    %3752 = vmatmul.mubr.f32.gmra.mxu0 %v3685
    %v3753 = vpop.f32.mrf.mxu0
    %v3754 = vadd.f32 %v3681, %v3753
    %v3755 = vpop.f32.mrf.mxu0
    %3756 = vdwg.mxu0
    %3757 = vrot.lane.b32.xlu0 %v2250, 112
    %v3758 = vpop.permute.xlu0 %3757
    %3759 = vrot.lane.b32.xlu0 %v2255, 48
    %v3760 = vpop.permute.xlu0 %3759
    %3761 = vrot.lane.b32.xlu0 %v2256, 48
    %v3762 = vpop.permute.xlu0 %3761
    %v3763 = vsel %vm183, %v3758, 0
    %v3765 = vsel %vm183, %v3760, 0
    %v3767 = vsel %vm183, %v3762, 0
    %3769 = vmatprep.subr.mxu0 0.0
    %3770 = vmatpush1.xpose.msra.mxu0 0.0
    %3771 = vmatprep.subr.mxu0 0.0
    %3772 = vmatpush1.xpose.msra.mxu0 0.0
    %3773 = vmatprep.subr.mxu0 0.0
    %3774 = vmatpush1.xpose.msra.mxu0 0.0
    %3775 = vmatprep.subr.mxu0 0.0
    %3776 = vmatpush1.xpose.msra.mxu0 0.0
    %3777 = vmatprep.subr.mxu0 0.0
    %3778 = vmatpush1.xpose.msra.mxu0 0.0
    %3779 = vmatprep.subr.mxu0 0.0
    %3780 = vmatpush1.xpose.msra.mxu0 0.0
    %3781 = vmatprep.subr.mxu0 0.0
    %3782 = vmatpush1.xpose.msra.mxu0 0.0
    %3783 = vmatprep.subr.mxu0 0.0
    %3784 = vmatpush1.xpose.msra.mxu0 0.0
    %3785 = vmatprep.subr.mxu0 0.0
    %3786 = vmatpush1.xpose.msra.mxu0 0.0
    %3787 = vmatprep.subr.mxu0 0.0
    %3788 = vmatpush1.xpose.msra.mxu0 0.0
    %3789 = vmatprep.subr.mxu0 0.0
    %3790 = vmatpush1.xpose.msra.mxu0 0.0
    %3791 = vmatprep.subr.mxu0 0.0
    %3792 = vmatpush1.xpose.msra.mxu0 0.0
    %3793 = vmatprep.subr.mxu0 0.0
    %3794 = vmatpush1.xpose.msra.mxu0 0.0
    %3795 = vmatprep.subr.mxu0 0.0
    %3796 = vmatpush1.xpose.msra.mxu0 0.0
    %3797 = vmatprep.subr.mxu0 0.0
    %3798 = vmatpush1.xpose.msra.mxu0 %v3767
    %3799 = vmatprep.subr.mxu0 0.0
    %3800 = vmatpush1.xpose.msra.mxu0 %v3765
    %3801 = vmatprep.subr.mxu0 0.0
    %3802 = vmatpush2.xpose.msra.mxu0 0.0
    %3803 = vmatprep.subr.mxu0 0.0
    %3804 = vmatpush2.xpose.msra.mxu0 0.0
    %3805 = vmatprep.subr.mxu0 0.0
    %3806 = vmatpush2.xpose.msra.mxu0 0.0
    %3807 = vmatprep.subr.mxu0 0.0
    %3808 = vmatpush2.xpose.msra.mxu0 0.0
    %3809 = vmatprep.subr.mxu0 0.0
    %3810 = vmatpush2.xpose.msra.mxu0 0.0
    %3811 = vmatprep.subr.mxu0 0.0
    %3812 = vmatpush2.xpose.msra.mxu0 0.0
    %3813 = vmatprep.subr.mxu0 0.0
    %3814 = vmatpush2.xpose.msra.mxu0 0.0
    %3815 = vmatprep.subr.mxu0 0.0
    %3816 = vmatpush2.xpose.msra.mxu0 0.0
    %3817 = vmatprep.subr.mxu0 0.0
    %3818 = vmatpush2.xpose.msra.mxu0 0.0
    %3819 = vmatprep.subr.mxu0 0.0
    %3820 = vmatpush2.xpose.msra.mxu0 0.0
    %3821 = vmatprep.subr.mxu0 0.0
    %3822 = vmatpush2.xpose.msra.mxu0 0.0
    %3823 = vmatprep.subr.mxu0 0.0
    %3824 = vmatpush2.xpose.msra.mxu0 0.0
    %3825 = vmatprep.subr.mxu0 0.0
    %3826 = vmatpush2.xpose.msra.mxu0 0.0
    %3827 = vmatprep.subr.mxu0 0.0
    %3828 = vmatpush2.xpose.msra.mxu0 0.0
    %3829 = vmatprep.subr.mxu0 0.0
    %3830 = vmatpush2.xpose.msra.mxu0 0.0
    %3831 = vmatprep.subr.mxu0 0.0
    %3832 = vmatpush2.xpose.msra.mxu0 0.0
    %3833 = vmatprep.mubr.f32.mxu0 0.0
    %3834 = vmatmul.mubr.f32.gmra.mxu0 %v3763
    %v3835 = vpop.f32.mrf.mxu0
    %v3836 = vadd.f32 0.0, %v3835
    %v3837 = vpop.f32.mrf.mxu0
    %3838 = vdwg.mxu0
    %v3839 = vmul.f32 %v3836, 0.35355338
    %v3840 = vadd.f32 %v3839, %v3260
    %v3841 = vsel %vm2347, %v3840, -inf
    %3842 = vmax.xlane.f32.xlu0 %v3841
    %v3843 = vpop.xlane.xlu0 %3842
    %v3844 = vsub.f32 %v3840, %v3843
    %v3845 = vmul.f32 %v3844, 1.442695
    %v3846 = vpow.pop %v3845
    %v3847 = vsel %vm2347, %v3846, 0.0
    %3848 = vadd.xlane.f32.xlu0 %v3847
    %v3849 = vpop.xlane.xlu0 %3848
    %v3850 = vrcp.pop %v3849
    %v3851 = vmul.f32 %v3846, %v3850
    %v3852 = vadd.f32 %v3531, %v3851
    %3853 = vrot.lane.b32.xlu0 %v2255, 16
    %v3854 = vpop.permute.xlu0 %3853
    %3855 = vrot.lane.b32.xlu0 %v2256, 16
    %v3856 = vpop.permute.xlu0 %3855
    %v3860 = vsel %vm2347, %v3851, 0
    %3862 = vmatprep.subr.mxu0 0.0
    %3863 = vmatpush1.msra.mxu0 0.0
    %3864 = vmatprep.subr.mxu0 0.0
    %3865 = vmatpush1.msra.mxu0 0.0
    %3866 = vmatprep.subr.mxu0 0.0
    %3867 = vmatpush1.msra.mxu0 0.0
    %3868 = vmatprep.subr.mxu0 0.0
    %3869 = vmatpush1.msra.mxu0 0.0
    %3870 = vmatprep.subr.mxu0 0.0
    %3871 = vmatpush1.msra.mxu0 0.0
    %3872 = vmatprep.subr.mxu0 0.0
    %3873 = vmatpush1.msra.mxu0 0.0
    %3874 = vmatprep.subr.mxu0 0.0
    %3875 = vmatpush1.msra.mxu0 0.0
    %3876 = vmatprep.subr.mxu0 0.0
    %3877 = vmatpush1.msra.mxu0 0.0
    %3878 = vmatprep.subr.mxu0 0.0
    %3879 = vmatpush1.msra.mxu0 0.0
    %3880 = vmatprep.subr.mxu0 0.0
    %3881 = vmatpush1.msra.mxu0 0.0
    %3882 = vmatprep.subr.mxu0 0.0
    %3883 = vmatpush1.msra.mxu0 0.0
    %3884 = vmatprep.subr.mxu0 0.0
    %3885 = vmatpush1.msra.mxu0 0.0
    %3886 = vmatprep.subr.mxu0 0.0
    %3887 = vmatpush1.msra.mxu0 0.0
    %3888 = vmatprep.subr.mxu0 0.0
    %3889 = vmatpush1.msra.mxu0 0.0
    %3890 = vmatprep.subr.mxu0 0.0
    %3891 = vmatpush1.msra.mxu0 %v3856
    %3892 = vmatprep.subr.mxu0 0.0
    %3893 = vmatpush1.msra.mxu0 %v3854
    %3894 = vmatprep.subr.mxu0 0.0
    %3895 = vmatpush2.msra.mxu0 0.0
    %3896 = vmatprep.subr.mxu0 0.0
    %3897 = vmatpush2.msra.mxu0 0.0
    %3898 = vmatprep.subr.mxu0 0.0
    %3899 = vmatpush2.msra.mxu0 0.0
    %3900 = vmatprep.subr.mxu0 0.0
    %3901 = vmatpush2.msra.mxu0 0.0
    %3902 = vmatprep.subr.mxu0 0.0
    %3903 = vmatpush2.msra.mxu0 0.0
    %3904 = vmatprep.subr.mxu0 0.0
    %3905 = vmatpush2.msra.mxu0 0.0
    %3906 = vmatprep.subr.mxu0 0.0
    %3907 = vmatpush2.msra.mxu0 0.0
    %3908 = vmatprep.subr.mxu0 0.0
    %3909 = vmatpush2.msra.mxu0 0.0
    %3910 = vmatprep.subr.mxu0 0.0
    %3911 = vmatpush2.msra.mxu0 0.0
    %3912 = vmatprep.subr.mxu0 0.0
    %3913 = vmatpush2.msra.mxu0 0.0
    %3914 = vmatprep.subr.mxu0 0.0
    %3915 = vmatpush2.msra.mxu0 0.0
    %3916 = vmatprep.subr.mxu0 0.0
    %3917 = vmatpush2.msra.mxu0 0.0
    %3918 = vmatprep.subr.mxu0 0.0
    %3919 = vmatpush2.msra.mxu0 0.0
    %3920 = vmatprep.subr.mxu0 0.0
    %3921 = vmatpush2.msra.mxu0 0.0
    %3922 = vmatprep.subr.mxu0 0.0
    %3923 = vmatpush2.msra.mxu0 0.0
    %3924 = vmatprep.subr.mxu0 0.0
    %3925 = vmatpush2.msra.mxu0 0.0
    %3926 = vmatprep.mubr.f32.mxu0 0.0
    %3927 = vmatmul.mubr.f32.gmra.mxu0 %v3860
    %v3928 = vpop.f32.mrf.mxu0
    %v3929 = vadd.f32 0.0, %v3928
    %v3930 = vpop.f32.mrf.mxu0
    %3931 = vdwg.mxu0
    %v3933 = vsel %vm183, %v3929, 0
    %3935 = vmatprep.subr.mxu0 0.0
    %3936 = vmatpush1.msra.mxu0 0.0
    %3937 = vmatprep.subr.mxu0 0.0
    %3938 = vmatpush1.msra.mxu0 0.0
    %3939 = vmatprep.subr.mxu0 0.0
    %3940 = vmatpush1.msra.mxu0 0.0
    %3941 = vmatprep.subr.mxu0 0.0
    %3942 = vmatpush1.msra.mxu0 0.0
    %3943 = vmatprep.subr.mxu0 0.0
    %3944 = vmatpush1.msra.mxu0 0.0
    %3945 = vmatprep.subr.mxu0 0.0
    %3946 = vmatpush1.msra.mxu0 0.0
    %3947 = vmatprep.subr.mxu0 0.0
    %3948 = vmatpush1.msra.mxu0 0.0
    %3949 = vmatprep.subr.mxu0 0.0
    %3950 = vmatpush1.msra.mxu0 0.0
    %3951 = vmatprep.subr.mxu0 0.0
    %3952 = vmatpush1.msra.mxu0 0.0
    %3953 = vmatprep.subr.mxu0 0.0
    %3954 = vmatpush1.msra.mxu0 0.0
    %3955 = vmatprep.subr.mxu0 0.0
    %3956 = vmatpush1.msra.mxu0 0.0
    %3957 = vmatprep.subr.mxu0 0.0
    %3958 = vmatpush1.msra.mxu0 0.0
    %3959 = vmatprep.subr.mxu0 0.0
    %3960 = vmatpush1.msra.mxu0 0.0
    %3961 = vmatprep.subr.mxu0 0.0
    %3962 = vmatpush1.msra.mxu0 0.0
    %3963 = vmatprep.subr.mxu0 0.0
    %3964 = vmatpush1.msra.mxu0 0.0
    %3965 = vmatprep.subr.mxu0 0.0
    %3966 = vmatpush1.msra.mxu0 %v2259
    %3967 = vmatprep.subr.mxu0 0.0
    %3968 = vmatpush2.msra.mxu0 0.0
    %3969 = vmatprep.subr.mxu0 0.0
    %3970 = vmatpush2.msra.mxu0 0.0
    %3971 = vmatprep.subr.mxu0 0.0
    %3972 = vmatpush2.msra.mxu0 0.0
    %3973 = vmatprep.subr.mxu0 0.0
    %3974 = vmatpush2.msra.mxu0 0.0
    %3975 = vmatprep.subr.mxu0 0.0
    %3976 = vmatpush2.msra.mxu0 0.0
    %3977 = vmatprep.subr.mxu0 0.0
    %3978 = vmatpush2.msra.mxu0 0.0
    %3979 = vmatprep.subr.mxu0 0.0
    %3980 = vmatpush2.msra.mxu0 0.0
    %3981 = vmatprep.subr.mxu0 0.0
    %3982 = vmatpush2.msra.mxu0 0.0
    %3983 = vmatprep.subr.mxu0 0.0
    %3984 = vmatpush2.msra.mxu0 0.0
    %3985 = vmatprep.subr.mxu0 0.0
    %3986 = vmatpush2.msra.mxu0 0.0
    %3987 = vmatprep.subr.mxu0 0.0
    %3988 = vmatpush2.msra.mxu0 0.0
    %3989 = vmatprep.subr.mxu0 0.0
    %3990 = vmatpush2.msra.mxu0 0.0
    %3991 = vmatprep.subr.mxu0 0.0
    %3992 = vmatpush2.msra.mxu0 0.0
    %3993 = vmatprep.subr.mxu0 0.0
    %3994 = vmatpush2.msra.mxu0 0.0
    %3995 = vmatprep.subr.mxu0 0.0
    %3996 = vmatpush2.msra.mxu0 0.0
    %3997 = vmatprep.subr.mxu0 0.0
    %3998 = vmatpush2.msra.mxu0 0.0
    %3999 = vmatprep.mubr.f32.mxu0 0.0
    %4000 = vmatmul.mubr.f32.gmra.mxu0 %v3933
    %v4001 = vpop.f32.mrf.mxu0
    %v4002 = vadd.f32 0.0, %v4001
    %v4003 = vpop.f32.mrf.mxu0
    %4004 = vdwg.mxu0
    %v4005 = vadd.f32 %v3754, %v4002
    %4006 = vrot.lane.b32.xlu0 %v2250, 104
    %v4007 = vpop.permute.xlu0 %4006
    %4008 = vrot.lane.b32.xlu0 %v2255, 40
    %v4009 = vpop.permute.xlu0 %4008
    %4010 = vrot.lane.b32.xlu0 %v2256, 40
    %v4011 = vpop.permute.xlu0 %4010
    %v4012 = vsel %vm183, %v4007, 0
    %v4014 = vsel %vm183, %v4009, 0
    %v4016 = vsel %vm183, %v4011, 0
    %4018 = vmatprep.subr.mxu0 0.0
    %4019 = vmatpush1.xpose.msra.mxu0 0.0
    %4020 = vmatprep.subr.mxu0 0.0
    %4021 = vmatpush1.xpose.msra.mxu0 0.0
    %4022 = vmatprep.subr.mxu0 0.0
    %4023 = vmatpush1.xpose.msra.mxu0 0.0
    %4024 = vmatprep.subr.mxu0 0.0
    %4025 = vmatpush1.xpose.msra.mxu0 0.0
    %4026 = vmatprep.subr.mxu0 0.0
    %4027 = vmatpush1.xpose.msra.mxu0 0.0
    %4028 = vmatprep.subr.mxu0 0.0
    %4029 = vmatpush1.xpose.msra.mxu0 0.0
    %4030 = vmatprep.subr.mxu0 0.0
    %4031 = vmatpush1.xpose.msra.mxu0 0.0
    %4032 = vmatprep.subr.mxu0 0.0
    %4033 = vmatpush1.xpose.msra.mxu0 0.0
    %4034 = vmatprep.subr.mxu0 0.0
    %4035 = vmatpush1.xpose.msra.mxu0 0.0
    %4036 = vmatprep.subr.mxu0 0.0
    %4037 = vmatpush1.xpose.msra.mxu0 0.0
    %4038 = vmatprep.subr.mxu0 0.0
    %4039 = vmatpush1.xpose.msra.mxu0 0.0
    %4040 = vmatprep.subr.mxu0 0.0
    %4041 = vmatpush1.xpose.msra.mxu0 0.0
    %4042 = vmatprep.subr.mxu0 0.0
    %4043 = vmatpush1.xpose.msra.mxu0 0.0
    %4044 = vmatprep.subr.mxu0 0.0
    %4045 = vmatpush1.xpose.msra.mxu0 0.0
    %4046 = vmatprep.subr.mxu0 0.0
    %4047 = vmatpush1.xpose.msra.mxu0 %v4016
    %4048 = vmatprep.subr.mxu0 0.0
    %4049 = vmatpush1.xpose.msra.mxu0 %v4014
    %4050 = vmatprep.subr.mxu0 0.0
    %4051 = vmatpush2.xpose.msra.mxu0 0.0
    %4052 = vmatprep.subr.mxu0 0.0
    %4053 = vmatpush2.xpose.msra.mxu0 0.0
    %4054 = vmatprep.subr.mxu0 0.0
    %4055 = vmatpush2.xpose.msra.mxu0 0.0
    %4056 = vmatprep.subr.mxu0 0.0
    %4057 = vmatpush2.xpose.msra.mxu0 0.0
    %4058 = vmatprep.subr.mxu0 0.0
    %4059 = vmatpush2.xpose.msra.mxu0 0.0
    %4060 = vmatprep.subr.mxu0 0.0
    %4061 = vmatpush2.xpose.msra.mxu0 0.0
    %4062 = vmatprep.subr.mxu0 0.0
    %4063 = vmatpush2.xpose.msra.mxu0 0.0
    %4064 = vmatprep.subr.mxu0 0.0
    %4065 = vmatpush2.xpose.msra.mxu0 0.0
    %4066 = vmatprep.subr.mxu0 0.0
    %4067 = vmatpush2.xpose.msra.mxu0 0.0
    %4068 = vmatprep.subr.mxu0 0.0
    %4069 = vmatpush2.xpose.msra.mxu0 0.0
    %4070 = vmatprep.subr.mxu0 0.0
    %4071 = vmatpush2.xpose.msra.mxu0 0.0
    %4072 = vmatprep.subr.mxu0 0.0
    %4073 = vmatpush2.xpose.msra.mxu0 0.0
    %4074 = vmatprep.subr.mxu0 0.0
    %4075 = vmatpush2.xpose.msra.mxu0 0.0
    %4076 = vmatprep.subr.mxu0 0.0
    %4077 = vmatpush2.xpose.msra.mxu0 0.0
    %4078 = vmatprep.subr.mxu0 0.0
    %4079 = vmatpush2.xpose.msra.mxu0 0.0
    %4080 = vmatprep.subr.mxu0 0.0
    %4081 = vmatpush2.xpose.msra.mxu0 0.0
    %4082 = vmatprep.mubr.f32.mxu0 0.0
    %4083 = vmatmul.mubr.f32.gmra.mxu0 %v4012
    %v4084 = vpop.f32.mrf.mxu0
    %v4085 = vadd.f32 0.0, %v4084
    %v4086 = vpop.f32.mrf.mxu0
    %4087 = vdwg.mxu0
    %v4088 = vmul.f32 %v4085, 0.35355338
    %v4089 = vadd.f32 %v4088, %v3260
    %v4090 = vsel %vm2347, %v4089, -inf
    %4091 = vmax.xlane.f32.xlu0 %v4090
    %v4092 = vpop.xlane.xlu0 %4091
    %v4093 = vsub.f32 %v4089, %v4092
    %v4094 = vmul.f32 %v4093, 1.442695
    %v4095 = vpow.pop %v4094
    %v4096 = vsel %vm2347, %v4095, 0.0
    %4097 = vadd.xlane.f32.xlu0 %v4096
    %v4098 = vpop.xlane.xlu0 %4097
    %v4099 = vrcp.pop %v4098
    %v4100 = vmul.f32 %v4095, %v4099
    %v4101 = vadd.f32 %v3852, %v4100
    %4102 = vrot.lane.b32.xlu0 %v2255, 8
    %v4103 = vpop.permute.xlu0 %4102
    %4104 = vrot.lane.b32.xlu0 %v2256, 8
    %v4105 = vpop.permute.xlu0 %4104
    %v4109 = vsel %vm2347, %v4100, 0
    %4111 = vmatprep.subr.mxu0 0.0
    %4112 = vmatpush1.msra.mxu0 0.0
    %4113 = vmatprep.subr.mxu0 0.0
    %4114 = vmatpush1.msra.mxu0 0.0
    %4115 = vmatprep.subr.mxu0 0.0
    %4116 = vmatpush1.msra.mxu0 0.0
    %4117 = vmatprep.subr.mxu0 0.0
    %4118 = vmatpush1.msra.mxu0 0.0
    %4119 = vmatprep.subr.mxu0 0.0
    %4120 = vmatpush1.msra.mxu0 0.0
    %4121 = vmatprep.subr.mxu0 0.0
    %4122 = vmatpush1.msra.mxu0 0.0
    %4123 = vmatprep.subr.mxu0 0.0
    %4124 = vmatpush1.msra.mxu0 0.0
    %4125 = vmatprep.subr.mxu0 0.0
    %4126 = vmatpush1.msra.mxu0 0.0
    %4127 = vmatprep.subr.mxu0 0.0
    %4128 = vmatpush1.msra.mxu0 0.0
    %4129 = vmatprep.subr.mxu0 0.0
    %4130 = vmatpush1.msra.mxu0 0.0
    %4131 = vmatprep.subr.mxu0 0.0
    %4132 = vmatpush1.msra.mxu0 0.0
    %4133 = vmatprep.subr.mxu0 0.0
    %4134 = vmatpush1.msra.mxu0 0.0
    %4135 = vmatprep.subr.mxu0 0.0
    %4136 = vmatpush1.msra.mxu0 0.0
    %4137 = vmatprep.subr.mxu0 0.0
    %4138 = vmatpush1.msra.mxu0 0.0
    %4139 = vmatprep.subr.mxu0 0.0
    %4140 = vmatpush1.msra.mxu0 %v4105
    %4141 = vmatprep.subr.mxu0 0.0
    %4142 = vmatpush1.msra.mxu0 %v4103
    %4143 = vmatprep.subr.mxu0 0.0
    %4144 = vmatpush2.msra.mxu0 0.0
    %4145 = vmatprep.subr.mxu0 0.0
    %4146 = vmatpush2.msra.mxu0 0.0
    %4147 = vmatprep.subr.mxu0 0.0
    %4148 = vmatpush2.msra.mxu0 0.0
    %4149 = vmatprep.subr.mxu0 0.0
    %4150 = vmatpush2.msra.mxu0 0.0
    %4151 = vmatprep.subr.mxu0 0.0
    %4152 = vmatpush2.msra.mxu0 0.0
    %4153 = vmatprep.subr.mxu0 0.0
    %4154 = vmatpush2.msra.mxu0 0.0
    %4155 = vmatprep.subr.mxu0 0.0
    %4156 = vmatpush2.msra.mxu0 0.0
    %4157 = vmatprep.subr.mxu0 0.0
    %4158 = vmatpush2.msra.mxu0 0.0
    %4159 = vmatprep.subr.mxu0 0.0
    %4160 = vmatpush2.msra.mxu0 0.0
    %4161 = vmatprep.subr.mxu0 0.0
    %4162 = vmatpush2.msra.mxu0 0.0
    %4163 = vmatprep.subr.mxu0 0.0
    %4164 = vmatpush2.msra.mxu0 0.0
    %4165 = vmatprep.subr.mxu0 0.0
    %4166 = vmatpush2.msra.mxu0 0.0
    %4167 = vmatprep.subr.mxu0 0.0
    %4168 = vmatpush2.msra.mxu0 0.0
    %4169 = vmatprep.subr.mxu0 0.0
    %4170 = vmatpush2.msra.mxu0 0.0
    %4171 = vmatprep.subr.mxu0 0.0
    %4172 = vmatpush2.msra.mxu0 0.0
    %4173 = vmatprep.subr.mxu0 0.0
    %4174 = vmatpush2.msra.mxu0 0.0
    %4175 = vmatprep.mubr.f32.mxu0 0.0
    %4176 = vmatmul.mubr.f32.gmra.mxu0 %v4109
    %v4177 = vpop.f32.mrf.mxu0
    %v4178 = vadd.f32 0.0, %v4177
    %v4179 = vpop.f32.mrf.mxu0
    %4180 = vdwg.mxu0
    %v4182 = vsel %vm183, %v4178, 0
    %4184 = vmatprep.subr.mxu0 0.0
    %4185 = vmatpush1.msra.mxu0 0.0
    %4186 = vmatprep.subr.mxu0 0.0
    %4187 = vmatpush1.msra.mxu0 0.0
    %4188 = vmatprep.subr.mxu0 0.0
    %4189 = vmatpush1.msra.mxu0 0.0
    %4190 = vmatprep.subr.mxu0 0.0
    %4191 = vmatpush1.msra.mxu0 0.0
    %4192 = vmatprep.subr.mxu0 0.0
    %4193 = vmatpush1.msra.mxu0 0.0
    %4194 = vmatprep.subr.mxu0 0.0
    %4195 = vmatpush1.msra.mxu0 0.0
    %4196 = vmatprep.subr.mxu0 0.0
    %4197 = vmatpush1.msra.mxu0 0.0
    %4198 = vmatprep.subr.mxu0 0.0
    %4199 = vmatpush1.msra.mxu0 0.0
    %4200 = vmatprep.subr.mxu0 0.0
    %4201 = vmatpush1.msra.mxu0 0.0
    %4202 = vmatprep.subr.mxu0 0.0
    %4203 = vmatpush1.msra.mxu0 0.0
    %4204 = vmatprep.subr.mxu0 0.0
    %4205 = vmatpush1.msra.mxu0 0.0
    %4206 = vmatprep.subr.mxu0 0.0
    %4207 = vmatpush1.msra.mxu0 0.0
    %4208 = vmatprep.subr.mxu0 0.0
    %4209 = vmatpush1.msra.mxu0 0.0
    %4210 = vmatprep.subr.mxu0 0.0
    %4211 = vmatpush1.msra.mxu0 0.0
    %4212 = vmatprep.subr.mxu0 0.0
    %4213 = vmatpush1.msra.mxu0 0.0
    %4214 = vmatprep.subr.mxu0 0.0
    %4215 = vmatpush1.msra.mxu0 %v2260
    %4216 = vmatprep.subr.mxu0 0.0
    %4217 = vmatpush2.msra.mxu0 0.0
    %4218 = vmatprep.subr.mxu0 0.0
    %4219 = vmatpush2.msra.mxu0 0.0
    %4220 = vmatprep.subr.mxu0 0.0
    %4221 = vmatpush2.msra.mxu0 0.0
    %4222 = vmatprep.subr.mxu0 0.0
    %4223 = vmatpush2.msra.mxu0 0.0
    %4224 = vmatprep.subr.mxu0 0.0
    %4225 = vmatpush2.msra.mxu0 0.0
    %4226 = vmatprep.subr.mxu0 0.0
    %4227 = vmatpush2.msra.mxu0 0.0
    %4228 = vmatprep.subr.mxu0 0.0
    %4229 = vmatpush2.msra.mxu0 0.0
    %4230 = vmatprep.subr.mxu0 0.0
    %4231 = vmatpush2.msra.mxu0 0.0
    %4232 = vmatprep.subr.mxu0 0.0
    %4233 = vmatpush2.msra.mxu0 0.0
    %4234 = vmatprep.subr.mxu0 0.0
    %4235 = vmatpush2.msra.mxu0 0.0
    %4236 = vmatprep.subr.mxu0 0.0
    %4237 = vmatpush2.msra.mxu0 0.0
    %4238 = vmatprep.subr.mxu0 0.0
    %4239 = vmatpush2.msra.mxu0 0.0
    %4240 = vmatprep.subr.mxu0 0.0
    %4241 = vmatpush2.msra.mxu0 0.0
    %4242 = vmatprep.subr.mxu0 0.0
    %4243 = vmatpush2.msra.mxu0 0.0
    %4244 = vmatprep.subr.mxu0 0.0
    %4245 = vmatpush2.msra.mxu0 0.0
    %4246 = vmatprep.subr.mxu0 0.0
    %4247 = vmatpush2.msra.mxu0 0.0
    %4248 = vmatprep.mubr.f32.mxu0 0.0
    %4249 = vmatmul.mubr.f32.gmra.mxu0 %v4182
    %v4250 = vpop.f32.mrf.mxu0
    %v4251 = vadd.f32 0.0, %v4250
    %v4252 = vpop.f32.mrf.mxu0
    %4253 = vdwg.mxu0
    %v4254 = vadd.f32 %v4005, %v4251
    %v4255 = vmul.f32 %v4101, 0.25
    %s4256 = scalar_lea.vmem [#allocation2], 8
    %4257 = vst.msk [vmem:[%s4256] sm:$0xff] %vm2347, %v4255
    %v4258 = vld [vmem:[%s9] sm:$0x1]
    %v4260 = vlaneseq
    %v4261 = vshrl.u32 %v4260, 7
    %v4262 = vsub.s32 0, %v4261
    %v4263 = vrot.slane %v4258, %v4262
    %v4265 = vadd.f32 %v3256, %v4263
    %v4266 = vadd.f32 %v4254, %v4263
    %v4267 = vadd.f32 %v2159, %v4265
    %v4268 = vadd.f32 %v2160, %v4266
    %v4269 = vld [vmem:[%s16] sm:$0x1]
    %v4270 = vld [vmem:[%s17] sm:$0x1]
    %v4271 = vsel %vm93, %v4267, 0.0
    %4272 = vadd.xlane.f32.xlu0 %v4271
    %v4273 = vpop.xlane.xlu0 %4272
    %v4274 = vsel %vm93, %v4268, 0.0
    %4275 = vadd.xlane.f32.xlu0 %v4274
    %v4276 = vpop.xlane.xlu0 %4275
    %v4277 = vmul.f32 %v4273, %v2124
    %v4278 = vmul.f32 %v4276, %v2124
    %v4279 = vsub.f32 %v4267, %v4277
    %v4280 = vsub.f32 %v4268, %v4278
    %v4281 = vmul.f32 %v4279, %v4279
    %v4282 = vmul.f32 %v4280, %v4280
    %v4283 = vsel %vm93, %v4281, 0.0
    %4284 = vadd.xlane.f32.xlu0 %v4283
    %v4285 = vpop.xlane.xlu0 %4284
    %v4286 = vsel %vm93, %v4282, 0.0
    %4287 = vadd.xlane.f32.xlu0 %v4286
    %v4288 = vpop.xlane.xlu0 %4287
    %v4289 = vmul.f32 %v4285, %v2124
    %v4290 = vmul.f32 %v4288, %v2124
    %v4291 = vadd.f32 %v4289, 1e-05
    %v4292 = vadd.f32 %v4290, 1e-05
    %v4293 = vrsqrt.pop %v4291
    %v4294 = vrsqrt.pop %v4292
    %v4295 = vmul.f32 %v4279, %v4293
    %v4296 = vmul.f32 %v4280, %v4294
    %v4298 = vlaneseq
    %v4299 = vshrl.u32 %v4298, 7
    %v4300 = vsub.s32 0, %v4299
    %v4301 = vrot.slane %v4269, %v4300
    %v4303 = vmul.f32 %v4295, %v4301
    %v4304 = vmul.f32 %v4296, %v4301
    %v4306 = vlaneseq
    %v4307 = vshrl.u32 %v4306, 7
    %v4308 = vsub.s32 0, %v4307
    %v4309 = vrot.slane %v4270, %v4308
    %v4311 = vadd.f32 %v4303, %v4309
    %v4312 = vadd.f32 %v4304, %v4309
    %v4313 = vld [vmem:[%s10] sm:$0xff]
    %v4314 = vld [vmem:[%s10 + $0x8] sm:$0xff]
    %v4315 = vld [vmem:[%s10 + $0x10] sm:$0xff]
    %v4316 = vld [vmem:[%s10 + $0x18] sm:$0xff]
    %v4317 = vld [vmem:[%s11] sm:$0x1]
    %v4319 = vlaneseq
    %v4320 = vshrl.u32 %v4319, 7
    %v4321 = vsub.s32 0, %v4320
    %v4322 = vrot.slane %v4317, %v4321
    %v4325 = vsel %vm93, %v4311, 0
    %v4328 = vsel %vm93, %v4312, 0
    %4330 = vmatprep.subr.mxu0 0.0
    %4331 = vmatpush1.msra.mxu0 0.0
    %4332 = vmatprep.subr.mxu0 0.0
    %4333 = vmatpush1.msra.mxu0 0.0
    %4334 = vmatprep.subr.mxu0 0.0
    %4335 = vmatpush1.msra.mxu0 0.0
    %4336 = vmatprep.subr.mxu0 0.0
    %4337 = vmatpush1.msra.mxu0 0.0
    %4338 = vmatprep.subr.mxu0 0.0
    %4339 = vmatpush1.msra.mxu0 0.0
    %4340 = vmatprep.subr.mxu0 0.0
    %4341 = vmatpush1.msra.mxu0 0.0
    %4342 = vmatprep.subr.mxu0 0.0
    %4343 = vmatpush1.msra.mxu0 0.0
    %4344 = vmatprep.subr.mxu0 0.0
    %4345 = vmatpush1.msra.mxu0 0.0
    %4346 = vmatprep.subr.mxu0 0.0
    %4347 = vmatpush1.msra.mxu0 0.0
    %4348 = vmatprep.subr.mxu0 0.0
    %4349 = vmatpush1.msra.mxu0 0.0
    %4350 = vmatprep.subr.mxu0 0.0
    %4351 = vmatpush1.msra.mxu0 0.0
    %4352 = vmatprep.subr.mxu0 0.0
    %4353 = vmatpush1.msra.mxu0 0.0
    %4354 = vmatprep.subr.mxu0 0.0
    %4355 = vmatpush1.msra.mxu0 %v4316
    %4356 = vmatprep.subr.mxu0 0.0
    %4357 = vmatpush1.msra.mxu0 %v4315
    %4358 = vmatprep.subr.mxu0 0.0
    %4359 = vmatpush1.msra.mxu0 %v4314
    %4360 = vmatprep.subr.mxu0 0.0
    %4361 = vmatpush1.msra.mxu0 %v4313
    %4362 = vmatprep.subr.mxu0 0.0
    %4363 = vmatpush2.msra.mxu0 0.0
    %4364 = vmatprep.subr.mxu0 0.0
    %4365 = vmatpush2.msra.mxu0 0.0
    %4366 = vmatprep.subr.mxu0 0.0
    %4367 = vmatpush2.msra.mxu0 0.0
    %4368 = vmatprep.subr.mxu0 0.0
    %4369 = vmatpush2.msra.mxu0 0.0
    %4370 = vmatprep.subr.mxu0 0.0
    %4371 = vmatpush2.msra.mxu0 0.0
    %4372 = vmatprep.subr.mxu0 0.0
    %4373 = vmatpush2.msra.mxu0 0.0
    %4374 = vmatprep.subr.mxu0 0.0
    %4375 = vmatpush2.msra.mxu0 0.0
    %4376 = vmatprep.subr.mxu0 0.0
    %4377 = vmatpush2.msra.mxu0 0.0
    %4378 = vmatprep.subr.mxu0 0.0
    %4379 = vmatpush2.msra.mxu0 0.0
    %4380 = vmatprep.subr.mxu0 0.0
    %4381 = vmatpush2.msra.mxu0 0.0
    %4382 = vmatprep.subr.mxu0 0.0
    %4383 = vmatpush2.msra.mxu0 0.0
    %4384 = vmatprep.subr.mxu0 0.0
    %4385 = vmatpush2.msra.mxu0 0.0
    %4386 = vmatprep.subr.mxu0 0.0
    %4387 = vmatpush2.msra.mxu0 0.0
    %4388 = vmatprep.subr.mxu0 0.0
    %4389 = vmatpush2.msra.mxu0 0.0
    %4390 = vmatprep.subr.mxu0 0.0
    %4391 = vmatpush2.msra.mxu0 0.0
    %4392 = vmatprep.subr.mxu0 0.0
    %4393 = vmatpush2.msra.mxu0 0.0
    %4394 = vmatprep.mubr.f32.mxu0 0.0
    %4395 = vmatmul.mubr.f32.gmra.mxu0 %v4325
    %v4396 = vpop.f32.mrf.mxu0
    %v4397 = vadd.f32 %v4322, %v4396
    %v4398 = vpop.f32.mrf.mxu0
    %4399 = vmatprep.mubr.f32.mxu0 0.0
    %4400 = vmatmul.mubr.f32.gmra.mxu0 %v4328
    %v4401 = vpop.f32.mrf.mxu0
    %v4402 = vadd.f32 %v4322, %v4401
    %v4403 = vpop.f32.mrf.mxu0
    %4404 = vdwg.mxu0
    %v4405 = vmax.f32 %v4397, 0.0
    %v4406 = vmax.f32 %v4402, 0.0
    %v4407 = vld [vmem:[%s12] sm:$0xff]
    %v4408 = vld [vmem:[%s12 + $0x8] sm:$0xff]
    %v4409 = vld [vmem:[%s12 + $0x10] sm:$0xff]
    %v4410 = vld [vmem:[%s12 + $0x18] sm:$0xff]
    %v4411 = vld [vmem:[%s12 + $0x20] sm:$0xff]
    %v4412 = vld [vmem:[%s12 + $0x28] sm:$0xff]
    %v4413 = vld [vmem:[%s12 + $0x30] sm:$0xff]
    %v4414 = vld [vmem:[%s12 + $0x38] sm:$0xff]
    %v4415 = vld [vmem:[%s13] sm:$0x1]
    %v4417 = vlaneseq
    %v4418 = vshrl.u32 %v4417, 7
    %v4419 = vsub.s32 0, %v4418
    %v4420 = vrot.slane %v4415, %v4419
    %vm4422 = vcmask 523264
    %v4424 = vsel %vm4422, %v4405, 0
    %v4427 = vsel %vm4422, %v4406, 0
    %4429 = vmatprep.subr.mxu0 0.0
    %4430 = vmatpush1.msra.mxu0 0.0
    %4431 = vmatprep.subr.mxu0 0.0
    %4432 = vmatpush1.msra.mxu0 0.0
    %4433 = vmatprep.subr.mxu0 0.0
    %4434 = vmatpush1.msra.mxu0 0.0
    %4435 = vmatprep.subr.mxu0 0.0
    %4436 = vmatpush1.msra.mxu0 0.0
    %4437 = vmatprep.subr.mxu0 0.0
    %4438 = vmatpush1.msra.mxu0 0.0
    %4439 = vmatprep.subr.mxu0 0.0
    %4440 = vmatpush1.msra.mxu0 0.0
    %4441 = vmatprep.subr.mxu0 0.0
    %4442 = vmatpush1.msra.mxu0 0.0
    %4443 = vmatprep.subr.mxu0 0.0
    %4444 = vmatpush1.msra.mxu0 0.0
    %4445 = vmatprep.subr.mxu0 0.0
    %4446 = vmatpush1.msra.mxu0 %v4414
    %4447 = vmatprep.subr.mxu0 0.0
    %4448 = vmatpush1.msra.mxu0 %v4413
    %4449 = vmatprep.subr.mxu0 0.0
    %4450 = vmatpush1.msra.mxu0 %v4412
    %4451 = vmatprep.subr.mxu0 0.0
    %4452 = vmatpush1.msra.mxu0 %v4411
    %4453 = vmatprep.subr.mxu0 0.0
    %4454 = vmatpush1.msra.mxu0 %v4410
    %4455 = vmatprep.subr.mxu0 0.0
    %4456 = vmatpush1.msra.mxu0 %v4409
    %4457 = vmatprep.subr.mxu0 0.0
    %4458 = vmatpush1.msra.mxu0 %v4408
    %4459 = vmatprep.subr.mxu0 0.0
    %4460 = vmatpush1.msra.mxu0 %v4407
    %4461 = vmatprep.subr.mxu0 0.0
    %4462 = vmatpush2.msra.mxu0 0.0
    %4463 = vmatprep.subr.mxu0 0.0
    %4464 = vmatpush2.msra.mxu0 0.0
    %4465 = vmatprep.subr.mxu0 0.0
    %4466 = vmatpush2.msra.mxu0 0.0
    %4467 = vmatprep.subr.mxu0 0.0
    %4468 = vmatpush2.msra.mxu0 0.0
    %4469 = vmatprep.subr.mxu0 0.0
    %4470 = vmatpush2.msra.mxu0 0.0
    %4471 = vmatprep.subr.mxu0 0.0
    %4472 = vmatpush2.msra.mxu0 0.0
    %4473 = vmatprep.subr.mxu0 0.0
    %4474 = vmatpush2.msra.mxu0 0.0
    %4475 = vmatprep.subr.mxu0 0.0
    %4476 = vmatpush2.msra.mxu0 0.0
    %4477 = vmatprep.subr.mxu0 0.0
    %4478 = vmatpush2.msra.mxu0 0.0
    %4479 = vmatprep.subr.mxu0 0.0
    %4480 = vmatpush2.msra.mxu0 0.0
    %4481 = vmatprep.subr.mxu0 0.0
    %4482 = vmatpush2.msra.mxu0 0.0
    %4483 = vmatprep.subr.mxu0 0.0
    %4484 = vmatpush2.msra.mxu0 0.0
    %4485 = vmatprep.subr.mxu0 0.0
    %4486 = vmatpush2.msra.mxu0 0.0
    %4487 = vmatprep.subr.mxu0 0.0
    %4488 = vmatpush2.msra.mxu0 0.0
    %4489 = vmatprep.subr.mxu0 0.0
    %4490 = vmatpush2.msra.mxu0 0.0
    %4491 = vmatprep.subr.mxu0 0.0
    %4492 = vmatpush2.msra.mxu0 0.0
    %4493 = vmatprep.mubr.f32.mxu0 0.0
    %4494 = vmatmul.mubr.f32.gmra.mxu0 %v4424
    %v4495 = vpop.f32.mrf.mxu0
    %v4496 = vadd.f32 %v4420, %v4495
    %v4497 = vpop.f32.mrf.mxu0
    %4498 = vmatprep.mubr.f32.mxu0 0.0
    %4499 = vmatmul.mubr.f32.gmra.mxu0 %v4427
    %v4500 = vpop.f32.mrf.mxu0
    %v4501 = vadd.f32 %v4420, %v4500
    %v4502 = vpop.f32.mrf.mxu0
    %4503 = vdwg.mxu0
    %v4504 = vadd.f32 %v4311, %v4496
    %v4505 = vadd.f32 %v4312, %v4501
    %v4506 = vld [vmem:[%s18] sm:$0x1]
    %v4507 = vld [vmem:[%s19] sm:$0x1]
    %v4508 = vsel %vm93, %v4504, 0.0
    %4509 = vadd.xlane.f32.xlu0 %v4508
    %v4510 = vpop.xlane.xlu0 %4509
    %v4511 = vsel %vm93, %v4505, 0.0
    %4512 = vadd.xlane.f32.xlu0 %v4511
    %v4513 = vpop.xlane.xlu0 %4512
    %v4514 = vmul.f32 %v4510, %v2124
    %v4515 = vmul.f32 %v4513, %v2124
    %v4516 = vsub.f32 %v4504, %v4514
    %v4517 = vsub.f32 %v4505, %v4515
    %v4518 = vmul.f32 %v4516, %v4516
    %v4519 = vmul.f32 %v4517, %v4517
    %v4520 = vsel %vm93, %v4518, 0.0
    %4521 = vadd.xlane.f32.xlu0 %v4520
    %v4522 = vpop.xlane.xlu0 %4521
    %v4523 = vsel %vm93, %v4519, 0.0
    %4524 = vadd.xlane.f32.xlu0 %v4523
    %v4525 = vpop.xlane.xlu0 %4524
    %v4526 = vmul.f32 %v4522, %v2124
    %v4527 = vmul.f32 %v4525, %v2124
    %v4528 = vadd.f32 %v4526, 1e-05
    %v4529 = vadd.f32 %v4527, 1e-05
    %v4530 = vrsqrt.pop %v4528
    %v4531 = vrsqrt.pop %v4529
    %v4532 = vmul.f32 %v4516, %v4530
    %v4533 = vmul.f32 %v4517, %v4531
    %v4535 = vlaneseq
    %v4536 = vshrl.u32 %v4535, 7
    %v4537 = vsub.s32 0, %v4536
    %v4538 = vrot.slane %v4506, %v4537
    %v4540 = vmul.f32 %v4532, %v4538
    %v4541 = vmul.f32 %v4533, %v4538
    %v4543 = vlaneseq
    %v4544 = vshrl.u32 %v4543, 7
    %v4545 = vsub.s32 0, %v4544
    %v4546 = vrot.slane %v4507, %v4545
    %v4548 = vadd.f32 %v4540, %v4546
    %v4549 = vadd.f32 %v4541, %v4546
    %v4550 = vld [vmem:[%s20] sm:$0x1]
    %v4551 = vld [vmem:[%s21] sm:$0x1]
    %v4552 = vsel %vm93, %v4548, 0.0
    %4553 = vadd.xlane.f32.xlu0 %v4552
    %v4554 = vpop.xlane.xlu0 %4553
    %v4555 = vsel %vm93, %v4549, 0.0
    %4556 = vadd.xlane.f32.xlu0 %v4555
    %v4557 = vpop.xlane.xlu0 %4556
    %v4558 = vmul.f32 %v4554, %v2124
    %v4559 = vmul.f32 %v4557, %v2124
    %v4560 = vsub.f32 %v4548, %v4558
    %v4561 = vsub.f32 %v4549, %v4559
    %v4562 = vmul.f32 %v4560, %v4560
    %v4563 = vmul.f32 %v4561, %v4561
    %v4564 = vsel %vm93, %v4562, 0.0
    %4565 = vadd.xlane.f32.xlu0 %v4564
    %v4566 = vpop.xlane.xlu0 %4565
    %v4567 = vsel %vm93, %v4563, 0.0
    %4568 = vadd.xlane.f32.xlu0 %v4567
    %v4569 = vpop.xlane.xlu0 %4568
    %v4570 = vmul.f32 %v4566, %v2124
    %v4571 = vmul.f32 %v4569, %v2124
    %v4572 = vadd.f32 %v4570, 1e-05
    %v4573 = vadd.f32 %v4571, 1e-05
    %v4574 = vrsqrt.pop %v4572
    %v4575 = vrsqrt.pop %v4573
    %v4576 = vmul.f32 %v4560, %v4574
    %v4577 = vmul.f32 %v4561, %v4575
    %v4579 = vlaneseq
    %v4580 = vshrl.u32 %v4579, 7
    %v4581 = vsub.s32 0, %v4580
    %v4582 = vrot.slane %v4550, %v4581
    %v4584 = vmul.f32 %v4576, %v4582
    %v4585 = vmul.f32 %v4577, %v4582
    %v4587 = vlaneseq
    %v4588 = vshrl.u32 %v4587, 7
    %v4589 = vsub.s32 0, %v4588
    %v4590 = vrot.slane %v4551, %v4589
    %v4592 = vadd.f32 %v4584, %v4590
    %v4593 = vadd.f32 %v4585, %v4590
    %4594 = vst.msk [vmem:[%s24] sm:$0xff] %vm93, %v4592
    %4595 = vst.msk [vmem:[%s24 + $0x8] sm:$0xff] %vm93, %v4593
    // Predicated region
    $region98: #{run.5} parent=1 // pred_check
      _
    $region99: #{run.5} parent=1 // pred_check_branch
      %4597 = sbr.rel (0) target = $region101
    $region100: #{run.5} parent=1 // pred_region
      _
    $region101: #{run.5} parent=1 // pred_fallthru
      _
    // Predicated region
    $region102: #{run.5} parent=1 // pred_check
      _
    $region103: #{run.5} parent=1 // pred_check_branch
      %4599 = sbr.rel (0) target = $region105
    $region104: #{run.5} parent=1 // pred_region
      %s4601 = ssub.s32 256, 256
      %4602 = vsyncadd [#allocation3], %s4601
      %s4603 = sshll.u32 [#allocation2], 4
      %s4604 = int_to_ptr.vmem [resolvable:$true] %s4603
      %4609 = dma.vmem_to_hbm [thread:$0]  %s4604, 256, %s25, [#allocation3], 128, 128, 8
    $region105: #{run.5} parent=1 // pred_fallthru
      _
    // Predicated region
    $region106: #{run.5} parent=1 // pred_check
      _
    $region107: #{run.5} parent=1 // pred_check_branch
      %4611 = sbr.rel (0) target = $region109
    $region108: #{run.5} parent=1 // pred_region
      _
    $region109: #{run.5} parent=1 // pred_fallthru
      _
    // Predicated region
    $region110: #{run.5} parent=1 // pred_check
      _
    $region111: #{run.5} parent=1 // pred_check_branch
      %4613 = sbr.rel (0) target = $region113
    $region112: #{run.5} parent=1 // pred_region
      %4614 = dma.done [#allocation3], 256
    $region113: #{run.5} parent=1 // pred_fallthru
      _
    %4615 = vsyncpa [#allocation3], 1

</llo_original>
